<compile_context>
chip_gen: v5e
topology: v5e:2x2
jax: 0.10.0
libtpu: 0.0.40
codegen_flags: <defaults>
</compile_context>

<pallas_src>
import functools

import numpy as np
import jax
import jax.numpy as jnp
from jax import lax
from jax.experimental import pallas as pl
from jax.experimental.pallas import tpu as pltpu


# dot_general dimension numbers (2-D, no batch dims)
NN_DIMS = (((1,), (0,)), ((), ()))   # A @ B
NT_DIMS = (((1,), (1,)), ((), ()))   # A @ B^T
TN_DIMS = (((0,), (0,)), ((), ()))   # A^T @ B


# ---------------------------------------------------------------------------
# Math helpers (used both inside the kernel and in the pure-JAX reference)
# ---------------------------------------------------------------------------
def _erf(x):
    # Abramowitz & Stegun 7.1.26 rational approximation (|err| < 1.5e-7),
    # built only from ops Mosaic always supports. Matches torch's exact
    # (erf-based) GELU within f32 rounding.
    p = 0.3275911
    a1, a2, a3, a4, a5 = (0.254829592, -0.284496736, 1.421413741,
                          -1.453152027, 1.061405429)
    s = jnp.where(x >= 0.0, 1.0, -1.0)
    ax = jnp.abs(x)
    t = 1.0 / (1.0 + p * ax)
    poly = ((((a5 * t + a4) * t + a3) * t + a2) * t + a1) * t
    return s * (1.0 - poly * jnp.exp(-ax * ax))


def _gelu_exact(x):
    # torch.nn.GELU() default (non-approximate)
    return 0.5 * x * (1.0 + _erf(x * 0.7071067811865476))


def _ln_last(x, gamma, beta, eps=1e-5):
    # torch.nn.LayerNorm over the last axis (biased variance, eps inside sqrt)
    mean = jnp.mean(x, axis=-1, keepdims=True)
    var = jnp.mean((x - mean) ** 2, axis=-1, keepdims=True)
    return (x - mean) * lax.rsqrt(var + eps) * gamma + beta


def _ln_axis0(x, gamma_col, beta_col, eps=1e-5):
    # LayerNorm over axis 0 of a 2-D tile (token-mix LN without transposing x)
    mean = jnp.mean(x, axis=0, keepdims=True)
    var = jnp.mean((x - mean) ** 2, axis=0, keepdims=True)
    return (x - mean) * lax.rsqrt(var + eps) * gamma_col + beta_col


# ---------------------------------------------------------------------------
# Fused Pallas kernel: patch-embed + all mixer blocks + head (one batch elem)
# ---------------------------------------------------------------------------
def _mixer_fused_kernel(p_ref, emb_w_ref, emb_b_ref,
                        tg_ref, tb_ref, tw1_ref, tb1_ref, tw2t_ref, tb2_ref,
                        cg_ref, cb_ref, cw1_ref, cb1_ref, cw2_ref, cb2_ref,
                        lng_ref, lnb_ref, owt_ref, ob_ref,
                        o_ref, *, num_blocks):
    f32 = jnp.float32

    # Patch embedding: (P, K) @ (K, Hd) + bias   -> activation stays in VMEM
    z = (jnp.dot(p_ref[0], emb_w_ref[...], preferred_element_type=f32)
         + emb_b_ref[...])                                          # (P, Hd)

    for blk in range(num_blocks):
        # ---- token mixing: LN over the patch axis, MLP contracts P ----
        n = _ln_axis0(z, tg_ref[blk], tb_ref[blk])                  # (P, Hd)
        g = _gelu_exact(
            lax.dot_general(n, tw1_ref[blk], TN_DIMS,
                            preferred_element_type=f32)
            + tb1_ref[blk])                                         # (Hd, T)
        t2 = (lax.dot_general(tw2t_ref[blk], g, NT_DIMS,
                              preferred_element_type=f32)
              + tb2_ref[blk])                                       # (P, Hd)
        z = z + t2                                                  # residual

        # ---- channel mixing ----
        c = _ln_last(z, cg_ref[blk], cb_ref[blk])                   # (P, Hd)
        g2 = _gelu_exact(jnp.dot(c, cw1_ref[blk],
                                 preferred_element_type=f32)
                         + cb1_ref[blk])                            # (P, Cm)
        c2 = (jnp.dot(g2, cw2_ref[blk], preferred_element_type=f32)
              + cb2_ref[blk])                                       # (P, Hd)
        z = z + c2                                                  # residual

    # ---- head: LayerNorm(Hd) fused with the 1x1 conv, lane-dense output ----
    n = _ln_last(z, lng_ref[...], lnb_ref[...])                     # (P, Hd)
    o_ref[0] = (lax.dot_general(owt_ref[...], n, NT_DIMS,
                                preferred_element_type=f32)
                + ob_ref[...])                                      # (C, P)


# ---------------------------------------------------------------------------
# Glue: patchify (== Conv2d(kernel=stride=patch) im2col), params, forward
# ---------------------------------------------------------------------------
def patchify(x, ph, pw):
    # x: (B, C, H, W) NCHW  ->  (B, num_patches, C*ph*pw)
    B, C, H, W = x.shape
    hp, wp = H // ph, W // pw
    x = x.reshape(B, C, hp, ph, wp, pw)
    x = x.transpose(0, 2, 4, 1, 3, 5)        # (B, hp, wp, C, ph, pw)
    return x.reshape(B, hp * wp, C * ph * pw)


def init_params(key, cfg):
    C = cfg["input_channels"]
    ph, pw = cfg["patch_size"]
    Hi, Wi = cfg["image_size"]
    Hd = cfg["hidden_dim"]
    T = cfg["tokens_mlp_dim"]
    Cm = cfg["channels_mlp_dim"]
    NB = cfg["num_blocks"]
    P = (Hi // ph) * (Wi // pw)
    K = C * ph * pw

    keys = iter(jax.random.split(key, 12))

    def rnd(shape, scale):
        return scale * jax.random.normal(next(keys), shape, jnp.float32)

    return dict(
        # Conv2d patch embedding, stored as (K, Hd) = W_torch.reshape(Hd, K).T
        emb_w=rnd((K, Hd), 1.0 / np.sqrt(K)),
        emb_b=rnd((1, Hd), 0.02),
        # token mixing (stacked over blocks): LN(P), Linear(P->T), GELU, Linear(T->P)
        tg=jnp.ones((NB, P, 1), jnp.float32),
        tb=jnp.zeros((NB, P, 1), jnp.float32),
        tw1=rnd((NB, P, T), 1.0 / np.sqrt(P)),
        tb1=rnd((NB, 1, T), 0.02),
        tw2t=rnd((NB, P, T), 1.0 / np.sqrt(T)),   # stored as W2^T: (P, T)
        tb2=rnd((NB, P, 1), 0.02),
        # channel mixing: LN(Hd), Linear(Hd->Cm), GELU, Linear(Cm->Hd)
        cg=jnp.ones((NB, 1, Hd), jnp.float32),
        cb=jnp.zeros((NB, 1, Hd), jnp.float32),
        cw1=rnd((NB, Hd, Cm), 1.0 / np.sqrt(Hd)),
        cb1=rnd((NB, 1, Cm), 0.02),
        cw2=rnd((NB, Cm, Hd), 1.0 / np.sqrt(Cm)),
        cb2=rnd((NB, 1, Hd), 0.02),
        # final LayerNorm(Hd) + 1x1 conv (weight kept in torch layout (C, Hd))
        lng=jnp.ones((1, Hd), jnp.float32),
        lnb=jnp.zeros((1, Hd), jnp.float32),
        out_wt=rnd((C, Hd), 1.0 / np.sqrt(Hd)),
        out_b=rnd((C, 1), 0.02),
    )


def mlp_mixer_forward(x, params, cfg):
    ph, pw = cfg["patch_size"]
    B, C, Hi, Wi = x.shape
    hp, wp = Hi // ph, Wi // pw
    P = hp * wp
    K = C * ph * pw

    patches = patchify(x, ph, pw)                  # plain-JAX glue (im2col)

    args = (patches,
            params["emb_w"], params["emb_b"],
            params["tg"], params["tb"], params["tw1"], params["tb1"],
            params["tw2t"], params["tb2"],
            params["cg"], params["cb"], params["cw1"], params["cb1"],
            params["cw2"], params["cb2"],
            params["lng"], params["lnb"], params["out_wt"], params["out_b"])

    def full(a):
        nd = a.ndim
        return pl.BlockSpec(a.shape, lambda i, _nd=nd: (0,) * _nd)

    in_specs = [pl.BlockSpec((1, P, K), lambda i: (i, 0, 0))]
    in_specs += [full(a) for a in args[1:]]

    kernel = functools.partial(_mixer_fused_kernel,
                               num_blocks=cfg["num_blocks"])

    y = pl.pallas_call(
        kernel,
        out_shape=jax.ShapeDtypeStruct((B, C, P), jnp.float32),
        grid=(B,),
        in_specs=in_specs,
        out_specs=pl.BlockSpec((1, C, P), lambda i: (i, 0, 0)),
        compiler_params=pltpu.CompilerParams(
            dimension_semantics=("parallel",)),
    )(*args)
    # Kernel already produced (B, C, P); final NCHW view is a pure reshape.
    return y.reshape(B, C, hp, wp)


# ---------------------------------------------------------------------------
# Pure-JAX reference (same math / same parameter layout)
# ---------------------------------------------------------------------------
def reference_forward(x, params, cfg):
    ph, pw = cfg["patch_size"]
    B, C, Hi, Wi = x.shape
    hp, wp = Hi // ph, Wi // pw
    NB = cfg["num_blocks"]

    z = patchify(x, ph, pw) @ params["emb_w"] + params["emb_b"]     # (B, P, Hd)
    for blk in range(NB):
        zt = jnp.swapaxes(z, 1, 2)                                  # (B, Hd, P)
        t = _ln_last(zt, params["tg"][blk][:, 0], params["tb"][blk][:, 0])
        t = _gelu_exact(t @ params["tw1"][blk] + params["tb1"][blk])
        t = t @ params["tw2t"][blk].T + params["tb2"][blk][:, 0]
        z = z + jnp.swapaxes(t, 1, 2)

        c = _ln_last(z, params["cg"][blk], params["cb"][blk])
        c = _gelu_exact(c @ params["cw1"][blk] + params["cb1"][blk])
        c = c @ params["cw2"][blk] + params["cb2"][blk]
        z = z + c

    z = _ln_last(z, params["lng"], params["lnb"])
    y = z @ params["out_wt"].T + params["out_b"][:, 0]              # (B, P, C)
    return jnp.swapaxes(y, 1, 2).reshape(B, C, hp, wp)


# ---------------------------------------------------------------------------
if __name__ == "__main__":
    cfg = dict(
        input_channels=3,
        image_size=(102, 64),   # from the PyTorch spec
        patch_size=(6, 8),      # from the PyTorch spec -> 17*8 = 136 patches
        hidden_dim=128,
        tokens_mlp_dim=128,
        channels_mlp_dim=256,
        num_blocks=2,
    )

    k_params, k_x = jax.random.split(jax.random.PRNGKey(0))
    params = init_params(k_params, cfg)
    x = jax.random.normal(
        k_x, (2, cfg["input_channels"], *cfg["image_size"]), jnp.float32)

    fwd = jax.jit(functools.partial(mlp_mixer_forward, cfg=cfg))
    y = jax.block_until_ready(fwd(x, params))
    y_ref = jax.block_until_ready(reference_forward(x, params, cfg))

    hp = cfg["image_size"][0] // cfg["patch_size"][0]
    wp = cfg["image_size"][1] // cfg["patch_size"][1]
    assert y.shape == (2, cfg["input_channels"], hp, wp), y.shape
    np.testing.assert_allclose(np.asarray(y), np.asarray(y_ref),
                               atol=2e-3, rtol=2e-3)
    print("KERNEL_OK")
</pallas_src>

<mosaic_0001>
module attributes {stable_mosaic.version = 11 : i64} {
  func.func @_mixer_fused_kernel(%arg0: i32, %arg1: memref<1x136x144xf32, #tpu.memory_space<vmem>>, %arg2: memref<144x128xf32, #tpu.memory_space<vmem>>, %arg3: memref<1x128xf32, #tpu.memory_space<vmem>>, %arg4: memref<2x136x1xf32, #tpu.memory_space<vmem>>, %arg5: memref<2x136x1xf32, #tpu.memory_space<vmem>>, %arg6: memref<2x136x128xf32, #tpu.memory_space<vmem>>, %arg7: memref<2x1x128xf32, #tpu.memory_space<vmem>>, %arg8: memref<2x136x128xf32, #tpu.memory_space<vmem>>, %arg9: memref<2x136x1xf32, #tpu.memory_space<vmem>>, %arg10: memref<2x1x128xf32, #tpu.memory_space<vmem>>, %arg11: memref<2x1x128xf32, #tpu.memory_space<vmem>>, %arg12: memref<2x128x256xf32, #tpu.memory_space<vmem>>, %arg13: memref<2x1x256xf32, #tpu.memory_space<vmem>>, %arg14: memref<2x256x128xf32, #tpu.memory_space<vmem>>, %arg15: memref<2x1x128xf32, #tpu.memory_space<vmem>>, %arg16: memref<1x128xf32, #tpu.memory_space<vmem>>, %arg17: memref<1x128xf32, #tpu.memory_space<vmem>>, %arg18: memref<3x128xf32, #tpu.memory_space<vmem>>, %arg19: memref<3x1xf32, #tpu.memory_space<vmem>>, %arg20: memref<1x3x136xf32, #tpu.memory_space<vmem>>) attributes {dimension_semantics = [#tpu.dimension_semantics<parallel>], iteration_bounds = array<i64: 2>, scalar_prefetch = 0 : i64, scratch_operands = 0 : i64, tpu.core_type = #tpu.core_type<tc>, window_params = [{transform_indices = @transform_0, window_bounds = array<i64: 1, 136, 144>}, {pipeline_mode = #tpu.pipeline_mode<synchronous>, transform_indices = @transform_1, window_bounds = array<i64: 144, 128>}, {pipeline_mode = #tpu.pipeline_mode<synchronous>, transform_indices = @transform_2, window_bounds = array<i64: 1, 128>}, {pipeline_mode = #tpu.pipeline_mode<synchronous>, transform_indices = @transform_3, window_bounds = array<i64: 2, 136, 1>}, {pipeline_mode = #tpu.pipeline_mode<synchronous>, transform_indices = @transform_4, window_bounds = array<i64: 2, 136, 1>}, {pipeline_mode = #tpu.pipeline_mode<synchronous>, transform_indices = @transform_5, window_bounds = array<i64: 2, 136, 128>}, {pipeline_mode = #tpu.pipeline_mode<synchronous>, transform_indices = @transform_6, window_bounds = array<i64: 2, 1, 128>}, {pipeline_mode = #tpu.pipeline_mode<synchronous>, transform_indices = @transform_7, window_bounds = array<i64: 2, 136, 128>}, {pipeline_mode = #tpu.pipeline_mode<synchronous>, transform_indices = @transform_8, window_bounds = array<i64: 2, 136, 1>}, {pipeline_mode = #tpu.pipeline_mode<synchronous>, transform_indices = @transform_9, window_bounds = array<i64: 2, 1, 128>}, {pipeline_mode = #tpu.pipeline_mode<synchronous>, transform_indices = @transform_10, window_bounds = array<i64: 2, 1, 128>}, {pipeline_mode = #tpu.pipeline_mode<synchronous>, transform_indices = @transform_11, window_bounds = array<i64: 2, 128, 256>}, {pipeline_mode = #tpu.pipeline_mode<synchronous>, transform_indices = @transform_12, window_bounds = array<i64: 2, 1, 256>}, {pipeline_mode = #tpu.pipeline_mode<synchronous>, transform_indices = @transform_13, window_bounds = array<i64: 2, 256, 128>}, {pipeline_mode = #tpu.pipeline_mode<synchronous>, transform_indices = @transform_14, window_bounds = array<i64: 2, 1, 128>}, {pipeline_mode = #tpu.pipeline_mode<synchronous>, transform_indices = @transform_15, window_bounds = array<i64: 1, 128>}, {pipeline_mode = #tpu.pipeline_mode<synchronous>, transform_indices = @transform_16, window_bounds = array<i64: 1, 128>}, {pipeline_mode = #tpu.pipeline_mode<synchronous>, transform_indices = @transform_17, window_bounds = array<i64: 3, 128>}, {pipeline_mode = #tpu.pipeline_mode<synchronous>, transform_indices = @transform_18, window_bounds = array<i64: 3, 1>}, {transform_indices = @transform_19, window_bounds = array<i64: 1, 3, 136>}]} {
    %c0 = arith.constant 0 : index
    %c0_0 = arith.constant 0 : index
    %c0_1 = arith.constant 0 : index
    %0 = vector.load %arg1[%c0, %c0_0, %c0_1] : memref<1x136x144xf32, #tpu.memory_space<vmem>>, vector<1x136x144xf32>
    %1 = vector.shape_cast %0 : vector<1x136x144xf32> to vector<136x144xf32>
    %c0_2 = arith.constant 0 : index
    %c0_3 = arith.constant 0 : index
    %2 = vector.load %arg2[%c0_2, %c0_3] : memref<144x128xf32, #tpu.memory_space<vmem>>, vector<144x128xf32>
    %cst = arith.constant dense<0.000000e+00> : vector<136x128xf32>
    %3 = tpu.matmul %1, %2, %cst {dimension_numbers = #tpu.dot_dimension_numbers<[1], [0], [0], [1], [0, 0, 1, 1], [], []>} : vector<136x144xf32>, vector<144x128xf32>, vector<136x128xf32> -> vector<136x128xf32>
    %c0_4 = arith.constant 0 : index
    %c0_5 = arith.constant 0 : index
    %4 = vector.load %arg3[%c0_4, %c0_5] : memref<1x128xf32, #tpu.memory_space<vmem>>, vector<1x128xf32>
    %5 = vector.broadcast %4 : vector<1x128xf32> to vector<136x128xf32>
    %6 = arith.addf %3, %5 : vector<136x128xf32>
    %c0_6 = arith.constant 0 : index
    %c0_7 = arith.constant 0 : index
    %c0_8 = arith.constant 0 : index
    %7 = vector.load %arg4[%c0_6, %c0_7, %c0_8] : memref<2x136x1xf32, #tpu.memory_space<vmem>>, vector<1x136x1xf32>
    %8 = vector.shape_cast %7 : vector<1x136x1xf32> to vector<136x1xf32>
    %c0_9 = arith.constant 0 : index
    %c0_10 = arith.constant 0 : index
    %c0_11 = arith.constant 0 : index
    %9 = vector.load %arg5[%c0_9, %c0_10, %c0_11] : memref<2x136x1xf32, #tpu.memory_space<vmem>>, vector<1x136x1xf32>
    %10 = vector.shape_cast %9 : vector<1x136x1xf32> to vector<136x1xf32>
    %cst_12 = arith.constant dense<0.000000e+00> : vector<128xf32>
    %11 = vector.multi_reduction <add>, %6, %cst_12 [0] : vector<136x128xf32> to vector<128xf32>
    %12 = vector.shape_cast %11 : vector<128xf32> to vector<1x128xf32>
    %cst_13 = arith.constant 1.360000e+02 : f32
    %13 = vector.broadcast %cst_13 : f32 to vector<1x128xf32>
    %14 = arith.divf %12, %13 : vector<1x128xf32>
    %15 = vector.broadcast %14 : vector<1x128xf32> to vector<136x128xf32>
    %16 = arith.subf %6, %15 : vector<136x128xf32>
    %17 = arith.mulf %16, %16 : vector<136x128xf32>
    %cst_14 = arith.constant dense<0.000000e+00> : vector<128xf32>
    %18 = vector.multi_reduction <add>, %17, %cst_14 [0] : vector<136x128xf32> to vector<128xf32>
    %19 = vector.shape_cast %18 : vector<128xf32> to vector<1x128xf32>
    %cst_15 = arith.constant 1.360000e+02 : f32
    %20 = vector.broadcast %cst_15 : f32 to vector<1x128xf32>
    %21 = arith.divf %19, %20 : vector<1x128xf32>
    %22 = vector.broadcast %14 : vector<1x128xf32> to vector<136x128xf32>
    %23 = arith.subf %6, %22 : vector<136x128xf32>
    %cst_16 = arith.constant 9.99999974E-6 : f32
    %24 = vector.broadcast %cst_16 : f32 to vector<1x128xf32>
    %25 = arith.addf %21, %24 : vector<1x128xf32>
    %26 = math.rsqrt %25 : vector<1x128xf32>
    %27 = vector.broadcast %26 : vector<1x128xf32> to vector<136x128xf32>
    %28 = arith.mulf %23, %27 : vector<136x128xf32>
    %29 = vector.broadcast %8 : vector<136x1xf32> to vector<136x128xf32>
    %30 = arith.mulf %28, %29 : vector<136x128xf32>
    %31 = vector.broadcast %10 : vector<136x1xf32> to vector<136x128xf32>
    %32 = arith.addf %30, %31 : vector<136x128xf32>
    %c0_17 = arith.constant 0 : index
    %c0_18 = arith.constant 0 : index
    %c0_19 = arith.constant 0 : index
    %33 = vector.load %arg6[%c0_17, %c0_18, %c0_19] : memref<2x136x128xf32, #tpu.memory_space<vmem>>, vector<1x136x128xf32>
    %34 = vector.shape_cast %33 : vector<1x136x128xf32> to vector<136x128xf32>
    %cst_20 = arith.constant dense<0.000000e+00> : vector<128x128xf32>
    %35 = tpu.matmul %32, %34, %cst_20 {dimension_numbers = #tpu.dot_dimension_numbers<[0], [0], [1], [1], [0, 1, 1, 1], [], []>} : vector<136x128xf32>, vector<136x128xf32>, vector<128x128xf32> -> vector<128x128xf32>
    %c0_21 = arith.constant 0 : index
    %c0_22 = arith.constant 0 : index
    %c0_23 = arith.constant 0 : index
    %36 = vector.load %arg7[%c0_21, %c0_22, %c0_23] : memref<2x1x128xf32, #tpu.memory_space<vmem>>, vector<1x1x128xf32>
    %37 = vector.shape_cast %36 : vector<1x1x128xf32> to vector<1x128xf32>
    %38 = vector.broadcast %37 : vector<1x128xf32> to vector<128x128xf32>
    %39 = arith.addf %35, %38 : vector<128x128xf32>
    %cst_24 = arith.constant 5.000000e-01 : f32
    %40 = vector.broadcast %cst_24 : f32 to vector<128x128xf32>
    %41 = arith.mulf %40, %39 : vector<128x128xf32>
    %cst_25 = arith.constant 0.707106769 : f32
    %42 = vector.broadcast %cst_25 : f32 to vector<128x128xf32>
    %43 = arith.mulf %39, %42 : vector<128x128xf32>
    %cst_26 = arith.constant 0.000000e+00 : f32
    %44 = vector.broadcast %cst_26 : f32 to vector<128x128xf32>
    %45 = arith.cmpf oge, %43, %44 : vector<128x128xf32>
    %cst_27 = arith.constant 1.000000e+00 : f32
    %cst_28 = arith.constant -1.000000e+00 : f32
    %46 = vector.broadcast %cst_27 : f32 to vector<128x128xf32>
    %47 = vector.broadcast %cst_28 : f32 to vector<128x128xf32>
    %48 = arith.select %45, %46, %47 : vector<128x128xi1>, vector<128x128xf32>
    %49 = math.absf %43 : vector<128x128xf32>
    %cst_29 = arith.constant 0.327591091 : f32
    %50 = vector.broadcast %cst_29 : f32 to vector<128x128xf32>
    %51 = arith.mulf %50, %49 : vector<128x128xf32>
    %cst_30 = arith.constant 1.000000e+00 : f32
    %52 = vector.broadcast %cst_30 : f32 to vector<128x128xf32>
    %53 = arith.addf %52, %51 : vector<128x128xf32>
    %cst_31 = arith.constant 1.000000e+00 : f32
    %54 = vector.broadcast %cst_31 : f32 to vector<128x128xf32>
    %55 = arith.divf %54, %53 : vector<128x128xf32>
    %cst_32 = arith.constant 1.06140542 : f32
    %56 = vector.broadcast %cst_32 : f32 to vector<128x128xf32>
    %57 = arith.mulf %56, %55 : vector<128x128xf32>
    %cst_33 = arith.constant -1.45315206 : f32
    %58 = vector.broadcast %cst_33 : f32 to vector<128x128xf32>
    %59 = arith.addf %57, %58 : vector<128x128xf32>
    %60 = arith.mulf %59, %55 : vector<128x128xf32>
    %cst_34 = arith.constant 1.42141378 : f32
    %61 = vector.broadcast %cst_34 : f32 to vector<128x128xf32>
    %62 = arith.addf %60, %61 : vector<128x128xf32>
    %63 = arith.mulf %62, %55 : vector<128x128xf32>
    %cst_35 = arith.constant -0.284496725 : f32
    %64 = vector.broadcast %cst_35 : f32 to vector<128x128xf32>
    %65 = arith.addf %63, %64 : vector<128x128xf32>
    %66 = arith.mulf %65, %55 : vector<128x128xf32>
    %cst_36 = arith.constant 0.254829586 : f32
    %67 = vector.broadcast %cst_36 : f32 to vector<128x128xf32>
    %68 = arith.addf %66, %67 : vector<128x128xf32>
    %69 = arith.mulf %68, %55 : vector<128x128xf32>
    %cst_37 = arith.constant 0.000000e+00 : f32
    %70 = vector.broadcast %cst_37 : f32 to vector<128x128xf32>
    %71 = arith.subf %70, %49 : vector<128x128xf32>
    %72 = arith.mulf %71, %49 : vector<128x128xf32>
    %73 = math.exp %72 : vector<128x128xf32>
    %74 = arith.mulf %69, %73 : vector<128x128xf32>
    %cst_38 = arith.constant 1.000000e+00 : f32
    %75 = vector.broadcast %cst_38 : f32 to vector<128x128xf32>
    %76 = arith.subf %75, %74 : vector<128x128xf32>
    %77 = arith.mulf %48, %76 : vector<128x128xf32>
    %cst_39 = arith.constant 1.000000e+00 : f32
    %78 = vector.broadcast %cst_39 : f32 to vector<128x128xf32>
    %79 = arith.addf %78, %77 : vector<128x128xf32>
    %80 = arith.mulf %41, %79 : vector<128x128xf32>
    %c0_40 = arith.constant 0 : index
    %c0_41 = arith.constant 0 : index
    %c0_42 = arith.constant 0 : index
    %81 = vector.load %arg8[%c0_40, %c0_41, %c0_42] : memref<2x136x128xf32, #tpu.memory_space<vmem>>, vector<1x136x128xf32>
    %82 = vector.shape_cast %81 : vector<1x136x128xf32> to vector<136x128xf32>
    %cst_43 = arith.constant dense<0.000000e+00> : vector<136x128xf32>
    %83 = tpu.matmul %82, %80, %cst_43 {dimension_numbers = #tpu.dot_dimension_numbers<[1], [1], [0], [0], [0, 0, 1, 0], [], []>} : vector<136x128xf32>, vector<128x128xf32>, vector<136x128xf32> -> vector<136x128xf32>
    %c0_44 = arith.constant 0 : index
    %c0_45 = arith.constant 0 : index
    %c0_46 = arith.constant 0 : index
    %84 = vector.load %arg9[%c0_44, %c0_45, %c0_46] : memref<2x136x1xf32, #tpu.memory_space<vmem>>, vector<1x136x1xf32>
    %85 = vector.shape_cast %84 : vector<1x136x1xf32> to vector<136x1xf32>
    %86 = vector.broadcast %85 : vector<136x1xf32> to vector<136x128xf32>
    %87 = arith.addf %83, %86 : vector<136x128xf32>
    %88 = arith.addf %6, %87 : vector<136x128xf32>
    %c0_47 = arith.constant 0 : index
    %c0_48 = arith.constant 0 : index
    %c0_49 = arith.constant 0 : index
    %89 = vector.load %arg10[%c0_47, %c0_48, %c0_49] : memref<2x1x128xf32, #tpu.memory_space<vmem>>, vector<1x1x128xf32>
    %90 = vector.shape_cast %89 : vector<1x1x128xf32> to vector<1x128xf32>
    %c0_50 = arith.constant 0 : index
    %c0_51 = arith.constant 0 : index
    %c0_52 = arith.constant 0 : index
    %91 = vector.load %arg11[%c0_50, %c0_51, %c0_52] : memref<2x1x128xf32, #tpu.memory_space<vmem>>, vector<1x1x128xf32>
    %92 = vector.shape_cast %91 : vector<1x1x128xf32> to vector<1x128xf32>
    %cst_53 = arith.constant dense<0.000000e+00> : vector<136xf32>
    %93 = vector.multi_reduction <add>, %88, %cst_53 [1] : vector<136x128xf32> to vector<136xf32>
    %94 = vector.shape_cast %93 : vector<136xf32> to vector<136x1xf32>
    %cst_54 = arith.constant 1.280000e+02 : f32
    %95 = vector.broadcast %cst_54 : f32 to vector<136x1xf32>
    %96 = arith.divf %94, %95 : vector<136x1xf32>
    %97 = vector.broadcast %96 : vector<136x1xf32> to vector<136x128xf32>
    %98 = arith.subf %88, %97 : vector<136x128xf32>
    %99 = arith.mulf %98, %98 : vector<136x128xf32>
    %cst_55 = arith.constant dense<0.000000e+00> : vector<136xf32>
    %100 = vector.multi_reduction <add>, %99, %cst_55 [1] : vector<136x128xf32> to vector<136xf32>
    %101 = vector.shape_cast %100 : vector<136xf32> to vector<136x1xf32>
    %cst_56 = arith.constant 1.280000e+02 : f32
    %102 = vector.broadcast %cst_56 : f32 to vector<136x1xf32>
    %103 = arith.divf %101, %102 : vector<136x1xf32>
    %104 = vector.broadcast %96 : vector<136x1xf32> to vector<136x128xf32>
    %105 = arith.subf %88, %104 : vector<136x128xf32>
    %cst_57 = arith.constant 9.99999974E-6 : f32
    %106 = vector.broadcast %cst_57 : f32 to vector<136x1xf32>
    %107 = arith.addf %103, %106 : vector<136x1xf32>
    %108 = math.rsqrt %107 : vector<136x1xf32>
    %109 = vector.broadcast %108 : vector<136x1xf32> to vector<136x128xf32>
    %110 = arith.mulf %105, %109 : vector<136x128xf32>
    %111 = vector.broadcast %90 : vector<1x128xf32> to vector<136x128xf32>
    %112 = arith.mulf %110, %111 : vector<136x128xf32>
    %113 = vector.broadcast %92 : vector<1x128xf32> to vector<136x128xf32>
    %114 = arith.addf %112, %113 : vector<136x128xf32>
    %c0_58 = arith.constant 0 : index
    %c0_59 = arith.constant 0 : index
    %c0_60 = arith.constant 0 : index
    %115 = vector.load %arg12[%c0_58, %c0_59, %c0_60] : memref<2x128x256xf32, #tpu.memory_space<vmem>>, vector<1x128x256xf32>
    %116 = vector.shape_cast %115 : vector<1x128x256xf32> to vector<128x256xf32>
    %cst_61 = arith.constant dense<0.000000e+00> : vector<136x256xf32>
    %117 = tpu.matmul %114, %116, %cst_61 {dimension_numbers = #tpu.dot_dimension_numbers<[1], [0], [0], [1], [0, 0, 1, 1], [], []>} : vector<136x128xf32>, vector<128x256xf32>, vector<136x256xf32> -> vector<136x256xf32>
    %c0_62 = arith.constant 0 : index
    %c0_63 = arith.constant 0 : index
    %c0_64 = arith.constant 0 : index
    %118 = vector.load %arg13[%c0_62, %c0_63, %c0_64] : memref<2x1x256xf32, #tpu.memory_space<vmem>>, vector<1x1x256xf32>
    %119 = vector.shape_cast %118 : vector<1x1x256xf32> to vector<1x256xf32>
    %120 = vector.broadcast %119 : vector<1x256xf32> to vector<136x256xf32>
    %121 = arith.addf %117, %120 : vector<136x256xf32>
    %cst_65 = arith.constant 5.000000e-01 : f32
    %122 = vector.broadcast %cst_65 : f32 to vector<136x256xf32>
    %123 = arith.mulf %122, %121 : vector<136x256xf32>
    %cst_66 = arith.constant 0.707106769 : f32
    %124 = vector.broadcast %cst_66 : f32 to vector<136x256xf32>
    %125 = arith.mulf %121, %124 : vector<136x256xf32>
    %cst_67 = arith.constant 0.000000e+00 : f32
    %126 = vector.broadcast %cst_67 : f32 to vector<136x256xf32>
    %127 = arith.cmpf oge, %125, %126 : vector<136x256xf32>
    %cst_68 = arith.constant 1.000000e+00 : f32
    %cst_69 = arith.constant -1.000000e+00 : f32
    %128 = vector.broadcast %cst_68 : f32 to vector<136x256xf32>
    %129 = vector.broadcast %cst_69 : f32 to vector<136x256xf32>
    %130 = arith.select %127, %128, %129 : vector<136x256xi1>, vector<136x256xf32>
    %131 = math.absf %125 : vector<136x256xf32>
    %cst_70 = arith.constant 0.327591091 : f32
    %132 = vector.broadcast %cst_70 : f32 to vector<136x256xf32>
    %133 = arith.mulf %132, %131 : vector<136x256xf32>
    %cst_71 = arith.constant 1.000000e+00 : f32
    %134 = vector.broadcast %cst_71 : f32 to vector<136x256xf32>
    %135 = arith.addf %134, %133 : vector<136x256xf32>
    %cst_72 = arith.constant 1.000000e+00 : f32
    %136 = vector.broadcast %cst_72 : f32 to vector<136x256xf32>
    %137 = arith.divf %136, %135 : vector<136x256xf32>
    %cst_73 = arith.constant 1.06140542 : f32
    %138 = vector.broadcast %cst_73 : f32 to vector<136x256xf32>
    %139 = arith.mulf %138, %137 : vector<136x256xf32>
    %cst_74 = arith.constant -1.45315206 : f32
    %140 = vector.broadcast %cst_74 : f32 to vector<136x256xf32>
    %141 = arith.addf %139, %140 : vector<136x256xf32>
    %142 = arith.mulf %141, %137 : vector<136x256xf32>
    %cst_75 = arith.constant 1.42141378 : f32
    %143 = vector.broadcast %cst_75 : f32 to vector<136x256xf32>
    %144 = arith.addf %142, %143 : vector<136x256xf32>
    %145 = arith.mulf %144, %137 : vector<136x256xf32>
    %cst_76 = arith.constant -0.284496725 : f32
    %146 = vector.broadcast %cst_76 : f32 to vector<136x256xf32>
    %147 = arith.addf %145, %146 : vector<136x256xf32>
    %148 = arith.mulf %147, %137 : vector<136x256xf32>
    %cst_77 = arith.constant 0.254829586 : f32
    %149 = vector.broadcast %cst_77 : f32 to vector<136x256xf32>
    %150 = arith.addf %148, %149 : vector<136x256xf32>
    %151 = arith.mulf %150, %137 : vector<136x256xf32>
    %cst_78 = arith.constant 0.000000e+00 : f32
    %152 = vector.broadcast %cst_78 : f32 to vector<136x256xf32>
    %153 = arith.subf %152, %131 : vector<136x256xf32>
    %154 = arith.mulf %153, %131 : vector<136x256xf32>
    %155 = math.exp %154 : vector<136x256xf32>
    %156 = arith.mulf %151, %155 : vector<136x256xf32>
    %cst_79 = arith.constant 1.000000e+00 : f32
    %157 = vector.broadcast %cst_79 : f32 to vector<136x256xf32>
    %158 = arith.subf %157, %156 : vector<136x256xf32>
    %159 = arith.mulf %130, %158 : vector<136x256xf32>
    %cst_80 = arith.constant 1.000000e+00 : f32
    %160 = vector.broadcast %cst_80 : f32 to vector<136x256xf32>
    %161 = arith.addf %160, %159 : vector<136x256xf32>
    %162 = arith.mulf %123, %161 : vector<136x256xf32>
    %c0_81 = arith.constant 0 : index
    %c0_82 = arith.constant 0 : index
    %c0_83 = arith.constant 0 : index
    %163 = vector.load %arg14[%c0_81, %c0_82, %c0_83] : memref<2x256x128xf32, #tpu.memory_space<vmem>>, vector<1x256x128xf32>
    %164 = vector.shape_cast %163 : vector<1x256x128xf32> to vector<256x128xf32>
    %cst_84 = arith.constant dense<0.000000e+00> : vector<136x128xf32>
    %165 = tpu.matmul %162, %164, %cst_84 {dimension_numbers = #tpu.dot_dimension_numbers<[1], [0], [0], [1], [0, 0, 1, 1], [], []>} : vector<136x256xf32>, vector<256x128xf32>, vector<136x128xf32> -> vector<136x128xf32>
    %c0_85 = arith.constant 0 : index
    %c0_86 = arith.constant 0 : index
    %c0_87 = arith.constant 0 : index
    %166 = vector.load %arg15[%c0_85, %c0_86, %c0_87] : memref<2x1x128xf32, #tpu.memory_space<vmem>>, vector<1x1x128xf32>
    %167 = vector.shape_cast %166 : vector<1x1x128xf32> to vector<1x128xf32>
    %168 = vector.broadcast %167 : vector<1x128xf32> to vector<136x128xf32>
    %169 = arith.addf %165, %168 : vector<136x128xf32>
    %170 = arith.addf %88, %169 : vector<136x128xf32>
    %c1 = arith.constant 1 : index
    %c0_88 = arith.constant 0 : index
    %c0_89 = arith.constant 0 : index
    %171 = vector.load %arg4[%c1, %c0_88, %c0_89] : memref<2x136x1xf32, #tpu.memory_space<vmem>>, vector<1x136x1xf32>
    %172 = vector.shape_cast %171 : vector<1x136x1xf32> to vector<136x1xf32>
    %c1_90 = arith.constant 1 : index
    %c0_91 = arith.constant 0 : index
    %c0_92 = arith.constant 0 : index
    %173 = vector.load %arg5[%c1_90, %c0_91, %c0_92] : memref<2x136x1xf32, #tpu.memory_space<vmem>>, vector<1x136x1xf32>
    %174 = vector.shape_cast %173 : vector<1x136x1xf32> to vector<136x1xf32>
    %cst_93 = arith.constant dense<0.000000e+00> : vector<128xf32>
    %175 = vector.multi_reduction <add>, %170, %cst_93 [0] : vector<136x128xf32> to vector<128xf32>
    %176 = vector.shape_cast %175 : vector<128xf32> to vector<1x128xf32>
    %cst_94 = arith.constant 1.360000e+02 : f32
    %177 = vector.broadcast %cst_94 : f32 to vector<1x128xf32>
    %178 = arith.divf %176, %177 : vector<1x128xf32>
    %179 = vector.broadcast %178 : vector<1x128xf32> to vector<136x128xf32>
    %180 = arith.subf %170, %179 : vector<136x128xf32>
    %181 = arith.mulf %180, %180 : vector<136x128xf32>
    %cst_95 = arith.constant dense<0.000000e+00> : vector<128xf32>
    %182 = vector.multi_reduction <add>, %181, %cst_95 [0] : vector<136x128xf32> to vector<128xf32>
    %183 = vector.shape_cast %182 : vector<128xf32> to vector<1x128xf32>
    %cst_96 = arith.constant 1.360000e+02 : f32
    %184 = vector.broadcast %cst_96 : f32 to vector<1x128xf32>
    %185 = arith.divf %183, %184 : vector<1x128xf32>
    %186 = vector.broadcast %178 : vector<1x128xf32> to vector<136x128xf32>
    %187 = arith.subf %170, %186 : vector<136x128xf32>
    %cst_97 = arith.constant 9.99999974E-6 : f32
    %188 = vector.broadcast %cst_97 : f32 to vector<1x128xf32>
    %189 = arith.addf %185, %188 : vector<1x128xf32>
    %190 = math.rsqrt %189 : vector<1x128xf32>
    %191 = vector.broadcast %190 : vector<1x128xf32> to vector<136x128xf32>
    %192 = arith.mulf %187, %191 : vector<136x128xf32>
    %193 = vector.broadcast %172 : vector<136x1xf32> to vector<136x128xf32>
    %194 = arith.mulf %192, %193 : vector<136x128xf32>
    %195 = vector.broadcast %174 : vector<136x1xf32> to vector<136x128xf32>
    %196 = arith.addf %194, %195 : vector<136x128xf32>
    %c1_98 = arith.constant 1 : index
    %c0_99 = arith.constant 0 : index
    %c0_100 = arith.constant 0 : index
    %197 = vector.load %arg6[%c1_98, %c0_99, %c0_100] : memref<2x136x128xf32, #tpu.memory_space<vmem>>, vector<1x136x128xf32>
    %198 = vector.shape_cast %197 : vector<1x136x128xf32> to vector<136x128xf32>
    %cst_101 = arith.constant dense<0.000000e+00> : vector<128x128xf32>
    %199 = tpu.matmul %196, %198, %cst_101 {dimension_numbers = #tpu.dot_dimension_numbers<[0], [0], [1], [1], [0, 1, 1, 1], [], []>} : vector<136x128xf32>, vector<136x128xf32>, vector<128x128xf32> -> vector<128x128xf32>
    %c1_102 = arith.constant 1 : index
    %c0_103 = arith.constant 0 : index
    %c0_104 = arith.constant 0 : index
    %200 = vector.load %arg7[%c1_102, %c0_103, %c0_104] : memref<2x1x128xf32, #tpu.memory_space<vmem>>, vector<1x1x128xf32>
    %201 = vector.shape_cast %200 : vector<1x1x128xf32> to vector<1x128xf32>
    %202 = vector.broadcast %201 : vector<1x128xf32> to vector<128x128xf32>
    %203 = arith.addf %199, %202 : vector<128x128xf32>
    %cst_105 = arith.constant 5.000000e-01 : f32
    %204 = vector.broadcast %cst_105 : f32 to vector<128x128xf32>
    %205 = arith.mulf %204, %203 : vector<128x128xf32>
    %cst_106 = arith.constant 0.707106769 : f32
    %206 = vector.broadcast %cst_106 : f32 to vector<128x128xf32>
    %207 = arith.mulf %203, %206 : vector<128x128xf32>
    %cst_107 = arith.constant 0.000000e+00 : f32
    %208 = vector.broadcast %cst_107 : f32 to vector<128x128xf32>
    %209 = arith.cmpf oge, %207, %208 : vector<128x128xf32>
    %cst_108 = arith.constant 1.000000e+00 : f32
    %cst_109 = arith.constant -1.000000e+00 : f32
    %210 = vector.broadcast %cst_108 : f32 to vector<128x128xf32>
    %211 = vector.broadcast %cst_109 : f32 to vector<128x128xf32>
    %212 = arith.select %209, %210, %211 : vector<128x128xi1>, vector<128x128xf32>
    %213 = math.absf %207 : vector<128x128xf32>
    %cst_110 = arith.constant 0.327591091 : f32
    %214 = vector.broadcast %cst_110 : f32 to vector<128x128xf32>
    %215 = arith.mulf %214, %213 : vector<128x128xf32>
    %cst_111 = arith.constant 1.000000e+00 : f32
    %216 = vector.broadcast %cst_111 : f32 to vector<128x128xf32>
    %217 = arith.addf %216, %215 : vector<128x128xf32>
    %cst_112 = arith.constant 1.000000e+00 : f32
    %218 = vector.broadcast %cst_112 : f32 to vector<128x128xf32>
    %219 = arith.divf %218, %217 : vector<128x128xf32>
    %cst_113 = arith.constant 1.06140542 : f32
    %220 = vector.broadcast %cst_113 : f32 to vector<128x128xf32>
    %221 = arith.mulf %220, %219 : vector<128x128xf32>
    %cst_114 = arith.constant -1.45315206 : f32
    %222 = vector.broadcast %cst_114 : f32 to vector<128x128xf32>
    %223 = arith.addf %221, %222 : vector<128x128xf32>
    %224 = arith.mulf %223, %219 : vector<128x128xf32>
    %cst_115 = arith.constant 1.42141378 : f32
    %225 = vector.broadcast %cst_115 : f32 to vector<128x128xf32>
    %226 = arith.addf %224, %225 : vector<128x128xf32>
    %227 = arith.mulf %226, %219 : vector<128x128xf32>
    %cst_116 = arith.constant -0.284496725 : f32
    %228 = vector.broadcast %cst_116 : f32 to vector<128x128xf32>
    %229 = arith.addf %227, %228 : vector<128x128xf32>
    %230 = arith.mulf %229, %219 : vector<128x128xf32>
    %cst_117 = arith.constant 0.254829586 : f32
    %231 = vector.broadcast %cst_117 : f32 to vector<128x128xf32>
    %232 = arith.addf %230, %231 : vector<128x128xf32>
    %233 = arith.mulf %232, %219 : vector<128x128xf32>
    %cst_118 = arith.constant 0.000000e+00 : f32
    %234 = vector.broadcast %cst_118 : f32 to vector<128x128xf32>
    %235 = arith.subf %234, %213 : vector<128x128xf32>
    %236 = arith.mulf %235, %213 : vector<128x128xf32>
    %237 = math.exp %236 : vector<128x128xf32>
    %238 = arith.mulf %233, %237 : vector<128x128xf32>
    %cst_119 = arith.constant 1.000000e+00 : f32
    %239 = vector.broadcast %cst_119 : f32 to vector<128x128xf32>
    %240 = arith.subf %239, %238 : vector<128x128xf32>
    %241 = arith.mulf %212, %240 : vector<128x128xf32>
    %cst_120 = arith.constant 1.000000e+00 : f32
    %242 = vector.broadcast %cst_120 : f32 to vector<128x128xf32>
    %243 = arith.addf %242, %241 : vector<128x128xf32>
    %244 = arith.mulf %205, %243 : vector<128x128xf32>
    %c1_121 = arith.constant 1 : index
    %c0_122 = arith.constant 0 : index
    %c0_123 = arith.constant 0 : index
    %245 = vector.load %arg8[%c1_121, %c0_122, %c0_123] : memref<2x136x128xf32, #tpu.memory_space<vmem>>, vector<1x136x128xf32>
    %246 = vector.shape_cast %245 : vector<1x136x128xf32> to vector<136x128xf32>
    %cst_124 = arith.constant dense<0.000000e+00> : vector<136x128xf32>
    %247 = tpu.matmul %246, %244, %cst_124 {dimension_numbers = #tpu.dot_dimension_numbers<[1], [1], [0], [0], [0, 0, 1, 0], [], []>} : vector<136x128xf32>, vector<128x128xf32>, vector<136x128xf32> -> vector<136x128xf32>
    %c1_125 = arith.constant 1 : index
    %c0_126 = arith.constant 0 : index
    %c0_127 = arith.constant 0 : index
    %248 = vector.load %arg9[%c1_125, %c0_126, %c0_127] : memref<2x136x1xf32, #tpu.memory_space<vmem>>, vector<1x136x1xf32>
    %249 = vector.shape_cast %248 : vector<1x136x1xf32> to vector<136x1xf32>
    %250 = vector.broadcast %249 : vector<136x1xf32> to vector<136x128xf32>
    %251 = arith.addf %247, %250 : vector<136x128xf32>
    %252 = arith.addf %170, %251 : vector<136x128xf32>
    %c1_128 = arith.constant 1 : index
    %c0_129 = arith.constant 0 : index
    %c0_130 = arith.constant 0 : index
    %253 = vector.load %arg10[%c1_128, %c0_129, %c0_130] : memref<2x1x128xf32, #tpu.memory_space<vmem>>, vector<1x1x128xf32>
    %254 = vector.shape_cast %253 : vector<1x1x128xf32> to vector<1x128xf32>
    %c1_131 = arith.constant 1 : index
    %c0_132 = arith.constant 0 : index
    %c0_133 = arith.constant 0 : index
    %255 = vector.load %arg11[%c1_131, %c0_132, %c0_133] : memref<2x1x128xf32, #tpu.memory_space<vmem>>, vector<1x1x128xf32>
    %256 = vector.shape_cast %255 : vector<1x1x128xf32> to vector<1x128xf32>
    %cst_134 = arith.constant dense<0.000000e+00> : vector<136xf32>
    %257 = vector.multi_reduction <add>, %252, %cst_134 [1] : vector<136x128xf32> to vector<136xf32>
    %258 = vector.shape_cast %257 : vector<136xf32> to vector<136x1xf32>
    %cst_135 = arith.constant 1.280000e+02 : f32
    %259 = vector.broadcast %cst_135 : f32 to vector<136x1xf32>
    %260 = arith.divf %258, %259 : vector<136x1xf32>
    %261 = vector.broadcast %260 : vector<136x1xf32> to vector<136x128xf32>
    %262 = arith.subf %252, %261 : vector<136x128xf32>
    %263 = arith.mulf %262, %262 : vector<136x128xf32>
    %cst_136 = arith.constant dense<0.000000e+00> : vector<136xf32>
    %264 = vector.multi_reduction <add>, %263, %cst_136 [1] : vector<136x128xf32> to vector<136xf32>
    %265 = vector.shape_cast %264 : vector<136xf32> to vector<136x1xf32>
    %cst_137 = arith.constant 1.280000e+02 : f32
    %266 = vector.broadcast %cst_137 : f32 to vector<136x1xf32>
    %267 = arith.divf %265, %266 : vector<136x1xf32>
    %268 = vector.broadcast %260 : vector<136x1xf32> to vector<136x128xf32>
    %269 = arith.subf %252, %268 : vector<136x128xf32>
    %cst_138 = arith.constant 9.99999974E-6 : f32
    %270 = vector.broadcast %cst_138 : f32 to vector<136x1xf32>
    %271 = arith.addf %267, %270 : vector<136x1xf32>
    %272 = math.rsqrt %271 : vector<136x1xf32>
    %273 = vector.broadcast %272 : vector<136x1xf32> to vector<136x128xf32>
    %274 = arith.mulf %269, %273 : vector<136x128xf32>
    %275 = vector.broadcast %254 : vector<1x128xf32> to vector<136x128xf32>
    %276 = arith.mulf %274, %275 : vector<136x128xf32>
    %277 = vector.broadcast %256 : vector<1x128xf32> to vector<136x128xf32>
    %278 = arith.addf %276, %277 : vector<136x128xf32>
    %c1_139 = arith.constant 1 : index
    %c0_140 = arith.constant 0 : index
    %c0_141 = arith.constant 0 : index
    %279 = vector.load %arg12[%c1_139, %c0_140, %c0_141] : memref<2x128x256xf32, #tpu.memory_space<vmem>>, vector<1x128x256xf32>
    %280 = vector.shape_cast %279 : vector<1x128x256xf32> to vector<128x256xf32>
    %cst_142 = arith.constant dense<0.000000e+00> : vector<136x256xf32>
    %281 = tpu.matmul %278, %280, %cst_142 {dimension_numbers = #tpu.dot_dimension_numbers<[1], [0], [0], [1], [0, 0, 1, 1], [], []>} : vector<136x128xf32>, vector<128x256xf32>, vector<136x256xf32> -> vector<136x256xf32>
    %c1_143 = arith.constant 1 : index
    %c0_144 = arith.constant 0 : index
    %c0_145 = arith.constant 0 : index
    %282 = vector.load %arg13[%c1_143, %c0_144, %c0_145] : memref<2x1x256xf32, #tpu.memory_space<vmem>>, vector<1x1x256xf32>
    %283 = vector.shape_cast %282 : vector<1x1x256xf32> to vector<1x256xf32>
    %284 = vector.broadcast %283 : vector<1x256xf32> to vector<136x256xf32>
    %285 = arith.addf %281, %284 : vector<136x256xf32>
    %cst_146 = arith.constant 5.000000e-01 : f32
    %286 = vector.broadcast %cst_146 : f32 to vector<136x256xf32>
    %287 = arith.mulf %286, %285 : vector<136x256xf32>
    %cst_147 = arith.constant 0.707106769 : f32
    %288 = vector.broadcast %cst_147 : f32 to vector<136x256xf32>
    %289 = arith.mulf %285, %288 : vector<136x256xf32>
    %cst_148 = arith.constant 0.000000e+00 : f32
    %290 = vector.broadcast %cst_148 : f32 to vector<136x256xf32>
    %291 = arith.cmpf oge, %289, %290 : vector<136x256xf32>
    %cst_149 = arith.constant 1.000000e+00 : f32
    %cst_150 = arith.constant -1.000000e+00 : f32
    %292 = vector.broadcast %cst_149 : f32 to vector<136x256xf32>
    %293 = vector.broadcast %cst_150 : f32 to vector<136x256xf32>
    %294 = arith.select %291, %292, %293 : vector<136x256xi1>, vector<136x256xf32>
    %295 = math.absf %289 : vector<136x256xf32>
    %cst_151 = arith.constant 0.327591091 : f32
    %296 = vector.broadcast %cst_151 : f32 to vector<136x256xf32>
    %297 = arith.mulf %296, %295 : vector<136x256xf32>
    %cst_152 = arith.constant 1.000000e+00 : f32
    %298 = vector.broadcast %cst_152 : f32 to vector<136x256xf32>
    %299 = arith.addf %298, %297 : vector<136x256xf32>
    %cst_153 = arith.constant 1.000000e+00 : f32
    %300 = vector.broadcast %cst_153 : f32 to vector<136x256xf32>
    %301 = arith.divf %300, %299 : vector<136x256xf32>
    %cst_154 = arith.constant 1.06140542 : f32
    %302 = vector.broadcast %cst_154 : f32 to vector<136x256xf32>
    %303 = arith.mulf %302, %301 : vector<136x256xf32>
    %cst_155 = arith.constant -1.45315206 : f32
    %304 = vector.broadcast %cst_155 : f32 to vector<136x256xf32>
    %305 = arith.addf %303, %304 : vector<136x256xf32>
    %306 = arith.mulf %305, %301 : vector<136x256xf32>
    %cst_156 = arith.constant 1.42141378 : f32
    %307 = vector.broadcast %cst_156 : f32 to vector<136x256xf32>
    %308 = arith.addf %306, %307 : vector<136x256xf32>
    %309 = arith.mulf %308, %301 : vector<136x256xf32>
    %cst_157 = arith.constant -0.284496725 : f32
    %310 = vector.broadcast %cst_157 : f32 to vector<136x256xf32>
    %311 = arith.addf %309, %310 : vector<136x256xf32>
    %312 = arith.mulf %311, %301 : vector<136x256xf32>
    %cst_158 = arith.constant 0.254829586 : f32
    %313 = vector.broadcast %cst_158 : f32 to vector<136x256xf32>
    %314 = arith.addf %312, %313 : vector<136x256xf32>
    %315 = arith.mulf %314, %301 : vector<136x256xf32>
    %cst_159 = arith.constant 0.000000e+00 : f32
    %316 = vector.broadcast %cst_159 : f32 to vector<136x256xf32>
    %317 = arith.subf %316, %295 : vector<136x256xf32>
    %318 = arith.mulf %317, %295 : vector<136x256xf32>
    %319 = math.exp %318 : vector<136x256xf32>
    %320 = arith.mulf %315, %319 : vector<136x256xf32>
    %cst_160 = arith.constant 1.000000e+00 : f32
    %321 = vector.broadcast %cst_160 : f32 to vector<136x256xf32>
    %322 = arith.subf %321, %320 : vector<136x256xf32>
    %323 = arith.mulf %294, %322 : vector<136x256xf32>
    %cst_161 = arith.constant 1.000000e+00 : f32
    %324 = vector.broadcast %cst_161 : f32 to vector<136x256xf32>
    %325 = arith.addf %324, %323 : vector<136x256xf32>
    %326 = arith.mulf %287, %325 : vector<136x256xf32>
    %c1_162 = arith.constant 1 : index
    %c0_163 = arith.constant 0 : index
    %c0_164 = arith.constant 0 : index
    %327 = vector.load %arg14[%c1_162, %c0_163, %c0_164] : memref<2x256x128xf32, #tpu.memory_space<vmem>>, vector<1x256x128xf32>
    %328 = vector.shape_cast %327 : vector<1x256x128xf32> to vector<256x128xf32>
    %cst_165 = arith.constant dense<0.000000e+00> : vector<136x128xf32>
    %329 = tpu.matmul %326, %328, %cst_165 {dimension_numbers = #tpu.dot_dimension_numbers<[1], [0], [0], [1], [0, 0, 1, 1], [], []>} : vector<136x256xf32>, vector<256x128xf32>, vector<136x128xf32> -> vector<136x128xf32>
    %c1_166 = arith.constant 1 : index
    %c0_167 = arith.constant 0 : index
    %c0_168 = arith.constant 0 : index
    %330 = vector.load %arg15[%c1_166, %c0_167, %c0_168] : memref<2x1x128xf32, #tpu.memory_space<vmem>>, vector<1x1x128xf32>
    %331 = vector.shape_cast %330 : vector<1x1x128xf32> to vector<1x128xf32>
    %332 = vector.broadcast %331 : vector<1x128xf32> to vector<136x128xf32>
    %333 = arith.addf %329, %332 : vector<136x128xf32>
    %334 = arith.addf %252, %333 : vector<136x128xf32>
    %c0_169 = arith.constant 0 : index
    %c0_170 = arith.constant 0 : index
    %335 = vector.load %arg16[%c0_169, %c0_170] : memref<1x128xf32, #tpu.memory_space<vmem>>, vector<1x128xf32>
    %c0_171 = arith.constant 0 : index
    %c0_172 = arith.constant 0 : index
    %336 = vector.load %arg17[%c0_171, %c0_172] : memref<1x128xf32, #tpu.memory_space<vmem>>, vector<1x128xf32>
    %cst_173 = arith.constant dense<0.000000e+00> : vector<136xf32>
    %337 = vector.multi_reduction <add>, %334, %cst_173 [1] : vector<136x128xf32> to vector<136xf32>
    %338 = vector.shape_cast %337 : vector<136xf32> to vector<136x1xf32>
    %cst_174 = arith.constant 1.280000e+02 : f32
    %339 = vector.broadcast %cst_174 : f32 to vector<136x1xf32>
    %340 = arith.divf %338, %339 : vector<136x1xf32>
    %341 = vector.broadcast %340 : vector<136x1xf32> to vector<136x128xf32>
    %342 = arith.subf %334, %341 : vector<136x128xf32>
    %343 = arith.mulf %342, %342 : vector<136x128xf32>
    %cst_175 = arith.constant dense<0.000000e+00> : vector<136xf32>
    %344 = vector.multi_reduction <add>, %343, %cst_175 [1] : vector<136x128xf32> to vector<136xf32>
    %345 = vector.shape_cast %344 : vector<136xf32> to vector<136x1xf32>
    %cst_176 = arith.constant 1.280000e+02 : f32
    %346 = vector.broadcast %cst_176 : f32 to vector<136x1xf32>
    %347 = arith.divf %345, %346 : vector<136x1xf32>
    %348 = vector.broadcast %340 : vector<136x1xf32> to vector<136x128xf32>
    %349 = arith.subf %334, %348 : vector<136x128xf32>
    %cst_177 = arith.constant 9.99999974E-6 : f32
    %350 = vector.broadcast %cst_177 : f32 to vector<136x1xf32>
    %351 = arith.addf %347, %350 : vector<136x1xf32>
    %352 = math.rsqrt %351 : vector<136x1xf32>
    %353 = vector.broadcast %352 : vector<136x1xf32> to vector<136x128xf32>
    %354 = arith.mulf %349, %353 : vector<136x128xf32>
    %355 = vector.broadcast %335 : vector<1x128xf32> to vector<136x128xf32>
    %356 = arith.mulf %354, %355 : vector<136x128xf32>
    %357 = vector.broadcast %336 : vector<1x128xf32> to vector<136x128xf32>
    %358 = arith.addf %356, %357 : vector<136x128xf32>
    %c0_178 = arith.constant 0 : index
    %c0_179 = arith.constant 0 : index
    %359 = vector.load %arg18[%c0_178, %c0_179] : memref<3x128xf32, #tpu.memory_space<vmem>>, vector<3x128xf32>
    %cst_180 = arith.constant dense<0.000000e+00> : vector<3x136xf32>
    %360 = tpu.matmul %359, %358, %cst_180 {dimension_numbers = #tpu.dot_dimension_numbers<[1], [1], [0], [0], [0, 0, 1, 0], [], []>} : vector<3x128xf32>, vector<136x128xf32>, vector<3x136xf32> -> vector<3x136xf32>
    %c0_181 = arith.constant 0 : index
    %c0_182 = arith.constant 0 : index
    %361 = vector.load %arg19[%c0_181, %c0_182] : memref<3x1xf32, #tpu.memory_space<vmem>>, vector<3x1xf32>
    %362 = vector.broadcast %361 : vector<3x1xf32> to vector<3x136xf32>
    %363 = arith.addf %360, %362 : vector<3x136xf32>
    %c0_183 = arith.constant 0 : index
    %c0_184 = arith.constant 0 : index
    %c0_185 = arith.constant 0 : index
    %364 = vector.load %arg20[%c0_183, %c0_184, %c0_185] : memref<1x3x136xf32, #tpu.memory_space<vmem>>, vector<1x3x136xf32>
    %365 = vector.shape_cast %364 : vector<1x3x136xf32> to vector<3x136xf32>
    %366 = vector.shape_cast %363 : vector<3x136xf32> to vector<1x3x136xf32>
    tpu.vector_store %arg20[%c0_183, %c0_184, %c0_185], %366 {strides = array<i32>} : memref<1x3x136xf32, #tpu.memory_space<vmem>>, vector<1x3x136xf32>,
    return
  }
  func.func @transform_0(%arg0: i32) -> (i32, i32, i32) {
    %c0_i32 = arith.constant 0 : i32
    %c0_i32_0 = arith.constant 0 : i32
    %c0_i32_1 = arith.constant 0 : i32
    return %arg0, %c0_i32, %c0_i32_0 : i32, i32, i32
  }
  func.func @transform_1(%arg0: i32) -> (i32, i32) {
    %c0_i32 = arith.constant 0 : i32
    %c0_i32_0 = arith.constant 0 : i32
    %c0_i32_1 = arith.constant 0 : i32
    return %c0_i32, %c0_i32_0 : i32, i32
  }
  func.func @transform_2(%arg0: i32) -> (i32, i32) {
    %c0_i32 = arith.constant 0 : i32
    %c0_i32_0 = arith.constant 0 : i32
    %c0_i32_1 = arith.constant 0 : i32
    return %c0_i32, %c0_i32_0 : i32, i32
  }
  func.func @transform_3(%arg0: i32) -> (i32, i32, i32) {
    %c0_i32 = arith.constant 0 : i32
    %c0_i32_0 = arith.constant 0 : i32
    %c0_i32_1 = arith.constant 0 : i32
    %c0_i32_2 = arith.constant 0 : i32
    return %c0_i32, %c0_i32_0, %c0_i32_1 : i32, i32, i32
  }
  func.func @transform_4(%arg0: i32) -> (i32, i32, i32) {
    %c0_i32 = arith.constant 0 : i32
    %c0_i32_0 = arith.constant 0 : i32
    %c0_i32_1 = arith.constant 0 : i32
    %c0_i32_2 = arith.constant 0 : i32
    return %c0_i32, %c0_i32_0, %c0_i32_1 : i32, i32, i32
  }
  func.func @transform_5(%arg0: i32) -> (i32, i32, i32) {
    %c0_i32 = arith.constant 0 : i32
    %c0_i32_0 = arith.constant 0 : i32
    %c0_i32_1 = arith.constant 0 : i32
    %c0_i32_2 = arith.constant 0 : i32
    return %c0_i32, %c0_i32_0, %c0_i32_1 : i32, i32, i32
  }
  func.func @transform_6(%arg0: i32) -> (i32, i32, i32) {
    %c0_i32 = arith.constant 0 : i32
    %c0_i32_0 = arith.constant 0 : i32
    %c0_i32_1 = arith.constant 0 : i32
    %c0_i32_2 = arith.constant 0 : i32
    return %c0_i32, %c0_i32_0, %c0_i32_1 : i32, i32, i32
  }
  func.func @transform_7(%arg0: i32) -> (i32, i32, i32) {
    %c0_i32 = arith.constant 0 : i32
    %c0_i32_0 = arith.constant 0 : i32
    %c0_i32_1 = arith.constant 0 : i32
    %c0_i32_2 = arith.constant 0 : i32
    return %c0_i32, %c0_i32_0, %c0_i32_1 : i32, i32, i32
  }
  func.func @transform_8(%arg0: i32) -> (i32, i32, i32) {
    %c0_i32 = arith.constant 0 : i32
    %c0_i32_0 = arith.constant 0 : i32
    %c0_i32_1 = arith.constant 0 : i32
    %c0_i32_2 = arith.constant 0 : i32
    return %c0_i32, %c0_i32_0, %c0_i32_1 : i32, i32, i32
  }
  func.func @transform_9(%arg0: i32) -> (i32, i32, i32) {
    %c0_i32 = arith.constant 0 : i32
    %c0_i32_0 = arith.constant 0 : i32
    %c0_i32_1 = arith.constant 0 : i32
    %c0_i32_2 = arith.constant 0 : i32
    return %c0_i32, %c0_i32_0, %c0_i32_1 : i32, i32, i32
  }
  func.func @transform_10(%arg0: i32) -> (i32, i32, i32) {
    %c0_i32 = arith.constant 0 : i32
    %c0_i32_0 = arith.constant 0 : i32
    %c0_i32_1 = arith.constant 0 : i32
    %c0_i32_2 = arith.constant 0 : i32
    return %c0_i32, %c0_i32_0, %c0_i32_1 : i32, i32, i32
  }
  func.func @transform_11(%arg0: i32) -> (i32, i32, i32) {
    %c0_i32 = arith.constant 0 : i32
    %c0_i32_0 = arith.constant 0 : i32
    %c0_i32_1 = arith.constant 0 : i32
    %c0_i32_2 = arith.constant 0 : i32
    return %c0_i32, %c0_i32_0, %c0_i32_1 : i32, i32, i32
  }
  func.func @transform_12(%arg0: i32) -> (i32, i32, i32) {
    %c0_i32 = arith.constant 0 : i32
    %c0_i32_0 = arith.constant 0 : i32
    %c0_i32_1 = arith.constant 0 : i32
    %c0_i32_2 = arith.constant 0 : i32
    return %c0_i32, %c0_i32_0, %c0_i32_1 : i32, i32, i32
  }
  func.func @transform_13(%arg0: i32) -> (i32, i32, i32) {
    %c0_i32 = arith.constant 0 : i32
    %c0_i32_0 = arith.constant 0 : i32
    %c0_i32_1 = arith.constant 0 : i32
    %c0_i32_2 = arith.constant 0 : i32
    return %c0_i32, %c0_i32_0, %c0_i32_1 : i32, i32, i32
  }
  func.func @transform_14(%arg0: i32) -> (i32, i32, i32) {
    %c0_i32 = arith.constant 0 : i32
    %c0_i32_0 = arith.constant 0 : i32
    %c0_i32_1 = arith.constant 0 : i32
    %c0_i32_2 = arith.constant 0 : i32
    return %c0_i32, %c0_i32_0, %c0_i32_1 : i32, i32, i32
  }
  func.func @transform_15(%arg0: i32) -> (i32, i32) {
    %c0_i32 = arith.constant 0 : i32
    %c0_i32_0 = arith.constant 0 : i32
    %c0_i32_1 = arith.constant 0 : i32
    return %c0_i32, %c0_i32_0 : i32, i32
  }
  func.func @transform_16(%arg0: i32) -> (i32, i32) {
    %c0_i32 = arith.constant 0 : i32
    %c0_i32_0 = arith.constant 0 : i32
    %c0_i32_1 = arith.constant 0 : i32
    return %c0_i32, %c0_i32_0 : i32, i32
  }
  func.func @transform_17(%arg0: i32) -> (i32, i32) {
    %c0_i32 = arith.constant 0 : i32
    %c0_i32_0 = arith.constant 0 : i32
    %c0_i32_1 = arith.constant 0 : i32
    return %c0_i32, %c0_i32_0 : i32, i32
  }
  func.func @transform_18(%arg0: i32) -> (i32, i32) {
    %c0_i32 = arith.constant 0 : i32
    %c0_i32_0 = arith.constant 0 : i32
    %c0_i32_1 = arith.constant 0 : i32
    return %c0_i32, %c0_i32_0 : i32, i32
  }
  func.func @transform_19(%arg0: i32) -> (i32, i32, i32) {
    %c0_i32 = arith.constant 0 : i32
    %c0_i32_0 = arith.constant 0 : i32
    %c0_i32_1 = arith.constant 0 : i32
    return %arg0, %c0_i32, %c0_i32_0 : i32, i32, i32
  }
}

</mosaic_0001>

<llo_original>
// kernel: mlp_mixer_forward.1
$region0: #{mlp_mixer_forward.1}
  #allocation0 [shape = 'u32[]', space=smem, size = 0x4, offset = 0x4, fixed_abs, tag = 'smem constant byte address 0x4 - core index']
  #allocation1 [shape = 'u32[72,128]{1,0:T(1,128)}', space=vmem, size = 0x9000, scoped, tag = 'internal scratch']
  %s0 = inlined_call_operand.vmem [shape: f32[2,136,144], index: 0, kind: input, shape index: {}]
  %s1 = inlined_call_operand.vmem [shape: f32[144,128], index: 1, kind: input, shape index: {}]
  %s2 = inlined_call_operand.vmem [shape: f32[1,128], index: 2, kind: input, shape index: {}]
  %s3 = inlined_call_operand.vmem [shape: f32[2,136,1], index: 3, kind: input, shape index: {}]
  %s4 = inlined_call_operand.vmem [shape: f32[2,136,1], index: 4, kind: input, shape index: {}]
  %s5 = inlined_call_operand.vmem [shape: f32[2,136,128], index: 5, kind: input, shape index: {}]
  %s6 = inlined_call_operand.vmem [shape: f32[2,1,128], index: 6, kind: input, shape index: {}]
  %s7 = inlined_call_operand.vmem [shape: f32[2,136,128], index: 7, kind: input, shape index: {}]
  %s8 = inlined_call_operand.vmem [shape: f32[2,136,1], index: 8, kind: input, shape index: {}]
  %s9 = inlined_call_operand.vmem [shape: f32[2,1,128], index: 9, kind: input, shape index: {}]
  %s10 = inlined_call_operand.vmem [shape: f32[2,1,128], index: 10, kind: input, shape index: {}]
  %s11 = inlined_call_operand.vmem [shape: f32[2,128,256], index: 11, kind: input, shape index: {}]
  %s12 = inlined_call_operand.vmem [shape: f32[2,1,256], index: 12, kind: input, shape index: {}]
  %s13 = inlined_call_operand.vmem [shape: f32[2,256,128], index: 13, kind: input, shape index: {}]
  %s14 = inlined_call_operand.vmem [shape: f32[2,1,128], index: 14, kind: input, shape index: {}]
  %s15 = inlined_call_operand.vmem [shape: f32[1,128], index: 15, kind: input, shape index: {}]
  %s16 = inlined_call_operand.vmem [shape: f32[1,128], index: 16, kind: input, shape index: {}]
  %s17 = inlined_call_operand.vmem [shape: f32[3,128], index: 17, kind: input, shape index: {}]
  %s18 = inlined_call_operand.vmem [shape: f32[3,1], index: 18, kind: input, shape index: {}]
  %s19 = inlined_call_operand.vmem [shape: f32[2,3,136], index: 19, kind: output, shape index: {}]
  %s20 = sld [smem:[#allocation0]]
  $region109: #{mlp_mixer_forward.1} parent=0
    _
  %s22 = ssub.s32 1, %s20
  %s23 = scalar_select 0, %s22, %s20
  loop: start=0, step=1, limit=4
  $region2: #{mlp_mixer_forward.1} parent=0 // loop_pre_header
    _
  $region3: #{mlp_mixer_forward.1} parent=0 // loop_header
    %s25 = sphi 0, %s29
    %p26 = scmp.ge.s32.totalorder %s25, 4
    %s35 = sphi 0, %s37
    %s38 = sphi 0, %s35
    %s39 = sphi 0, %s38
    %s55 = sphi 0, %s39
    %s59 = sphi 0, %s59
    %s61 = sphi 0, %s59
    %s62 = sphi 0, %s61
    %s76 = sphi 0, %s62
    %s80 = sphi 0, %s80
    %s82 = sphi 0, %s80
    %s83 = sphi 0, %s82
    %s97 = sphi 0, %s83
    %s101 = sphi 0, %s101
    %s103 = sphi 0, %s101
    %s104 = sphi 0, %s103
    %s118 = sphi 0, %s104
    %s122 = sphi 0, %s122
    %s124 = sphi 0, %s122
    %s125 = sphi 0, %s124
    %s139 = sphi 0, %s125
    %s143 = sphi 0, %s143
    %s145 = sphi 0, %s143
    %s146 = sphi 0, %s145
    %s160 = sphi 0, %s146
    %s164 = sphi 0, %s164
    %s166 = sphi 0, %s164
    %s167 = sphi 0, %s166
    %s181 = sphi 0, %s167
    %s185 = sphi 0, %s185
    %s187 = sphi 0, %s185
    %s188 = sphi 0, %s187
    %s202 = sphi 0, %s188
    %s206 = sphi 0, %s206
    %s208 = sphi 0, %s206
    %s209 = sphi 0, %s208
    %s223 = sphi 0, %s209
    %s227 = sphi 0, %s227
    %s229 = sphi 0, %s227
    %s230 = sphi 0, %s229
    %s244 = sphi 0, %s230
    %s248 = sphi 0, %s248
    %s250 = sphi 0, %s248
    %s251 = sphi 0, %s250
    %s265 = sphi 0, %s251
    %s269 = sphi 0, %s269
    %s271 = sphi 0, %s269
    %s272 = sphi 0, %s271
    %s286 = sphi 0, %s272
    %s290 = sphi 0, %s290
    %s292 = sphi 0, %s290
    %s293 = sphi 0, %s292
    %s307 = sphi 0, %s293
    %s311 = sphi 0, %s311
    %s313 = sphi 0, %s311
    %s314 = sphi 0, %s313
    %s328 = sphi 0, %s314
    %s332 = sphi 0, %s332
    %s334 = sphi 0, %s332
    %s335 = sphi 0, %s334
    %s349 = sphi 0, %s335
    %s353 = sphi 0, %s353
    %s355 = sphi 0, %s353
    %s356 = sphi 0, %s355
    %s370 = sphi 0, %s356
    %s374 = sphi 0, %s374
    %s376 = sphi 0, %s374
    %s377 = sphi 0, %s376
    %s391 = sphi 0, %s377
    %s395 = sphi 0, %s395
    %s397 = sphi 0, %s395
    %s398 = sphi 0, %s397
    %s412 = sphi 0, %s398
    %s416 = sphi 0, %s416
    %s418 = sphi 0, %s416
    %s419 = sphi 0, %s418
    %s433 = sphi 0, %s419
    %s439 = sphi 0, %s441
    %s442 = sphi 0, %s439
    %s443 = sphi 0, %s442
    %s459 = sphi 0, %s443
  $region4: #{mlp_mixer_forward.1} parent=0 // loop_header_branch
    %28 = sbr.rel (%p26) target = $region8
  $region5: #{mlp_mixer_forward.1} parent=0 // loop_body
    %s30 = ssub.s32 %s25, 1
    %s31 = ssub.s32 %s25, 2
    %s32 = sadd.s32 %s25, 1
    %s33 = ssub.s32 %s25, %s32
    %p34 = scmp.eq.s32.totalorder %s33, 0
    %s36 = sadd.s32 %s35, 1
    %s37 = scalar_select %p34, %s35, %s36
    %p40 = pneg %p34
    %p41 = scmp.eq.s32.totalorder %s25, 1
    %p42 = por %p40, %p41
    %p43 = scmp.ne.s32.totalorder %s35, %s38
    %p44 = scmp.eq.s32.totalorder %s25, 0
    %p45 = por %p43, %p44
    %p46 = scmp.ne.s32.totalorder %s35, %s38
    %p47 = scmp.eq.s32.totalorder %s30, 1
    %p48 = por %p46, %p47
    %p49 = scmp.ne.s32.totalorder %s38, %s39
    %p50 = scmp.eq.s32.totalorder %s30, 0
    %p51 = por %p49, %p50
    %p52 = scmp.ne.s32.totalorder %s38, %s39
    %p53 = scmp.eq.s32.totalorder %s31, 1
    %p54 = por %p52, %p53
    %p56 = scmp.ne.s32.totalorder %s39, %s55
    %p57 = scmp.eq.s32.totalorder %s31, 0
    %p58 = por %p56, %p57
    %s60 = sadd.s32 %s59, 1
    %p63 = scmp.eq.s32.totalorder %s25, 1
    %p64 = scmp.ne.s32.totalorder %s59, %s61
    %p65 = scmp.eq.s32.totalorder %s25, 0
    %p66 = por %p64, %p65
    %p67 = scmp.ne.s32.totalorder %s59, %s61
    %p68 = scmp.eq.s32.totalorder %s30, 1
    %p69 = por %p67, %p68
    %p70 = scmp.ne.s32.totalorder %s61, %s62
    %p71 = scmp.eq.s32.totalorder %s30, 0
    %p72 = por %p70, %p71
    %p73 = scmp.ne.s32.totalorder %s61, %s62
    %p74 = scmp.eq.s32.totalorder %s31, 1
    %p75 = por %p73, %p74
    %p77 = scmp.ne.s32.totalorder %s62, %s76
    %p78 = scmp.eq.s32.totalorder %s31, 0
    %p79 = por %p77, %p78
    %s81 = sadd.s32 %s80, 1
    %p84 = scmp.eq.s32.totalorder %s25, 1
    %p85 = scmp.ne.s32.totalorder %s80, %s82
    %p86 = scmp.eq.s32.totalorder %s25, 0
    %p87 = por %p85, %p86
    %p88 = scmp.ne.s32.totalorder %s80, %s82
    %p89 = scmp.eq.s32.totalorder %s30, 1
    %p90 = por %p88, %p89
    %p91 = scmp.ne.s32.totalorder %s82, %s83
    %p92 = scmp.eq.s32.totalorder %s30, 0
    %p93 = por %p91, %p92
    %p94 = scmp.ne.s32.totalorder %s82, %s83
    %p95 = scmp.eq.s32.totalorder %s31, 1
    %p96 = por %p94, %p95
    %p98 = scmp.ne.s32.totalorder %s83, %s97
    %p99 = scmp.eq.s32.totalorder %s31, 0
    %p100 = por %p98, %p99
    %s102 = sadd.s32 %s101, 1
    %p105 = scmp.eq.s32.totalorder %s25, 1
    %p106 = scmp.ne.s32.totalorder %s101, %s103
    %p107 = scmp.eq.s32.totalorder %s25, 0
    %p108 = por %p106, %p107
    %p109 = scmp.ne.s32.totalorder %s101, %s103
    %p110 = scmp.eq.s32.totalorder %s30, 1
    %p111 = por %p109, %p110
    %p112 = scmp.ne.s32.totalorder %s103, %s104
    %p113 = scmp.eq.s32.totalorder %s30, 0
    %p114 = por %p112, %p113
    %p115 = scmp.ne.s32.totalorder %s103, %s104
    %p116 = scmp.eq.s32.totalorder %s31, 1
    %p117 = por %p115, %p116
    %p119 = scmp.ne.s32.totalorder %s104, %s118
    %p120 = scmp.eq.s32.totalorder %s31, 0
    %p121 = por %p119, %p120
    %s123 = sadd.s32 %s122, 1
    %p126 = scmp.eq.s32.totalorder %s25, 1
    %p127 = scmp.ne.s32.totalorder %s122, %s124
    %p128 = scmp.eq.s32.totalorder %s25, 0
    %p129 = por %p127, %p128
    %p130 = scmp.ne.s32.totalorder %s122, %s124
    %p131 = scmp.eq.s32.totalorder %s30, 1
    %p132 = por %p130, %p131
    %p133 = scmp.ne.s32.totalorder %s124, %s125
    %p134 = scmp.eq.s32.totalorder %s30, 0
    %p135 = por %p133, %p134
    %p136 = scmp.ne.s32.totalorder %s124, %s125
    %p137 = scmp.eq.s32.totalorder %s31, 1
    %p138 = por %p136, %p137
    %p140 = scmp.ne.s32.totalorder %s125, %s139
    %p141 = scmp.eq.s32.totalorder %s31, 0
    %p142 = por %p140, %p141
    %s144 = sadd.s32 %s143, 1
    %p147 = scmp.eq.s32.totalorder %s25, 1
    %p148 = scmp.ne.s32.totalorder %s143, %s145
    %p149 = scmp.eq.s32.totalorder %s25, 0
    %p150 = por %p148, %p149
    %p151 = scmp.ne.s32.totalorder %s143, %s145
    %p152 = scmp.eq.s32.totalorder %s30, 1
    %p153 = por %p151, %p152
    %p154 = scmp.ne.s32.totalorder %s145, %s146
    %p155 = scmp.eq.s32.totalorder %s30, 0
    %p156 = por %p154, %p155
    %p157 = scmp.ne.s32.totalorder %s145, %s146
    %p158 = scmp.eq.s32.totalorder %s31, 1
    %p159 = por %p157, %p158
    %p161 = scmp.ne.s32.totalorder %s146, %s160
    %p162 = scmp.eq.s32.totalorder %s31, 0
    %p163 = por %p161, %p162
    %s165 = sadd.s32 %s164, 1
    %p168 = scmp.eq.s32.totalorder %s25, 1
    %p169 = scmp.ne.s32.totalorder %s164, %s166
    %p170 = scmp.eq.s32.totalorder %s25, 0
    %p171 = por %p169, %p170
    %p172 = scmp.ne.s32.totalorder %s164, %s166
    %p173 = scmp.eq.s32.totalorder %s30, 1
    %p174 = por %p172, %p173
    %p175 = scmp.ne.s32.totalorder %s166, %s167
    %p176 = scmp.eq.s32.totalorder %s30, 0
    %p177 = por %p175, %p176
    %p178 = scmp.ne.s32.totalorder %s166, %s167
    %p179 = scmp.eq.s32.totalorder %s31, 1
    %p180 = por %p178, %p179
    %p182 = scmp.ne.s32.totalorder %s167, %s181
    %p183 = scmp.eq.s32.totalorder %s31, 0
    %p184 = por %p182, %p183
    %s186 = sadd.s32 %s185, 1
    %p189 = scmp.eq.s32.totalorder %s25, 1
    %p190 = scmp.ne.s32.totalorder %s185, %s187
    %p191 = scmp.eq.s32.totalorder %s25, 0
    %p192 = por %p190, %p191
    %p193 = scmp.ne.s32.totalorder %s185, %s187
    %p194 = scmp.eq.s32.totalorder %s30, 1
    %p195 = por %p193, %p194
    %p196 = scmp.ne.s32.totalorder %s187, %s188
    %p197 = scmp.eq.s32.totalorder %s30, 0
    %p198 = por %p196, %p197
    %p199 = scmp.ne.s32.totalorder %s187, %s188
    %p200 = scmp.eq.s32.totalorder %s31, 1
    %p201 = por %p199, %p200
    %p203 = scmp.ne.s32.totalorder %s188, %s202
    %p204 = scmp.eq.s32.totalorder %s31, 0
    %p205 = por %p203, %p204
    %s207 = sadd.s32 %s206, 1
    %p210 = scmp.eq.s32.totalorder %s25, 1
    %p211 = scmp.ne.s32.totalorder %s206, %s208
    %p212 = scmp.eq.s32.totalorder %s25, 0
    %p213 = por %p211, %p212
    %p214 = scmp.ne.s32.totalorder %s206, %s208
    %p215 = scmp.eq.s32.totalorder %s30, 1
    %p216 = por %p214, %p215
    %p217 = scmp.ne.s32.totalorder %s208, %s209
    %p218 = scmp.eq.s32.totalorder %s30, 0
    %p219 = por %p217, %p218
    %p220 = scmp.ne.s32.totalorder %s208, %s209
    %p221 = scmp.eq.s32.totalorder %s31, 1
    %p222 = por %p220, %p221
    %p224 = scmp.ne.s32.totalorder %s209, %s223
    %p225 = scmp.eq.s32.totalorder %s31, 0
    %p226 = por %p224, %p225
    %s228 = sadd.s32 %s227, 1
    %p231 = scmp.eq.s32.totalorder %s25, 1
    %p232 = scmp.ne.s32.totalorder %s227, %s229
    %p233 = scmp.eq.s32.totalorder %s25, 0
    %p234 = por %p232, %p233
    %p235 = scmp.ne.s32.totalorder %s227, %s229
    %p236 = scmp.eq.s32.totalorder %s30, 1
    %p237 = por %p235, %p236
    %p238 = scmp.ne.s32.totalorder %s229, %s230
    %p239 = scmp.eq.s32.totalorder %s30, 0
    %p240 = por %p238, %p239
    %p241 = scmp.ne.s32.totalorder %s229, %s230
    %p242 = scmp.eq.s32.totalorder %s31, 1
    %p243 = por %p241, %p242
    %p245 = scmp.ne.s32.totalorder %s230, %s244
    %p246 = scmp.eq.s32.totalorder %s31, 0
    %p247 = por %p245, %p246
    %s249 = sadd.s32 %s248, 1
    %p252 = scmp.eq.s32.totalorder %s25, 1
    %p253 = scmp.ne.s32.totalorder %s248, %s250
    %p254 = scmp.eq.s32.totalorder %s25, 0
    %p255 = por %p253, %p254
    %p256 = scmp.ne.s32.totalorder %s248, %s250
    %p257 = scmp.eq.s32.totalorder %s30, 1
    %p258 = por %p256, %p257
    %p259 = scmp.ne.s32.totalorder %s250, %s251
    %p260 = scmp.eq.s32.totalorder %s30, 0
    %p261 = por %p259, %p260
    %p262 = scmp.ne.s32.totalorder %s250, %s251
    %p263 = scmp.eq.s32.totalorder %s31, 1
    %p264 = por %p262, %p263
    %p266 = scmp.ne.s32.totalorder %s251, %s265
    %p267 = scmp.eq.s32.totalorder %s31, 0
    %p268 = por %p266, %p267
    %s270 = sadd.s32 %s269, 1
    %p273 = scmp.eq.s32.totalorder %s25, 1
    %p274 = scmp.ne.s32.totalorder %s269, %s271
    %p275 = scmp.eq.s32.totalorder %s25, 0
    %p276 = por %p274, %p275
    %p277 = scmp.ne.s32.totalorder %s269, %s271
    %p278 = scmp.eq.s32.totalorder %s30, 1
    %p279 = por %p277, %p278
    %p280 = scmp.ne.s32.totalorder %s271, %s272
    %p281 = scmp.eq.s32.totalorder %s30, 0
    %p282 = por %p280, %p281
    %p283 = scmp.ne.s32.totalorder %s271, %s272
    %p284 = scmp.eq.s32.totalorder %s31, 1
    %p285 = por %p283, %p284
    %p287 = scmp.ne.s32.totalorder %s272, %s286
    %p288 = scmp.eq.s32.totalorder %s31, 0
    %p289 = por %p287, %p288
    %s291 = sadd.s32 %s290, 1
    %p294 = scmp.eq.s32.totalorder %s25, 1
    %p295 = scmp.ne.s32.totalorder %s290, %s292
    %p296 = scmp.eq.s32.totalorder %s25, 0
    %p297 = por %p295, %p296
    %p298 = scmp.ne.s32.totalorder %s290, %s292
    %p299 = scmp.eq.s32.totalorder %s30, 1
    %p300 = por %p298, %p299
    %p301 = scmp.ne.s32.totalorder %s292, %s293
    %p302 = scmp.eq.s32.totalorder %s30, 0
    %p303 = por %p301, %p302
    %p304 = scmp.ne.s32.totalorder %s292, %s293
    %p305 = scmp.eq.s32.totalorder %s31, 1
    %p306 = por %p304, %p305
    %p308 = scmp.ne.s32.totalorder %s293, %s307
    %p309 = scmp.eq.s32.totalorder %s31, 0
    %p310 = por %p308, %p309
    %s312 = sadd.s32 %s311, 1
    %p315 = scmp.eq.s32.totalorder %s25, 1
    %p316 = scmp.ne.s32.totalorder %s311, %s313
    %p317 = scmp.eq.s32.totalorder %s25, 0
    %p318 = por %p316, %p317
    %p319 = scmp.ne.s32.totalorder %s311, %s313
    %p320 = scmp.eq.s32.totalorder %s30, 1
    %p321 = por %p319, %p320
    %p322 = scmp.ne.s32.totalorder %s313, %s314
    %p323 = scmp.eq.s32.totalorder %s30, 0
    %p324 = por %p322, %p323
    %p325 = scmp.ne.s32.totalorder %s313, %s314
    %p326 = scmp.eq.s32.totalorder %s31, 1
    %p327 = por %p325, %p326
    %p329 = scmp.ne.s32.totalorder %s314, %s328
    %p330 = scmp.eq.s32.totalorder %s31, 0
    %p331 = por %p329, %p330
    %s333 = sadd.s32 %s332, 1
    %p336 = scmp.eq.s32.totalorder %s25, 1
    %p337 = scmp.ne.s32.totalorder %s332, %s334
    %p338 = scmp.eq.s32.totalorder %s25, 0
    %p339 = por %p337, %p338
    %p340 = scmp.ne.s32.totalorder %s332, %s334
    %p341 = scmp.eq.s32.totalorder %s30, 1
    %p342 = por %p340, %p341
    %p343 = scmp.ne.s32.totalorder %s334, %s335
    %p344 = scmp.eq.s32.totalorder %s30, 0
    %p345 = por %p343, %p344
    %p346 = scmp.ne.s32.totalorder %s334, %s335
    %p347 = scmp.eq.s32.totalorder %s31, 1
    %p348 = por %p346, %p347
    %p350 = scmp.ne.s32.totalorder %s335, %s349
    %p351 = scmp.eq.s32.totalorder %s31, 0
    %p352 = por %p350, %p351
    %s354 = sadd.s32 %s353, 1
    %p357 = scmp.eq.s32.totalorder %s25, 1
    %p358 = scmp.ne.s32.totalorder %s353, %s355
    %p359 = scmp.eq.s32.totalorder %s25, 0
    %p360 = por %p358, %p359
    %p361 = scmp.ne.s32.totalorder %s353, %s355
    %p362 = scmp.eq.s32.totalorder %s30, 1
    %p363 = por %p361, %p362
    %p364 = scmp.ne.s32.totalorder %s355, %s356
    %p365 = scmp.eq.s32.totalorder %s30, 0
    %p366 = por %p364, %p365
    %p367 = scmp.ne.s32.totalorder %s355, %s356
    %p368 = scmp.eq.s32.totalorder %s31, 1
    %p369 = por %p367, %p368
    %p371 = scmp.ne.s32.totalorder %s356, %s370
    %p372 = scmp.eq.s32.totalorder %s31, 0
    %p373 = por %p371, %p372
    %s375 = sadd.s32 %s374, 1
    %p378 = scmp.eq.s32.totalorder %s25, 1
    %p379 = scmp.ne.s32.totalorder %s374, %s376
    %p380 = scmp.eq.s32.totalorder %s25, 0
    %p381 = por %p379, %p380
    %p382 = scmp.ne.s32.totalorder %s374, %s376
    %p383 = scmp.eq.s32.totalorder %s30, 1
    %p384 = por %p382, %p383
    %p385 = scmp.ne.s32.totalorder %s376, %s377
    %p386 = scmp.eq.s32.totalorder %s30, 0
    %p387 = por %p385, %p386
    %p388 = scmp.ne.s32.totalorder %s376, %s377
    %p389 = scmp.eq.s32.totalorder %s31, 1
    %p390 = por %p388, %p389
    %p392 = scmp.ne.s32.totalorder %s377, %s391
    %p393 = scmp.eq.s32.totalorder %s31, 0
    %p394 = por %p392, %p393
    %s396 = sadd.s32 %s395, 1
    %p399 = scmp.eq.s32.totalorder %s25, 1
    %p400 = scmp.ne.s32.totalorder %s395, %s397
    %p401 = scmp.eq.s32.totalorder %s25, 0
    %p402 = por %p400, %p401
    %p403 = scmp.ne.s32.totalorder %s395, %s397
    %p404 = scmp.eq.s32.totalorder %s30, 1
    %p405 = por %p403, %p404
    %p406 = scmp.ne.s32.totalorder %s397, %s398
    %p407 = scmp.eq.s32.totalorder %s30, 0
    %p408 = por %p406, %p407
    %p409 = scmp.ne.s32.totalorder %s397, %s398
    %p410 = scmp.eq.s32.totalorder %s31, 1
    %p411 = por %p409, %p410
    %p413 = scmp.ne.s32.totalorder %s398, %s412
    %p414 = scmp.eq.s32.totalorder %s31, 0
    %p415 = por %p413, %p414
    %s417 = sadd.s32 %s416, 1
    %p420 = scmp.eq.s32.totalorder %s25, 1
    %p421 = scmp.ne.s32.totalorder %s416, %s418
    %p422 = scmp.eq.s32.totalorder %s25, 0
    %p423 = por %p421, %p422
    %p424 = scmp.ne.s32.totalorder %s416, %s418
    %p425 = scmp.eq.s32.totalorder %s30, 1
    %p426 = por %p424, %p425
    %p427 = scmp.ne.s32.totalorder %s418, %s419
    %p428 = scmp.eq.s32.totalorder %s30, 0
    %p429 = por %p427, %p428
    %p430 = scmp.ne.s32.totalorder %s418, %s419
    %p431 = scmp.eq.s32.totalorder %s31, 1
    %p432 = por %p430, %p431
    %p434 = scmp.ne.s32.totalorder %s419, %s433
    %p435 = scmp.eq.s32.totalorder %s31, 0
    %p436 = por %p434, %p435
    %s437 = ssub.s32 %s25, %s32
    %p438 = scmp.eq.s32.totalorder %s437, 0
    %s440 = sadd.s32 %s439, 1
    %s441 = scalar_select %p438, %s439, %s440
    %p444 = pneg %p438
    %p445 = scmp.eq.s32.totalorder %s25, 1
    %p446 = por %p444, %p445
    %p447 = scmp.ne.s32.totalorder %s439, %s442
    %p448 = scmp.eq.s32.totalorder %s25, 0
    %p449 = por %p447, %p448
    %p450 = scmp.ne.s32.totalorder %s439, %s442
    %p451 = scmp.eq.s32.totalorder %s30, 1
    %p452 = por %p450, %p451
    %p453 = scmp.ne.s32.totalorder %s442, %s443
    %p454 = scmp.eq.s32.totalorder %s30, 0
    %p455 = por %p453, %p454
    %p456 = scmp.ne.s32.totalorder %s442, %s443
    %p457 = scmp.eq.s32.totalorder %s31, 1
    %p458 = por %p456, %p457
    %p460 = scmp.ne.s32.totalorder %s443, %s459
    %p461 = scmp.eq.s32.totalorder %s31, 0
    %p462 = por %p460, %p461
    %p463 = scmp.le.s32.totalorder 1, %s25
    %p464 = scmp.lt.s32.totalorder %s25, 3
    %p465 = pnand %p463, %p464
    %p466 = pneg %p465
    // Predicated region
    $region9: #{mlp_mixer_forward.1} parent=5 // pred_check
      _
    $region10: #{mlp_mixer_forward.1} parent=5 // pred_check_branch
      %468 = sbr.rel (%p465) target = $region12
    $region11: #{mlp_mixer_forward.1} parent=5 // pred_region
      %s469 = ssub.s32 %s25, 1
      // Predicated region
      $region13: #{mlp_mixer_forward.1} parent=11 // pred_check
        %p470 = pneg %p72
      $region14: #{mlp_mixer_forward.1} parent=11 // pred_check_branch
        %472 = sbr.rel (%p470) target = $region16
      $region15: #{mlp_mixer_forward.1} parent=11 // pred_region
        _
      $region16: #{mlp_mixer_forward.1} parent=11 // pred_fallthru
        _
      // Predicated region
      $region17: #{mlp_mixer_forward.1} parent=11 // pred_check
        %p473 = pneg %p93
      $region18: #{mlp_mixer_forward.1} parent=11 // pred_check_branch
        %475 = sbr.rel (%p473) target = $region20
      $region19: #{mlp_mixer_forward.1} parent=11 // pred_region
        _
      $region20: #{mlp_mixer_forward.1} parent=11 // pred_fallthru
        _
      // Predicated region
      $region21: #{mlp_mixer_forward.1} parent=11 // pred_check
        %p476 = pneg %p114
      $region22: #{mlp_mixer_forward.1} parent=11 // pred_check_branch
        %478 = sbr.rel (%p476) target = $region24
      $region23: #{mlp_mixer_forward.1} parent=11 // pred_region
        _
      $region24: #{mlp_mixer_forward.1} parent=11 // pred_fallthru
        _
      // Predicated region
      $region25: #{mlp_mixer_forward.1} parent=11 // pred_check
        %p479 = pneg %p135
      $region26: #{mlp_mixer_forward.1} parent=11 // pred_check_branch
        %481 = sbr.rel (%p479) target = $region28
      $region27: #{mlp_mixer_forward.1} parent=11 // pred_region
        _
      $region28: #{mlp_mixer_forward.1} parent=11 // pred_fallthru
        _
      // Predicated region
      $region29: #{mlp_mixer_forward.1} parent=11 // pred_check
        %p482 = pneg %p156
      $region30: #{mlp_mixer_forward.1} parent=11 // pred_check_branch
        %484 = sbr.rel (%p482) target = $region32
      $region31: #{mlp_mixer_forward.1} parent=11 // pred_region
        _
      $region32: #{mlp_mixer_forward.1} parent=11 // pred_fallthru
        _
      // Predicated region
      $region33: #{mlp_mixer_forward.1} parent=11 // pred_check
        %p485 = pneg %p177
      $region34: #{mlp_mixer_forward.1} parent=11 // pred_check_branch
        %487 = sbr.rel (%p485) target = $region36
      $region35: #{mlp_mixer_forward.1} parent=11 // pred_region
        _
      $region36: #{mlp_mixer_forward.1} parent=11 // pred_fallthru
        _
      // Predicated region
      $region37: #{mlp_mixer_forward.1} parent=11 // pred_check
        %p488 = pneg %p198
      $region38: #{mlp_mixer_forward.1} parent=11 // pred_check_branch
        %490 = sbr.rel (%p488) target = $region40
      $region39: #{mlp_mixer_forward.1} parent=11 // pred_region
        _
      $region40: #{mlp_mixer_forward.1} parent=11 // pred_fallthru
        _
      // Predicated region
      $region41: #{mlp_mixer_forward.1} parent=11 // pred_check
        %p491 = pneg %p219
      $region42: #{mlp_mixer_forward.1} parent=11 // pred_check_branch
        %493 = sbr.rel (%p491) target = $region44
      $region43: #{mlp_mixer_forward.1} parent=11 // pred_region
        _
      $region44: #{mlp_mixer_forward.1} parent=11 // pred_fallthru
        _
      // Predicated region
      $region45: #{mlp_mixer_forward.1} parent=11 // pred_check
        %p494 = pneg %p240
      $region46: #{mlp_mixer_forward.1} parent=11 // pred_check_branch
        %496 = sbr.rel (%p494) target = $region48
      $region47: #{mlp_mixer_forward.1} parent=11 // pred_region
        _
      $region48: #{mlp_mixer_forward.1} parent=11 // pred_fallthru
        _
      // Predicated region
      $region49: #{mlp_mixer_forward.1} parent=11 // pred_check
        %p497 = pneg %p261
      $region50: #{mlp_mixer_forward.1} parent=11 // pred_check_branch
        %499 = sbr.rel (%p497) target = $region52
      $region51: #{mlp_mixer_forward.1} parent=11 // pred_region
        _
      $region52: #{mlp_mixer_forward.1} parent=11 // pred_fallthru
        _
      // Predicated region
      $region53: #{mlp_mixer_forward.1} parent=11 // pred_check
        %p500 = pneg %p282
      $region54: #{mlp_mixer_forward.1} parent=11 // pred_check_branch
        %502 = sbr.rel (%p500) target = $region56
      $region55: #{mlp_mixer_forward.1} parent=11 // pred_region
        _
      $region56: #{mlp_mixer_forward.1} parent=11 // pred_fallthru
        _
      // Predicated region
      $region57: #{mlp_mixer_forward.1} parent=11 // pred_check
        %p503 = pneg %p303
      $region58: #{mlp_mixer_forward.1} parent=11 // pred_check_branch
        %505 = sbr.rel (%p503) target = $region60
      $region59: #{mlp_mixer_forward.1} parent=11 // pred_region
        _
      $region60: #{mlp_mixer_forward.1} parent=11 // pred_fallthru
        _
      // Predicated region
      $region61: #{mlp_mixer_forward.1} parent=11 // pred_check
        %p506 = pneg %p324
      $region62: #{mlp_mixer_forward.1} parent=11 // pred_check_branch
        %508 = sbr.rel (%p506) target = $region64
      $region63: #{mlp_mixer_forward.1} parent=11 // pred_region
        _
      $region64: #{mlp_mixer_forward.1} parent=11 // pred_fallthru
        _
      // Predicated region
      $region65: #{mlp_mixer_forward.1} parent=11 // pred_check
        %p509 = pneg %p345
      $region66: #{mlp_mixer_forward.1} parent=11 // pred_check_branch
        %511 = sbr.rel (%p509) target = $region68
      $region67: #{mlp_mixer_forward.1} parent=11 // pred_region
        _
      $region68: #{mlp_mixer_forward.1} parent=11 // pred_fallthru
        _
      // Predicated region
      $region69: #{mlp_mixer_forward.1} parent=11 // pred_check
        %p512 = pneg %p366
      $region70: #{mlp_mixer_forward.1} parent=11 // pred_check_branch
        %514 = sbr.rel (%p512) target = $region72
      $region71: #{mlp_mixer_forward.1} parent=11 // pred_region
        _
      $region72: #{mlp_mixer_forward.1} parent=11 // pred_fallthru
        _
      // Predicated region
      $region73: #{mlp_mixer_forward.1} parent=11 // pred_check
        %p515 = pneg %p387
      $region74: #{mlp_mixer_forward.1} parent=11 // pred_check_branch
        %517 = sbr.rel (%p515) target = $region76
      $region75: #{mlp_mixer_forward.1} parent=11 // pred_region
        _
      $region76: #{mlp_mixer_forward.1} parent=11 // pred_fallthru
        _
      // Predicated region
      $region77: #{mlp_mixer_forward.1} parent=11 // pred_check
        %p518 = pneg %p408
      $region78: #{mlp_mixer_forward.1} parent=11 // pred_check_branch
        %520 = sbr.rel (%p518) target = $region80
      $region79: #{mlp_mixer_forward.1} parent=11 // pred_region
        _
      $region80: #{mlp_mixer_forward.1} parent=11 // pred_fallthru
        _
      // Predicated region
      $region81: #{mlp_mixer_forward.1} parent=11 // pred_check
        %p521 = pneg %p429
      $region82: #{mlp_mixer_forward.1} parent=11 // pred_check_branch
        %523 = sbr.rel (%p521) target = $region84
      $region83: #{mlp_mixer_forward.1} parent=11 // pred_region
        _
      $region84: #{mlp_mixer_forward.1} parent=11 // pred_fallthru
        _
    $region12: #{mlp_mixer_forward.1} parent=5 // pred_fallthru
      _
    %p524 = scmp.lt.s32.totalorder %s25, 2
    // Predicated region
    $region85: #{mlp_mixer_forward.1} parent=5 // pred_check
      %p525 = pneg %p524
    $region86: #{mlp_mixer_forward.1} parent=5 // pred_check_branch
      %527 = sbr.rel (%p525) target = $region88
    $region87: #{mlp_mixer_forward.1} parent=5 // pred_region
      // Predicated region
      $region89: #{mlp_mixer_forward.1} parent=87 // pred_check
        %p528 = pneg %p45
      $region90: #{mlp_mixer_forward.1} parent=87 // pred_check_branch
        %530 = sbr.rel (%p528) target = $region92
      $region91: #{mlp_mixer_forward.1} parent=87 // pred_region
        %p531 = scmp.lt.s32.totalorder %s25, 1
        %s532 = scalar_select %p531, %s25, 1
        %s533 = smul.addr %s532, 34
        %s534 = smul.addr %s533, 8
        %s535 = scalar_lea.vmem %s0, %s534
      $region92: #{mlp_mixer_forward.1} parent=87 // pred_fallthru
        _
    $region88: #{mlp_mixer_forward.1} parent=5 // pred_fallthru
      _
    %p536 = scmp.le.s32.totalorder 1, %s25
    %p537 = scmp.lt.s32.totalorder %s25, 3
    %p538 = pnand %p536, %p537
    %p539 = pneg %p538
    // Predicated region
    $region93: #{mlp_mixer_forward.1} parent=5 // pred_check
      _
    $region94: #{mlp_mixer_forward.1} parent=5 // pred_check_branch
      %541 = sbr.rel (%p538) target = $region96
    $region95: #{mlp_mixer_forward.1} parent=5 // pred_region
      %s542 = ssub.s32 %s25, 1
      %p543 = scmp.lt.s32.totalorder %s30, 1
      %s544 = scalar_select %p543, %s30, 1
      %s545 = smul.addr %s544, 34
      %s546 = smul.addr %s545, 8
      %s547 = scalar_lea.vmem %s0, %s546
      %p548 = pneg %p51
      %p549 = pneg %p48
      %p550 = pneg %p72
      %p551 = pneg %p69
      %p552 = pneg %p93
      %p553 = pneg %p90
      %p554 = pneg %p114
      %p555 = pneg %p111
      %p556 = pneg %p135
      %p557 = pneg %p132
      %p558 = pneg %p156
      %p559 = pneg %p153
      %p560 = pneg %p177
      %p561 = pneg %p174
      %p562 = pneg %p198
      %p563 = pneg %p195
      %p564 = pneg %p219
      %p565 = pneg %p216
      %p566 = pneg %p240
      %p567 = pneg %p237
      %p568 = pneg %p261
      %p569 = pneg %p258
      %p570 = pneg %p282
      %p571 = pneg %p279
      %p572 = pneg %p303
      %p573 = pneg %p300
      %p574 = pneg %p324
      %p575 = pneg %p321
      %p576 = pneg %p345
      %p577 = pneg %p342
      %p578 = pneg %p366
      %p579 = pneg %p363
      %p580 = pneg %p387
      %p581 = pneg %p384
      %p582 = pneg %p408
      %p583 = pneg %p405
      %p584 = pneg %p429
      %p585 = pneg %p426
      %p586 = pneg %p455
      %p587 = pneg %p452
      %p588 = scmp.lt.s32.totalorder %s30, 1
      %s589 = scalar_select %p588, %s30, 1
      %s590 = smul.addr %s589, 2
      %s591 = smul.addr %s590, 4
      %s592 = scalar_lea.vmem %s19, %s591
      %p593 = scmp.lt.s32.totalorder %s30, 1
      %s594 = scalar_select %p593, %s30, 1
      %s595 = smul.addr %s594, 34
      %s596 = smul.addr %s595, 8
      %s597 = scalar_lea.vmem %s0, %s596
      %p598 = scmp.lt.s32.totalorder %s30, 1
      %s599 = scalar_select %p598, %s30, 1
      %s600 = smul.addr %s599, 2
      %s601 = smul.addr %s600, 4
      %s602 = scalar_lea.vmem %s19, %s601
      %v603 = vld [vmem:[%s597] sm:$0xff]
      %v604 = vld [vmem:[%s597 + $0x8] sm:$0xff]
      %v605 = vld [vmem:[%s597 + $0x10] sm:$0xff]
      %v606 = vld [vmem:[%s597 + $0x18] sm:$0xff]
      %v607 = vld [vmem:[%s597 + $0x20] sm:$0xff]
      %v608 = vld [vmem:[%s597 + $0x28] sm:$0xff]
      %v609 = vld [vmem:[%s597 + $0x30] sm:$0xff]
      %v610 = vld [vmem:[%s597 + $0x38] sm:$0xff]
      %v611 = vld [vmem:[%s597 + $0x40] sm:$0xff]
      %v612 = vld [vmem:[%s597 + $0x48] sm:$0xff]
      %v613 = vld [vmem:[%s597 + $0x50] sm:$0xff]
      %v614 = vld [vmem:[%s597 + $0x58] sm:$0xff]
      %v615 = vld [vmem:[%s597 + $0x60] sm:$0xff]
      %v616 = vld [vmem:[%s597 + $0x68] sm:$0xff]
      %v617 = vld [vmem:[%s597 + $0x70] sm:$0xff]
      %v618 = vld [vmem:[%s597 + $0x78] sm:$0xff]
      %v619 = vld [vmem:[%s597 + $0x80] sm:$0xff]
      %v620 = vld [vmem:[%s597 + $0x88] sm:$0xff]
      %v621 = vld [vmem:[%s597 + $0x90] sm:$0xff]
      %v622 = vld [vmem:[%s597 + $0x98] sm:$0xff]
      %v623 = vld [vmem:[%s597 + $0xa0] sm:$0xff]
      %v624 = vld [vmem:[%s597 + $0xa8] sm:$0xff]
      %v625 = vld [vmem:[%s597 + $0xb0] sm:$0xff]
      %v626 = vld [vmem:[%s597 + $0xb8] sm:$0xff]
      %v627 = vld [vmem:[%s597 + $0xc0] sm:$0xff]
      %v628 = vld [vmem:[%s597 + $0xc8] sm:$0xff]
      %v629 = vld [vmem:[%s597 + $0xd0] sm:$0xff]
      %v630 = vld [vmem:[%s597 + $0xd8] sm:$0xff]
      %v631 = vld [vmem:[%s597 + $0xe0] sm:$0xff]
      %v632 = vld [vmem:[%s597 + $0xe8] sm:$0xff]
      %v633 = vld [vmem:[%s597 + $0xf0] sm:$0xff]
      %v634 = vld [vmem:[%s597 + $0xf8] sm:$0xff]
      %v635 = vld [vmem:[%s597 + $0x100] sm:$0xff]
      %v636 = vld [vmem:[%s597 + $0x108] sm:$0xff]
      %v637 = vld [vmem:[%s1] sm:$0xff]
      %v638 = vld [vmem:[%s1 + $0x8] sm:$0xff]
      %v639 = vld [vmem:[%s1 + $0x10] sm:$0xff]
      %v640 = vld [vmem:[%s1 + $0x18] sm:$0xff]
      %v641 = vld [vmem:[%s1 + $0x20] sm:$0xff]
      %v642 = vld [vmem:[%s1 + $0x28] sm:$0xff]
      %v643 = vld [vmem:[%s1 + $0x30] sm:$0xff]
      %v644 = vld [vmem:[%s1 + $0x38] sm:$0xff]
      %v645 = vld [vmem:[%s1 + $0x40] sm:$0xff]
      %v646 = vld [vmem:[%s1 + $0x48] sm:$0xff]
      %v647 = vld [vmem:[%s1 + $0x50] sm:$0xff]
      %v648 = vld [vmem:[%s1 + $0x58] sm:$0xff]
      %v649 = vld [vmem:[%s1 + $0x60] sm:$0xff]
      %v650 = vld [vmem:[%s1 + $0x68] sm:$0xff]
      %v651 = vld [vmem:[%s1 + $0x70] sm:$0xff]
      %v652 = vld [vmem:[%s1 + $0x78] sm:$0xff]
      %v653 = vld [vmem:[%s1 + $0x80] sm:$0xff]
      %v654 = vld [vmem:[%s1 + $0x88] sm:$0xff]
      %v655 = vld [vmem:[%s2] sm:$0x1]
      %v657 = vperm.slane %v655, 0
      %vm659 = vcmask 130048
      %v661 = vsel %vm659, %v604, 0
      %v664 = vsel %vm659, %v606, 0
      %v667 = vsel %vm659, %v608, 0
      %v670 = vsel %vm659, %v610, 0
      %v673 = vsel %vm659, %v612, 0
      %v676 = vsel %vm659, %v614, 0
      %v679 = vsel %vm659, %v616, 0
      %v682 = vsel %vm659, %v618, 0
      %v685 = vsel %vm659, %v620, 0
      %v688 = vsel %vm659, %v622, 0
      %v691 = vsel %vm659, %v624, 0
      %v694 = vsel %vm659, %v626, 0
      %v697 = vsel %vm659, %v628, 0
      %v700 = vsel %vm659, %v630, 0
      %v703 = vsel %vm659, %v632, 0
      %v706 = vsel %vm659, %v634, 0
      %v709 = vsel %vm659, %v636, 0
      %711 = vmatpush.msra.mxu0 %v652
      %712 = vmatpush.msra.mxu0 %v651
      %713 = vmatpush.msra.mxu0 %v650
      %714 = vmatpush.msra.mxu0 %v649
      %715 = vmatpush.msra.mxu0 %v648
      %716 = vmatpush.msra.mxu0 %v647
      %717 = vmatpush.msra.mxu0 %v646
      %718 = vmatpush.msra.mxu0 %v645
      %719 = vmatpush.msra.mxu0 %v644
      %720 = vmatpush.msra.mxu0 %v643
      %721 = vmatpush.msra.mxu0 %v642
      %722 = vmatpush.msra.mxu0 %v641
      %723 = vmatpush.msra.mxu0 %v640
      %724 = vmatpush.msra.mxu0 %v639
      %725 = vmatpush.msra.mxu0 %v638
      %726 = vmatpush.msra.mxu0 %v637
      %727 = vmatmul.f32.gmra.mxu0 %v603
      %v728 = vpop.f32.mrf.mxu0
      %v729 = vadd.f32 %v657, %v728
      %730 = vmatmul.f32.gmra.mxu0 %v605
      %v731 = vpop.f32.mrf.mxu0
      %v732 = vadd.f32 %v657, %v731
      %733 = vmatmul.f32.gmra.mxu0 %v607
      %v734 = vpop.f32.mrf.mxu0
      %v735 = vadd.f32 %v657, %v734
      %736 = vmatmul.f32.gmra.mxu0 %v609
      %v737 = vpop.f32.mrf.mxu0
      %v738 = vadd.f32 %v657, %v737
      %739 = vmatmul.f32.gmra.mxu0 %v611
      %v740 = vpop.f32.mrf.mxu0
      %v741 = vadd.f32 %v657, %v740
      %742 = vmatmul.f32.gmra.mxu0 %v613
      %v743 = vpop.f32.mrf.mxu0
      %v744 = vadd.f32 %v657, %v743
      %745 = vmatmul.f32.gmra.mxu0 %v615
      %v746 = vpop.f32.mrf.mxu0
      %v747 = vadd.f32 %v657, %v746
      %748 = vmatmul.f32.gmra.mxu0 %v617
      %v749 = vpop.f32.mrf.mxu0
      %v750 = vadd.f32 %v657, %v749
      %751 = vmatmul.f32.gmra.mxu0 %v619
      %v752 = vpop.f32.mrf.mxu0
      %v753 = vadd.f32 %v657, %v752
      %754 = vmatmul.f32.gmra.mxu0 %v621
      %v755 = vpop.f32.mrf.mxu0
      %v756 = vadd.f32 %v657, %v755
      %757 = vmatmul.f32.gmra.mxu0 %v623
      %v758 = vpop.f32.mrf.mxu0
      %v759 = vadd.f32 %v657, %v758
      %760 = vmatmul.f32.gmra.mxu0 %v625
      %v761 = vpop.f32.mrf.mxu0
      %v762 = vadd.f32 %v657, %v761
      %763 = vmatmul.f32.gmra.mxu0 %v627
      %v764 = vpop.f32.mrf.mxu0
      %v765 = vadd.f32 %v657, %v764
      %766 = vmatmul.f32.gmra.mxu0 %v629
      %v767 = vpop.f32.mrf.mxu0
      %v768 = vadd.f32 %v657, %v767
      %769 = vmatmul.f32.gmra.mxu0 %v631
      %v770 = vpop.f32.mrf.mxu0
      %v771 = vadd.f32 %v657, %v770
      %772 = vmatmul.f32.gmra.mxu0 %v633
      %v773 = vpop.f32.mrf.mxu0
      %v774 = vadd.f32 %v657, %v773
      %775 = vmatmul.f32.gmra.mxu0 %v635
      %v776 = vpop.f32.mrf.mxu0
      %v777 = vadd.f32 %v657, %v776
      %778 = vdwg.mxu0
      %779 = vmatpush.msra.mxu0 0.0
      %780 = vmatpush.msra.mxu0 0.0
      %781 = vmatpush.msra.mxu0 0.0
      %782 = vmatpush.msra.mxu0 0.0
      %783 = vmatpush.msra.mxu0 0.0
      %784 = vmatpush.msra.mxu0 0.0
      %785 = vmatpush.msra.mxu0 0.0
      %786 = vmatpush.msra.mxu0 0.0
      %787 = vmatpush.msra.mxu0 0.0
      %788 = vmatpush.msra.mxu0 0.0
      %789 = vmatpush.msra.mxu0 0.0
      %790 = vmatpush.msra.mxu0 0.0
      %791 = vmatpush.msra.mxu0 0.0
      %792 = vmatpush.msra.mxu0 0.0
      %793 = vmatpush.msra.mxu0 %v654
      %794 = vmatpush.msra.mxu0 %v653
      %795 = vmatmul.f32.gmra.mxu0 %v661
      %v796 = vpop.f32.mrf.mxu0
      %v797 = vadd.f32 %v729, %v796
      %798 = vmatmul.f32.gmra.mxu0 %v664
      %v799 = vpop.f32.mrf.mxu0
      %v800 = vadd.f32 %v732, %v799
      %801 = vmatmul.f32.gmra.mxu0 %v667
      %v802 = vpop.f32.mrf.mxu0
      %v803 = vadd.f32 %v735, %v802
      %804 = vmatmul.f32.gmra.mxu0 %v670
      %v805 = vpop.f32.mrf.mxu0
      %v806 = vadd.f32 %v738, %v805
      %807 = vmatmul.f32.gmra.mxu0 %v673
      %v808 = vpop.f32.mrf.mxu0
      %v809 = vadd.f32 %v741, %v808
      %810 = vmatmul.f32.gmra.mxu0 %v676
      %v811 = vpop.f32.mrf.mxu0
      %v812 = vadd.f32 %v744, %v811
      %813 = vmatmul.f32.gmra.mxu0 %v679
      %v814 = vpop.f32.mrf.mxu0
      %v815 = vadd.f32 %v747, %v814
      %816 = vmatmul.f32.gmra.mxu0 %v682
      %v817 = vpop.f32.mrf.mxu0
      %v818 = vadd.f32 %v750, %v817
      %819 = vmatmul.f32.gmra.mxu0 %v685
      %v820 = vpop.f32.mrf.mxu0
      %v821 = vadd.f32 %v753, %v820
      %822 = vmatmul.f32.gmra.mxu0 %v688
      %v823 = vpop.f32.mrf.mxu0
      %v824 = vadd.f32 %v756, %v823
      %825 = vmatmul.f32.gmra.mxu0 %v691
      %v826 = vpop.f32.mrf.mxu0
      %v827 = vadd.f32 %v759, %v826
      %828 = vmatmul.f32.gmra.mxu0 %v694
      %v829 = vpop.f32.mrf.mxu0
      %v830 = vadd.f32 %v762, %v829
      %831 = vmatmul.f32.gmra.mxu0 %v697
      %v832 = vpop.f32.mrf.mxu0
      %v833 = vadd.f32 %v765, %v832
      %834 = vmatmul.f32.gmra.mxu0 %v700
      %v835 = vpop.f32.mrf.mxu0
      %v836 = vadd.f32 %v768, %v835
      %837 = vmatmul.f32.gmra.mxu0 %v703
      %v838 = vpop.f32.mrf.mxu0
      %v839 = vadd.f32 %v771, %v838
      %840 = vmatmul.f32.gmra.mxu0 %v706
      %v841 = vpop.f32.mrf.mxu0
      %v842 = vadd.f32 %v774, %v841
      %843 = vmatmul.f32.gmra.mxu0 %v709
      %v844 = vpop.f32.mrf.mxu0
      %v845 = vadd.f32 %v777, %v844
      %846 = vdwg.mxu0
      %v847 = vld [vmem:[%s3] sm:$0xff]
      %v848 = vld [vmem:[%s3 + $0x8] sm:$0xff]
      %v849 = vld [vmem:[%s3 + $0x10] sm:$0xff]
      %v850 = vld [vmem:[%s3 + $0x18] sm:$0xff]
      %v851 = vld [vmem:[%s3 + $0x20] sm:$0xff]
      %v852 = vld [vmem:[%s3 + $0x28] sm:$0xff]
      %v853 = vld [vmem:[%s3 + $0x30] sm:$0xff]
      %v854 = vld [vmem:[%s3 + $0x38] sm:$0xff]
      %v855 = vld [vmem:[%s3 + $0x40] sm:$0xff]
      %v856 = vld [vmem:[%s3 + $0x48] sm:$0xff]
      %v857 = vld [vmem:[%s3 + $0x50] sm:$0xff]
      %v858 = vld [vmem:[%s3 + $0x58] sm:$0xff]
      %v859 = vld [vmem:[%s3 + $0x60] sm:$0xff]
      %v860 = vld [vmem:[%s3 + $0x68] sm:$0xff]
      %v861 = vld [vmem:[%s3 + $0x70] sm:$0xff]
      %v862 = vld [vmem:[%s3 + $0x78] sm:$0xff]
      %v863 = vld [vmem:[%s3 + $0x80] sm:$0xff]
      %v864 = vld [vmem:[%s4] sm:$0xff]
      %v865 = vld [vmem:[%s4 + $0x8] sm:$0xff]
      %v866 = vld [vmem:[%s4 + $0x10] sm:$0xff]
      %v867 = vld [vmem:[%s4 + $0x18] sm:$0xff]
      %v868 = vld [vmem:[%s4 + $0x20] sm:$0xff]
      %v869 = vld [vmem:[%s4 + $0x28] sm:$0xff]
      %v870 = vld [vmem:[%s4 + $0x30] sm:$0xff]
      %v871 = vld [vmem:[%s4 + $0x38] sm:$0xff]
      %v872 = vld [vmem:[%s4 + $0x40] sm:$0xff]
      %v873 = vld [vmem:[%s4 + $0x48] sm:$0xff]
      %v874 = vld [vmem:[%s4 + $0x50] sm:$0xff]
      %v875 = vld [vmem:[%s4 + $0x58] sm:$0xff]
      %v876 = vld [vmem:[%s4 + $0x60] sm:$0xff]
      %v877 = vld [vmem:[%s4 + $0x68] sm:$0xff]
      %v878 = vld [vmem:[%s4 + $0x70] sm:$0xff]
      %v879 = vld [vmem:[%s4 + $0x78] sm:$0xff]
      %v880 = vld [vmem:[%s4 + $0x80] sm:$0xff]
      %v881 = vadd.f32 %v797, %v800
      %v882 = vadd.f32 %v881, %v803
      %v883 = vadd.f32 %v882, %v806
      %v884 = vadd.f32 %v883, %v809
      %v885 = vadd.f32 %v884, %v812
      %v886 = vadd.f32 %v885, %v815
      %v887 = vadd.f32 %v886, %v818
      %v888 = vadd.f32 %v887, %v821
      %v889 = vadd.f32 %v888, %v824
      %v890 = vadd.f32 %v889, %v827
      %v891 = vadd.f32 %v890, %v830
      %v892 = vadd.f32 %v891, %v833
      %v893 = vadd.f32 %v892, %v836
      %v894 = vadd.f32 %v893, %v839
      %v895 = vadd.f32 %v894, %v842
      %v896 = vadd.f32 %v895, %v845
      %v897 = vrot.slane %v896, 4
      %v898 = vadd.f32 %v896, %v897
      %v899 = vrot.slane %v898, 2
      %v900 = vadd.f32 %v898, %v899
      %v901 = vrot.slane %v900, 1
      %v902 = vadd.f32 %v900, %v901
      %v903 = vrcp.pop 136.0
      %v904 = vmul.f32 136.0, %v903
      %v905 = vsub.f32 1.0, %v904
      %v906 = vmul.f32 %v903, %v905
      %v907 = vadd.f32 %v903, %v906
      %vm908 = vweird.f32 %v903
      %v909 = vsel %vm908, %v903, %v907
      %v910 = vmul.f32 %v902, %v909
      %v911 = vsub.f32 %v797, %v910
      %v912 = vsub.f32 %v800, %v910
      %v913 = vsub.f32 %v803, %v910
      %v914 = vsub.f32 %v806, %v910
      %v915 = vsub.f32 %v809, %v910
      %v916 = vsub.f32 %v812, %v910
      %v917 = vsub.f32 %v815, %v910
      %v918 = vsub.f32 %v818, %v910
      %v919 = vsub.f32 %v821, %v910
      %v920 = vsub.f32 %v824, %v910
      %v921 = vsub.f32 %v827, %v910
      %v922 = vsub.f32 %v830, %v910
      %v923 = vsub.f32 %v833, %v910
      %v924 = vsub.f32 %v836, %v910
      %v925 = vsub.f32 %v839, %v910
      %v926 = vsub.f32 %v842, %v910
      %v927 = vsub.f32 %v845, %v910
      %v928 = vmul.f32 %v911, %v911
      %v929 = vmul.f32 %v912, %v912
      %v930 = vmul.f32 %v913, %v913
      %v931 = vmul.f32 %v914, %v914
      %v932 = vmul.f32 %v915, %v915
      %v933 = vmul.f32 %v916, %v916
      %v934 = vmul.f32 %v917, %v917
      %v935 = vmul.f32 %v918, %v918
      %v936 = vmul.f32 %v919, %v919
      %v937 = vmul.f32 %v920, %v920
      %v938 = vmul.f32 %v921, %v921
      %v939 = vmul.f32 %v922, %v922
      %v940 = vmul.f32 %v923, %v923
      %v941 = vmul.f32 %v924, %v924
      %v942 = vmul.f32 %v925, %v925
      %v943 = vmul.f32 %v926, %v926
      %v944 = vmul.f32 %v927, %v927
      %v945 = vadd.f32 %v928, %v929
      %v946 = vadd.f32 %v945, %v930
      %v947 = vadd.f32 %v946, %v931
      %v948 = vadd.f32 %v947, %v932
      %v949 = vadd.f32 %v948, %v933
      %v950 = vadd.f32 %v949, %v934
      %v951 = vadd.f32 %v950, %v935
      %v952 = vadd.f32 %v951, %v936
      %v953 = vadd.f32 %v952, %v937
      %v954 = vadd.f32 %v953, %v938
      %v955 = vadd.f32 %v954, %v939
      %v956 = vadd.f32 %v955, %v940
      %v957 = vadd.f32 %v956, %v941
      %v958 = vadd.f32 %v957, %v942
      %v959 = vadd.f32 %v958, %v943
      %v960 = vadd.f32 %v959, %v944
      %v961 = vrot.slane %v960, 4
      %v962 = vadd.f32 %v960, %v961
      %v963 = vrot.slane %v962, 2
      %v964 = vadd.f32 %v962, %v963
      %v965 = vrot.slane %v964, 1
      %v966 = vadd.f32 %v964, %v965
      %v967 = vmul.f32 %v966, %v909
      %v968 = vadd.f32 %v967, 1e-05
      %v969 = vrsqrt.pop %v968
      %v970 = vmul.f32 %v969, %v968
      %v971 = vmul.f32 %v970, %v969
      %v972 = vmul.f32 0.5, %v971
      %v973 = vsub.f32 1.5, %v972
      %v974 = vmul.f32 %v969, %v973
      %vm975 = vweird.f32 %v968
      %vm976 = vweird.f32 %v969
      %vm977 = vmor %vm975, %vm976
      %v978 = vsel %vm977, %v969, %v974
      %v979 = vmul.f32 %v911, %v978
      %v980 = vmul.f32 %v912, %v978
      %v981 = vmul.f32 %v913, %v978
      %v982 = vmul.f32 %v914, %v978
      %v983 = vmul.f32 %v915, %v978
      %v984 = vmul.f32 %v916, %v978
      %v985 = vmul.f32 %v917, %v978
      %v986 = vmul.f32 %v918, %v978
      %v987 = vmul.f32 %v919, %v978
      %v988 = vmul.f32 %v920, %v978
      %v989 = vmul.f32 %v921, %v978
      %v990 = vmul.f32 %v922, %v978
      %v991 = vmul.f32 %v923, %v978
      %v992 = vmul.f32 %v924, %v978
      %v993 = vmul.f32 %v925, %v978
      %v994 = vmul.f32 %v926, %v978
      %v995 = vmul.f32 %v927, %v978
      %997 = vset.pattern.permute.xlu0 0
      %998 = vperm.xlu0 %997, %v847
      %v999 = vpop.permute.xlu0 %998
      %1002 = vset.pattern.permute.xlu0 0
      %1003 = vperm.xlu0 %1002, %v848
      %v1004 = vpop.permute.xlu0 %1003
      %1007 = vset.pattern.permute.xlu0 0
      %1008 = vperm.xlu0 %1007, %v849
      %v1009 = vpop.permute.xlu0 %1008
      %1012 = vset.pattern.permute.xlu0 0
      %1013 = vperm.xlu0 %1012, %v850
      %v1014 = vpop.permute.xlu0 %1013
      %1017 = vset.pattern.permute.xlu0 0
      %1018 = vperm.xlu0 %1017, %v851
      %v1019 = vpop.permute.xlu0 %1018
      %1022 = vset.pattern.permute.xlu0 0
      %1023 = vperm.xlu0 %1022, %v852
      %v1024 = vpop.permute.xlu0 %1023
      %1027 = vset.pattern.permute.xlu0 0
      %1028 = vperm.xlu0 %1027, %v853
      %v1029 = vpop.permute.xlu0 %1028
      %1032 = vset.pattern.permute.xlu0 0
      %1033 = vperm.xlu0 %1032, %v854
      %v1034 = vpop.permute.xlu0 %1033
      %1037 = vset.pattern.permute.xlu0 0
      %1038 = vperm.xlu0 %1037, %v855
      %v1039 = vpop.permute.xlu0 %1038
      %1042 = vset.pattern.permute.xlu0 0
      %1043 = vperm.xlu0 %1042, %v856
      %v1044 = vpop.permute.xlu0 %1043
      %1047 = vset.pattern.permute.xlu0 0
      %1048 = vperm.xlu0 %1047, %v857
      %v1049 = vpop.permute.xlu0 %1048
      %1052 = vset.pattern.permute.xlu0 0
      %1053 = vperm.xlu0 %1052, %v858
      %v1054 = vpop.permute.xlu0 %1053
      %1057 = vset.pattern.permute.xlu0 0
      %1058 = vperm.xlu0 %1057, %v859
      %v1059 = vpop.permute.xlu0 %1058
      %1062 = vset.pattern.permute.xlu0 0
      %1063 = vperm.xlu0 %1062, %v860
      %v1064 = vpop.permute.xlu0 %1063
      %1067 = vset.pattern.permute.xlu0 0
      %1068 = vperm.xlu0 %1067, %v861
      %v1069 = vpop.permute.xlu0 %1068
      %1072 = vset.pattern.permute.xlu0 0
      %1073 = vperm.xlu0 %1072, %v862
      %v1074 = vpop.permute.xlu0 %1073
      %1077 = vset.pattern.permute.xlu0 0
      %1078 = vperm.xlu0 %1077, %v863
      %v1079 = vpop.permute.xlu0 %1078
      %v1081 = vmul.f32 %v979, %v999
      %v1082 = vmul.f32 %v980, %v1004
      %v1083 = vmul.f32 %v981, %v1009
      %v1084 = vmul.f32 %v982, %v1014
      %v1085 = vmul.f32 %v983, %v1019
      %v1086 = vmul.f32 %v984, %v1024
      %v1087 = vmul.f32 %v985, %v1029
      %v1088 = vmul.f32 %v986, %v1034
      %v1089 = vmul.f32 %v987, %v1039
      %v1090 = vmul.f32 %v988, %v1044
      %v1091 = vmul.f32 %v989, %v1049
      %v1092 = vmul.f32 %v990, %v1054
      %v1093 = vmul.f32 %v991, %v1059
      %v1094 = vmul.f32 %v992, %v1064
      %v1095 = vmul.f32 %v993, %v1069
      %v1096 = vmul.f32 %v994, %v1074
      %v1097 = vmul.f32 %v995, %v1079
      %1099 = vset.pattern.permute.xlu0 0
      %1100 = vperm.xlu0 %1099, %v864
      %v1101 = vpop.permute.xlu0 %1100
      %1104 = vset.pattern.permute.xlu0 0
      %1105 = vperm.xlu0 %1104, %v865
      %v1106 = vpop.permute.xlu0 %1105
      %1109 = vset.pattern.permute.xlu0 0
      %1110 = vperm.xlu0 %1109, %v866
      %v1111 = vpop.permute.xlu0 %1110
      %1114 = vset.pattern.permute.xlu0 0
      %1115 = vperm.xlu0 %1114, %v867
      %v1116 = vpop.permute.xlu0 %1115
      %1119 = vset.pattern.permute.xlu0 0
      %1120 = vperm.xlu0 %1119, %v868
      %v1121 = vpop.permute.xlu0 %1120
      %1124 = vset.pattern.permute.xlu0 0
      %1125 = vperm.xlu0 %1124, %v869
      %v1126 = vpop.permute.xlu0 %1125
      %1129 = vset.pattern.permute.xlu0 0
      %1130 = vperm.xlu0 %1129, %v870
      %v1131 = vpop.permute.xlu0 %1130
      %1134 = vset.pattern.permute.xlu0 0
      %1135 = vperm.xlu0 %1134, %v871
      %v1136 = vpop.permute.xlu0 %1135
      %1139 = vset.pattern.permute.xlu0 0
      %1140 = vperm.xlu0 %1139, %v872
      %v1141 = vpop.permute.xlu0 %1140
      %1144 = vset.pattern.permute.xlu0 0
      %1145 = vperm.xlu0 %1144, %v873
      %v1146 = vpop.permute.xlu0 %1145
      %1149 = vset.pattern.permute.xlu0 0
      %1150 = vperm.xlu0 %1149, %v874
      %v1151 = vpop.permute.xlu0 %1150
      %1154 = vset.pattern.permute.xlu0 0
      %1155 = vperm.xlu0 %1154, %v875
      %v1156 = vpop.permute.xlu0 %1155
      %1159 = vset.pattern.permute.xlu0 0
      %1160 = vperm.xlu0 %1159, %v876
      %v1161 = vpop.permute.xlu0 %1160
      %1164 = vset.pattern.permute.xlu0 0
      %1165 = vperm.xlu0 %1164, %v877
      %v1166 = vpop.permute.xlu0 %1165
      %1169 = vset.pattern.permute.xlu0 0
      %1170 = vperm.xlu0 %1169, %v878
      %v1171 = vpop.permute.xlu0 %1170
      %1174 = vset.pattern.permute.xlu0 0
      %1175 = vperm.xlu0 %1174, %v879
      %v1176 = vpop.permute.xlu0 %1175
      %1179 = vset.pattern.permute.xlu0 0
      %1180 = vperm.xlu0 %1179, %v880
      %v1181 = vpop.permute.xlu0 %1180
      %v1183 = vadd.f32 %v1081, %v1101
      %v1184 = vadd.f32 %v1082, %v1106
      %v1185 = vadd.f32 %v1083, %v1111
      %v1186 = vadd.f32 %v1084, %v1116
      %v1187 = vadd.f32 %v1085, %v1121
      %v1188 = vadd.f32 %v1086, %v1126
      %v1189 = vadd.f32 %v1087, %v1131
      %v1190 = vadd.f32 %v1088, %v1136
      %v1191 = vadd.f32 %v1089, %v1141
      %v1192 = vadd.f32 %v1090, %v1146
      %v1193 = vadd.f32 %v1091, %v1151
      %v1194 = vadd.f32 %v1092, %v1156
      %v1195 = vadd.f32 %v1093, %v1161
      %v1196 = vadd.f32 %v1094, %v1166
      %v1197 = vadd.f32 %v1095, %v1171
      %v1198 = vadd.f32 %v1096, %v1176
      %v1199 = vadd.f32 %v1097, %v1181
      %v1200 = vld [vmem:[%s5] sm:$0xff]
      %v1201 = vld [vmem:[%s5 + $0x8] sm:$0xff]
      %v1202 = vld [vmem:[%s5 + $0x10] sm:$0xff]
      %v1203 = vld [vmem:[%s5 + $0x18] sm:$0xff]
      %v1204 = vld [vmem:[%s5 + $0x20] sm:$0xff]
      %v1205 = vld [vmem:[%s5 + $0x28] sm:$0xff]
      %v1206 = vld [vmem:[%s5 + $0x30] sm:$0xff]
      %v1207 = vld [vmem:[%s5 + $0x38] sm:$0xff]
      %v1208 = vld [vmem:[%s5 + $0x40] sm:$0xff]
      %v1209 = vld [vmem:[%s5 + $0x48] sm:$0xff]
      %v1210 = vld [vmem:[%s5 + $0x50] sm:$0xff]
      %v1211 = vld [vmem:[%s5 + $0x58] sm:$0xff]
      %v1212 = vld [vmem:[%s5 + $0x60] sm:$0xff]
      %v1213 = vld [vmem:[%s5 + $0x68] sm:$0xff]
      %v1214 = vld [vmem:[%s5 + $0x70] sm:$0xff]
      %v1215 = vld [vmem:[%s5 + $0x78] sm:$0xff]
      %v1216 = vld [vmem:[%s5 + $0x80] sm:$0xff]
      %v1217 = vld [vmem:[%s6] sm:$0x1]
      %v1219 = vperm.slane %v1217, 0
      %1221 = vxpose.xlu0.b32.start [1/16] %v1183, 128
      %1222 = vxpose.xlu0.b32.cont [2/16] %v1184, 128
      %1223 = vxpose.xlu0.b32.cont [3/16] %v1185, 128
      %1224 = vxpose.xlu0.b32.cont [4/16] %v1186, 128
      %1225 = vxpose.xlu0.b32.cont [5/16] %v1187, 128
      %1226 = vxpose.xlu0.b32.cont [6/16] %v1188, 128
      %1227 = vxpose.xlu0.b32.cont [7/16] %v1189, 128
      %1228 = vxpose.xlu0.b32.cont [8/16] %v1190, 128
      %1229 = vxpose.xlu0.b32.cont [9/16] %v1191, 128
      %1230 = vxpose.xlu0.b32.cont [10/16] %v1192, 128
      %1231 = vxpose.xlu0.b32.cont [11/16] %v1193, 128
      %1232 = vxpose.xlu0.b32.cont [12/16] %v1194, 128
      %1233 = vxpose.xlu0.b32.cont [13/16] %v1195, 128
      %1234 = vxpose.xlu0.b32.cont [14/16] %v1196, 128
      %1235 = vxpose.xlu0.b32.cont [15/16] %v1197, 128
      %1236 = vxpose.xlu0.b32.end [16/16] %v1198, 128
      %v1237 = vpop.trf.xlu0
      %v1238 = vpop.trf.xlu0
      %v1239 = vpop.trf.xlu0
      %v1240 = vpop.trf.xlu0
      %v1241 = vpop.trf.xlu0
      %v1242 = vpop.trf.xlu0
      %v1243 = vpop.trf.xlu0
      %v1244 = vpop.trf.xlu0
      %v1245 = vpop.trf.xlu0
      %v1246 = vpop.trf.xlu0
      %v1247 = vpop.trf.xlu0
      %v1248 = vpop.trf.xlu0
      %v1249 = vpop.trf.xlu0
      %v1250 = vpop.trf.xlu0
      %v1251 = vpop.trf.xlu0
      %v1252 = vpop.trf.xlu0
      %1253 = vxpose.xlu0.b32.start [1/16] %v1199, 128
      %1254 = vxpose.xlu0.b32.cont [2/16] 0.0, 128
      %1255 = vxpose.xlu0.b32.cont [3/16] 0.0, 128
      %1256 = vxpose.xlu0.b32.cont [4/16] 0.0, 128
      %1257 = vxpose.xlu0.b32.cont [5/16] 0.0, 128
      %1258 = vxpose.xlu0.b32.cont [6/16] 0.0, 128
      %1259 = vxpose.xlu0.b32.cont [7/16] 0.0, 128
      %1260 = vxpose.xlu0.b32.cont [8/16] 0.0, 128
      %1261 = vxpose.xlu0.b32.cont [9/16] 0.0, 128
      %1262 = vxpose.xlu0.b32.cont [10/16] 0.0, 128
      %1263 = vxpose.xlu0.b32.cont [11/16] 0.0, 128
      %1264 = vxpose.xlu0.b32.cont [12/16] 0.0, 128
      %1265 = vxpose.xlu0.b32.cont [13/16] 0.0, 128
      %1266 = vxpose.xlu0.b32.cont [14/16] 0.0, 128
      %1267 = vxpose.xlu0.b32.cont [15/16] 0.0, 128
      %1268 = vxpose.xlu0.b32.end [16/16] 0.0, 128
      %v1269 = vpop.trf.xlu0
      %v1270 = vpop.trf.xlu0
      %v1271 = vpop.trf.xlu0
      %v1272 = vpop.trf.xlu0
      %v1273 = vpop.trf.xlu0
      %v1274 = vpop.trf.xlu0
      %v1275 = vpop.trf.xlu0
      %v1276 = vpop.trf.xlu0
      %v1277 = vpop.trf.xlu0
      %v1278 = vpop.trf.xlu0
      %v1279 = vpop.trf.xlu0
      %v1280 = vpop.trf.xlu0
      %v1281 = vpop.trf.xlu0
      %v1282 = vpop.trf.xlu0
      %v1283 = vpop.trf.xlu0
      %v1284 = vpop.trf.xlu0
      %vm1285 = vcmask 64512
      %v1287 = vsel %vm1285, %v1269, 0
      %v1290 = vsel %vm1285, %v1270, 0
      %v1293 = vsel %vm1285, %v1271, 0
      %v1296 = vsel %vm1285, %v1272, 0
      %v1299 = vsel %vm1285, %v1273, 0
      %v1302 = vsel %vm1285, %v1274, 0
      %v1305 = vsel %vm1285, %v1275, 0
      %v1308 = vsel %vm1285, %v1276, 0
      %v1311 = vsel %vm1285, %v1277, 0
      %v1314 = vsel %vm1285, %v1278, 0
      %v1317 = vsel %vm1285, %v1279, 0
      %v1320 = vsel %vm1285, %v1280, 0
      %v1323 = vsel %vm1285, %v1281, 0
      %v1326 = vsel %vm1285, %v1282, 0
      %v1329 = vsel %vm1285, %v1283, 0
      %v1332 = vsel %vm1285, %v1284, 0
      %1334 = vmatpush.msra.mxu0 %v1215
      %1335 = vmatpush.msra.mxu0 %v1214
      %1336 = vmatpush.msra.mxu0 %v1213
      %1337 = vmatpush.msra.mxu0 %v1212
      %1338 = vmatpush.msra.mxu0 %v1211
      %1339 = vmatpush.msra.mxu0 %v1210
      %1340 = vmatpush.msra.mxu0 %v1209
      %1341 = vmatpush.msra.mxu0 %v1208
      %1342 = vmatpush.msra.mxu0 %v1207
      %1343 = vmatpush.msra.mxu0 %v1206
      %1344 = vmatpush.msra.mxu0 %v1205
      %1345 = vmatpush.msra.mxu0 %v1204
      %1346 = vmatpush.msra.mxu0 %v1203
      %1347 = vmatpush.msra.mxu0 %v1202
      %1348 = vmatpush.msra.mxu0 %v1201
      %1349 = vmatpush.msra.mxu0 %v1200
      %1350 = vmatmul.f32.gmra.mxu0 %v1237
      %v1351 = vpop.f32.mrf.mxu0
      %v1352 = vadd.f32 %v1219, %v1351
      %1353 = vmatmul.f32.gmra.mxu0 %v1238
      %v1354 = vpop.f32.mrf.mxu0
      %v1355 = vadd.f32 %v1219, %v1354
      %1356 = vmatmul.f32.gmra.mxu0 %v1239
      %v1357 = vpop.f32.mrf.mxu0
      %v1358 = vadd.f32 %v1219, %v1357
      %1359 = vmatmul.f32.gmra.mxu0 %v1240
      %v1360 = vpop.f32.mrf.mxu0
      %v1361 = vadd.f32 %v1219, %v1360
      %1362 = vmatmul.f32.gmra.mxu0 %v1241
      %v1363 = vpop.f32.mrf.mxu0
      %v1364 = vadd.f32 %v1219, %v1363
      %1365 = vmatmul.f32.gmra.mxu0 %v1242
      %v1366 = vpop.f32.mrf.mxu0
      %v1367 = vadd.f32 %v1219, %v1366
      %1368 = vmatmul.f32.gmra.mxu0 %v1243
      %v1369 = vpop.f32.mrf.mxu0
      %v1370 = vadd.f32 %v1219, %v1369
      %1371 = vmatmul.f32.gmra.mxu0 %v1244
      %v1372 = vpop.f32.mrf.mxu0
      %v1373 = vadd.f32 %v1219, %v1372
      %1374 = vmatmul.f32.gmra.mxu0 %v1245
      %v1375 = vpop.f32.mrf.mxu0
      %v1376 = vadd.f32 %v1219, %v1375
      %1377 = vmatmul.f32.gmra.mxu0 %v1246
      %v1378 = vpop.f32.mrf.mxu0
      %v1379 = vadd.f32 %v1219, %v1378
      %1380 = vmatmul.f32.gmra.mxu0 %v1247
      %v1381 = vpop.f32.mrf.mxu0
      %v1382 = vadd.f32 %v1219, %v1381
      %1383 = vmatmul.f32.gmra.mxu0 %v1248
      %v1384 = vpop.f32.mrf.mxu0
      %v1385 = vadd.f32 %v1219, %v1384
      %1386 = vmatmul.f32.gmra.mxu0 %v1249
      %v1387 = vpop.f32.mrf.mxu0
      %v1388 = vadd.f32 %v1219, %v1387
      %1389 = vmatmul.f32.gmra.mxu0 %v1250
      %v1390 = vpop.f32.mrf.mxu0
      %v1391 = vadd.f32 %v1219, %v1390
      %1392 = vmatmul.f32.gmra.mxu0 %v1251
      %v1393 = vpop.f32.mrf.mxu0
      %v1394 = vadd.f32 %v1219, %v1393
      %1395 = vmatmul.f32.gmra.mxu0 %v1252
      %v1396 = vpop.f32.mrf.mxu0
      %v1397 = vadd.f32 %v1219, %v1396
      %1398 = vdwg.mxu0
      %1399 = vmatpush.msra.mxu0 0.0
      %1400 = vmatpush.msra.mxu0 0.0
      %1401 = vmatpush.msra.mxu0 0.0
      %1402 = vmatpush.msra.mxu0 0.0
      %1403 = vmatpush.msra.mxu0 0.0
      %1404 = vmatpush.msra.mxu0 0.0
      %1405 = vmatpush.msra.mxu0 0.0
      %1406 = vmatpush.msra.mxu0 0.0
      %1407 = vmatpush.msra.mxu0 0.0
      %1408 = vmatpush.msra.mxu0 0.0
      %1409 = vmatpush.msra.mxu0 0.0
      %1410 = vmatpush.msra.mxu0 0.0
      %1411 = vmatpush.msra.mxu0 0.0
      %1412 = vmatpush.msra.mxu0 0.0
      %1413 = vmatpush.msra.mxu0 0.0
      %1414 = vmatpush.msra.mxu0 %v1216
      %1415 = vmatmul.f32.gmra.mxu0 %v1287
      %v1416 = vpop.f32.mrf.mxu0
      %v1417 = vadd.f32 %v1352, %v1416
      %1418 = vmatmul.f32.gmra.mxu0 %v1290
      %v1419 = vpop.f32.mrf.mxu0
      %v1420 = vadd.f32 %v1355, %v1419
      %1421 = vmatmul.f32.gmra.mxu0 %v1293
      %v1422 = vpop.f32.mrf.mxu0
      %v1423 = vadd.f32 %v1358, %v1422
      %1424 = vmatmul.f32.gmra.mxu0 %v1296
      %v1425 = vpop.f32.mrf.mxu0
      %v1426 = vadd.f32 %v1361, %v1425
      %1427 = vmatmul.f32.gmra.mxu0 %v1299
      %v1428 = vpop.f32.mrf.mxu0
      %v1429 = vadd.f32 %v1364, %v1428
      %1430 = vmatmul.f32.gmra.mxu0 %v1302
      %v1431 = vpop.f32.mrf.mxu0
      %v1432 = vadd.f32 %v1367, %v1431
      %1433 = vmatmul.f32.gmra.mxu0 %v1305
      %v1434 = vpop.f32.mrf.mxu0
      %v1435 = vadd.f32 %v1370, %v1434
      %1436 = vmatmul.f32.gmra.mxu0 %v1308
      %v1437 = vpop.f32.mrf.mxu0
      %v1438 = vadd.f32 %v1373, %v1437
      %1439 = vmatmul.f32.gmra.mxu0 %v1311
      %v1440 = vpop.f32.mrf.mxu0
      %v1441 = vadd.f32 %v1376, %v1440
      %1442 = vmatmul.f32.gmra.mxu0 %v1314
      %v1443 = vpop.f32.mrf.mxu0
      %v1444 = vadd.f32 %v1379, %v1443
      %1445 = vmatmul.f32.gmra.mxu0 %v1317
      %v1446 = vpop.f32.mrf.mxu0
      %v1447 = vadd.f32 %v1382, %v1446
      %1448 = vmatmul.f32.gmra.mxu0 %v1320
      %v1449 = vpop.f32.mrf.mxu0
      %v1450 = vadd.f32 %v1385, %v1449
      %1451 = vmatmul.f32.gmra.mxu0 %v1323
      %v1452 = vpop.f32.mrf.mxu0
      %v1453 = vadd.f32 %v1388, %v1452
      %1454 = vmatmul.f32.gmra.mxu0 %v1326
      %v1455 = vpop.f32.mrf.mxu0
      %v1456 = vadd.f32 %v1391, %v1455
      %1457 = vmatmul.f32.gmra.mxu0 %v1329
      %v1458 = vpop.f32.mrf.mxu0
      %v1459 = vadd.f32 %v1394, %v1458
      %1460 = vmatmul.f32.gmra.mxu0 %v1332
      %v1461 = vpop.f32.mrf.mxu0
      %v1462 = vadd.f32 %v1397, %v1461
      %1463 = vdwg.mxu0
      %v1464 = vmul.f32 %v1417, 0.5
      %v1465 = vmul.f32 %v1420, 0.5
      %v1466 = vmul.f32 %v1423, 0.5
      %v1467 = vmul.f32 %v1426, 0.5
      %v1468 = vmul.f32 %v1429, 0.5
      %v1469 = vmul.f32 %v1432, 0.5
      %v1470 = vmul.f32 %v1435, 0.5
      %v1471 = vmul.f32 %v1438, 0.5
      %v1472 = vmul.f32 %v1441, 0.5
      %v1473 = vmul.f32 %v1444, 0.5
      %v1474 = vmul.f32 %v1447, 0.5
      %v1475 = vmul.f32 %v1450, 0.5
      %v1476 = vmul.f32 %v1453, 0.5
      %v1477 = vmul.f32 %v1456, 0.5
      %v1478 = vmul.f32 %v1459, 0.5
      %v1479 = vmul.f32 %v1462, 0.5
      %v1480 = vmul.f32 %v1417, 0.70710677
      %v1481 = vmul.f32 %v1420, 0.70710677
      %v1482 = vmul.f32 %v1423, 0.70710677
      %v1483 = vmul.f32 %v1426, 0.70710677
      %v1484 = vmul.f32 %v1429, 0.70710677
      %v1485 = vmul.f32 %v1432, 0.70710677
      %v1486 = vmul.f32 %v1435, 0.70710677
      %v1487 = vmul.f32 %v1438, 0.70710677
      %v1488 = vmul.f32 %v1441, 0.70710677
      %v1489 = vmul.f32 %v1444, 0.70710677
      %v1490 = vmul.f32 %v1447, 0.70710677
      %v1491 = vmul.f32 %v1450, 0.70710677
      %v1492 = vmul.f32 %v1453, 0.70710677
      %v1493 = vmul.f32 %v1456, 0.70710677
      %v1494 = vmul.f32 %v1459, 0.70710677
      %v1495 = vmul.f32 %v1462, 0.70710677
      %vm1496 = vcmp.ge.f32.partialorder %v1480, 0.0
      %vm1497 = vcmp.ge.f32.partialorder %v1481, 0.0
      %vm1498 = vcmp.ge.f32.partialorder %v1482, 0.0
      %vm1499 = vcmp.ge.f32.partialorder %v1483, 0.0
      %vm1500 = vcmp.ge.f32.partialorder %v1484, 0.0
      %vm1501 = vcmp.ge.f32.partialorder %v1485, 0.0
      %vm1502 = vcmp.ge.f32.partialorder %v1486, 0.0
      %vm1503 = vcmp.ge.f32.partialorder %v1487, 0.0
      %vm1504 = vcmp.ge.f32.partialorder %v1488, 0.0
      %vm1505 = vcmp.ge.f32.partialorder %v1489, 0.0
      %vm1506 = vcmp.ge.f32.partialorder %v1490, 0.0
      %vm1507 = vcmp.ge.f32.partialorder %v1491, 0.0
      %vm1508 = vcmp.ge.f32.partialorder %v1492, 0.0
      %vm1509 = vcmp.ge.f32.partialorder %v1493, 0.0
      %vm1510 = vcmp.ge.f32.partialorder %v1494, 0.0
      %vm1511 = vcmp.ge.f32.partialorder %v1495, 0.0
      %v1512 = vsel %vm1496, 1.0, -1.0
      %v1513 = vsel %vm1497, 1.0, -1.0
      %v1514 = vsel %vm1498, 1.0, -1.0
      %v1515 = vsel %vm1499, 1.0, -1.0
      %v1516 = vsel %vm1500, 1.0, -1.0
      %v1517 = vsel %vm1501, 1.0, -1.0
      %v1518 = vsel %vm1502, 1.0, -1.0
      %v1519 = vsel %vm1503, 1.0, -1.0
      %v1520 = vsel %vm1504, 1.0, -1.0
      %v1521 = vsel %vm1505, 1.0, -1.0
      %v1522 = vsel %vm1506, 1.0, -1.0
      %v1523 = vsel %vm1507, 1.0, -1.0
      %v1524 = vsel %vm1508, 1.0, -1.0
      %v1525 = vsel %vm1509, 1.0, -1.0
      %v1526 = vsel %vm1510, 1.0, -1.0
      %v1527 = vsel %vm1511, 1.0, -1.0
      %v1528 = vand.u32 2147483647, %v1480
      %v1529 = vand.u32 2147483647, %v1481
      %v1530 = vand.u32 2147483647, %v1482
      %v1531 = vand.u32 2147483647, %v1483
      %v1532 = vand.u32 2147483647, %v1484
      %v1533 = vand.u32 2147483647, %v1485
      %v1534 = vand.u32 2147483647, %v1486
      %v1535 = vand.u32 2147483647, %v1487
      %v1536 = vand.u32 2147483647, %v1488
      %v1537 = vand.u32 2147483647, %v1489
      %v1538 = vand.u32 2147483647, %v1490
      %v1539 = vand.u32 2147483647, %v1491
      %v1540 = vand.u32 2147483647, %v1492
      %v1541 = vand.u32 2147483647, %v1493
      %v1542 = vand.u32 2147483647, %v1494
      %v1543 = vand.u32 2147483647, %v1495
      %v1544 = vmul.f32 %v1528, 0.3275911
      %v1545 = vmul.f32 %v1529, 0.3275911
      %v1546 = vmul.f32 %v1530, 0.3275911
      %v1547 = vmul.f32 %v1531, 0.3275911
      %v1548 = vmul.f32 %v1532, 0.3275911
      %v1549 = vmul.f32 %v1533, 0.3275911
      %v1550 = vmul.f32 %v1534, 0.3275911
      %v1551 = vmul.f32 %v1535, 0.3275911
      %v1552 = vmul.f32 %v1536, 0.3275911
      %v1553 = vmul.f32 %v1537, 0.3275911
      %v1554 = vmul.f32 %v1538, 0.3275911
      %v1555 = vmul.f32 %v1539, 0.3275911
      %v1556 = vmul.f32 %v1540, 0.3275911
      %v1557 = vmul.f32 %v1541, 0.3275911
      %v1558 = vmul.f32 %v1542, 0.3275911
      %v1559 = vmul.f32 %v1543, 0.3275911
      %v1560 = vadd.f32 %v1544, 1.0
      %v1561 = vadd.f32 %v1545, 1.0
      %v1562 = vadd.f32 %v1546, 1.0
      %v1563 = vadd.f32 %v1547, 1.0
      %v1564 = vadd.f32 %v1548, 1.0
      %v1565 = vadd.f32 %v1549, 1.0
      %v1566 = vadd.f32 %v1550, 1.0
      %v1567 = vadd.f32 %v1551, 1.0
      %v1568 = vadd.f32 %v1552, 1.0
      %v1569 = vadd.f32 %v1553, 1.0
      %v1570 = vadd.f32 %v1554, 1.0
      %v1571 = vadd.f32 %v1555, 1.0
      %v1572 = vadd.f32 %v1556, 1.0
      %v1573 = vadd.f32 %v1557, 1.0
      %v1574 = vadd.f32 %v1558, 1.0
      %v1575 = vadd.f32 %v1559, 1.0
      %v1576 = vrcp.pop %v1560
      %v1577 = vmul.f32 %v1560, %v1576
      %v1578 = vsub.f32 1.0, %v1577
      %v1579 = vmul.f32 %v1576, %v1578
      %v1580 = vadd.f32 %v1576, %v1579
      %vm1581 = vweird.f32 %v1560
      %vm1582 = vweird.f32 %v1576
      %vm1583 = vmor %vm1581, %vm1582
      %v1584 = vsel %vm1583, %v1576, %v1580
      %v1585 = vand.u32 2147483647, %v1560
      %vm1586 = vcmp.eq.f32.partialorder %v1585, 8.507059e+37
      %v1587 = vand.u32 %v1560, 2147483648
      %v1588 = vor.u32 1.1754944e-38, %v1587
      %v1589 = vsel %vm1586, %v1588, %v1584
      %v1590 = vmul.f32 1.0, %v1589
      %v1591 = vrcp.pop %v1561
      %v1592 = vmul.f32 %v1561, %v1591
      %v1593 = vsub.f32 1.0, %v1592
      %v1594 = vmul.f32 %v1591, %v1593
      %v1595 = vadd.f32 %v1591, %v1594
      %vm1596 = vweird.f32 %v1561
      %vm1597 = vweird.f32 %v1591
      %vm1598 = vmor %vm1596, %vm1597
      %v1599 = vsel %vm1598, %v1591, %v1595
      %v1600 = vand.u32 2147483647, %v1561
      %vm1601 = vcmp.eq.f32.partialorder %v1600, 8.507059e+37
      %v1602 = vand.u32 %v1561, 2147483648
      %v1603 = vor.u32 1.1754944e-38, %v1602
      %v1604 = vsel %vm1601, %v1603, %v1599
      %v1605 = vmul.f32 1.0, %v1604
      %v1606 = vrcp.pop %v1562
      %v1607 = vmul.f32 %v1562, %v1606
      %v1608 = vsub.f32 1.0, %v1607
      %v1609 = vmul.f32 %v1606, %v1608
      %v1610 = vadd.f32 %v1606, %v1609
      %vm1611 = vweird.f32 %v1562
      %vm1612 = vweird.f32 %v1606
      %vm1613 = vmor %vm1611, %vm1612
      %v1614 = vsel %vm1613, %v1606, %v1610
      %v1615 = vand.u32 2147483647, %v1562
      %vm1616 = vcmp.eq.f32.partialorder %v1615, 8.507059e+37
      %v1617 = vand.u32 %v1562, 2147483648
      %v1618 = vor.u32 1.1754944e-38, %v1617
      %v1619 = vsel %vm1616, %v1618, %v1614
      %v1620 = vmul.f32 1.0, %v1619
      %v1621 = vrcp.pop %v1563
      %v1622 = vmul.f32 %v1563, %v1621
      %v1623 = vsub.f32 1.0, %v1622
      %v1624 = vmul.f32 %v1621, %v1623
      %v1625 = vadd.f32 %v1621, %v1624
      %vm1626 = vweird.f32 %v1563
      %vm1627 = vweird.f32 %v1621
      %vm1628 = vmor %vm1626, %vm1627
      %v1629 = vsel %vm1628, %v1621, %v1625
      %v1630 = vand.u32 2147483647, %v1563
      %vm1631 = vcmp.eq.f32.partialorder %v1630, 8.507059e+37
      %v1632 = vand.u32 %v1563, 2147483648
      %v1633 = vor.u32 1.1754944e-38, %v1632
      %v1634 = vsel %vm1631, %v1633, %v1629
      %v1635 = vmul.f32 1.0, %v1634
      %v1636 = vrcp.pop %v1564
      %v1637 = vmul.f32 %v1564, %v1636
      %v1638 = vsub.f32 1.0, %v1637
      %v1639 = vmul.f32 %v1636, %v1638
      %v1640 = vadd.f32 %v1636, %v1639
      %vm1641 = vweird.f32 %v1564
      %vm1642 = vweird.f32 %v1636
      %vm1643 = vmor %vm1641, %vm1642
      %v1644 = vsel %vm1643, %v1636, %v1640
      %v1645 = vand.u32 2147483647, %v1564
      %vm1646 = vcmp.eq.f32.partialorder %v1645, 8.507059e+37
      %v1647 = vand.u32 %v1564, 2147483648
      %v1648 = vor.u32 1.1754944e-38, %v1647
      %v1649 = vsel %vm1646, %v1648, %v1644
      %v1650 = vmul.f32 1.0, %v1649
      %v1651 = vrcp.pop %v1565
      %v1652 = vmul.f32 %v1565, %v1651
      %v1653 = vsub.f32 1.0, %v1652
      %v1654 = vmul.f32 %v1651, %v1653
      %v1655 = vadd.f32 %v1651, %v1654
      %vm1656 = vweird.f32 %v1565
      %vm1657 = vweird.f32 %v1651
      %vm1658 = vmor %vm1656, %vm1657
      %v1659 = vsel %vm1658, %v1651, %v1655
      %v1660 = vand.u32 2147483647, %v1565
      %vm1661 = vcmp.eq.f32.partialorder %v1660, 8.507059e+37
      %v1662 = vand.u32 %v1565, 2147483648
      %v1663 = vor.u32 1.1754944e-38, %v1662
      %v1664 = vsel %vm1661, %v1663, %v1659
      %v1665 = vmul.f32 1.0, %v1664
      %v1666 = vrcp.pop %v1566
      %v1667 = vmul.f32 %v1566, %v1666
      %v1668 = vsub.f32 1.0, %v1667
      %v1669 = vmul.f32 %v1666, %v1668
      %v1670 = vadd.f32 %v1666, %v1669
      %vm1671 = vweird.f32 %v1566
      %vm1672 = vweird.f32 %v1666
      %vm1673 = vmor %vm1671, %vm1672
      %v1674 = vsel %vm1673, %v1666, %v1670
      %v1675 = vand.u32 2147483647, %v1566
      %vm1676 = vcmp.eq.f32.partialorder %v1675, 8.507059e+37
      %v1677 = vand.u32 %v1566, 2147483648
      %v1678 = vor.u32 1.1754944e-38, %v1677
      %v1679 = vsel %vm1676, %v1678, %v1674
      %v1680 = vmul.f32 1.0, %v1679
      %v1681 = vrcp.pop %v1567
      %v1682 = vmul.f32 %v1567, %v1681
      %v1683 = vsub.f32 1.0, %v1682
      %v1684 = vmul.f32 %v1681, %v1683
      %v1685 = vadd.f32 %v1681, %v1684
      %vm1686 = vweird.f32 %v1567
      %vm1687 = vweird.f32 %v1681
      %vm1688 = vmor %vm1686, %vm1687
      %v1689 = vsel %vm1688, %v1681, %v1685
      %v1690 = vand.u32 2147483647, %v1567
      %vm1691 = vcmp.eq.f32.partialorder %v1690, 8.507059e+37
      %v1692 = vand.u32 %v1567, 2147483648
      %v1693 = vor.u32 1.1754944e-38, %v1692
      %v1694 = vsel %vm1691, %v1693, %v1689
      %v1695 = vmul.f32 1.0, %v1694
      %v1696 = vrcp.pop %v1568
      %v1697 = vmul.f32 %v1568, %v1696
      %v1698 = vsub.f32 1.0, %v1697
      %v1699 = vmul.f32 %v1696, %v1698
      %v1700 = vadd.f32 %v1696, %v1699
      %vm1701 = vweird.f32 %v1568
      %vm1702 = vweird.f32 %v1696
      %vm1703 = vmor %vm1701, %vm1702
      %v1704 = vsel %vm1703, %v1696, %v1700
      %v1705 = vand.u32 2147483647, %v1568
      %vm1706 = vcmp.eq.f32.partialorder %v1705, 8.507059e+37
      %v1707 = vand.u32 %v1568, 2147483648
      %v1708 = vor.u32 1.1754944e-38, %v1707
      %v1709 = vsel %vm1706, %v1708, %v1704
      %v1710 = vmul.f32 1.0, %v1709
      %v1711 = vrcp.pop %v1569
      %v1712 = vmul.f32 %v1569, %v1711
      %v1713 = vsub.f32 1.0, %v1712
      %v1714 = vmul.f32 %v1711, %v1713
      %v1715 = vadd.f32 %v1711, %v1714
      %vm1716 = vweird.f32 %v1569
      %vm1717 = vweird.f32 %v1711
      %vm1718 = vmor %vm1716, %vm1717
      %v1719 = vsel %vm1718, %v1711, %v1715
      %v1720 = vand.u32 2147483647, %v1569
      %vm1721 = vcmp.eq.f32.partialorder %v1720, 8.507059e+37
      %v1722 = vand.u32 %v1569, 2147483648
      %v1723 = vor.u32 1.1754944e-38, %v1722
      %v1724 = vsel %vm1721, %v1723, %v1719
      %v1725 = vmul.f32 1.0, %v1724
      %v1726 = vrcp.pop %v1570
      %v1727 = vmul.f32 %v1570, %v1726
      %v1728 = vsub.f32 1.0, %v1727
      %v1729 = vmul.f32 %v1726, %v1728
      %v1730 = vadd.f32 %v1726, %v1729
      %vm1731 = vweird.f32 %v1570
      %vm1732 = vweird.f32 %v1726
      %vm1733 = vmor %vm1731, %vm1732
      %v1734 = vsel %vm1733, %v1726, %v1730
      %v1735 = vand.u32 2147483647, %v1570
      %vm1736 = vcmp.eq.f32.partialorder %v1735, 8.507059e+37
      %v1737 = vand.u32 %v1570, 2147483648
      %v1738 = vor.u32 1.1754944e-38, %v1737
      %v1739 = vsel %vm1736, %v1738, %v1734
      %v1740 = vmul.f32 1.0, %v1739
      %v1741 = vrcp.pop %v1571
      %v1742 = vmul.f32 %v1571, %v1741
      %v1743 = vsub.f32 1.0, %v1742
      %v1744 = vmul.f32 %v1741, %v1743
      %v1745 = vadd.f32 %v1741, %v1744
      %vm1746 = vweird.f32 %v1571
      %vm1747 = vweird.f32 %v1741
      %vm1748 = vmor %vm1746, %vm1747
      %v1749 = vsel %vm1748, %v1741, %v1745
      %v1750 = vand.u32 2147483647, %v1571
      %vm1751 = vcmp.eq.f32.partialorder %v1750, 8.507059e+37
      %v1752 = vand.u32 %v1571, 2147483648
      %v1753 = vor.u32 1.1754944e-38, %v1752
      %v1754 = vsel %vm1751, %v1753, %v1749
      %v1755 = vmul.f32 1.0, %v1754
      %v1756 = vrcp.pop %v1572
      %v1757 = vmul.f32 %v1572, %v1756
      %v1758 = vsub.f32 1.0, %v1757
      %v1759 = vmul.f32 %v1756, %v1758
      %v1760 = vadd.f32 %v1756, %v1759
      %vm1761 = vweird.f32 %v1572
      %vm1762 = vweird.f32 %v1756
      %vm1763 = vmor %vm1761, %vm1762
      %v1764 = vsel %vm1763, %v1756, %v1760
      %v1765 = vand.u32 2147483647, %v1572
      %vm1766 = vcmp.eq.f32.partialorder %v1765, 8.507059e+37
      %v1767 = vand.u32 %v1572, 2147483648
      %v1768 = vor.u32 1.1754944e-38, %v1767
      %v1769 = vsel %vm1766, %v1768, %v1764
      %v1770 = vmul.f32 1.0, %v1769
      %v1771 = vrcp.pop %v1573
      %v1772 = vmul.f32 %v1573, %v1771
      %v1773 = vsub.f32 1.0, %v1772
      %v1774 = vmul.f32 %v1771, %v1773
      %v1775 = vadd.f32 %v1771, %v1774
      %vm1776 = vweird.f32 %v1573
      %vm1777 = vweird.f32 %v1771
      %vm1778 = vmor %vm1776, %vm1777
      %v1779 = vsel %vm1778, %v1771, %v1775
      %v1780 = vand.u32 2147483647, %v1573
      %vm1781 = vcmp.eq.f32.partialorder %v1780, 8.507059e+37
      %v1782 = vand.u32 %v1573, 2147483648
      %v1783 = vor.u32 1.1754944e-38, %v1782
      %v1784 = vsel %vm1781, %v1783, %v1779
      %v1785 = vmul.f32 1.0, %v1784
      %v1786 = vrcp.pop %v1574
      %v1787 = vmul.f32 %v1574, %v1786
      %v1788 = vsub.f32 1.0, %v1787
      %v1789 = vmul.f32 %v1786, %v1788
      %v1790 = vadd.f32 %v1786, %v1789
      %vm1791 = vweird.f32 %v1574
      %vm1792 = vweird.f32 %v1786
      %vm1793 = vmor %vm1791, %vm1792
      %v1794 = vsel %vm1793, %v1786, %v1790
      %v1795 = vand.u32 2147483647, %v1574
      %vm1796 = vcmp.eq.f32.partialorder %v1795, 8.507059e+37
      %v1797 = vand.u32 %v1574, 2147483648
      %v1798 = vor.u32 1.1754944e-38, %v1797
      %v1799 = vsel %vm1796, %v1798, %v1794
      %v1800 = vmul.f32 1.0, %v1799
      %v1801 = vrcp.pop %v1575
      %v1802 = vmul.f32 %v1575, %v1801
      %v1803 = vsub.f32 1.0, %v1802
      %v1804 = vmul.f32 %v1801, %v1803
      %v1805 = vadd.f32 %v1801, %v1804
      %vm1806 = vweird.f32 %v1575
      %vm1807 = vweird.f32 %v1801
      %vm1808 = vmor %vm1806, %vm1807
      %v1809 = vsel %vm1808, %v1801, %v1805
      %v1810 = vand.u32 2147483647, %v1575
      %vm1811 = vcmp.eq.f32.partialorder %v1810, 8.507059e+37
      %v1812 = vand.u32 %v1575, 2147483648
      %v1813 = vor.u32 1.1754944e-38, %v1812
      %v1814 = vsel %vm1811, %v1813, %v1809
      %v1815 = vmul.f32 1.0, %v1814
      %v1816 = vmul.f32 %v1590, 1.0614054
      %v1817 = vmul.f32 %v1605, 1.0614054
      %v1818 = vmul.f32 %v1620, 1.0614054
      %v1819 = vmul.f32 %v1635, 1.0614054
      %v1820 = vmul.f32 %v1650, 1.0614054
      %v1821 = vmul.f32 %v1665, 1.0614054
      %v1822 = vmul.f32 %v1680, 1.0614054
      %v1823 = vmul.f32 %v1695, 1.0614054
      %v1824 = vmul.f32 %v1710, 1.0614054
      %v1825 = vmul.f32 %v1725, 1.0614054
      %v1826 = vmul.f32 %v1740, 1.0614054
      %v1827 = vmul.f32 %v1755, 1.0614054
      %v1828 = vmul.f32 %v1770, 1.0614054
      %v1829 = vmul.f32 %v1785, 1.0614054
      %v1830 = vmul.f32 %v1800, 1.0614054
      %v1831 = vmul.f32 %v1815, 1.0614054
      %v1832 = vadd.f32 %v1816, -1.4531521
      %v1833 = vadd.f32 %v1817, -1.4531521
      %v1834 = vadd.f32 %v1818, -1.4531521
      %v1835 = vadd.f32 %v1819, -1.4531521
      %v1836 = vadd.f32 %v1820, -1.4531521
      %v1837 = vadd.f32 %v1821, -1.4531521
      %v1838 = vadd.f32 %v1822, -1.4531521
      %v1839 = vadd.f32 %v1823, -1.4531521
      %v1840 = vadd.f32 %v1824, -1.4531521
      %v1841 = vadd.f32 %v1825, -1.4531521
      %v1842 = vadd.f32 %v1826, -1.4531521
      %v1843 = vadd.f32 %v1827, -1.4531521
      %v1844 = vadd.f32 %v1828, -1.4531521
      %v1845 = vadd.f32 %v1829, -1.4531521
      %v1846 = vadd.f32 %v1830, -1.4531521
      %v1847 = vadd.f32 %v1831, -1.4531521
      %v1848 = vmul.f32 %v1832, %v1590
      %v1849 = vmul.f32 %v1833, %v1605
      %v1850 = vmul.f32 %v1834, %v1620
      %v1851 = vmul.f32 %v1835, %v1635
      %v1852 = vmul.f32 %v1836, %v1650
      %v1853 = vmul.f32 %v1837, %v1665
      %v1854 = vmul.f32 %v1838, %v1680
      %v1855 = vmul.f32 %v1839, %v1695
      %v1856 = vmul.f32 %v1840, %v1710
      %v1857 = vmul.f32 %v1841, %v1725
      %v1858 = vmul.f32 %v1842, %v1740
      %v1859 = vmul.f32 %v1843, %v1755
      %v1860 = vmul.f32 %v1844, %v1770
      %v1861 = vmul.f32 %v1845, %v1785
      %v1862 = vmul.f32 %v1846, %v1800
      %v1863 = vmul.f32 %v1847, %v1815
      %v1864 = vadd.f32 %v1848, 1.4214138
      %v1865 = vadd.f32 %v1849, 1.4214138
      %v1866 = vadd.f32 %v1850, 1.4214138
      %v1867 = vadd.f32 %v1851, 1.4214138
      %v1868 = vadd.f32 %v1852, 1.4214138
      %v1869 = vadd.f32 %v1853, 1.4214138
      %v1870 = vadd.f32 %v1854, 1.4214138
      %v1871 = vadd.f32 %v1855, 1.4214138
      %v1872 = vadd.f32 %v1856, 1.4214138
      %v1873 = vadd.f32 %v1857, 1.4214138
      %v1874 = vadd.f32 %v1858, 1.4214138
      %v1875 = vadd.f32 %v1859, 1.4214138
      %v1876 = vadd.f32 %v1860, 1.4214138
      %v1877 = vadd.f32 %v1861, 1.4214138
      %v1878 = vadd.f32 %v1862, 1.4214138
      %v1879 = vadd.f32 %v1863, 1.4214138
      %v1880 = vmul.f32 %v1864, %v1590
      %v1881 = vmul.f32 %v1865, %v1605
      %v1882 = vmul.f32 %v1866, %v1620
      %v1883 = vmul.f32 %v1867, %v1635
      %v1884 = vmul.f32 %v1868, %v1650
      %v1885 = vmul.f32 %v1869, %v1665
      %v1886 = vmul.f32 %v1870, %v1680
      %v1887 = vmul.f32 %v1871, %v1695
      %v1888 = vmul.f32 %v1872, %v1710
      %v1889 = vmul.f32 %v1873, %v1725
      %v1890 = vmul.f32 %v1874, %v1740
      %v1891 = vmul.f32 %v1875, %v1755
      %v1892 = vmul.f32 %v1876, %v1770
      %v1893 = vmul.f32 %v1877, %v1785
      %v1894 = vmul.f32 %v1878, %v1800
      %v1895 = vmul.f32 %v1879, %v1815
      %v1896 = vadd.f32 %v1880, -0.28449672
      %v1897 = vadd.f32 %v1881, -0.28449672
      %v1898 = vadd.f32 %v1882, -0.28449672
      %v1899 = vadd.f32 %v1883, -0.28449672
      %v1900 = vadd.f32 %v1884, -0.28449672
      %v1901 = vadd.f32 %v1885, -0.28449672
      %v1902 = vadd.f32 %v1886, -0.28449672
      %v1903 = vadd.f32 %v1887, -0.28449672
      %v1904 = vadd.f32 %v1888, -0.28449672
      %v1905 = vadd.f32 %v1889, -0.28449672
      %v1906 = vadd.f32 %v1890, -0.28449672
      %v1907 = vadd.f32 %v1891, -0.28449672
      %v1908 = vadd.f32 %v1892, -0.28449672
      %v1909 = vadd.f32 %v1893, -0.28449672
      %v1910 = vadd.f32 %v1894, -0.28449672
      %v1911 = vadd.f32 %v1895, -0.28449672
      %v1912 = vmul.f32 %v1896, %v1590
      %v1913 = vmul.f32 %v1897, %v1605
      %v1914 = vmul.f32 %v1898, %v1620
      %v1915 = vmul.f32 %v1899, %v1635
      %v1916 = vmul.f32 %v1900, %v1650
      %v1917 = vmul.f32 %v1901, %v1665
      %v1918 = vmul.f32 %v1902, %v1680
      %v1919 = vmul.f32 %v1903, %v1695
      %v1920 = vmul.f32 %v1904, %v1710
      %v1921 = vmul.f32 %v1905, %v1725
      %v1922 = vmul.f32 %v1906, %v1740
      %v1923 = vmul.f32 %v1907, %v1755
      %v1924 = vmul.f32 %v1908, %v1770
      %v1925 = vmul.f32 %v1909, %v1785
      %v1926 = vmul.f32 %v1910, %v1800
      %v1927 = vmul.f32 %v1911, %v1815
      %v1928 = vadd.f32 %v1912, 0.2548296
      %v1929 = vadd.f32 %v1913, 0.2548296
      %v1930 = vadd.f32 %v1914, 0.2548296
      %v1931 = vadd.f32 %v1915, 0.2548296
      %v1932 = vadd.f32 %v1916, 0.2548296
      %v1933 = vadd.f32 %v1917, 0.2548296
      %v1934 = vadd.f32 %v1918, 0.2548296
      %v1935 = vadd.f32 %v1919, 0.2548296
      %v1936 = vadd.f32 %v1920, 0.2548296
      %v1937 = vadd.f32 %v1921, 0.2548296
      %v1938 = vadd.f32 %v1922, 0.2548296
      %v1939 = vadd.f32 %v1923, 0.2548296
      %v1940 = vadd.f32 %v1924, 0.2548296
      %v1941 = vadd.f32 %v1925, 0.2548296
      %v1942 = vadd.f32 %v1926, 0.2548296
      %v1943 = vadd.f32 %v1927, 0.2548296
      %v1944 = vmul.f32 %v1928, %v1590
      %v1945 = vmul.f32 %v1929, %v1605
      %v1946 = vmul.f32 %v1930, %v1620
      %v1947 = vmul.f32 %v1931, %v1635
      %v1948 = vmul.f32 %v1932, %v1650
      %v1949 = vmul.f32 %v1933, %v1665
      %v1950 = vmul.f32 %v1934, %v1680
      %v1951 = vmul.f32 %v1935, %v1695
      %v1952 = vmul.f32 %v1936, %v1710
      %v1953 = vmul.f32 %v1937, %v1725
      %v1954 = vmul.f32 %v1938, %v1740
      %v1955 = vmul.f32 %v1939, %v1755
      %v1956 = vmul.f32 %v1940, %v1770
      %v1957 = vmul.f32 %v1941, %v1785
      %v1958 = vmul.f32 %v1942, %v1800
      %v1959 = vmul.f32 %v1943, %v1815
      %v1960 = vsub.f32 0.0, %v1528
      %v1961 = vsub.f32 0.0, %v1529
      %v1962 = vsub.f32 0.0, %v1530
      %v1963 = vsub.f32 0.0, %v1531
      %v1964 = vsub.f32 0.0, %v1532
      %v1965 = vsub.f32 0.0, %v1533
      %v1966 = vsub.f32 0.0, %v1534
      %v1967 = vsub.f32 0.0, %v1535
      %v1968 = vsub.f32 0.0, %v1536
      %v1969 = vsub.f32 0.0, %v1537
      %v1970 = vsub.f32 0.0, %v1538
      %v1971 = vsub.f32 0.0, %v1539
      %v1972 = vsub.f32 0.0, %v1540
      %v1973 = vsub.f32 0.0, %v1541
      %v1974 = vsub.f32 0.0, %v1542
      %v1975 = vsub.f32 0.0, %v1543
      %v1976 = vmul.f32 %v1960, %v1528
      %v1977 = vmul.f32 %v1961, %v1529
      %v1978 = vmul.f32 %v1962, %v1530
      %v1979 = vmul.f32 %v1963, %v1531
      %v1980 = vmul.f32 %v1964, %v1532
      %v1981 = vmul.f32 %v1965, %v1533
      %v1982 = vmul.f32 %v1966, %v1534
      %v1983 = vmul.f32 %v1967, %v1535
      %v1984 = vmul.f32 %v1968, %v1536
      %v1985 = vmul.f32 %v1969, %v1537
      %v1986 = vmul.f32 %v1970, %v1538
      %v1987 = vmul.f32 %v1971, %v1539
      %v1988 = vmul.f32 %v1972, %v1540
      %v1989 = vmul.f32 %v1973, %v1541
      %v1990 = vmul.f32 %v1974, %v1542
      %v1991 = vmul.f32 %v1975, %v1543
      %v1992 = vmul.f32 %v1976, 1.442695
      %v1993 = vpow.pop %v1992
      %v1994 = vmul.f32 %v1977, 1.442695
      %v1995 = vpow.pop %v1994
      %v1996 = vmul.f32 %v1978, 1.442695
      %v1997 = vpow.pop %v1996
      %v1998 = vmul.f32 %v1979, 1.442695
      %v1999 = vpow.pop %v1998
      %v2000 = vmul.f32 %v1980, 1.442695
      %v2001 = vpow.pop %v2000
      %v2002 = vmul.f32 %v1981, 1.442695
      %v2003 = vpow.pop %v2002
      %v2004 = vmul.f32 %v1982, 1.442695
      %v2005 = vpow.pop %v2004
      %v2006 = vmul.f32 %v1983, 1.442695
      %v2007 = vpow.pop %v2006
      %v2008 = vmul.f32 %v1984, 1.442695
      %v2009 = vpow.pop %v2008
      %v2010 = vmul.f32 %v1985, 1.442695
      %v2011 = vpow.pop %v2010
      %v2012 = vmul.f32 %v1986, 1.442695
      %v2013 = vpow.pop %v2012
      %v2014 = vmul.f32 %v1987, 1.442695
      %v2015 = vpow.pop %v2014
      %v2016 = vmul.f32 %v1988, 1.442695
      %v2017 = vpow.pop %v2016
      %v2018 = vmul.f32 %v1989, 1.442695
      %v2019 = vpow.pop %v2018
      %v2020 = vmul.f32 %v1990, 1.442695
      %v2021 = vpow.pop %v2020
      %v2022 = vmul.f32 %v1991, 1.442695
      %v2023 = vpow.pop %v2022
      %v2024 = vmul.f32 %v1944, %v1993
      %v2025 = vmul.f32 %v1945, %v1995
      %v2026 = vmul.f32 %v1946, %v1997
      %v2027 = vmul.f32 %v1947, %v1999
      %v2028 = vmul.f32 %v1948, %v2001
      %v2029 = vmul.f32 %v1949, %v2003
      %v2030 = vmul.f32 %v1950, %v2005
      %v2031 = vmul.f32 %v1951, %v2007
      %v2032 = vmul.f32 %v1952, %v2009
      %v2033 = vmul.f32 %v1953, %v2011
      %v2034 = vmul.f32 %v1954, %v2013
      %v2035 = vmul.f32 %v1955, %v2015
      %v2036 = vmul.f32 %v1956, %v2017
      %v2037 = vmul.f32 %v1957, %v2019
      %v2038 = vmul.f32 %v1958, %v2021
      %v2039 = vmul.f32 %v1959, %v2023
      %v2040 = vsub.f32 1.0, %v2024
      %v2041 = vsub.f32 1.0, %v2025
      %v2042 = vsub.f32 1.0, %v2026
      %v2043 = vsub.f32 1.0, %v2027
      %v2044 = vsub.f32 1.0, %v2028
      %v2045 = vsub.f32 1.0, %v2029
      %v2046 = vsub.f32 1.0, %v2030
      %v2047 = vsub.f32 1.0, %v2031
      %v2048 = vsub.f32 1.0, %v2032
      %v2049 = vsub.f32 1.0, %v2033
      %v2050 = vsub.f32 1.0, %v2034
      %v2051 = vsub.f32 1.0, %v2035
      %v2052 = vsub.f32 1.0, %v2036
      %v2053 = vsub.f32 1.0, %v2037
      %v2054 = vsub.f32 1.0, %v2038
      %v2055 = vsub.f32 1.0, %v2039
      %v2056 = vmul.f32 %v1512, %v2040
      %v2057 = vmul.f32 %v1513, %v2041
      %v2058 = vmul.f32 %v1514, %v2042
      %v2059 = vmul.f32 %v1515, %v2043
      %v2060 = vmul.f32 %v1516, %v2044
      %v2061 = vmul.f32 %v1517, %v2045
      %v2062 = vmul.f32 %v1518, %v2046
      %v2063 = vmul.f32 %v1519, %v2047
      %v2064 = vmul.f32 %v1520, %v2048
      %v2065 = vmul.f32 %v1521, %v2049
      %v2066 = vmul.f32 %v1522, %v2050
      %v2067 = vmul.f32 %v1523, %v2051
      %v2068 = vmul.f32 %v1524, %v2052
      %v2069 = vmul.f32 %v1525, %v2053
      %v2070 = vmul.f32 %v1526, %v2054
      %v2071 = vmul.f32 %v1527, %v2055
      %v2072 = vadd.f32 %v2056, 1.0
      %v2073 = vadd.f32 %v2057, 1.0
      %v2074 = vadd.f32 %v2058, 1.0
      %v2075 = vadd.f32 %v2059, 1.0
      %v2076 = vadd.f32 %v2060, 1.0
      %v2077 = vadd.f32 %v2061, 1.0
      %v2078 = vadd.f32 %v2062, 1.0
      %v2079 = vadd.f32 %v2063, 1.0
      %v2080 = vadd.f32 %v2064, 1.0
      %v2081 = vadd.f32 %v2065, 1.0
      %v2082 = vadd.f32 %v2066, 1.0
      %v2083 = vadd.f32 %v2067, 1.0
      %v2084 = vadd.f32 %v2068, 1.0
      %v2085 = vadd.f32 %v2069, 1.0
      %v2086 = vadd.f32 %v2070, 1.0
      %v2087 = vadd.f32 %v2071, 1.0
      %v2088 = vmul.f32 %v1464, %v2072
      %v2089 = vmul.f32 %v1465, %v2073
      %v2090 = vmul.f32 %v1466, %v2074
      %v2091 = vmul.f32 %v1467, %v2075
      %v2092 = vmul.f32 %v1468, %v2076
      %v2093 = vmul.f32 %v1469, %v2077
      %v2094 = vmul.f32 %v1470, %v2078
      %v2095 = vmul.f32 %v1471, %v2079
      %v2096 = vmul.f32 %v1472, %v2080
      %v2097 = vmul.f32 %v1473, %v2081
      %v2098 = vmul.f32 %v1474, %v2082
      %v2099 = vmul.f32 %v1475, %v2083
      %v2100 = vmul.f32 %v1476, %v2084
      %v2101 = vmul.f32 %v1477, %v2085
      %v2102 = vmul.f32 %v1478, %v2086
      %v2103 = vmul.f32 %v1479, %v2087
      %v2104 = vld [vmem:[%s7] sm:$0xff]
      %v2105 = vld [vmem:[%s7 + $0x8] sm:$0xff]
      %v2106 = vld [vmem:[%s7 + $0x10] sm:$0xff]
      %v2107 = vld [vmem:[%s7 + $0x18] sm:$0xff]
      %v2108 = vld [vmem:[%s7 + $0x20] sm:$0xff]
      %v2109 = vld [vmem:[%s7 + $0x28] sm:$0xff]
      %v2110 = vld [vmem:[%s7 + $0x30] sm:$0xff]
      %v2111 = vld [vmem:[%s7 + $0x38] sm:$0xff]
      %v2112 = vld [vmem:[%s7 + $0x40] sm:$0xff]
      %v2113 = vld [vmem:[%s7 + $0x48] sm:$0xff]
      %v2114 = vld [vmem:[%s7 + $0x50] sm:$0xff]
      %v2115 = vld [vmem:[%s7 + $0x58] sm:$0xff]
      %v2116 = vld [vmem:[%s7 + $0x60] sm:$0xff]
      %v2117 = vld [vmem:[%s7 + $0x68] sm:$0xff]
      %v2118 = vld [vmem:[%s7 + $0x70] sm:$0xff]
      %v2119 = vld [vmem:[%s7 + $0x78] sm:$0xff]
      %v2120 = vld [vmem:[%s7 + $0x80] sm:$0xff]
      %v2121 = vld [vmem:[%s8] sm:$0xff]
      %v2122 = vld [vmem:[%s8 + $0x8] sm:$0xff]
      %v2123 = vld [vmem:[%s8 + $0x10] sm:$0xff]
      %v2124 = vld [vmem:[%s8 + $0x18] sm:$0xff]
      %v2125 = vld [vmem:[%s8 + $0x20] sm:$0xff]
      %v2126 = vld [vmem:[%s8 + $0x28] sm:$0xff]
      %v2127 = vld [vmem:[%s8 + $0x30] sm:$0xff]
      %v2128 = vld [vmem:[%s8 + $0x38] sm:$0xff]
      %v2129 = vld [vmem:[%s8 + $0x40] sm:$0xff]
      %v2130 = vld [vmem:[%s8 + $0x48] sm:$0xff]
      %v2131 = vld [vmem:[%s8 + $0x50] sm:$0xff]
      %v2132 = vld [vmem:[%s8 + $0x58] sm:$0xff]
      %v2133 = vld [vmem:[%s8 + $0x60] sm:$0xff]
      %v2134 = vld [vmem:[%s8 + $0x68] sm:$0xff]
      %v2135 = vld [vmem:[%s8 + $0x70] sm:$0xff]
      %v2136 = vld [vmem:[%s8 + $0x78] sm:$0xff]
      %v2137 = vld [vmem:[%s8 + $0x80] sm:$0xff]
      %2139 = vset.pattern.permute.xlu0 0
      %2140 = vperm.xlu0 %2139, %v2121
      %v2141 = vpop.permute.xlu0 %2140
      %2144 = vset.pattern.permute.xlu0 0
      %2145 = vperm.xlu0 %2144, %v2122
      %v2146 = vpop.permute.xlu0 %2145
      %2149 = vset.pattern.permute.xlu0 0
      %2150 = vperm.xlu0 %2149, %v2123
      %v2151 = vpop.permute.xlu0 %2150
      %2154 = vset.pattern.permute.xlu0 0
      %2155 = vperm.xlu0 %2154, %v2124
      %v2156 = vpop.permute.xlu0 %2155
      %2159 = vset.pattern.permute.xlu0 0
      %2160 = vperm.xlu0 %2159, %v2125
      %v2161 = vpop.permute.xlu0 %2160
      %2164 = vset.pattern.permute.xlu0 0
      %2165 = vperm.xlu0 %2164, %v2126
      %v2166 = vpop.permute.xlu0 %2165
      %2169 = vset.pattern.permute.xlu0 0
      %2170 = vperm.xlu0 %2169, %v2127
      %v2171 = vpop.permute.xlu0 %2170
      %2174 = vset.pattern.permute.xlu0 0
      %2175 = vperm.xlu0 %2174, %v2128
      %v2176 = vpop.permute.xlu0 %2175
      %2179 = vset.pattern.permute.xlu0 0
      %2180 = vperm.xlu0 %2179, %v2129
      %v2181 = vpop.permute.xlu0 %2180
      %2184 = vset.pattern.permute.xlu0 0
      %2185 = vperm.xlu0 %2184, %v2130
      %v2186 = vpop.permute.xlu0 %2185
      %2189 = vset.pattern.permute.xlu0 0
      %2190 = vperm.xlu0 %2189, %v2131
      %v2191 = vpop.permute.xlu0 %2190
      %2194 = vset.pattern.permute.xlu0 0
      %2195 = vperm.xlu0 %2194, %v2132
      %v2196 = vpop.permute.xlu0 %2195
      %2199 = vset.pattern.permute.xlu0 0
      %2200 = vperm.xlu0 %2199, %v2133
      %v2201 = vpop.permute.xlu0 %2200
      %2204 = vset.pattern.permute.xlu0 0
      %2205 = vperm.xlu0 %2204, %v2134
      %v2206 = vpop.permute.xlu0 %2205
      %2209 = vset.pattern.permute.xlu0 0
      %2210 = vperm.xlu0 %2209, %v2135
      %v2211 = vpop.permute.xlu0 %2210
      %2214 = vset.pattern.permute.xlu0 0
      %2215 = vperm.xlu0 %2214, %v2136
      %v2216 = vpop.permute.xlu0 %2215
      %2219 = vset.pattern.permute.xlu0 0
      %2220 = vperm.xlu0 %2219, %v2137
      %v2221 = vpop.permute.xlu0 %2220
      %2223 = vmatpush.xpose.msra.mxu0 %v2103
      %2224 = vmatpush.xpose.msra.mxu0 %v2102
      %2225 = vmatpush.xpose.msra.mxu0 %v2101
      %2226 = vmatpush.xpose.msra.mxu0 %v2100
      %2227 = vmatpush.xpose.msra.mxu0 %v2099
      %2228 = vmatpush.xpose.msra.mxu0 %v2098
      %2229 = vmatpush.xpose.msra.mxu0 %v2097
      %2230 = vmatpush.xpose.msra.mxu0 %v2096
      %2231 = vmatpush.xpose.msra.mxu0 %v2095
      %2232 = vmatpush.xpose.msra.mxu0 %v2094
      %2233 = vmatpush.xpose.msra.mxu0 %v2093
      %2234 = vmatpush.xpose.msra.mxu0 %v2092
      %2235 = vmatpush.xpose.msra.mxu0 %v2091
      %2236 = vmatpush.xpose.msra.mxu0 %v2090
      %2237 = vmatpush.xpose.msra.mxu0 %v2089
      %2238 = vmatpush.xpose.msra.mxu0 %v2088
      %2239 = vmatmul.f32.gmra.mxu0 %v2104
      %v2240 = vpop.f32.mrf.mxu0
      %v2241 = vadd.f32 %v2141, %v2240
      %2242 = vmatmul.f32.gmra.mxu0 %v2105
      %v2243 = vpop.f32.mrf.mxu0
      %v2244 = vadd.f32 %v2146, %v2243
      %2245 = vmatmul.f32.gmra.mxu0 %v2106
      %v2246 = vpop.f32.mrf.mxu0
      %v2247 = vadd.f32 %v2151, %v2246
      %2248 = vmatmul.f32.gmra.mxu0 %v2107
      %v2249 = vpop.f32.mrf.mxu0
      %v2250 = vadd.f32 %v2156, %v2249
      %2251 = vmatmul.f32.gmra.mxu0 %v2108
      %v2252 = vpop.f32.mrf.mxu0
      %v2253 = vadd.f32 %v2161, %v2252
      %2254 = vmatmul.f32.gmra.mxu0 %v2109
      %v2255 = vpop.f32.mrf.mxu0
      %v2256 = vadd.f32 %v2166, %v2255
      %2257 = vmatmul.f32.gmra.mxu0 %v2110
      %v2258 = vpop.f32.mrf.mxu0
      %v2259 = vadd.f32 %v2171, %v2258
      %2260 = vmatmul.f32.gmra.mxu0 %v2111
      %v2261 = vpop.f32.mrf.mxu0
      %v2262 = vadd.f32 %v2176, %v2261
      %2263 = vmatmul.f32.gmra.mxu0 %v2112
      %v2264 = vpop.f32.mrf.mxu0
      %v2265 = vadd.f32 %v2181, %v2264
      %2266 = vmatmul.f32.gmra.mxu0 %v2113
      %v2267 = vpop.f32.mrf.mxu0
      %v2268 = vadd.f32 %v2186, %v2267
      %2269 = vmatmul.f32.gmra.mxu0 %v2114
      %v2270 = vpop.f32.mrf.mxu0
      %v2271 = vadd.f32 %v2191, %v2270
      %2272 = vmatmul.f32.gmra.mxu0 %v2115
      %v2273 = vpop.f32.mrf.mxu0
      %v2274 = vadd.f32 %v2196, %v2273
      %2275 = vmatmul.f32.gmra.mxu0 %v2116
      %v2276 = vpop.f32.mrf.mxu0
      %v2277 = vadd.f32 %v2201, %v2276
      %2278 = vmatmul.f32.gmra.mxu0 %v2117
      %v2279 = vpop.f32.mrf.mxu0
      %v2280 = vadd.f32 %v2206, %v2279
      %2281 = vmatmul.f32.gmra.mxu0 %v2118
      %v2282 = vpop.f32.mrf.mxu0
      %v2283 = vadd.f32 %v2211, %v2282
      %2284 = vmatmul.f32.gmra.mxu0 %v2119
      %v2285 = vpop.f32.mrf.mxu0
      %v2286 = vadd.f32 %v2216, %v2285
      %2287 = vmatmul.f32.gmra.mxu0 %v2120
      %v2288 = vpop.f32.mrf.mxu0
      %v2289 = vadd.f32 %v2221, %v2288
      %2290 = vdwg.mxu0
      %v2291 = vadd.f32 %v797, %v2241
      %v2292 = vadd.f32 %v800, %v2244
      %v2293 = vadd.f32 %v803, %v2247
      %v2294 = vadd.f32 %v806, %v2250
      %v2295 = vadd.f32 %v809, %v2253
      %v2296 = vadd.f32 %v812, %v2256
      %v2297 = vadd.f32 %v815, %v2259
      %v2298 = vadd.f32 %v818, %v2262
      %v2299 = vadd.f32 %v821, %v2265
      %v2300 = vadd.f32 %v824, %v2268
      %v2301 = vadd.f32 %v827, %v2271
      %v2302 = vadd.f32 %v830, %v2274
      %v2303 = vadd.f32 %v833, %v2277
      %v2304 = vadd.f32 %v836, %v2280
      %v2305 = vadd.f32 %v839, %v2283
      %v2306 = vadd.f32 %v842, %v2286
      %v2307 = vadd.f32 %v845, %v2289
      %v2308 = vld [vmem:[%s9] sm:$0x1]
      %v2309 = vld [vmem:[%s10] sm:$0x1]
      %2310 = vadd.xlane.f32.xlu0 %v2291
      %v2311 = vpop.xlane.xlu0 %2310
      %2312 = vadd.xlane.f32.xlu0 %v2292
      %v2313 = vpop.xlane.xlu0 %2312
      %2314 = vadd.xlane.f32.xlu0 %v2293
      %v2315 = vpop.xlane.xlu0 %2314
      %2316 = vadd.xlane.f32.xlu0 %v2294
      %v2317 = vpop.xlane.xlu0 %2316
      %2318 = vadd.xlane.f32.xlu0 %v2295
      %v2319 = vpop.xlane.xlu0 %2318
      %2320 = vadd.xlane.f32.xlu0 %v2296
      %v2321 = vpop.xlane.xlu0 %2320
      %2322 = vadd.xlane.f32.xlu0 %v2297
      %v2323 = vpop.xlane.xlu0 %2322
      %2324 = vadd.xlane.f32.xlu0 %v2298
      %v2325 = vpop.xlane.xlu0 %2324
      %2326 = vadd.xlane.f32.xlu0 %v2299
      %v2327 = vpop.xlane.xlu0 %2326
      %2328 = vadd.xlane.f32.xlu0 %v2300
      %v2329 = vpop.xlane.xlu0 %2328
      %2330 = vadd.xlane.f32.xlu0 %v2301
      %v2331 = vpop.xlane.xlu0 %2330
      %2332 = vadd.xlane.f32.xlu0 %v2302
      %v2333 = vpop.xlane.xlu0 %2332
      %2334 = vadd.xlane.f32.xlu0 %v2303
      %v2335 = vpop.xlane.xlu0 %2334
      %2336 = vadd.xlane.f32.xlu0 %v2304
      %v2337 = vpop.xlane.xlu0 %2336
      %2338 = vadd.xlane.f32.xlu0 %v2305
      %v2339 = vpop.xlane.xlu0 %2338
      %2340 = vadd.xlane.f32.xlu0 %v2306
      %v2341 = vpop.xlane.xlu0 %2340
      %2342 = vadd.xlane.f32.xlu0 %v2307
      %v2343 = vpop.xlane.xlu0 %2342
      %v2344 = vrcp.pop 128.0
      %v2345 = vmul.f32 128.0, %v2344
      %v2346 = vsub.f32 1.0, %v2345
      %v2347 = vmul.f32 %v2344, %v2346
      %v2348 = vadd.f32 %v2344, %v2347
      %vm2349 = vweird.f32 %v2344
      %v2350 = vsel %vm2349, %v2344, %v2348
      %v2351 = vmul.f32 %v2311, %v2350
      %v2352 = vmul.f32 %v2313, %v2350
      %v2353 = vmul.f32 %v2315, %v2350
      %v2354 = vmul.f32 %v2317, %v2350
      %v2355 = vmul.f32 %v2319, %v2350
      %v2356 = vmul.f32 %v2321, %v2350
      %v2357 = vmul.f32 %v2323, %v2350
      %v2358 = vmul.f32 %v2325, %v2350
      %v2359 = vmul.f32 %v2327, %v2350
      %v2360 = vmul.f32 %v2329, %v2350
      %v2361 = vmul.f32 %v2331, %v2350
      %v2362 = vmul.f32 %v2333, %v2350
      %v2363 = vmul.f32 %v2335, %v2350
      %v2364 = vmul.f32 %v2337, %v2350
      %v2365 = vmul.f32 %v2339, %v2350
      %v2366 = vmul.f32 %v2341, %v2350
      %v2367 = vmul.f32 %v2343, %v2350
      %v2368 = vsub.f32 %v2291, %v2351
      %v2369 = vsub.f32 %v2292, %v2352
      %v2370 = vsub.f32 %v2293, %v2353
      %v2371 = vsub.f32 %v2294, %v2354
      %v2372 = vsub.f32 %v2295, %v2355
      %v2373 = vsub.f32 %v2296, %v2356
      %v2374 = vsub.f32 %v2297, %v2357
      %v2375 = vsub.f32 %v2298, %v2358
      %v2376 = vsub.f32 %v2299, %v2359
      %v2377 = vsub.f32 %v2300, %v2360
      %v2378 = vsub.f32 %v2301, %v2361
      %v2379 = vsub.f32 %v2302, %v2362
      %v2380 = vsub.f32 %v2303, %v2363
      %v2381 = vsub.f32 %v2304, %v2364
      %v2382 = vsub.f32 %v2305, %v2365
      %v2383 = vsub.f32 %v2306, %v2366
      %v2384 = vsub.f32 %v2307, %v2367
      %v2385 = vmul.f32 %v2368, %v2368
      %v2386 = vmul.f32 %v2369, %v2369
      %v2387 = vmul.f32 %v2370, %v2370
      %v2388 = vmul.f32 %v2371, %v2371
      %v2389 = vmul.f32 %v2372, %v2372
      %v2390 = vmul.f32 %v2373, %v2373
      %v2391 = vmul.f32 %v2374, %v2374
      %v2392 = vmul.f32 %v2375, %v2375
      %v2393 = vmul.f32 %v2376, %v2376
      %v2394 = vmul.f32 %v2377, %v2377
      %v2395 = vmul.f32 %v2378, %v2378
      %v2396 = vmul.f32 %v2379, %v2379
      %v2397 = vmul.f32 %v2380, %v2380
      %v2398 = vmul.f32 %v2381, %v2381
      %v2399 = vmul.f32 %v2382, %v2382
      %v2400 = vmul.f32 %v2383, %v2383
      %v2401 = vmul.f32 %v2384, %v2384
      %2402 = vadd.xlane.f32.xlu0 %v2385
      %v2403 = vpop.xlane.xlu0 %2402
      %2404 = vadd.xlane.f32.xlu0 %v2386
      %v2405 = vpop.xlane.xlu0 %2404
      %2406 = vadd.xlane.f32.xlu0 %v2387
      %v2407 = vpop.xlane.xlu0 %2406
      %2408 = vadd.xlane.f32.xlu0 %v2388
      %v2409 = vpop.xlane.xlu0 %2408
      %2410 = vadd.xlane.f32.xlu0 %v2389
      %v2411 = vpop.xlane.xlu0 %2410
      %2412 = vadd.xlane.f32.xlu0 %v2390
      %v2413 = vpop.xlane.xlu0 %2412
      %2414 = vadd.xlane.f32.xlu0 %v2391
      %v2415 = vpop.xlane.xlu0 %2414
      %2416 = vadd.xlane.f32.xlu0 %v2392
      %v2417 = vpop.xlane.xlu0 %2416
      %2418 = vadd.xlane.f32.xlu0 %v2393
      %v2419 = vpop.xlane.xlu0 %2418
      %2420 = vadd.xlane.f32.xlu0 %v2394
      %v2421 = vpop.xlane.xlu0 %2420
      %2422 = vadd.xlane.f32.xlu0 %v2395
      %v2423 = vpop.xlane.xlu0 %2422
      %2424 = vadd.xlane.f32.xlu0 %v2396
      %v2425 = vpop.xlane.xlu0 %2424
      %2426 = vadd.xlane.f32.xlu0 %v2397
      %v2427 = vpop.xlane.xlu0 %2426
      %2428 = vadd.xlane.f32.xlu0 %v2398
      %v2429 = vpop.xlane.xlu0 %2428
      %2430 = vadd.xlane.f32.xlu0 %v2399
      %v2431 = vpop.xlane.xlu0 %2430
      %2432 = vadd.xlane.f32.xlu0 %v2400
      %v2433 = vpop.xlane.xlu0 %2432
      %2434 = vadd.xlane.f32.xlu0 %v2401
      %v2435 = vpop.xlane.xlu0 %2434
      %v2436 = vmul.f32 %v2403, %v2350
      %v2437 = vmul.f32 %v2405, %v2350
      %v2438 = vmul.f32 %v2407, %v2350
      %v2439 = vmul.f32 %v2409, %v2350
      %v2440 = vmul.f32 %v2411, %v2350
      %v2441 = vmul.f32 %v2413, %v2350
      %v2442 = vmul.f32 %v2415, %v2350
      %v2443 = vmul.f32 %v2417, %v2350
      %v2444 = vmul.f32 %v2419, %v2350
      %v2445 = vmul.f32 %v2421, %v2350
      %v2446 = vmul.f32 %v2423, %v2350
      %v2447 = vmul.f32 %v2425, %v2350
      %v2448 = vmul.f32 %v2427, %v2350
      %v2449 = vmul.f32 %v2429, %v2350
      %v2450 = vmul.f32 %v2431, %v2350
      %v2451 = vmul.f32 %v2433, %v2350
      %v2452 = vmul.f32 %v2435, %v2350
      %v2453 = vadd.f32 %v2436, 1e-05
      %v2454 = vadd.f32 %v2437, 1e-05
      %v2455 = vadd.f32 %v2438, 1e-05
      %v2456 = vadd.f32 %v2439, 1e-05
      %v2457 = vadd.f32 %v2440, 1e-05
      %v2458 = vadd.f32 %v2441, 1e-05
      %v2459 = vadd.f32 %v2442, 1e-05
      %v2460 = vadd.f32 %v2443, 1e-05
      %v2461 = vadd.f32 %v2444, 1e-05
      %v2462 = vadd.f32 %v2445, 1e-05
      %v2463 = vadd.f32 %v2446, 1e-05
      %v2464 = vadd.f32 %v2447, 1e-05
      %v2465 = vadd.f32 %v2448, 1e-05
      %v2466 = vadd.f32 %v2449, 1e-05
      %v2467 = vadd.f32 %v2450, 1e-05
      %v2468 = vadd.f32 %v2451, 1e-05
      %v2469 = vadd.f32 %v2452, 1e-05
      %v2470 = vrsqrt.pop %v2453
      %v2471 = vmul.f32 %v2470, %v2453
      %v2472 = vmul.f32 %v2471, %v2470
      %v2473 = vmul.f32 0.5, %v2472
      %v2474 = vsub.f32 1.5, %v2473
      %v2475 = vmul.f32 %v2470, %v2474
      %vm2476 = vweird.f32 %v2453
      %vm2477 = vweird.f32 %v2470
      %vm2478 = vmor %vm2476, %vm2477
      %v2479 = vsel %vm2478, %v2470, %v2475
      %v2480 = vrsqrt.pop %v2454
      %v2481 = vmul.f32 %v2480, %v2454
      %v2482 = vmul.f32 %v2481, %v2480
      %v2483 = vmul.f32 0.5, %v2482
      %v2484 = vsub.f32 1.5, %v2483
      %v2485 = vmul.f32 %v2480, %v2484
      %vm2486 = vweird.f32 %v2454
      %vm2487 = vweird.f32 %v2480
      %vm2488 = vmor %vm2486, %vm2487
      %v2489 = vsel %vm2488, %v2480, %v2485
      %v2490 = vrsqrt.pop %v2455
      %v2491 = vmul.f32 %v2490, %v2455
      %v2492 = vmul.f32 %v2491, %v2490
      %v2493 = vmul.f32 0.5, %v2492
      %v2494 = vsub.f32 1.5, %v2493
      %v2495 = vmul.f32 %v2490, %v2494
      %vm2496 = vweird.f32 %v2455
      %vm2497 = vweird.f32 %v2490
      %vm2498 = vmor %vm2496, %vm2497
      %v2499 = vsel %vm2498, %v2490, %v2495
      %v2500 = vrsqrt.pop %v2456
      %v2501 = vmul.f32 %v2500, %v2456
      %v2502 = vmul.f32 %v2501, %v2500
      %v2503 = vmul.f32 0.5, %v2502
      %v2504 = vsub.f32 1.5, %v2503
      %v2505 = vmul.f32 %v2500, %v2504
      %vm2506 = vweird.f32 %v2456
      %vm2507 = vweird.f32 %v2500
      %vm2508 = vmor %vm2506, %vm2507
      %v2509 = vsel %vm2508, %v2500, %v2505
      %v2510 = vrsqrt.pop %v2457
      %v2511 = vmul.f32 %v2510, %v2457
      %v2512 = vmul.f32 %v2511, %v2510
      %v2513 = vmul.f32 0.5, %v2512
      %v2514 = vsub.f32 1.5, %v2513
      %v2515 = vmul.f32 %v2510, %v2514
      %vm2516 = vweird.f32 %v2457
      %vm2517 = vweird.f32 %v2510
      %vm2518 = vmor %vm2516, %vm2517
      %v2519 = vsel %vm2518, %v2510, %v2515
      %v2520 = vrsqrt.pop %v2458
      %v2521 = vmul.f32 %v2520, %v2458
      %v2522 = vmul.f32 %v2521, %v2520
      %v2523 = vmul.f32 0.5, %v2522
      %v2524 = vsub.f32 1.5, %v2523
      %v2525 = vmul.f32 %v2520, %v2524
      %vm2526 = vweird.f32 %v2458
      %vm2527 = vweird.f32 %v2520
      %vm2528 = vmor %vm2526, %vm2527
      %v2529 = vsel %vm2528, %v2520, %v2525
      %v2530 = vrsqrt.pop %v2459
      %v2531 = vmul.f32 %v2530, %v2459
      %v2532 = vmul.f32 %v2531, %v2530
      %v2533 = vmul.f32 0.5, %v2532
      %v2534 = vsub.f32 1.5, %v2533
      %v2535 = vmul.f32 %v2530, %v2534
      %vm2536 = vweird.f32 %v2459
      %vm2537 = vweird.f32 %v2530
      %vm2538 = vmor %vm2536, %vm2537
      %v2539 = vsel %vm2538, %v2530, %v2535
      %v2540 = vrsqrt.pop %v2460
      %v2541 = vmul.f32 %v2540, %v2460
      %v2542 = vmul.f32 %v2541, %v2540
      %v2543 = vmul.f32 0.5, %v2542
      %v2544 = vsub.f32 1.5, %v2543
      %v2545 = vmul.f32 %v2540, %v2544
      %vm2546 = vweird.f32 %v2460
      %vm2547 = vweird.f32 %v2540
      %vm2548 = vmor %vm2546, %vm2547
      %v2549 = vsel %vm2548, %v2540, %v2545
      %v2550 = vrsqrt.pop %v2461
      %v2551 = vmul.f32 %v2550, %v2461
      %v2552 = vmul.f32 %v2551, %v2550
      %v2553 = vmul.f32 0.5, %v2552
      %v2554 = vsub.f32 1.5, %v2553
      %v2555 = vmul.f32 %v2550, %v2554
      %vm2556 = vweird.f32 %v2461
      %vm2557 = vweird.f32 %v2550
      %vm2558 = vmor %vm2556, %vm2557
      %v2559 = vsel %vm2558, %v2550, %v2555
      %v2560 = vrsqrt.pop %v2462
      %v2561 = vmul.f32 %v2560, %v2462
      %v2562 = vmul.f32 %v2561, %v2560
      %v2563 = vmul.f32 0.5, %v2562
      %v2564 = vsub.f32 1.5, %v2563
      %v2565 = vmul.f32 %v2560, %v2564
      %vm2566 = vweird.f32 %v2462
      %vm2567 = vweird.f32 %v2560
      %vm2568 = vmor %vm2566, %vm2567
      %v2569 = vsel %vm2568, %v2560, %v2565
      %v2570 = vrsqrt.pop %v2463
      %v2571 = vmul.f32 %v2570, %v2463
      %v2572 = vmul.f32 %v2571, %v2570
      %v2573 = vmul.f32 0.5, %v2572
      %v2574 = vsub.f32 1.5, %v2573
      %v2575 = vmul.f32 %v2570, %v2574
      %vm2576 = vweird.f32 %v2463
      %vm2577 = vweird.f32 %v2570
      %vm2578 = vmor %vm2576, %vm2577
      %v2579 = vsel %vm2578, %v2570, %v2575
      %v2580 = vrsqrt.pop %v2464
      %v2581 = vmul.f32 %v2580, %v2464
      %v2582 = vmul.f32 %v2581, %v2580
      %v2583 = vmul.f32 0.5, %v2582
      %v2584 = vsub.f32 1.5, %v2583
      %v2585 = vmul.f32 %v2580, %v2584
      %vm2586 = vweird.f32 %v2464
      %vm2587 = vweird.f32 %v2580
      %vm2588 = vmor %vm2586, %vm2587
      %v2589 = vsel %vm2588, %v2580, %v2585
      %v2590 = vrsqrt.pop %v2465
      %v2591 = vmul.f32 %v2590, %v2465
      %v2592 = vmul.f32 %v2591, %v2590
      %v2593 = vmul.f32 0.5, %v2592
      %v2594 = vsub.f32 1.5, %v2593
      %v2595 = vmul.f32 %v2590, %v2594
      %vm2596 = vweird.f32 %v2465
      %vm2597 = vweird.f32 %v2590
      %vm2598 = vmor %vm2596, %vm2597
      %v2599 = vsel %vm2598, %v2590, %v2595
      %v2600 = vrsqrt.pop %v2466
      %v2601 = vmul.f32 %v2600, %v2466
      %v2602 = vmul.f32 %v2601, %v2600
      %v2603 = vmul.f32 0.5, %v2602
      %v2604 = vsub.f32 1.5, %v2603
      %v2605 = vmul.f32 %v2600, %v2604
      %vm2606 = vweird.f32 %v2466
      %vm2607 = vweird.f32 %v2600
      %vm2608 = vmor %vm2606, %vm2607
      %v2609 = vsel %vm2608, %v2600, %v2605
      %v2610 = vrsqrt.pop %v2467
      %v2611 = vmul.f32 %v2610, %v2467
      %v2612 = vmul.f32 %v2611, %v2610
      %v2613 = vmul.f32 0.5, %v2612
      %v2614 = vsub.f32 1.5, %v2613
      %v2615 = vmul.f32 %v2610, %v2614
      %vm2616 = vweird.f32 %v2467
      %vm2617 = vweird.f32 %v2610
      %vm2618 = vmor %vm2616, %vm2617
      %v2619 = vsel %vm2618, %v2610, %v2615
      %v2620 = vrsqrt.pop %v2468
      %v2621 = vmul.f32 %v2620, %v2468
      %v2622 = vmul.f32 %v2621, %v2620
      %v2623 = vmul.f32 0.5, %v2622
      %v2624 = vsub.f32 1.5, %v2623
      %v2625 = vmul.f32 %v2620, %v2624
      %vm2626 = vweird.f32 %v2468
      %vm2627 = vweird.f32 %v2620
      %vm2628 = vmor %vm2626, %vm2627
      %v2629 = vsel %vm2628, %v2620, %v2625
      %v2630 = vrsqrt.pop %v2469
      %v2631 = vmul.f32 %v2630, %v2469
      %v2632 = vmul.f32 %v2631, %v2630
      %v2633 = vmul.f32 0.5, %v2632
      %v2634 = vsub.f32 1.5, %v2633
      %v2635 = vmul.f32 %v2630, %v2634
      %vm2636 = vweird.f32 %v2469
      %vm2637 = vweird.f32 %v2630
      %vm2638 = vmor %vm2636, %vm2637
      %v2639 = vsel %vm2638, %v2630, %v2635
      %v2640 = vmul.f32 %v2368, %v2479
      %v2641 = vmul.f32 %v2369, %v2489
      %v2642 = vmul.f32 %v2370, %v2499
      %v2643 = vmul.f32 %v2371, %v2509
      %v2644 = vmul.f32 %v2372, %v2519
      %v2645 = vmul.f32 %v2373, %v2529
      %v2646 = vmul.f32 %v2374, %v2539
      %v2647 = vmul.f32 %v2375, %v2549
      %v2648 = vmul.f32 %v2376, %v2559
      %v2649 = vmul.f32 %v2377, %v2569
      %v2650 = vmul.f32 %v2378, %v2579
      %v2651 = vmul.f32 %v2379, %v2589
      %v2652 = vmul.f32 %v2380, %v2599
      %v2653 = vmul.f32 %v2381, %v2609
      %v2654 = vmul.f32 %v2382, %v2619
      %v2655 = vmul.f32 %v2383, %v2629
      %v2656 = vmul.f32 %v2384, %v2639
      %v2658 = vperm.slane %v2308, 0
      %v2660 = vmul.f32 %v2640, %v2658
      %v2661 = vmul.f32 %v2641, %v2658
      %v2662 = vmul.f32 %v2642, %v2658
      %v2663 = vmul.f32 %v2643, %v2658
      %v2664 = vmul.f32 %v2644, %v2658
      %v2665 = vmul.f32 %v2645, %v2658
      %v2666 = vmul.f32 %v2646, %v2658
      %v2667 = vmul.f32 %v2647, %v2658
      %v2668 = vmul.f32 %v2648, %v2658
      %v2669 = vmul.f32 %v2649, %v2658
      %v2670 = vmul.f32 %v2650, %v2658
      %v2671 = vmul.f32 %v2651, %v2658
      %v2672 = vmul.f32 %v2652, %v2658
      %v2673 = vmul.f32 %v2653, %v2658
      %v2674 = vmul.f32 %v2654, %v2658
      %v2675 = vmul.f32 %v2655, %v2658
      %v2676 = vmul.f32 %v2656, %v2658
      %v2678 = vperm.slane %v2309, 0
      %v2680 = vadd.f32 %v2660, %v2678
      %v2681 = vadd.f32 %v2661, %v2678
      %v2682 = vadd.f32 %v2662, %v2678
      %v2683 = vadd.f32 %v2663, %v2678
      %v2684 = vadd.f32 %v2664, %v2678
      %v2685 = vadd.f32 %v2665, %v2678
      %v2686 = vadd.f32 %v2666, %v2678
      %v2687 = vadd.f32 %v2667, %v2678
      %v2688 = vadd.f32 %v2668, %v2678
      %v2689 = vadd.f32 %v2669, %v2678
      %v2690 = vadd.f32 %v2670, %v2678
      %v2691 = vadd.f32 %v2671, %v2678
      %v2692 = vadd.f32 %v2672, %v2678
      %v2693 = vadd.f32 %v2673, %v2678
      %v2694 = vadd.f32 %v2674, %v2678
      %v2695 = vadd.f32 %v2675, %v2678
      %v2696 = vadd.f32 %v2676, %v2678
      %v2697 = vld [vmem:[%s11] sm:$0xff]
      %v2698 = vld [vmem:[%s11 + $0x8] sm:$0xff]
      %v2699 = vld [vmem:[%s11 + $0x10] sm:$0xff]
      %v2700 = vld [vmem:[%s11 + $0x18] sm:$0xff]
      %v2701 = vld [vmem:[%s11 + $0x20] sm:$0xff]
      %v2702 = vld [vmem:[%s11 + $0x28] sm:$0xff]
      %v2703 = vld [vmem:[%s11 + $0x30] sm:$0xff]
      %v2704 = vld [vmem:[%s11 + $0x38] sm:$0xff]
      %v2705 = vld [vmem:[%s11 + $0x40] sm:$0xff]
      %v2706 = vld [vmem:[%s11 + $0x48] sm:$0xff]
      %v2707 = vld [vmem:[%s11 + $0x50] sm:$0xff]
      %v2708 = vld [vmem:[%s11 + $0x58] sm:$0xff]
      %v2709 = vld [vmem:[%s11 + $0x60] sm:$0xff]
      %v2710 = vld [vmem:[%s11 + $0x68] sm:$0xff]
      %v2711 = vld [vmem:[%s11 + $0x70] sm:$0xff]
      %v2712 = vld [vmem:[%s11 + $0x78] sm:$0xff]
      %v2713 = vld [vmem:[%s11 + $0x80] sm:$0xff]
      %v2714 = vld [vmem:[%s11 + $0x88] sm:$0xff]
      %v2715 = vld [vmem:[%s11 + $0x90] sm:$0xff]
      %v2716 = vld [vmem:[%s11 + $0x98] sm:$0xff]
      %v2717 = vld [vmem:[%s11 + $0xa0] sm:$0xff]
      %v2718 = vld [vmem:[%s11 + $0xa8] sm:$0xff]
      %v2719 = vld [vmem:[%s11 + $0xb0] sm:$0xff]
      %v2720 = vld [vmem:[%s11 + $0xb8] sm:$0xff]
      %v2721 = vld [vmem:[%s11 + $0xc0] sm:$0xff]
      %v2722 = vld [vmem:[%s11 + $0xc8] sm:$0xff]
      %v2723 = vld [vmem:[%s11 + $0xd0] sm:$0xff]
      %v2724 = vld [vmem:[%s11 + $0xd8] sm:$0xff]
      %v2725 = vld [vmem:[%s11 + $0xe0] sm:$0xff]
      %v2726 = vld [vmem:[%s11 + $0xe8] sm:$0xff]
      %v2727 = vld [vmem:[%s11 + $0xf0] sm:$0xff]
      %v2728 = vld [vmem:[%s11 + $0xf8] sm:$0xff]
      %v2729 = vld [vmem:[%s12] sm:$0x3]
      %v2731 = vperm.slane %v2729, 0
      %v2732 = vperm.slane %v2729, 1
      %2735 = vmatpush.msra.mxu0 %v2727
      %2736 = vmatpush.msra.mxu0 %v2725
      %2737 = vmatpush.msra.mxu0 %v2723
      %2738 = vmatpush.msra.mxu0 %v2721
      %2739 = vmatpush.msra.mxu0 %v2719
      %2740 = vmatpush.msra.mxu0 %v2717
      %2741 = vmatpush.msra.mxu0 %v2715
      %2742 = vmatpush.msra.mxu0 %v2713
      %2743 = vmatpush.msra.mxu0 %v2711
      %2744 = vmatpush.msra.mxu0 %v2709
      %2745 = vmatpush.msra.mxu0 %v2707
      %2746 = vmatpush.msra.mxu0 %v2705
      %2747 = vmatpush.msra.mxu0 %v2703
      %2748 = vmatpush.msra.mxu0 %v2701
      %2749 = vmatpush.msra.mxu0 %v2699
      %2750 = vmatpush.msra.mxu0 %v2697
      %2751 = vmatmul.f32.gmra.mxu0 %v2680
      %v2752 = vpop.f32.mrf.mxu0
      %v2753 = vadd.f32 %v2731, %v2752
      %2754 = vmatmul.f32.gmra.mxu0 %v2681
      %v2755 = vpop.f32.mrf.mxu0
      %v2756 = vadd.f32 %v2731, %v2755
      %2757 = vmatmul.f32.gmra.mxu0 %v2682
      %v2758 = vpop.f32.mrf.mxu0
      %v2759 = vadd.f32 %v2731, %v2758
      %2760 = vmatmul.f32.gmra.mxu0 %v2683
      %v2761 = vpop.f32.mrf.mxu0
      %v2762 = vadd.f32 %v2731, %v2761
      %2763 = vmatmul.f32.gmra.mxu0 %v2684
      %v2764 = vpop.f32.mrf.mxu0
      %v2765 = vadd.f32 %v2731, %v2764
      %2766 = vmatmul.f32.gmra.mxu0 %v2685
      %v2767 = vpop.f32.mrf.mxu0
      %v2768 = vadd.f32 %v2731, %v2767
      %2769 = vmatmul.f32.gmra.mxu0 %v2686
      %v2770 = vpop.f32.mrf.mxu0
      %v2771 = vadd.f32 %v2731, %v2770
      %2772 = vmatmul.f32.gmra.mxu0 %v2687
      %v2773 = vpop.f32.mrf.mxu0
      %v2774 = vadd.f32 %v2731, %v2773
      %2775 = vmatmul.f32.gmra.mxu0 %v2688
      %v2776 = vpop.f32.mrf.mxu0
      %v2777 = vadd.f32 %v2731, %v2776
      %2778 = vmatmul.f32.gmra.mxu0 %v2689
      %v2779 = vpop.f32.mrf.mxu0
      %v2780 = vadd.f32 %v2731, %v2779
      %2781 = vmatmul.f32.gmra.mxu0 %v2690
      %v2782 = vpop.f32.mrf.mxu0
      %v2783 = vadd.f32 %v2731, %v2782
      %2784 = vmatmul.f32.gmra.mxu0 %v2691
      %v2785 = vpop.f32.mrf.mxu0
      %v2786 = vadd.f32 %v2731, %v2785
      %2787 = vmatmul.f32.gmra.mxu0 %v2692
      %v2788 = vpop.f32.mrf.mxu0
      %v2789 = vadd.f32 %v2731, %v2788
      %2790 = vmatmul.f32.gmra.mxu0 %v2693
      %v2791 = vpop.f32.mrf.mxu0
      %v2792 = vadd.f32 %v2731, %v2791
      %2793 = vmatmul.f32.gmra.mxu0 %v2694
      %v2794 = vpop.f32.mrf.mxu0
      %v2795 = vadd.f32 %v2731, %v2794
      %2796 = vmatmul.f32.gmra.mxu0 %v2695
      %v2797 = vpop.f32.mrf.mxu0
      %v2798 = vadd.f32 %v2731, %v2797
      %2799 = vmatmul.f32.gmra.mxu0 %v2696
      %v2800 = vpop.f32.mrf.mxu0
      %v2801 = vadd.f32 %v2731, %v2800
      %2802 = vdwg.mxu0
      %2803 = vmatpush.msra.mxu0 %v2728
      %2804 = vmatpush.msra.mxu0 %v2726
      %2805 = vmatpush.msra.mxu0 %v2724
      %2806 = vmatpush.msra.mxu0 %v2722
      %2807 = vmatpush.msra.mxu0 %v2720
      %2808 = vmatpush.msra.mxu0 %v2718
      %2809 = vmatpush.msra.mxu0 %v2716
      %2810 = vmatpush.msra.mxu0 %v2714
      %2811 = vmatpush.msra.mxu0 %v2712
      %2812 = vmatpush.msra.mxu0 %v2710
      %2813 = vmatpush.msra.mxu0 %v2708
      %2814 = vmatpush.msra.mxu0 %v2706
      %2815 = vmatpush.msra.mxu0 %v2704
      %2816 = vmatpush.msra.mxu0 %v2702
      %2817 = vmatpush.msra.mxu0 %v2700
      %2818 = vmatpush.msra.mxu0 %v2698
      %2819 = vmatmul.f32.gmra.mxu0 %v2680
      %v2820 = vpop.f32.mrf.mxu0
      %v2821 = vadd.f32 %v2732, %v2820
      %2822 = vmatmul.f32.gmra.mxu0 %v2681
      %v2823 = vpop.f32.mrf.mxu0
      %v2824 = vadd.f32 %v2732, %v2823
      %2825 = vmatmul.f32.gmra.mxu0 %v2682
      %v2826 = vpop.f32.mrf.mxu0
      %v2827 = vadd.f32 %v2732, %v2826
      %2828 = vmatmul.f32.gmra.mxu0 %v2683
      %v2829 = vpop.f32.mrf.mxu0
      %v2830 = vadd.f32 %v2732, %v2829
      %2831 = vmatmul.f32.gmra.mxu0 %v2684
      %v2832 = vpop.f32.mrf.mxu0
      %v2833 = vadd.f32 %v2732, %v2832
      %2834 = vmatmul.f32.gmra.mxu0 %v2685
      %v2835 = vpop.f32.mrf.mxu0
      %v2836 = vadd.f32 %v2732, %v2835
      %2837 = vmatmul.f32.gmra.mxu0 %v2686
      %v2838 = vpop.f32.mrf.mxu0
      %v2839 = vadd.f32 %v2732, %v2838
      %2840 = vmatmul.f32.gmra.mxu0 %v2687
      %v2841 = vpop.f32.mrf.mxu0
      %v2842 = vadd.f32 %v2732, %v2841
      %2843 = vmatmul.f32.gmra.mxu0 %v2688
      %v2844 = vpop.f32.mrf.mxu0
      %v2845 = vadd.f32 %v2732, %v2844
      %2846 = vmatmul.f32.gmra.mxu0 %v2689
      %v2847 = vpop.f32.mrf.mxu0
      %v2848 = vadd.f32 %v2732, %v2847
      %2849 = vmatmul.f32.gmra.mxu0 %v2690
      %v2850 = vpop.f32.mrf.mxu0
      %v2851 = vadd.f32 %v2732, %v2850
      %2852 = vmatmul.f32.gmra.mxu0 %v2691
      %v2853 = vpop.f32.mrf.mxu0
      %v2854 = vadd.f32 %v2732, %v2853
      %2855 = vmatmul.f32.gmra.mxu0 %v2692
      %v2856 = vpop.f32.mrf.mxu0
      %v2857 = vadd.f32 %v2732, %v2856
      %2858 = vmatmul.f32.gmra.mxu0 %v2693
      %v2859 = vpop.f32.mrf.mxu0
      %v2860 = vadd.f32 %v2732, %v2859
      %2861 = vmatmul.f32.gmra.mxu0 %v2694
      %v2862 = vpop.f32.mrf.mxu0
      %v2863 = vadd.f32 %v2732, %v2862
      %2864 = vmatmul.f32.gmra.mxu0 %v2695
      %v2865 = vpop.f32.mrf.mxu0
      %v2866 = vadd.f32 %v2732, %v2865
      %2867 = vmatmul.f32.gmra.mxu0 %v2696
      %v2868 = vpop.f32.mrf.mxu0
      %v2869 = vadd.f32 %v2732, %v2868
      %2870 = vdwg.mxu0
      %v2871 = vmul.f32 %v2753, 0.5
      %v2872 = vmul.f32 %v2821, 0.5
      %v2873 = vmul.f32 %v2756, 0.5
      %v2874 = vmul.f32 %v2824, 0.5
      %v2875 = vmul.f32 %v2759, 0.5
      %v2876 = vmul.f32 %v2827, 0.5
      %v2877 = vmul.f32 %v2762, 0.5
      %v2878 = vmul.f32 %v2830, 0.5
      %v2879 = vmul.f32 %v2765, 0.5
      %v2880 = vmul.f32 %v2833, 0.5
      %v2881 = vmul.f32 %v2768, 0.5
      %v2882 = vmul.f32 %v2836, 0.5
      %v2883 = vmul.f32 %v2771, 0.5
      %v2884 = vmul.f32 %v2839, 0.5
      %v2885 = vmul.f32 %v2774, 0.5
      %v2886 = vmul.f32 %v2842, 0.5
      %v2887 = vmul.f32 %v2777, 0.5
      %v2888 = vmul.f32 %v2845, 0.5
      %v2889 = vmul.f32 %v2780, 0.5
      %v2890 = vmul.f32 %v2848, 0.5
      %v2891 = vmul.f32 %v2783, 0.5
      %v2892 = vmul.f32 %v2851, 0.5
      %v2893 = vmul.f32 %v2786, 0.5
      %v2894 = vmul.f32 %v2854, 0.5
      %v2895 = vmul.f32 %v2789, 0.5
      %v2896 = vmul.f32 %v2857, 0.5
      %v2897 = vmul.f32 %v2792, 0.5
      %v2898 = vmul.f32 %v2860, 0.5
      %v2899 = vmul.f32 %v2795, 0.5
      %v2900 = vmul.f32 %v2863, 0.5
      %v2901 = vmul.f32 %v2798, 0.5
      %v2902 = vmul.f32 %v2866, 0.5
      %v2903 = vmul.f32 %v2801, 0.5
      %v2904 = vmul.f32 %v2869, 0.5
      %v2905 = vmul.f32 %v2753, 0.70710677
      %v2906 = vmul.f32 %v2821, 0.70710677
      %v2907 = vmul.f32 %v2756, 0.70710677
      %v2908 = vmul.f32 %v2824, 0.70710677
      %v2909 = vmul.f32 %v2759, 0.70710677
      %v2910 = vmul.f32 %v2827, 0.70710677
      %v2911 = vmul.f32 %v2762, 0.70710677
      %v2912 = vmul.f32 %v2830, 0.70710677
      %v2913 = vmul.f32 %v2765, 0.70710677
      %v2914 = vmul.f32 %v2833, 0.70710677
      %v2915 = vmul.f32 %v2768, 0.70710677
      %v2916 = vmul.f32 %v2836, 0.70710677
      %v2917 = vmul.f32 %v2771, 0.70710677
      %v2918 = vmul.f32 %v2839, 0.70710677
      %v2919 = vmul.f32 %v2774, 0.70710677
      %v2920 = vmul.f32 %v2842, 0.70710677
      %v2921 = vmul.f32 %v2777, 0.70710677
      %v2922 = vmul.f32 %v2845, 0.70710677
      %v2923 = vmul.f32 %v2780, 0.70710677
      %v2924 = vmul.f32 %v2848, 0.70710677
      %v2925 = vmul.f32 %v2783, 0.70710677
      %v2926 = vmul.f32 %v2851, 0.70710677
      %v2927 = vmul.f32 %v2786, 0.70710677
      %v2928 = vmul.f32 %v2854, 0.70710677
      %v2929 = vmul.f32 %v2789, 0.70710677
      %v2930 = vmul.f32 %v2857, 0.70710677
      %v2931 = vmul.f32 %v2792, 0.70710677
      %v2932 = vmul.f32 %v2860, 0.70710677
      %v2933 = vmul.f32 %v2795, 0.70710677
      %v2934 = vmul.f32 %v2863, 0.70710677
      %v2935 = vmul.f32 %v2798, 0.70710677
      %v2936 = vmul.f32 %v2866, 0.70710677
      %v2937 = vmul.f32 %v2801, 0.70710677
      %v2938 = vmul.f32 %v2869, 0.70710677
      %vm2939 = vcmp.ge.f32.partialorder %v2905, 0.0
      %vm2940 = vcmp.ge.f32.partialorder %v2906, 0.0
      %vm2941 = vcmp.ge.f32.partialorder %v2907, 0.0
      %vm2942 = vcmp.ge.f32.partialorder %v2908, 0.0
      %vm2943 = vcmp.ge.f32.partialorder %v2909, 0.0
      %vm2944 = vcmp.ge.f32.partialorder %v2910, 0.0
      %vm2945 = vcmp.ge.f32.partialorder %v2911, 0.0
      %vm2946 = vcmp.ge.f32.partialorder %v2912, 0.0
      %vm2947 = vcmp.ge.f32.partialorder %v2913, 0.0
      %vm2948 = vcmp.ge.f32.partialorder %v2914, 0.0
      %vm2949 = vcmp.ge.f32.partialorder %v2915, 0.0
      %vm2950 = vcmp.ge.f32.partialorder %v2916, 0.0
      %vm2951 = vcmp.ge.f32.partialorder %v2917, 0.0
      %vm2952 = vcmp.ge.f32.partialorder %v2918, 0.0
      %vm2953 = vcmp.ge.f32.partialorder %v2919, 0.0
      %vm2954 = vcmp.ge.f32.partialorder %v2920, 0.0
      %vm2955 = vcmp.ge.f32.partialorder %v2921, 0.0
      %vm2956 = vcmp.ge.f32.partialorder %v2922, 0.0
      %vm2957 = vcmp.ge.f32.partialorder %v2923, 0.0
      %vm2958 = vcmp.ge.f32.partialorder %v2924, 0.0
      %vm2959 = vcmp.ge.f32.partialorder %v2925, 0.0
      %vm2960 = vcmp.ge.f32.partialorder %v2926, 0.0
      %vm2961 = vcmp.ge.f32.partialorder %v2927, 0.0
      %vm2962 = vcmp.ge.f32.partialorder %v2928, 0.0
      %vm2963 = vcmp.ge.f32.partialorder %v2929, 0.0
      %vm2964 = vcmp.ge.f32.partialorder %v2930, 0.0
      %vm2965 = vcmp.ge.f32.partialorder %v2931, 0.0
      %vm2966 = vcmp.ge.f32.partialorder %v2932, 0.0
      %vm2967 = vcmp.ge.f32.partialorder %v2933, 0.0
      %vm2968 = vcmp.ge.f32.partialorder %v2934, 0.0
      %vm2969 = vcmp.ge.f32.partialorder %v2935, 0.0
      %vm2970 = vcmp.ge.f32.partialorder %v2936, 0.0
      %vm2971 = vcmp.ge.f32.partialorder %v2937, 0.0
      %vm2972 = vcmp.ge.f32.partialorder %v2938, 0.0
      %v2973 = vsel %vm2939, 1.0, -1.0
      %v2974 = vsel %vm2940, 1.0, -1.0
      %v2975 = vsel %vm2941, 1.0, -1.0
      %v2976 = vsel %vm2942, 1.0, -1.0
      %v2977 = vsel %vm2943, 1.0, -1.0
      %v2978 = vsel %vm2944, 1.0, -1.0
      %v2979 = vsel %vm2945, 1.0, -1.0
      %v2980 = vsel %vm2946, 1.0, -1.0
      %v2981 = vsel %vm2947, 1.0, -1.0
      %v2982 = vsel %vm2948, 1.0, -1.0
      %v2983 = vsel %vm2949, 1.0, -1.0
      %v2984 = vsel %vm2950, 1.0, -1.0
      %v2985 = vsel %vm2951, 1.0, -1.0
      %v2986 = vsel %vm2952, 1.0, -1.0
      %v2987 = vsel %vm2953, 1.0, -1.0
      %v2988 = vsel %vm2954, 1.0, -1.0
      %v2989 = vsel %vm2955, 1.0, -1.0
      %v2990 = vsel %vm2956, 1.0, -1.0
      %v2991 = vsel %vm2957, 1.0, -1.0
      %v2992 = vsel %vm2958, 1.0, -1.0
      %v2993 = vsel %vm2959, 1.0, -1.0
      %v2994 = vsel %vm2960, 1.0, -1.0
      %v2995 = vsel %vm2961, 1.0, -1.0
      %v2996 = vsel %vm2962, 1.0, -1.0
      %v2997 = vsel %vm2963, 1.0, -1.0
      %v2998 = vsel %vm2964, 1.0, -1.0
      %v2999 = vsel %vm2965, 1.0, -1.0
      %v3000 = vsel %vm2966, 1.0, -1.0
      %v3001 = vsel %vm2967, 1.0, -1.0
      %v3002 = vsel %vm2968, 1.0, -1.0
      %v3003 = vsel %vm2969, 1.0, -1.0
      %v3004 = vsel %vm2970, 1.0, -1.0
      %v3005 = vsel %vm2971, 1.0, -1.0
      %v3006 = vsel %vm2972, 1.0, -1.0
      %v3007 = vand.u32 2147483647, %v2905
      %v3008 = vand.u32 2147483647, %v2906
      %v3009 = vand.u32 2147483647, %v2907
      %v3010 = vand.u32 2147483647, %v2908
      %v3011 = vand.u32 2147483647, %v2909
      %v3012 = vand.u32 2147483647, %v2910
      %v3013 = vand.u32 2147483647, %v2911
      %v3014 = vand.u32 2147483647, %v2912
      %v3015 = vand.u32 2147483647, %v2913
      %v3016 = vand.u32 2147483647, %v2914
      %v3017 = vand.u32 2147483647, %v2915
      %v3018 = vand.u32 2147483647, %v2916
      %v3019 = vand.u32 2147483647, %v2917
      %v3020 = vand.u32 2147483647, %v2918
      %v3021 = vand.u32 2147483647, %v2919
      %v3022 = vand.u32 2147483647, %v2920
      %v3023 = vand.u32 2147483647, %v2921
      %v3024 = vand.u32 2147483647, %v2922
      %v3025 = vand.u32 2147483647, %v2923
      %v3026 = vand.u32 2147483647, %v2924
      %v3027 = vand.u32 2147483647, %v2925
      %v3028 = vand.u32 2147483647, %v2926
      %v3029 = vand.u32 2147483647, %v2927
      %v3030 = vand.u32 2147483647, %v2928
      %v3031 = vand.u32 2147483647, %v2929
      %v3032 = vand.u32 2147483647, %v2930
      %v3033 = vand.u32 2147483647, %v2931
      %v3034 = vand.u32 2147483647, %v2932
      %v3035 = vand.u32 2147483647, %v2933
      %v3036 = vand.u32 2147483647, %v2934
      %v3037 = vand.u32 2147483647, %v2935
      %v3038 = vand.u32 2147483647, %v2936
      %v3039 = vand.u32 2147483647, %v2937
      %v3040 = vand.u32 2147483647, %v2938
      %v3041 = vmul.f32 %v3007, 0.3275911
      %v3042 = vmul.f32 %v3008, 0.3275911
      %v3043 = vmul.f32 %v3009, 0.3275911
      %v3044 = vmul.f32 %v3010, 0.3275911
      %v3045 = vmul.f32 %v3011, 0.3275911
      %v3046 = vmul.f32 %v3012, 0.3275911
      %v3047 = vmul.f32 %v3013, 0.3275911
      %v3048 = vmul.f32 %v3014, 0.3275911
      %v3049 = vmul.f32 %v3015, 0.3275911
      %v3050 = vmul.f32 %v3016, 0.3275911
      %v3051 = vmul.f32 %v3017, 0.3275911
      %v3052 = vmul.f32 %v3018, 0.3275911
      %v3053 = vmul.f32 %v3019, 0.3275911
      %v3054 = vmul.f32 %v3020, 0.3275911
      %v3055 = vmul.f32 %v3021, 0.3275911
      %v3056 = vmul.f32 %v3022, 0.3275911
      %v3057 = vmul.f32 %v3023, 0.3275911
      %v3058 = vmul.f32 %v3024, 0.3275911
      %v3059 = vmul.f32 %v3025, 0.3275911
      %v3060 = vmul.f32 %v3026, 0.3275911
      %v3061 = vmul.f32 %v3027, 0.3275911
      %v3062 = vmul.f32 %v3028, 0.3275911
      %v3063 = vmul.f32 %v3029, 0.3275911
      %v3064 = vmul.f32 %v3030, 0.3275911
      %v3065 = vmul.f32 %v3031, 0.3275911
      %v3066 = vmul.f32 %v3032, 0.3275911
      %v3067 = vmul.f32 %v3033, 0.3275911
      %v3068 = vmul.f32 %v3034, 0.3275911
      %v3069 = vmul.f32 %v3035, 0.3275911
      %v3070 = vmul.f32 %v3036, 0.3275911
      %v3071 = vmul.f32 %v3037, 0.3275911
      %v3072 = vmul.f32 %v3038, 0.3275911
      %v3073 = vmul.f32 %v3039, 0.3275911
      %v3074 = vmul.f32 %v3040, 0.3275911
      %v3075 = vadd.f32 %v3041, 1.0
      %v3076 = vadd.f32 %v3042, 1.0
      %v3077 = vadd.f32 %v3043, 1.0
      %v3078 = vadd.f32 %v3044, 1.0
      %v3079 = vadd.f32 %v3045, 1.0
      %v3080 = vadd.f32 %v3046, 1.0
      %v3081 = vadd.f32 %v3047, 1.0
      %v3082 = vadd.f32 %v3048, 1.0
      %v3083 = vadd.f32 %v3049, 1.0
      %v3084 = vadd.f32 %v3050, 1.0
      %v3085 = vadd.f32 %v3051, 1.0
      %v3086 = vadd.f32 %v3052, 1.0
      %v3087 = vadd.f32 %v3053, 1.0
      %v3088 = vadd.f32 %v3054, 1.0
      %v3089 = vadd.f32 %v3055, 1.0
      %v3090 = vadd.f32 %v3056, 1.0
      %v3091 = vadd.f32 %v3057, 1.0
      %v3092 = vadd.f32 %v3058, 1.0
      %v3093 = vadd.f32 %v3059, 1.0
      %v3094 = vadd.f32 %v3060, 1.0
      %v3095 = vadd.f32 %v3061, 1.0
      %v3096 = vadd.f32 %v3062, 1.0
      %v3097 = vadd.f32 %v3063, 1.0
      %v3098 = vadd.f32 %v3064, 1.0
      %v3099 = vadd.f32 %v3065, 1.0
      %v3100 = vadd.f32 %v3066, 1.0
      %v3101 = vadd.f32 %v3067, 1.0
      %v3102 = vadd.f32 %v3068, 1.0
      %v3103 = vadd.f32 %v3069, 1.0
      %v3104 = vadd.f32 %v3070, 1.0
      %v3105 = vadd.f32 %v3071, 1.0
      %v3106 = vadd.f32 %v3072, 1.0
      %v3107 = vadd.f32 %v3073, 1.0
      %v3108 = vadd.f32 %v3074, 1.0
      %v3109 = vrcp.pop %v3075
      %v3110 = vmul.f32 %v3075, %v3109
      %v3111 = vsub.f32 1.0, %v3110
      %v3112 = vmul.f32 %v3109, %v3111
      %v3113 = vadd.f32 %v3109, %v3112
      %vm3114 = vweird.f32 %v3075
      %vm3115 = vweird.f32 %v3109
      %vm3116 = vmor %vm3114, %vm3115
      %v3117 = vsel %vm3116, %v3109, %v3113
      %v3118 = vand.u32 2147483647, %v3075
      %vm3119 = vcmp.eq.f32.partialorder %v3118, 8.507059e+37
      %v3120 = vand.u32 %v3075, 2147483648
      %v3121 = vor.u32 1.1754944e-38, %v3120
      %v3122 = vsel %vm3119, %v3121, %v3117
      %v3123 = vmul.f32 1.0, %v3122
      %v3124 = vrcp.pop %v3076
      %v3125 = vmul.f32 %v3076, %v3124
      %v3126 = vsub.f32 1.0, %v3125
      %v3127 = vmul.f32 %v3124, %v3126
      %v3128 = vadd.f32 %v3124, %v3127
      %vm3129 = vweird.f32 %v3076
      %vm3130 = vweird.f32 %v3124
      %vm3131 = vmor %vm3129, %vm3130
      %v3132 = vsel %vm3131, %v3124, %v3128
      %v3133 = vand.u32 2147483647, %v3076
      %vm3134 = vcmp.eq.f32.partialorder %v3133, 8.507059e+37
      %v3135 = vand.u32 %v3076, 2147483648
      %v3136 = vor.u32 1.1754944e-38, %v3135
      %v3137 = vsel %vm3134, %v3136, %v3132
      %v3138 = vmul.f32 1.0, %v3137
      %v3139 = vrcp.pop %v3077
      %v3140 = vmul.f32 %v3077, %v3139
      %v3141 = vsub.f32 1.0, %v3140
      %v3142 = vmul.f32 %v3139, %v3141
      %v3143 = vadd.f32 %v3139, %v3142
      %vm3144 = vweird.f32 %v3077
      %vm3145 = vweird.f32 %v3139
      %vm3146 = vmor %vm3144, %vm3145
      %v3147 = vsel %vm3146, %v3139, %v3143
      %v3148 = vand.u32 2147483647, %v3077
      %vm3149 = vcmp.eq.f32.partialorder %v3148, 8.507059e+37
      %v3150 = vand.u32 %v3077, 2147483648
      %v3151 = vor.u32 1.1754944e-38, %v3150
      %v3152 = vsel %vm3149, %v3151, %v3147
      %v3153 = vmul.f32 1.0, %v3152
      %v3154 = vrcp.pop %v3078
      %v3155 = vmul.f32 %v3078, %v3154
      %v3156 = vsub.f32 1.0, %v3155
      %v3157 = vmul.f32 %v3154, %v3156
      %v3158 = vadd.f32 %v3154, %v3157
      %vm3159 = vweird.f32 %v3078
      %vm3160 = vweird.f32 %v3154
      %vm3161 = vmor %vm3159, %vm3160
      %v3162 = vsel %vm3161, %v3154, %v3158
      %v3163 = vand.u32 2147483647, %v3078
      %vm3164 = vcmp.eq.f32.partialorder %v3163, 8.507059e+37
      %v3165 = vand.u32 %v3078, 2147483648
      %v3166 = vor.u32 1.1754944e-38, %v3165
      %v3167 = vsel %vm3164, %v3166, %v3162
      %v3168 = vmul.f32 1.0, %v3167
      %v3169 = vrcp.pop %v3079
      %v3170 = vmul.f32 %v3079, %v3169
      %v3171 = vsub.f32 1.0, %v3170
      %v3172 = vmul.f32 %v3169, %v3171
      %v3173 = vadd.f32 %v3169, %v3172
      %vm3174 = vweird.f32 %v3079
      %vm3175 = vweird.f32 %v3169
      %vm3176 = vmor %vm3174, %vm3175
      %v3177 = vsel %vm3176, %v3169, %v3173
      %v3178 = vand.u32 2147483647, %v3079
      %vm3179 = vcmp.eq.f32.partialorder %v3178, 8.507059e+37
      %v3180 = vand.u32 %v3079, 2147483648
      %v3181 = vor.u32 1.1754944e-38, %v3180
      %v3182 = vsel %vm3179, %v3181, %v3177
      %v3183 = vmul.f32 1.0, %v3182
      %v3184 = vrcp.pop %v3080
      %v3185 = vmul.f32 %v3080, %v3184
      %v3186 = vsub.f32 1.0, %v3185
      %v3187 = vmul.f32 %v3184, %v3186
      %v3188 = vadd.f32 %v3184, %v3187
      %vm3189 = vweird.f32 %v3080
      %vm3190 = vweird.f32 %v3184
      %vm3191 = vmor %vm3189, %vm3190
      %v3192 = vsel %vm3191, %v3184, %v3188
      %v3193 = vand.u32 2147483647, %v3080
      %vm3194 = vcmp.eq.f32.partialorder %v3193, 8.507059e+37
      %v3195 = vand.u32 %v3080, 2147483648
      %v3196 = vor.u32 1.1754944e-38, %v3195
      %v3197 = vsel %vm3194, %v3196, %v3192
      %v3198 = vmul.f32 1.0, %v3197
      %v3199 = vrcp.pop %v3081
      %v3200 = vmul.f32 %v3081, %v3199
      %v3201 = vsub.f32 1.0, %v3200
      %v3202 = vmul.f32 %v3199, %v3201
      %v3203 = vadd.f32 %v3199, %v3202
      %vm3204 = vweird.f32 %v3081
      %vm3205 = vweird.f32 %v3199
      %vm3206 = vmor %vm3204, %vm3205
      %v3207 = vsel %vm3206, %v3199, %v3203
      %v3208 = vand.u32 2147483647, %v3081
      %vm3209 = vcmp.eq.f32.partialorder %v3208, 8.507059e+37
      %v3210 = vand.u32 %v3081, 2147483648
      %v3211 = vor.u32 1.1754944e-38, %v3210
      %v3212 = vsel %vm3209, %v3211, %v3207
      %v3213 = vmul.f32 1.0, %v3212
      %v3214 = vrcp.pop %v3082
      %v3215 = vmul.f32 %v3082, %v3214
      %v3216 = vsub.f32 1.0, %v3215
      %v3217 = vmul.f32 %v3214, %v3216
      %v3218 = vadd.f32 %v3214, %v3217
      %vm3219 = vweird.f32 %v3082
      %vm3220 = vweird.f32 %v3214
      %vm3221 = vmor %vm3219, %vm3220
      %v3222 = vsel %vm3221, %v3214, %v3218
      %v3223 = vand.u32 2147483647, %v3082
      %vm3224 = vcmp.eq.f32.partialorder %v3223, 8.507059e+37
      %v3225 = vand.u32 %v3082, 2147483648
      %v3226 = vor.u32 1.1754944e-38, %v3225
      %v3227 = vsel %vm3224, %v3226, %v3222
      %v3228 = vmul.f32 1.0, %v3227
      %v3229 = vrcp.pop %v3083
      %v3230 = vmul.f32 %v3083, %v3229
      %v3231 = vsub.f32 1.0, %v3230
      %v3232 = vmul.f32 %v3229, %v3231
      %v3233 = vadd.f32 %v3229, %v3232
      %vm3234 = vweird.f32 %v3083
      %vm3235 = vweird.f32 %v3229
      %vm3236 = vmor %vm3234, %vm3235
      %v3237 = vsel %vm3236, %v3229, %v3233
      %v3238 = vand.u32 2147483647, %v3083
      %vm3239 = vcmp.eq.f32.partialorder %v3238, 8.507059e+37
      %v3240 = vand.u32 %v3083, 2147483648
      %v3241 = vor.u32 1.1754944e-38, %v3240
      %v3242 = vsel %vm3239, %v3241, %v3237
      %v3243 = vmul.f32 1.0, %v3242
      %v3244 = vrcp.pop %v3084
      %v3245 = vmul.f32 %v3084, %v3244
      %v3246 = vsub.f32 1.0, %v3245
      %v3247 = vmul.f32 %v3244, %v3246
      %v3248 = vadd.f32 %v3244, %v3247
      %vm3249 = vweird.f32 %v3084
      %vm3250 = vweird.f32 %v3244
      %vm3251 = vmor %vm3249, %vm3250
      %v3252 = vsel %vm3251, %v3244, %v3248
      %v3253 = vand.u32 2147483647, %v3084
      %vm3254 = vcmp.eq.f32.partialorder %v3253, 8.507059e+37
      %v3255 = vand.u32 %v3084, 2147483648
      %v3256 = vor.u32 1.1754944e-38, %v3255
      %v3257 = vsel %vm3254, %v3256, %v3252
      %v3258 = vmul.f32 1.0, %v3257
      %v3259 = vrcp.pop %v3085
      %v3260 = vmul.f32 %v3085, %v3259
      %v3261 = vsub.f32 1.0, %v3260
      %v3262 = vmul.f32 %v3259, %v3261
      %v3263 = vadd.f32 %v3259, %v3262
      %vm3264 = vweird.f32 %v3085
      %vm3265 = vweird.f32 %v3259
      %vm3266 = vmor %vm3264, %vm3265
      %v3267 = vsel %vm3266, %v3259, %v3263
      %v3268 = vand.u32 2147483647, %v3085
      %vm3269 = vcmp.eq.f32.partialorder %v3268, 8.507059e+37
      %v3270 = vand.u32 %v3085, 2147483648
      %v3271 = vor.u32 1.1754944e-38, %v3270
      %v3272 = vsel %vm3269, %v3271, %v3267
      %v3273 = vmul.f32 1.0, %v3272
      %v3274 = vrcp.pop %v3086
      %v3275 = vmul.f32 %v3086, %v3274
      %v3276 = vsub.f32 1.0, %v3275
      %v3277 = vmul.f32 %v3274, %v3276
      %v3278 = vadd.f32 %v3274, %v3277
      %vm3279 = vweird.f32 %v3086
      %vm3280 = vweird.f32 %v3274
      %vm3281 = vmor %vm3279, %vm3280
      %v3282 = vsel %vm3281, %v3274, %v3278
      %v3283 = vand.u32 2147483647, %v3086
      %vm3284 = vcmp.eq.f32.partialorder %v3283, 8.507059e+37
      %v3285 = vand.u32 %v3086, 2147483648
      %v3286 = vor.u32 1.1754944e-38, %v3285
      %v3287 = vsel %vm3284, %v3286, %v3282
      %v3288 = vmul.f32 1.0, %v3287
      %v3289 = vrcp.pop %v3087
      %v3290 = vmul.f32 %v3087, %v3289
      %v3291 = vsub.f32 1.0, %v3290
      %v3292 = vmul.f32 %v3289, %v3291
      %v3293 = vadd.f32 %v3289, %v3292
      %vm3294 = vweird.f32 %v3087
      %vm3295 = vweird.f32 %v3289
      %vm3296 = vmor %vm3294, %vm3295
      %v3297 = vsel %vm3296, %v3289, %v3293
      %v3298 = vand.u32 2147483647, %v3087
      %vm3299 = vcmp.eq.f32.partialorder %v3298, 8.507059e+37
      %v3300 = vand.u32 %v3087, 2147483648
      %v3301 = vor.u32 1.1754944e-38, %v3300
      %v3302 = vsel %vm3299, %v3301, %v3297
      %v3303 = vmul.f32 1.0, %v3302
      %v3304 = vrcp.pop %v3088
      %v3305 = vmul.f32 %v3088, %v3304
      %v3306 = vsub.f32 1.0, %v3305
      %v3307 = vmul.f32 %v3304, %v3306
      %v3308 = vadd.f32 %v3304, %v3307
      %vm3309 = vweird.f32 %v3088
      %vm3310 = vweird.f32 %v3304
      %vm3311 = vmor %vm3309, %vm3310
      %v3312 = vsel %vm3311, %v3304, %v3308
      %v3313 = vand.u32 2147483647, %v3088
      %vm3314 = vcmp.eq.f32.partialorder %v3313, 8.507059e+37
      %v3315 = vand.u32 %v3088, 2147483648
      %v3316 = vor.u32 1.1754944e-38, %v3315
      %v3317 = vsel %vm3314, %v3316, %v3312
      %v3318 = vmul.f32 1.0, %v3317
      %v3319 = vrcp.pop %v3089
      %v3320 = vmul.f32 %v3089, %v3319
      %v3321 = vsub.f32 1.0, %v3320
      %v3322 = vmul.f32 %v3319, %v3321
      %v3323 = vadd.f32 %v3319, %v3322
      %vm3324 = vweird.f32 %v3089
      %vm3325 = vweird.f32 %v3319
      %vm3326 = vmor %vm3324, %vm3325
      %v3327 = vsel %vm3326, %v3319, %v3323
      %v3328 = vand.u32 2147483647, %v3089
      %vm3329 = vcmp.eq.f32.partialorder %v3328, 8.507059e+37
      %v3330 = vand.u32 %v3089, 2147483648
      %v3331 = vor.u32 1.1754944e-38, %v3330
      %v3332 = vsel %vm3329, %v3331, %v3327
      %v3333 = vmul.f32 1.0, %v3332
      %v3334 = vrcp.pop %v3090
      %v3335 = vmul.f32 %v3090, %v3334
      %v3336 = vsub.f32 1.0, %v3335
      %v3337 = vmul.f32 %v3334, %v3336
      %v3338 = vadd.f32 %v3334, %v3337
      %vm3339 = vweird.f32 %v3090
      %vm3340 = vweird.f32 %v3334
      %vm3341 = vmor %vm3339, %vm3340
      %v3342 = vsel %vm3341, %v3334, %v3338
      %v3343 = vand.u32 2147483647, %v3090
      %vm3344 = vcmp.eq.f32.partialorder %v3343, 8.507059e+37
      %v3345 = vand.u32 %v3090, 2147483648
      %v3346 = vor.u32 1.1754944e-38, %v3345
      %v3347 = vsel %vm3344, %v3346, %v3342
      %v3348 = vmul.f32 1.0, %v3347
      %v3349 = vrcp.pop %v3091
      %v3350 = vmul.f32 %v3091, %v3349
      %v3351 = vsub.f32 1.0, %v3350
      %v3352 = vmul.f32 %v3349, %v3351
      %v3353 = vadd.f32 %v3349, %v3352
      %vm3354 = vweird.f32 %v3091
      %vm3355 = vweird.f32 %v3349
      %vm3356 = vmor %vm3354, %vm3355
      %v3357 = vsel %vm3356, %v3349, %v3353
      %v3358 = vand.u32 2147483647, %v3091
      %vm3359 = vcmp.eq.f32.partialorder %v3358, 8.507059e+37
      %v3360 = vand.u32 %v3091, 2147483648
      %v3361 = vor.u32 1.1754944e-38, %v3360
      %v3362 = vsel %vm3359, %v3361, %v3357
      %v3363 = vmul.f32 1.0, %v3362
      %v3364 = vrcp.pop %v3092
      %v3365 = vmul.f32 %v3092, %v3364
      %v3366 = vsub.f32 1.0, %v3365
      %v3367 = vmul.f32 %v3364, %v3366
      %v3368 = vadd.f32 %v3364, %v3367
      %vm3369 = vweird.f32 %v3092
      %vm3370 = vweird.f32 %v3364
      %vm3371 = vmor %vm3369, %vm3370
      %v3372 = vsel %vm3371, %v3364, %v3368
      %v3373 = vand.u32 2147483647, %v3092
      %vm3374 = vcmp.eq.f32.partialorder %v3373, 8.507059e+37
      %v3375 = vand.u32 %v3092, 2147483648
      %v3376 = vor.u32 1.1754944e-38, %v3375
      %v3377 = vsel %vm3374, %v3376, %v3372
      %v3378 = vmul.f32 1.0, %v3377
      %v3379 = vrcp.pop %v3093
      %v3380 = vmul.f32 %v3093, %v3379
      %v3381 = vsub.f32 1.0, %v3380
      %v3382 = vmul.f32 %v3379, %v3381
      %v3383 = vadd.f32 %v3379, %v3382
      %vm3384 = vweird.f32 %v3093
      %vm3385 = vweird.f32 %v3379
      %vm3386 = vmor %vm3384, %vm3385
      %v3387 = vsel %vm3386, %v3379, %v3383
      %v3388 = vand.u32 2147483647, %v3093
      %vm3389 = vcmp.eq.f32.partialorder %v3388, 8.507059e+37
      %v3390 = vand.u32 %v3093, 2147483648
      %v3391 = vor.u32 1.1754944e-38, %v3390
      %v3392 = vsel %vm3389, %v3391, %v3387
      %v3393 = vmul.f32 1.0, %v3392
      %v3394 = vrcp.pop %v3094
      %v3395 = vmul.f32 %v3094, %v3394
      %v3396 = vsub.f32 1.0, %v3395
      %v3397 = vmul.f32 %v3394, %v3396
      %v3398 = vadd.f32 %v3394, %v3397
      %vm3399 = vweird.f32 %v3094
      %vm3400 = vweird.f32 %v3394
      %vm3401 = vmor %vm3399, %vm3400
      %v3402 = vsel %vm3401, %v3394, %v3398
      %v3403 = vand.u32 2147483647, %v3094
      %vm3404 = vcmp.eq.f32.partialorder %v3403, 8.507059e+37
      %v3405 = vand.u32 %v3094, 2147483648
      %v3406 = vor.u32 1.1754944e-38, %v3405
      %v3407 = vsel %vm3404, %v3406, %v3402
      %v3408 = vmul.f32 1.0, %v3407
      %v3409 = vrcp.pop %v3095
      %v3410 = vmul.f32 %v3095, %v3409
      %v3411 = vsub.f32 1.0, %v3410
      %v3412 = vmul.f32 %v3409, %v3411
      %v3413 = vadd.f32 %v3409, %v3412
      %vm3414 = vweird.f32 %v3095
      %vm3415 = vweird.f32 %v3409
      %vm3416 = vmor %vm3414, %vm3415
      %v3417 = vsel %vm3416, %v3409, %v3413
      %v3418 = vand.u32 2147483647, %v3095
      %vm3419 = vcmp.eq.f32.partialorder %v3418, 8.507059e+37
      %v3420 = vand.u32 %v3095, 2147483648
      %v3421 = vor.u32 1.1754944e-38, %v3420
      %v3422 = vsel %vm3419, %v3421, %v3417
      %v3423 = vmul.f32 1.0, %v3422
      %v3424 = vrcp.pop %v3096
      %v3425 = vmul.f32 %v3096, %v3424
      %v3426 = vsub.f32 1.0, %v3425
      %v3427 = vmul.f32 %v3424, %v3426
      %v3428 = vadd.f32 %v3424, %v3427
      %vm3429 = vweird.f32 %v3096
      %vm3430 = vweird.f32 %v3424
      %vm3431 = vmor %vm3429, %vm3430
      %v3432 = vsel %vm3431, %v3424, %v3428
      %v3433 = vand.u32 2147483647, %v3096
      %vm3434 = vcmp.eq.f32.partialorder %v3433, 8.507059e+37
      %v3435 = vand.u32 %v3096, 2147483648
      %v3436 = vor.u32 1.1754944e-38, %v3435
      %v3437 = vsel %vm3434, %v3436, %v3432
      %v3438 = vmul.f32 1.0, %v3437
      %v3439 = vrcp.pop %v3097
      %v3440 = vmul.f32 %v3097, %v3439
      %v3441 = vsub.f32 1.0, %v3440
      %v3442 = vmul.f32 %v3439, %v3441
      %v3443 = vadd.f32 %v3439, %v3442
      %vm3444 = vweird.f32 %v3097
      %vm3445 = vweird.f32 %v3439
      %vm3446 = vmor %vm3444, %vm3445
      %v3447 = vsel %vm3446, %v3439, %v3443
      %v3448 = vand.u32 2147483647, %v3097
      %vm3449 = vcmp.eq.f32.partialorder %v3448, 8.507059e+37
      %v3450 = vand.u32 %v3097, 2147483648
      %v3451 = vor.u32 1.1754944e-38, %v3450
      %v3452 = vsel %vm3449, %v3451, %v3447
      %v3453 = vmul.f32 1.0, %v3452
      %v3454 = vrcp.pop %v3098
      %v3455 = vmul.f32 %v3098, %v3454
      %v3456 = vsub.f32 1.0, %v3455
      %v3457 = vmul.f32 %v3454, %v3456
      %v3458 = vadd.f32 %v3454, %v3457
      %vm3459 = vweird.f32 %v3098
      %vm3460 = vweird.f32 %v3454
      %vm3461 = vmor %vm3459, %vm3460
      %v3462 = vsel %vm3461, %v3454, %v3458
      %v3463 = vand.u32 2147483647, %v3098
      %vm3464 = vcmp.eq.f32.partialorder %v3463, 8.507059e+37
      %v3465 = vand.u32 %v3098, 2147483648
      %v3466 = vor.u32 1.1754944e-38, %v3465
      %v3467 = vsel %vm3464, %v3466, %v3462
      %v3468 = vmul.f32 1.0, %v3467
      %v3469 = vrcp.pop %v3099
      %v3470 = vmul.f32 %v3099, %v3469
      %v3471 = vsub.f32 1.0, %v3470
      %v3472 = vmul.f32 %v3469, %v3471
      %v3473 = vadd.f32 %v3469, %v3472
      %vm3474 = vweird.f32 %v3099
      %vm3475 = vweird.f32 %v3469
      %vm3476 = vmor %vm3474, %vm3475
      %v3477 = vsel %vm3476, %v3469, %v3473
      %v3478 = vand.u32 2147483647, %v3099
      %vm3479 = vcmp.eq.f32.partialorder %v3478, 8.507059e+37
      %v3480 = vand.u32 %v3099, 2147483648
      %v3481 = vor.u32 1.1754944e-38, %v3480
      %v3482 = vsel %vm3479, %v3481, %v3477
      %v3483 = vmul.f32 1.0, %v3482
      %v3484 = vrcp.pop %v3100
      %v3485 = vmul.f32 %v3100, %v3484
      %v3486 = vsub.f32 1.0, %v3485
      %v3487 = vmul.f32 %v3484, %v3486
      %v3488 = vadd.f32 %v3484, %v3487
      %vm3489 = vweird.f32 %v3100
      %vm3490 = vweird.f32 %v3484
      %vm3491 = vmor %vm3489, %vm3490
      %v3492 = vsel %vm3491, %v3484, %v3488
      %v3493 = vand.u32 2147483647, %v3100
      %vm3494 = vcmp.eq.f32.partialorder %v3493, 8.507059e+37
      %v3495 = vand.u32 %v3100, 2147483648
      %v3496 = vor.u32 1.1754944e-38, %v3495
      %v3497 = vsel %vm3494, %v3496, %v3492
      %v3498 = vmul.f32 1.0, %v3497
      %v3499 = vrcp.pop %v3101
      %v3500 = vmul.f32 %v3101, %v3499
      %v3501 = vsub.f32 1.0, %v3500
      %v3502 = vmul.f32 %v3499, %v3501
      %v3503 = vadd.f32 %v3499, %v3502
      %vm3504 = vweird.f32 %v3101
      %vm3505 = vweird.f32 %v3499
      %vm3506 = vmor %vm3504, %vm3505
      %v3507 = vsel %vm3506, %v3499, %v3503
      %v3508 = vand.u32 2147483647, %v3101
      %vm3509 = vcmp.eq.f32.partialorder %v3508, 8.507059e+37
      %v3510 = vand.u32 %v3101, 2147483648
      %v3511 = vor.u32 1.1754944e-38, %v3510
      %v3512 = vsel %vm3509, %v3511, %v3507
      %v3513 = vmul.f32 1.0, %v3512
      %v3514 = vrcp.pop %v3102
      %v3515 = vmul.f32 %v3102, %v3514
      %v3516 = vsub.f32 1.0, %v3515
      %v3517 = vmul.f32 %v3514, %v3516
      %v3518 = vadd.f32 %v3514, %v3517
      %vm3519 = vweird.f32 %v3102
      %vm3520 = vweird.f32 %v3514
      %vm3521 = vmor %vm3519, %vm3520
      %v3522 = vsel %vm3521, %v3514, %v3518
      %v3523 = vand.u32 2147483647, %v3102
      %vm3524 = vcmp.eq.f32.partialorder %v3523, 8.507059e+37
      %v3525 = vand.u32 %v3102, 2147483648
      %v3526 = vor.u32 1.1754944e-38, %v3525
      %v3527 = vsel %vm3524, %v3526, %v3522
      %v3528 = vmul.f32 1.0, %v3527
      %v3529 = vrcp.pop %v3103
      %v3530 = vmul.f32 %v3103, %v3529
      %v3531 = vsub.f32 1.0, %v3530
      %v3532 = vmul.f32 %v3529, %v3531
      %v3533 = vadd.f32 %v3529, %v3532
      %vm3534 = vweird.f32 %v3103
      %vm3535 = vweird.f32 %v3529
      %vm3536 = vmor %vm3534, %vm3535
      %v3537 = vsel %vm3536, %v3529, %v3533
      %v3538 = vand.u32 2147483647, %v3103
      %vm3539 = vcmp.eq.f32.partialorder %v3538, 8.507059e+37
      %v3540 = vand.u32 %v3103, 2147483648
      %v3541 = vor.u32 1.1754944e-38, %v3540
      %v3542 = vsel %vm3539, %v3541, %v3537
      %v3543 = vmul.f32 1.0, %v3542
      %v3544 = vrcp.pop %v3104
      %v3545 = vmul.f32 %v3104, %v3544
      %v3546 = vsub.f32 1.0, %v3545
      %v3547 = vmul.f32 %v3544, %v3546
      %v3548 = vadd.f32 %v3544, %v3547
      %vm3549 = vweird.f32 %v3104
      %vm3550 = vweird.f32 %v3544
      %vm3551 = vmor %vm3549, %vm3550
      %v3552 = vsel %vm3551, %v3544, %v3548
      %v3553 = vand.u32 2147483647, %v3104
      %vm3554 = vcmp.eq.f32.partialorder %v3553, 8.507059e+37
      %v3555 = vand.u32 %v3104, 2147483648
      %v3556 = vor.u32 1.1754944e-38, %v3555
      %v3557 = vsel %vm3554, %v3556, %v3552
      %v3558 = vmul.f32 1.0, %v3557
      %v3559 = vrcp.pop %v3105
      %v3560 = vmul.f32 %v3105, %v3559
      %v3561 = vsub.f32 1.0, %v3560
      %v3562 = vmul.f32 %v3559, %v3561
      %v3563 = vadd.f32 %v3559, %v3562
      %vm3564 = vweird.f32 %v3105
      %vm3565 = vweird.f32 %v3559
      %vm3566 = vmor %vm3564, %vm3565
      %v3567 = vsel %vm3566, %v3559, %v3563
      %v3568 = vand.u32 2147483647, %v3105
      %vm3569 = vcmp.eq.f32.partialorder %v3568, 8.507059e+37
      %v3570 = vand.u32 %v3105, 2147483648
      %v3571 = vor.u32 1.1754944e-38, %v3570
      %v3572 = vsel %vm3569, %v3571, %v3567
      %v3573 = vmul.f32 1.0, %v3572
      %v3574 = vrcp.pop %v3106
      %v3575 = vmul.f32 %v3106, %v3574
      %v3576 = vsub.f32 1.0, %v3575
      %v3577 = vmul.f32 %v3574, %v3576
      %v3578 = vadd.f32 %v3574, %v3577
      %vm3579 = vweird.f32 %v3106
      %vm3580 = vweird.f32 %v3574
      %vm3581 = vmor %vm3579, %vm3580
      %v3582 = vsel %vm3581, %v3574, %v3578
      %v3583 = vand.u32 2147483647, %v3106
      %vm3584 = vcmp.eq.f32.partialorder %v3583, 8.507059e+37
      %v3585 = vand.u32 %v3106, 2147483648
      %v3586 = vor.u32 1.1754944e-38, %v3585
      %v3587 = vsel %vm3584, %v3586, %v3582
      %v3588 = vmul.f32 1.0, %v3587
      %v3589 = vrcp.pop %v3107
      %v3590 = vmul.f32 %v3107, %v3589
      %v3591 = vsub.f32 1.0, %v3590
      %v3592 = vmul.f32 %v3589, %v3591
      %v3593 = vadd.f32 %v3589, %v3592
      %vm3594 = vweird.f32 %v3107
      %vm3595 = vweird.f32 %v3589
      %vm3596 = vmor %vm3594, %vm3595
      %v3597 = vsel %vm3596, %v3589, %v3593
      %v3598 = vand.u32 2147483647, %v3107
      %vm3599 = vcmp.eq.f32.partialorder %v3598, 8.507059e+37
      %v3600 = vand.u32 %v3107, 2147483648
      %v3601 = vor.u32 1.1754944e-38, %v3600
      %v3602 = vsel %vm3599, %v3601, %v3597
      %v3603 = vmul.f32 1.0, %v3602
      %v3604 = vrcp.pop %v3108
      %v3605 = vmul.f32 %v3108, %v3604
      %v3606 = vsub.f32 1.0, %v3605
      %v3607 = vmul.f32 %v3604, %v3606
      %v3608 = vadd.f32 %v3604, %v3607
      %vm3609 = vweird.f32 %v3108
      %vm3610 = vweird.f32 %v3604
      %vm3611 = vmor %vm3609, %vm3610
      %v3612 = vsel %vm3611, %v3604, %v3608
      %v3613 = vand.u32 2147483647, %v3108
      %vm3614 = vcmp.eq.f32.partialorder %v3613, 8.507059e+37
      %v3615 = vand.u32 %v3108, 2147483648
      %v3616 = vor.u32 1.1754944e-38, %v3615
      %v3617 = vsel %vm3614, %v3616, %v3612
      %v3618 = vmul.f32 1.0, %v3617
      %v3619 = vmul.f32 %v3123, 1.0614054
      %v3620 = vmul.f32 %v3138, 1.0614054
      %v3621 = vmul.f32 %v3153, 1.0614054
      %v3622 = vmul.f32 %v3168, 1.0614054
      %v3623 = vmul.f32 %v3183, 1.0614054
      %v3624 = vmul.f32 %v3198, 1.0614054
      %v3625 = vmul.f32 %v3213, 1.0614054
      %v3626 = vmul.f32 %v3228, 1.0614054
      %v3627 = vmul.f32 %v3243, 1.0614054
      %v3628 = vmul.f32 %v3258, 1.0614054
      %v3629 = vmul.f32 %v3273, 1.0614054
      %v3630 = vmul.f32 %v3288, 1.0614054
      %v3631 = vmul.f32 %v3303, 1.0614054
      %v3632 = vmul.f32 %v3318, 1.0614054
      %v3633 = vmul.f32 %v3333, 1.0614054
      %v3634 = vmul.f32 %v3348, 1.0614054
      %v3635 = vmul.f32 %v3363, 1.0614054
      %v3636 = vmul.f32 %v3378, 1.0614054
      %v3637 = vmul.f32 %v3393, 1.0614054
      %v3638 = vmul.f32 %v3408, 1.0614054
      %v3639 = vmul.f32 %v3423, 1.0614054
      %v3640 = vmul.f32 %v3438, 1.0614054
      %v3641 = vmul.f32 %v3453, 1.0614054
      %v3642 = vmul.f32 %v3468, 1.0614054
      %v3643 = vmul.f32 %v3483, 1.0614054
      %v3644 = vmul.f32 %v3498, 1.0614054
      %v3645 = vmul.f32 %v3513, 1.0614054
      %v3646 = vmul.f32 %v3528, 1.0614054
      %v3647 = vmul.f32 %v3543, 1.0614054
      %v3648 = vmul.f32 %v3558, 1.0614054
      %v3649 = vmul.f32 %v3573, 1.0614054
      %v3650 = vmul.f32 %v3588, 1.0614054
      %v3651 = vmul.f32 %v3603, 1.0614054
      %v3652 = vmul.f32 %v3618, 1.0614054
      %v3653 = vadd.f32 %v3619, -1.4531521
      %v3654 = vadd.f32 %v3620, -1.4531521
      %v3655 = vadd.f32 %v3621, -1.4531521
      %v3656 = vadd.f32 %v3622, -1.4531521
      %v3657 = vadd.f32 %v3623, -1.4531521
      %v3658 = vadd.f32 %v3624, -1.4531521
      %v3659 = vadd.f32 %v3625, -1.4531521
      %v3660 = vadd.f32 %v3626, -1.4531521
      %v3661 = vadd.f32 %v3627, -1.4531521
      %v3662 = vadd.f32 %v3628, -1.4531521
      %v3663 = vadd.f32 %v3629, -1.4531521
      %v3664 = vadd.f32 %v3630, -1.4531521
      %v3665 = vadd.f32 %v3631, -1.4531521
      %v3666 = vadd.f32 %v3632, -1.4531521
      %v3667 = vadd.f32 %v3633, -1.4531521
      %v3668 = vadd.f32 %v3634, -1.4531521
      %v3669 = vadd.f32 %v3635, -1.4531521
      %v3670 = vadd.f32 %v3636, -1.4531521
      %v3671 = vadd.f32 %v3637, -1.4531521
      %v3672 = vadd.f32 %v3638, -1.4531521
      %v3673 = vadd.f32 %v3639, -1.4531521
      %v3674 = vadd.f32 %v3640, -1.4531521
      %v3675 = vadd.f32 %v3641, -1.4531521
      %v3676 = vadd.f32 %v3642, -1.4531521
      %v3677 = vadd.f32 %v3643, -1.4531521
      %v3678 = vadd.f32 %v3644, -1.4531521
      %v3679 = vadd.f32 %v3645, -1.4531521
      %v3680 = vadd.f32 %v3646, -1.4531521
      %v3681 = vadd.f32 %v3647, -1.4531521
      %v3682 = vadd.f32 %v3648, -1.4531521
      %v3683 = vadd.f32 %v3649, -1.4531521
      %v3684 = vadd.f32 %v3650, -1.4531521
      %v3685 = vadd.f32 %v3651, -1.4531521
      %v3686 = vadd.f32 %v3652, -1.4531521
      %v3687 = vmul.f32 %v3653, %v3123
      %v3688 = vmul.f32 %v3654, %v3138
      %v3689 = vmul.f32 %v3655, %v3153
      %v3690 = vmul.f32 %v3656, %v3168
      %v3691 = vmul.f32 %v3657, %v3183
      %v3692 = vmul.f32 %v3658, %v3198
      %v3693 = vmul.f32 %v3659, %v3213
      %v3694 = vmul.f32 %v3660, %v3228
      %v3695 = vmul.f32 %v3661, %v3243
      %v3696 = vmul.f32 %v3662, %v3258
      %v3697 = vmul.f32 %v3663, %v3273
      %v3698 = vmul.f32 %v3664, %v3288
      %v3699 = vmul.f32 %v3665, %v3303
      %v3700 = vmul.f32 %v3666, %v3318
      %v3701 = vmul.f32 %v3667, %v3333
      %v3702 = vmul.f32 %v3668, %v3348
      %v3703 = vmul.f32 %v3669, %v3363
      %v3704 = vmul.f32 %v3670, %v3378
      %v3705 = vmul.f32 %v3671, %v3393
      %v3706 = vmul.f32 %v3672, %v3408
      %v3707 = vmul.f32 %v3673, %v3423
      %v3708 = vmul.f32 %v3674, %v3438
      %v3709 = vmul.f32 %v3675, %v3453
      %v3710 = vmul.f32 %v3676, %v3468
      %v3711 = vmul.f32 %v3677, %v3483
      %v3712 = vmul.f32 %v3678, %v3498
      %v3713 = vmul.f32 %v3679, %v3513
      %v3714 = vmul.f32 %v3680, %v3528
      %v3715 = vmul.f32 %v3681, %v3543
      %v3716 = vmul.f32 %v3682, %v3558
      %v3717 = vmul.f32 %v3683, %v3573
      %v3718 = vmul.f32 %v3684, %v3588
      %v3719 = vmul.f32 %v3685, %v3603
      %v3720 = vmul.f32 %v3686, %v3618
      %v3721 = vadd.f32 %v3687, 1.4214138
      %v3722 = vadd.f32 %v3688, 1.4214138
      %v3723 = vadd.f32 %v3689, 1.4214138
      %v3724 = vadd.f32 %v3690, 1.4214138
      %v3725 = vadd.f32 %v3691, 1.4214138
      %v3726 = vadd.f32 %v3692, 1.4214138
      %v3727 = vadd.f32 %v3693, 1.4214138
      %v3728 = vadd.f32 %v3694, 1.4214138
      %v3729 = vadd.f32 %v3695, 1.4214138
      %v3730 = vadd.f32 %v3696, 1.4214138
      %v3731 = vadd.f32 %v3697, 1.4214138
      %v3732 = vadd.f32 %v3698, 1.4214138
      %v3733 = vadd.f32 %v3699, 1.4214138
      %v3734 = vadd.f32 %v3700, 1.4214138
      %v3735 = vadd.f32 %v3701, 1.4214138
      %v3736 = vadd.f32 %v3702, 1.4214138
      %v3737 = vadd.f32 %v3703, 1.4214138
      %v3738 = vadd.f32 %v3704, 1.4214138
      %v3739 = vadd.f32 %v3705, 1.4214138
      %v3740 = vadd.f32 %v3706, 1.4214138
      %v3741 = vadd.f32 %v3707, 1.4214138
      %v3742 = vadd.f32 %v3708, 1.4214138
      %v3743 = vadd.f32 %v3709, 1.4214138
      %v3744 = vadd.f32 %v3710, 1.4214138
      %v3745 = vadd.f32 %v3711, 1.4214138
      %v3746 = vadd.f32 %v3712, 1.4214138
      %v3747 = vadd.f32 %v3713, 1.4214138
      %v3748 = vadd.f32 %v3714, 1.4214138
      %v3749 = vadd.f32 %v3715, 1.4214138
      %v3750 = vadd.f32 %v3716, 1.4214138
      %v3751 = vadd.f32 %v3717, 1.4214138
      %v3752 = vadd.f32 %v3718, 1.4214138
      %v3753 = vadd.f32 %v3719, 1.4214138
      %v3754 = vadd.f32 %v3720, 1.4214138
      %v3755 = vmul.f32 %v3721, %v3123
      %v3756 = vmul.f32 %v3722, %v3138
      %v3757 = vmul.f32 %v3723, %v3153
      %v3758 = vmul.f32 %v3724, %v3168
      %v3759 = vmul.f32 %v3725, %v3183
      %v3760 = vmul.f32 %v3726, %v3198
      %v3761 = vmul.f32 %v3727, %v3213
      %v3762 = vmul.f32 %v3728, %v3228
      %v3763 = vmul.f32 %v3729, %v3243
      %v3764 = vmul.f32 %v3730, %v3258
      %v3765 = vmul.f32 %v3731, %v3273
      %v3766 = vmul.f32 %v3732, %v3288
      %v3767 = vmul.f32 %v3733, %v3303
      %v3768 = vmul.f32 %v3734, %v3318
      %v3769 = vmul.f32 %v3735, %v3333
      %v3770 = vmul.f32 %v3736, %v3348
      %v3771 = vmul.f32 %v3737, %v3363
      %v3772 = vmul.f32 %v3738, %v3378
      %v3773 = vmul.f32 %v3739, %v3393
      %v3774 = vmul.f32 %v3740, %v3408
      %v3775 = vmul.f32 %v3741, %v3423
      %v3776 = vmul.f32 %v3742, %v3438
      %v3777 = vmul.f32 %v3743, %v3453
      %v3778 = vmul.f32 %v3744, %v3468
      %v3779 = vmul.f32 %v3745, %v3483
      %v3780 = vmul.f32 %v3746, %v3498
      %v3781 = vmul.f32 %v3747, %v3513
      %v3782 = vmul.f32 %v3748, %v3528
      %v3783 = vmul.f32 %v3749, %v3543
      %v3784 = vmul.f32 %v3750, %v3558
      %v3785 = vmul.f32 %v3751, %v3573
      %v3786 = vmul.f32 %v3752, %v3588
      %v3787 = vmul.f32 %v3753, %v3603
      %v3788 = vmul.f32 %v3754, %v3618
      %v3789 = vadd.f32 %v3755, -0.28449672
      %v3790 = vadd.f32 %v3756, -0.28449672
      %v3791 = vadd.f32 %v3757, -0.28449672
      %v3792 = vadd.f32 %v3758, -0.28449672
      %v3793 = vadd.f32 %v3759, -0.28449672
      %v3794 = vadd.f32 %v3760, -0.28449672
      %v3795 = vadd.f32 %v3761, -0.28449672
      %v3796 = vadd.f32 %v3762, -0.28449672
      %v3797 = vadd.f32 %v3763, -0.28449672
      %v3798 = vadd.f32 %v3764, -0.28449672
      %v3799 = vadd.f32 %v3765, -0.28449672
      %v3800 = vadd.f32 %v3766, -0.28449672
      %v3801 = vadd.f32 %v3767, -0.28449672
      %v3802 = vadd.f32 %v3768, -0.28449672
      %v3803 = vadd.f32 %v3769, -0.28449672
      %v3804 = vadd.f32 %v3770, -0.28449672
      %v3805 = vadd.f32 %v3771, -0.28449672
      %v3806 = vadd.f32 %v3772, -0.28449672
      %v3807 = vadd.f32 %v3773, -0.28449672
      %v3808 = vadd.f32 %v3774, -0.28449672
      %v3809 = vadd.f32 %v3775, -0.28449672
      %v3810 = vadd.f32 %v3776, -0.28449672
      %v3811 = vadd.f32 %v3777, -0.28449672
      %v3812 = vadd.f32 %v3778, -0.28449672
      %v3813 = vadd.f32 %v3779, -0.28449672
      %v3814 = vadd.f32 %v3780, -0.28449672
      %v3815 = vadd.f32 %v3781, -0.28449672
      %v3816 = vadd.f32 %v3782, -0.28449672
      %v3817 = vadd.f32 %v3783, -0.28449672
      %v3818 = vadd.f32 %v3784, -0.28449672
      %v3819 = vadd.f32 %v3785, -0.28449672
      %v3820 = vadd.f32 %v3786, -0.28449672
      %v3821 = vadd.f32 %v3787, -0.28449672
      %v3822 = vadd.f32 %v3788, -0.28449672
      %v3823 = vmul.f32 %v3789, %v3123
      %v3824 = vmul.f32 %v3790, %v3138
      %v3825 = vmul.f32 %v3791, %v3153
      %v3826 = vmul.f32 %v3792, %v3168
      %v3827 = vmul.f32 %v3793, %v3183
      %v3828 = vmul.f32 %v3794, %v3198
      %v3829 = vmul.f32 %v3795, %v3213
      %v3830 = vmul.f32 %v3796, %v3228
      %v3831 = vmul.f32 %v3797, %v3243
      %v3832 = vmul.f32 %v3798, %v3258
      %v3833 = vmul.f32 %v3799, %v3273
      %v3834 = vmul.f32 %v3800, %v3288
      %v3835 = vmul.f32 %v3801, %v3303
      %v3836 = vmul.f32 %v3802, %v3318
      %v3837 = vmul.f32 %v3803, %v3333
      %v3838 = vmul.f32 %v3804, %v3348
      %v3839 = vmul.f32 %v3805, %v3363
      %v3840 = vmul.f32 %v3806, %v3378
      %v3841 = vmul.f32 %v3807, %v3393
      %v3842 = vmul.f32 %v3808, %v3408
      %v3843 = vmul.f32 %v3809, %v3423
      %v3844 = vmul.f32 %v3810, %v3438
      %v3845 = vmul.f32 %v3811, %v3453
      %v3846 = vmul.f32 %v3812, %v3468
      %v3847 = vmul.f32 %v3813, %v3483
      %v3848 = vmul.f32 %v3814, %v3498
      %v3849 = vmul.f32 %v3815, %v3513
      %v3850 = vmul.f32 %v3816, %v3528
      %v3851 = vmul.f32 %v3817, %v3543
      %v3852 = vmul.f32 %v3818, %v3558
      %v3853 = vmul.f32 %v3819, %v3573
      %v3854 = vmul.f32 %v3820, %v3588
      %v3855 = vmul.f32 %v3821, %v3603
      %v3856 = vmul.f32 %v3822, %v3618
      %v3857 = vadd.f32 %v3823, 0.2548296
      %v3858 = vadd.f32 %v3824, 0.2548296
      %v3859 = vadd.f32 %v3825, 0.2548296
      %v3860 = vadd.f32 %v3826, 0.2548296
      %v3861 = vadd.f32 %v3827, 0.2548296
      %v3862 = vadd.f32 %v3828, 0.2548296
      %v3863 = vadd.f32 %v3829, 0.2548296
      %v3864 = vadd.f32 %v3830, 0.2548296
      %v3865 = vadd.f32 %v3831, 0.2548296
      %v3866 = vadd.f32 %v3832, 0.2548296
      %v3867 = vadd.f32 %v3833, 0.2548296
      %v3868 = vadd.f32 %v3834, 0.2548296
      %v3869 = vadd.f32 %v3835, 0.2548296
      %v3870 = vadd.f32 %v3836, 0.2548296
      %v3871 = vadd.f32 %v3837, 0.2548296
      %v3872 = vadd.f32 %v3838, 0.2548296
      %v3873 = vadd.f32 %v3839, 0.2548296
      %v3874 = vadd.f32 %v3840, 0.2548296
      %v3875 = vadd.f32 %v3841, 0.2548296
      %v3876 = vadd.f32 %v3842, 0.2548296
      %v3877 = vadd.f32 %v3843, 0.2548296
      %v3878 = vadd.f32 %v3844, 0.2548296
      %v3879 = vadd.f32 %v3845, 0.2548296
      %v3880 = vadd.f32 %v3846, 0.2548296
      %v3881 = vadd.f32 %v3847, 0.2548296
      %v3882 = vadd.f32 %v3848, 0.2548296
      %v3883 = vadd.f32 %v3849, 0.2548296
      %v3884 = vadd.f32 %v3850, 0.2548296
      %v3885 = vadd.f32 %v3851, 0.2548296
      %v3886 = vadd.f32 %v3852, 0.2548296
      %v3887 = vadd.f32 %v3853, 0.2548296
      %v3888 = vadd.f32 %v3854, 0.2548296
      %v3889 = vadd.f32 %v3855, 0.2548296
      %v3890 = vadd.f32 %v3856, 0.2548296
      %v3891 = vmul.f32 %v3857, %v3123
      %v3892 = vmul.f32 %v3858, %v3138
      %v3893 = vmul.f32 %v3859, %v3153
      %v3894 = vmul.f32 %v3860, %v3168
      %v3895 = vmul.f32 %v3861, %v3183
      %v3896 = vmul.f32 %v3862, %v3198
      %v3897 = vmul.f32 %v3863, %v3213
      %v3898 = vmul.f32 %v3864, %v3228
      %v3899 = vmul.f32 %v3865, %v3243
      %v3900 = vmul.f32 %v3866, %v3258
      %v3901 = vmul.f32 %v3867, %v3273
      %v3902 = vmul.f32 %v3868, %v3288
      %v3903 = vmul.f32 %v3869, %v3303
      %v3904 = vmul.f32 %v3870, %v3318
      %v3905 = vmul.f32 %v3871, %v3333
      %v3906 = vmul.f32 %v3872, %v3348
      %v3907 = vmul.f32 %v3873, %v3363
      %v3908 = vmul.f32 %v3874, %v3378
      %v3909 = vmul.f32 %v3875, %v3393
      %v3910 = vmul.f32 %v3876, %v3408
      %v3911 = vmul.f32 %v3877, %v3423
      %v3912 = vmul.f32 %v3878, %v3438
      %v3913 = vmul.f32 %v3879, %v3453
      %v3914 = vmul.f32 %v3880, %v3468
      %v3915 = vmul.f32 %v3881, %v3483
      %v3916 = vmul.f32 %v3882, %v3498
      %v3917 = vmul.f32 %v3883, %v3513
      %v3918 = vmul.f32 %v3884, %v3528
      %v3919 = vmul.f32 %v3885, %v3543
      %v3920 = vmul.f32 %v3886, %v3558
      %v3921 = vmul.f32 %v3887, %v3573
      %v3922 = vmul.f32 %v3888, %v3588
      %v3923 = vmul.f32 %v3889, %v3603
      %v3924 = vmul.f32 %v3890, %v3618
      %v3925 = vsub.f32 0.0, %v3007
      %v3926 = vsub.f32 0.0, %v3008
      %v3927 = vsub.f32 0.0, %v3009
      %v3928 = vsub.f32 0.0, %v3010
      %v3929 = vsub.f32 0.0, %v3011
      %v3930 = vsub.f32 0.0, %v3012
      %v3931 = vsub.f32 0.0, %v3013
      %v3932 = vsub.f32 0.0, %v3014
      %v3933 = vsub.f32 0.0, %v3015
      %v3934 = vsub.f32 0.0, %v3016
      %v3935 = vsub.f32 0.0, %v3017
      %v3936 = vsub.f32 0.0, %v3018
      %v3937 = vsub.f32 0.0, %v3019
      %v3938 = vsub.f32 0.0, %v3020
      %v3939 = vsub.f32 0.0, %v3021
      %v3940 = vsub.f32 0.0, %v3022
      %v3941 = vsub.f32 0.0, %v3023
      %v3942 = vsub.f32 0.0, %v3024
      %v3943 = vsub.f32 0.0, %v3025
      %v3944 = vsub.f32 0.0, %v3026
      %v3945 = vsub.f32 0.0, %v3027
      %v3946 = vsub.f32 0.0, %v3028
      %v3947 = vsub.f32 0.0, %v3029
      %v3948 = vsub.f32 0.0, %v3030
      %v3949 = vsub.f32 0.0, %v3031
      %v3950 = vsub.f32 0.0, %v3032
      %v3951 = vsub.f32 0.0, %v3033
      %v3952 = vsub.f32 0.0, %v3034
      %v3953 = vsub.f32 0.0, %v3035
      %v3954 = vsub.f32 0.0, %v3036
      %v3955 = vsub.f32 0.0, %v3037
      %v3956 = vsub.f32 0.0, %v3038
      %v3957 = vsub.f32 0.0, %v3039
      %v3958 = vsub.f32 0.0, %v3040
      %v3959 = vmul.f32 %v3925, %v3007
      %v3960 = vmul.f32 %v3926, %v3008
      %v3961 = vmul.f32 %v3927, %v3009
      %v3962 = vmul.f32 %v3928, %v3010
      %v3963 = vmul.f32 %v3929, %v3011
      %v3964 = vmul.f32 %v3930, %v3012
      %v3965 = vmul.f32 %v3931, %v3013
      %v3966 = vmul.f32 %v3932, %v3014
      %v3967 = vmul.f32 %v3933, %v3015
      %v3968 = vmul.f32 %v3934, %v3016
      %v3969 = vmul.f32 %v3935, %v3017
      %v3970 = vmul.f32 %v3936, %v3018
      %v3971 = vmul.f32 %v3937, %v3019
      %v3972 = vmul.f32 %v3938, %v3020
      %v3973 = vmul.f32 %v3939, %v3021
      %v3974 = vmul.f32 %v3940, %v3022
      %v3975 = vmul.f32 %v3941, %v3023
      %v3976 = vmul.f32 %v3942, %v3024
      %v3977 = vmul.f32 %v3943, %v3025
      %v3978 = vmul.f32 %v3944, %v3026
      %v3979 = vmul.f32 %v3945, %v3027
      %v3980 = vmul.f32 %v3946, %v3028
      %v3981 = vmul.f32 %v3947, %v3029
      %v3982 = vmul.f32 %v3948, %v3030
      %v3983 = vmul.f32 %v3949, %v3031
      %v3984 = vmul.f32 %v3950, %v3032
      %v3985 = vmul.f32 %v3951, %v3033
      %v3986 = vmul.f32 %v3952, %v3034
      %v3987 = vmul.f32 %v3953, %v3035
      %v3988 = vmul.f32 %v3954, %v3036
      %v3989 = vmul.f32 %v3955, %v3037
      %v3990 = vmul.f32 %v3956, %v3038
      %v3991 = vmul.f32 %v3957, %v3039
      %v3992 = vmul.f32 %v3958, %v3040
      %v3993 = vmul.f32 %v3959, 1.442695
      %v3994 = vpow.pop %v3993
      %v3995 = vmul.f32 %v3960, 1.442695
      %v3996 = vpow.pop %v3995
      %v3997 = vmul.f32 %v3961, 1.442695
      %v3998 = vpow.pop %v3997
      %v3999 = vmul.f32 %v3962, 1.442695
      %v4000 = vpow.pop %v3999
      %v4001 = vmul.f32 %v3963, 1.442695
      %v4002 = vpow.pop %v4001
      %v4003 = vmul.f32 %v3964, 1.442695
      %v4004 = vpow.pop %v4003
      %v4005 = vmul.f32 %v3965, 1.442695
      %v4006 = vpow.pop %v4005
      %v4007 = vmul.f32 %v3966, 1.442695
      %v4008 = vpow.pop %v4007
      %v4009 = vmul.f32 %v3967, 1.442695
      %v4010 = vpow.pop %v4009
      %v4011 = vmul.f32 %v3968, 1.442695
      %v4012 = vpow.pop %v4011
      %v4013 = vmul.f32 %v3969, 1.442695
      %v4014 = vpow.pop %v4013
      %v4015 = vmul.f32 %v3970, 1.442695
      %v4016 = vpow.pop %v4015
      %v4017 = vmul.f32 %v3971, 1.442695
      %v4018 = vpow.pop %v4017
      %v4019 = vmul.f32 %v3972, 1.442695
      %v4020 = vpow.pop %v4019
      %v4021 = vmul.f32 %v3973, 1.442695
      %v4022 = vpow.pop %v4021
      %v4023 = vmul.f32 %v3974, 1.442695
      %v4024 = vpow.pop %v4023
      %v4025 = vmul.f32 %v3975, 1.442695
      %v4026 = vpow.pop %v4025
      %v4027 = vmul.f32 %v3976, 1.442695
      %v4028 = vpow.pop %v4027
      %v4029 = vmul.f32 %v3977, 1.442695
      %v4030 = vpow.pop %v4029
      %v4031 = vmul.f32 %v3978, 1.442695
      %v4032 = vpow.pop %v4031
      %v4033 = vmul.f32 %v3979, 1.442695
      %v4034 = vpow.pop %v4033
      %v4035 = vmul.f32 %v3980, 1.442695
      %v4036 = vpow.pop %v4035
      %v4037 = vmul.f32 %v3981, 1.442695
      %v4038 = vpow.pop %v4037
      %v4039 = vmul.f32 %v3982, 1.442695
      %v4040 = vpow.pop %v4039
      %v4041 = vmul.f32 %v3983, 1.442695
      %v4042 = vpow.pop %v4041
      %v4043 = vmul.f32 %v3984, 1.442695
      %v4044 = vpow.pop %v4043
      %v4045 = vmul.f32 %v3985, 1.442695
      %v4046 = vpow.pop %v4045
      %v4047 = vmul.f32 %v3986, 1.442695
      %v4048 = vpow.pop %v4047
      %v4049 = vmul.f32 %v3987, 1.442695
      %v4050 = vpow.pop %v4049
      %v4051 = vmul.f32 %v3988, 1.442695
      %v4052 = vpow.pop %v4051
      %v4053 = vmul.f32 %v3989, 1.442695
      %v4054 = vpow.pop %v4053
      %v4055 = vmul.f32 %v3990, 1.442695
      %v4056 = vpow.pop %v4055
      %v4057 = vmul.f32 %v3991, 1.442695
      %v4058 = vpow.pop %v4057
      %v4059 = vmul.f32 %v3992, 1.442695
      %v4060 = vpow.pop %v4059
      %v4061 = vmul.f32 %v3891, %v3994
      %v4062 = vmul.f32 %v3892, %v3996
      %v4063 = vmul.f32 %v3893, %v3998
      %v4064 = vmul.f32 %v3894, %v4000
      %v4065 = vmul.f32 %v3895, %v4002
      %v4066 = vmul.f32 %v3896, %v4004
      %v4067 = vmul.f32 %v3897, %v4006
      %v4068 = vmul.f32 %v3898, %v4008
      %v4069 = vmul.f32 %v3899, %v4010
      %v4070 = vmul.f32 %v3900, %v4012
      %v4071 = vmul.f32 %v3901, %v4014
      %v4072 = vmul.f32 %v3902, %v4016
      %v4073 = vmul.f32 %v3903, %v4018
      %v4074 = vmul.f32 %v3904, %v4020
      %v4075 = vmul.f32 %v3905, %v4022
      %v4076 = vmul.f32 %v3906, %v4024
      %v4077 = vmul.f32 %v3907, %v4026
      %v4078 = vmul.f32 %v3908, %v4028
      %v4079 = vmul.f32 %v3909, %v4030
      %v4080 = vmul.f32 %v3910, %v4032
      %v4081 = vmul.f32 %v3911, %v4034
      %v4082 = vmul.f32 %v3912, %v4036
      %v4083 = vmul.f32 %v3913, %v4038
      %v4084 = vmul.f32 %v3914, %v4040
      %v4085 = vmul.f32 %v3915, %v4042
      %v4086 = vmul.f32 %v3916, %v4044
      %v4087 = vmul.f32 %v3917, %v4046
      %v4088 = vmul.f32 %v3918, %v4048
      %v4089 = vmul.f32 %v3919, %v4050
      %v4090 = vmul.f32 %v3920, %v4052
      %v4091 = vmul.f32 %v3921, %v4054
      %v4092 = vmul.f32 %v3922, %v4056
      %v4093 = vmul.f32 %v3923, %v4058
      %v4094 = vmul.f32 %v3924, %v4060
      %v4095 = vsub.f32 1.0, %v4061
      %v4096 = vsub.f32 1.0, %v4062
      %v4097 = vsub.f32 1.0, %v4063
      %v4098 = vsub.f32 1.0, %v4064
      %v4099 = vsub.f32 1.0, %v4065
      %v4100 = vsub.f32 1.0, %v4066
      %v4101 = vsub.f32 1.0, %v4067
      %v4102 = vsub.f32 1.0, %v4068
      %v4103 = vsub.f32 1.0, %v4069
      %v4104 = vsub.f32 1.0, %v4070
      %v4105 = vsub.f32 1.0, %v4071
      %v4106 = vsub.f32 1.0, %v4072
      %v4107 = vsub.f32 1.0, %v4073
      %v4108 = vsub.f32 1.0, %v4074
      %v4109 = vsub.f32 1.0, %v4075
      %v4110 = vsub.f32 1.0, %v4076
      %v4111 = vsub.f32 1.0, %v4077
      %v4112 = vsub.f32 1.0, %v4078
      %v4113 = vsub.f32 1.0, %v4079
      %v4114 = vsub.f32 1.0, %v4080
      %v4115 = vsub.f32 1.0, %v4081
      %v4116 = vsub.f32 1.0, %v4082
      %v4117 = vsub.f32 1.0, %v4083
      %v4118 = vsub.f32 1.0, %v4084
      %v4119 = vsub.f32 1.0, %v4085
      %v4120 = vsub.f32 1.0, %v4086
      %v4121 = vsub.f32 1.0, %v4087
      %v4122 = vsub.f32 1.0, %v4088
      %v4123 = vsub.f32 1.0, %v4089
      %v4124 = vsub.f32 1.0, %v4090
      %v4125 = vsub.f32 1.0, %v4091
      %v4126 = vsub.f32 1.0, %v4092
      %v4127 = vsub.f32 1.0, %v4093
      %v4128 = vsub.f32 1.0, %v4094
      %v4129 = vmul.f32 %v2973, %v4095
      %v4130 = vmul.f32 %v2974, %v4096
      %v4131 = vmul.f32 %v2975, %v4097
      %v4132 = vmul.f32 %v2976, %v4098
      %v4133 = vmul.f32 %v2977, %v4099
      %v4134 = vmul.f32 %v2978, %v4100
      %v4135 = vmul.f32 %v2979, %v4101
      %v4136 = vmul.f32 %v2980, %v4102
      %v4137 = vmul.f32 %v2981, %v4103
      %v4138 = vmul.f32 %v2982, %v4104
      %v4139 = vmul.f32 %v2983, %v4105
      %v4140 = vmul.f32 %v2984, %v4106
      %v4141 = vmul.f32 %v2985, %v4107
      %v4142 = vmul.f32 %v2986, %v4108
      %v4143 = vmul.f32 %v2987, %v4109
      %v4144 = vmul.f32 %v2988, %v4110
      %v4145 = vmul.f32 %v2989, %v4111
      %v4146 = vmul.f32 %v2990, %v4112
      %v4147 = vmul.f32 %v2991, %v4113
      %v4148 = vmul.f32 %v2992, %v4114
      %v4149 = vmul.f32 %v2993, %v4115
      %v4150 = vmul.f32 %v2994, %v4116
      %v4151 = vmul.f32 %v2995, %v4117
      %v4152 = vmul.f32 %v2996, %v4118
      %v4153 = vmul.f32 %v2997, %v4119
      %v4154 = vmul.f32 %v2998, %v4120
      %v4155 = vmul.f32 %v2999, %v4121
      %v4156 = vmul.f32 %v3000, %v4122
      %v4157 = vmul.f32 %v3001, %v4123
      %v4158 = vmul.f32 %v3002, %v4124
      %v4159 = vmul.f32 %v3003, %v4125
      %v4160 = vmul.f32 %v3004, %v4126
      %v4161 = vmul.f32 %v3005, %v4127
      %v4162 = vmul.f32 %v3006, %v4128
      %v4163 = vadd.f32 %v4129, 1.0
      %v4164 = vadd.f32 %v4130, 1.0
      %v4165 = vadd.f32 %v4131, 1.0
      %v4166 = vadd.f32 %v4132, 1.0
      %v4167 = vadd.f32 %v4133, 1.0
      %v4168 = vadd.f32 %v4134, 1.0
      %v4169 = vadd.f32 %v4135, 1.0
      %v4170 = vadd.f32 %v4136, 1.0
      %v4171 = vadd.f32 %v4137, 1.0
      %v4172 = vadd.f32 %v4138, 1.0
      %v4173 = vadd.f32 %v4139, 1.0
      %v4174 = vadd.f32 %v4140, 1.0
      %v4175 = vadd.f32 %v4141, 1.0
      %v4176 = vadd.f32 %v4142, 1.0
      %v4177 = vadd.f32 %v4143, 1.0
      %v4178 = vadd.f32 %v4144, 1.0
      %v4179 = vadd.f32 %v4145, 1.0
      %v4180 = vadd.f32 %v4146, 1.0
      %v4181 = vadd.f32 %v4147, 1.0
      %v4182 = vadd.f32 %v4148, 1.0
      %v4183 = vadd.f32 %v4149, 1.0
      %v4184 = vadd.f32 %v4150, 1.0
      %v4185 = vadd.f32 %v4151, 1.0
      %v4186 = vadd.f32 %v4152, 1.0
      %v4187 = vadd.f32 %v4153, 1.0
      %v4188 = vadd.f32 %v4154, 1.0
      %v4189 = vadd.f32 %v4155, 1.0
      %v4190 = vadd.f32 %v4156, 1.0
      %v4191 = vadd.f32 %v4157, 1.0
      %v4192 = vadd.f32 %v4158, 1.0
      %v4193 = vadd.f32 %v4159, 1.0
      %v4194 = vadd.f32 %v4160, 1.0
      %v4195 = vadd.f32 %v4161, 1.0
      %v4196 = vadd.f32 %v4162, 1.0
      %v4197 = vmul.f32 %v2871, %v4163
      %v4198 = vmul.f32 %v2872, %v4164
      %v4199 = vmul.f32 %v2873, %v4165
      %v4200 = vmul.f32 %v2874, %v4166
      %v4201 = vmul.f32 %v2875, %v4167
      %v4202 = vmul.f32 %v2876, %v4168
      %v4203 = vmul.f32 %v2877, %v4169
      %v4204 = vmul.f32 %v2878, %v4170
      %v4205 = vmul.f32 %v2879, %v4171
      %v4206 = vmul.f32 %v2880, %v4172
      %v4207 = vmul.f32 %v2881, %v4173
      %v4208 = vmul.f32 %v2882, %v4174
      %v4209 = vmul.f32 %v2883, %v4175
      %v4210 = vmul.f32 %v2884, %v4176
      %v4211 = vmul.f32 %v2885, %v4177
      %v4212 = vmul.f32 %v2886, %v4178
      %v4213 = vmul.f32 %v2887, %v4179
      %v4214 = vmul.f32 %v2888, %v4180
      %v4215 = vmul.f32 %v2889, %v4181
      %v4216 = vmul.f32 %v2890, %v4182
      %v4217 = vmul.f32 %v2891, %v4183
      %v4218 = vmul.f32 %v2892, %v4184
      %v4219 = vmul.f32 %v2893, %v4185
      %v4220 = vmul.f32 %v2894, %v4186
      %v4221 = vmul.f32 %v2895, %v4187
      %v4222 = vmul.f32 %v2896, %v4188
      %v4223 = vmul.f32 %v2897, %v4189
      %v4224 = vmul.f32 %v2898, %v4190
      %v4225 = vmul.f32 %v2899, %v4191
      %v4226 = vmul.f32 %v2900, %v4192
      %v4227 = vmul.f32 %v2901, %v4193
      %v4228 = vmul.f32 %v2902, %v4194
      %v4229 = vmul.f32 %v2903, %v4195
      %v4230 = vmul.f32 %v2904, %v4196
      %v4231 = vld [vmem:[%s13] sm:$0xff]
      %v4232 = vld [vmem:[%s13 + $0x8] sm:$0xff]
      %v4233 = vld [vmem:[%s13 + $0x10] sm:$0xff]
      %v4234 = vld [vmem:[%s13 + $0x18] sm:$0xff]
      %v4235 = vld [vmem:[%s13 + $0x20] sm:$0xff]
      %v4236 = vld [vmem:[%s13 + $0x28] sm:$0xff]
      %v4237 = vld [vmem:[%s13 + $0x30] sm:$0xff]
      %v4238 = vld [vmem:[%s13 + $0x38] sm:$0xff]
      %v4239 = vld [vmem:[%s13 + $0x40] sm:$0xff]
      %v4240 = vld [vmem:[%s13 + $0x48] sm:$0xff]
      %v4241 = vld [vmem:[%s13 + $0x50] sm:$0xff]
      %v4242 = vld [vmem:[%s13 + $0x58] sm:$0xff]
      %v4243 = vld [vmem:[%s13 + $0x60] sm:$0xff]
      %v4244 = vld [vmem:[%s13 + $0x68] sm:$0xff]
      %v4245 = vld [vmem:[%s13 + $0x70] sm:$0xff]
      %v4246 = vld [vmem:[%s13 + $0x78] sm:$0xff]
      %v4247 = vld [vmem:[%s13 + $0x80] sm:$0xff]
      %v4248 = vld [vmem:[%s13 + $0x88] sm:$0xff]
      %v4249 = vld [vmem:[%s13 + $0x90] sm:$0xff]
      %v4250 = vld [vmem:[%s13 + $0x98] sm:$0xff]
      %v4251 = vld [vmem:[%s13 + $0xa0] sm:$0xff]
      %v4252 = vld [vmem:[%s13 + $0xa8] sm:$0xff]
      %v4253 = vld [vmem:[%s13 + $0xb0] sm:$0xff]
      %v4254 = vld [vmem:[%s13 + $0xb8] sm:$0xff]
      %v4255 = vld [vmem:[%s13 + $0xc0] sm:$0xff]
      %v4256 = vld [vmem:[%s13 + $0xc8] sm:$0xff]
      %v4257 = vld [vmem:[%s13 + $0xd0] sm:$0xff]
      %v4258 = vld [vmem:[%s13 + $0xd8] sm:$0xff]
      %v4259 = vld [vmem:[%s13 + $0xe0] sm:$0xff]
      %v4260 = vld [vmem:[%s13 + $0xe8] sm:$0xff]
      %v4261 = vld [vmem:[%s13 + $0xf0] sm:$0xff]
      %v4262 = vld [vmem:[%s13 + $0xf8] sm:$0xff]
      %v4263 = vld [vmem:[%s14] sm:$0x1]
      %v4265 = vperm.slane %v4263, 0
      %4267 = vmatpush.msra.mxu0 %v4246
      %4268 = vmatpush.msra.mxu0 %v4245
      %4269 = vmatpush.msra.mxu0 %v4244
      %4270 = vmatpush.msra.mxu0 %v4243
      %4271 = vmatpush.msra.mxu0 %v4242
      %4272 = vmatpush.msra.mxu0 %v4241
      %4273 = vmatpush.msra.mxu0 %v4240
      %4274 = vmatpush.msra.mxu0 %v4239
      %4275 = vmatpush.msra.mxu0 %v4238
      %4276 = vmatpush.msra.mxu0 %v4237
      %4277 = vmatpush.msra.mxu0 %v4236
      %4278 = vmatpush.msra.mxu0 %v4235
      %4279 = vmatpush.msra.mxu0 %v4234
      %4280 = vmatpush.msra.mxu0 %v4233
      %4281 = vmatpush.msra.mxu0 %v4232
      %4282 = vmatpush.msra.mxu0 %v4231
      %4283 = vmatmul.f32.gmra.mxu0 %v4197
      %v4284 = vpop.f32.mrf.mxu0
      %v4285 = vadd.f32 %v4265, %v4284
      %4286 = vmatmul.f32.gmra.mxu0 %v4199
      %v4287 = vpop.f32.mrf.mxu0
      %v4288 = vadd.f32 %v4265, %v4287
      %4289 = vmatmul.f32.gmra.mxu0 %v4201
      %v4290 = vpop.f32.mrf.mxu0
      %v4291 = vadd.f32 %v4265, %v4290
      %4292 = vmatmul.f32.gmra.mxu0 %v4203
      %v4293 = vpop.f32.mrf.mxu0
      %v4294 = vadd.f32 %v4265, %v4293
      %4295 = vmatmul.f32.gmra.mxu0 %v4205
      %v4296 = vpop.f32.mrf.mxu0
      %v4297 = vadd.f32 %v4265, %v4296
      %4298 = vmatmul.f32.gmra.mxu0 %v4207
      %v4299 = vpop.f32.mrf.mxu0
      %v4300 = vadd.f32 %v4265, %v4299
      %4301 = vmatmul.f32.gmra.mxu0 %v4209
      %v4302 = vpop.f32.mrf.mxu0
      %v4303 = vadd.f32 %v4265, %v4302
      %4304 = vmatmul.f32.gmra.mxu0 %v4211
      %v4305 = vpop.f32.mrf.mxu0
      %v4306 = vadd.f32 %v4265, %v4305
      %4307 = vmatmul.f32.gmra.mxu0 %v4213
      %v4308 = vpop.f32.mrf.mxu0
      %v4309 = vadd.f32 %v4265, %v4308
      %4310 = vmatmul.f32.gmra.mxu0 %v4215
      %v4311 = vpop.f32.mrf.mxu0
      %v4312 = vadd.f32 %v4265, %v4311
      %4313 = vmatmul.f32.gmra.mxu0 %v4217
      %v4314 = vpop.f32.mrf.mxu0
      %v4315 = vadd.f32 %v4265, %v4314
      %4316 = vmatmul.f32.gmra.mxu0 %v4219
      %v4317 = vpop.f32.mrf.mxu0
      %v4318 = vadd.f32 %v4265, %v4317
      %4319 = vmatmul.f32.gmra.mxu0 %v4221
      %v4320 = vpop.f32.mrf.mxu0
      %v4321 = vadd.f32 %v4265, %v4320
      %4322 = vmatmul.f32.gmra.mxu0 %v4223
      %v4323 = vpop.f32.mrf.mxu0
      %v4324 = vadd.f32 %v4265, %v4323
      %4325 = vmatmul.f32.gmra.mxu0 %v4225
      %v4326 = vpop.f32.mrf.mxu0
      %v4327 = vadd.f32 %v4265, %v4326
      %4328 = vmatmul.f32.gmra.mxu0 %v4227
      %v4329 = vpop.f32.mrf.mxu0
      %v4330 = vadd.f32 %v4265, %v4329
      %4331 = vmatmul.f32.gmra.mxu0 %v4229
      %v4332 = vpop.f32.mrf.mxu0
      %v4333 = vadd.f32 %v4265, %v4332
      %4334 = vdwg.mxu0
      %4335 = vmatpush.msra.mxu0 %v4262
      %4336 = vmatpush.msra.mxu0 %v4261
      %4337 = vmatpush.msra.mxu0 %v4260
      %4338 = vmatpush.msra.mxu0 %v4259
      %4339 = vmatpush.msra.mxu0 %v4258
      %4340 = vmatpush.msra.mxu0 %v4257
      %4341 = vmatpush.msra.mxu0 %v4256
      %4342 = vmatpush.msra.mxu0 %v4255
      %4343 = vmatpush.msra.mxu0 %v4254
      %4344 = vmatpush.msra.mxu0 %v4253
      %4345 = vmatpush.msra.mxu0 %v4252
      %4346 = vmatpush.msra.mxu0 %v4251
      %4347 = vmatpush.msra.mxu0 %v4250
      %4348 = vmatpush.msra.mxu0 %v4249
      %4349 = vmatpush.msra.mxu0 %v4248
      %4350 = vmatpush.msra.mxu0 %v4247
      %4351 = vmatmul.f32.gmra.mxu0 %v4198
      %v4352 = vpop.f32.mrf.mxu0
      %v4353 = vadd.f32 %v4285, %v4352
      %4354 = vmatmul.f32.gmra.mxu0 %v4200
      %v4355 = vpop.f32.mrf.mxu0
      %v4356 = vadd.f32 %v4288, %v4355
      %4357 = vmatmul.f32.gmra.mxu0 %v4202
      %v4358 = vpop.f32.mrf.mxu0
      %v4359 = vadd.f32 %v4291, %v4358
      %4360 = vmatmul.f32.gmra.mxu0 %v4204
      %v4361 = vpop.f32.mrf.mxu0
      %v4362 = vadd.f32 %v4294, %v4361
      %4363 = vmatmul.f32.gmra.mxu0 %v4206
      %v4364 = vpop.f32.mrf.mxu0
      %v4365 = vadd.f32 %v4297, %v4364
      %4366 = vmatmul.f32.gmra.mxu0 %v4208
      %v4367 = vpop.f32.mrf.mxu0
      %v4368 = vadd.f32 %v4300, %v4367
      %4369 = vmatmul.f32.gmra.mxu0 %v4210
      %v4370 = vpop.f32.mrf.mxu0
      %v4371 = vadd.f32 %v4303, %v4370
      %4372 = vmatmul.f32.gmra.mxu0 %v4212
      %v4373 = vpop.f32.mrf.mxu0
      %v4374 = vadd.f32 %v4306, %v4373
      %4375 = vmatmul.f32.gmra.mxu0 %v4214
      %v4376 = vpop.f32.mrf.mxu0
      %v4377 = vadd.f32 %v4309, %v4376
      %4378 = vmatmul.f32.gmra.mxu0 %v4216
      %v4379 = vpop.f32.mrf.mxu0
      %v4380 = vadd.f32 %v4312, %v4379
      %4381 = vmatmul.f32.gmra.mxu0 %v4218
      %v4382 = vpop.f32.mrf.mxu0
      %v4383 = vadd.f32 %v4315, %v4382
      %4384 = vmatmul.f32.gmra.mxu0 %v4220
      %v4385 = vpop.f32.mrf.mxu0
      %v4386 = vadd.f32 %v4318, %v4385
      %4387 = vmatmul.f32.gmra.mxu0 %v4222
      %v4388 = vpop.f32.mrf.mxu0
      %v4389 = vadd.f32 %v4321, %v4388
      %4390 = vmatmul.f32.gmra.mxu0 %v4224
      %v4391 = vpop.f32.mrf.mxu0
      %v4392 = vadd.f32 %v4324, %v4391
      %4393 = vmatmul.f32.gmra.mxu0 %v4226
      %v4394 = vpop.f32.mrf.mxu0
      %v4395 = vadd.f32 %v4327, %v4394
      %4396 = vmatmul.f32.gmra.mxu0 %v4228
      %v4397 = vpop.f32.mrf.mxu0
      %v4398 = vadd.f32 %v4330, %v4397
      %4399 = vmatmul.f32.gmra.mxu0 %v4230
      %v4400 = vpop.f32.mrf.mxu0
      %v4401 = vadd.f32 %v4333, %v4400
      %4402 = vdwg.mxu0
      %v4403 = vadd.f32 %v2291, %v4353
      %v4404 = vadd.f32 %v2292, %v4356
      %v4405 = vadd.f32 %v2293, %v4359
      %v4406 = vadd.f32 %v2294, %v4362
      %v4407 = vadd.f32 %v2295, %v4365
      %v4408 = vadd.f32 %v2296, %v4368
      %v4409 = vadd.f32 %v2297, %v4371
      %v4410 = vadd.f32 %v2298, %v4374
      %v4411 = vadd.f32 %v2299, %v4377
      %v4412 = vadd.f32 %v2300, %v4380
      %v4413 = vadd.f32 %v2301, %v4383
      %v4414 = vadd.f32 %v2302, %v4386
      %v4415 = vadd.f32 %v2303, %v4389
      %v4416 = vadd.f32 %v2304, %v4392
      %v4417 = vadd.f32 %v2305, %v4395
      %v4418 = vadd.f32 %v2306, %v4398
      %v4419 = vadd.f32 %v2307, %v4401
      %s4420 = scalar_lea.vmem %s3, 136
      %v4421 = vld [vmem:[%s4420] sm:$0xff]
      %v4422 = vld [vmem:[%s4420 + $0x8] sm:$0xff]
      %v4423 = vld [vmem:[%s4420 + $0x10] sm:$0xff]
      %v4424 = vld [vmem:[%s4420 + $0x18] sm:$0xff]
      %v4425 = vld [vmem:[%s4420 + $0x20] sm:$0xff]
      %v4426 = vld [vmem:[%s4420 + $0x28] sm:$0xff]
      %v4427 = vld [vmem:[%s4420 + $0x30] sm:$0xff]
      %v4428 = vld [vmem:[%s4420 + $0x38] sm:$0xff]
      %v4429 = vld [vmem:[%s4420 + $0x40] sm:$0xff]
      %v4430 = vld [vmem:[%s4420 + $0x48] sm:$0xff]
      %v4431 = vld [vmem:[%s4420 + $0x50] sm:$0xff]
      %v4432 = vld [vmem:[%s4420 + $0x58] sm:$0xff]
      %v4433 = vld [vmem:[%s4420 + $0x60] sm:$0xff]
      %v4434 = vld [vmem:[%s4420 + $0x68] sm:$0xff]
      %v4435 = vld [vmem:[%s4420 + $0x70] sm:$0xff]
      %v4436 = vld [vmem:[%s4420 + $0x78] sm:$0xff]
      %v4437 = vld [vmem:[%s4420 + $0x80] sm:$0xff]
      %s4438 = scalar_lea.vmem %s4, 136
      %v4439 = vld [vmem:[%s4438] sm:$0xff]
      %v4440 = vld [vmem:[%s4438 + $0x8] sm:$0xff]
      %v4441 = vld [vmem:[%s4438 + $0x10] sm:$0xff]
      %v4442 = vld [vmem:[%s4438 + $0x18] sm:$0xff]
      %v4443 = vld [vmem:[%s4438 + $0x20] sm:$0xff]
      %v4444 = vld [vmem:[%s4438 + $0x28] sm:$0xff]
      %v4445 = vld [vmem:[%s4438 + $0x30] sm:$0xff]
      %v4446 = vld [vmem:[%s4438 + $0x38] sm:$0xff]
      %v4447 = vld [vmem:[%s4438 + $0x40] sm:$0xff]
      %v4448 = vld [vmem:[%s4438 + $0x48] sm:$0xff]
      %v4449 = vld [vmem:[%s4438 + $0x50] sm:$0xff]
      %v4450 = vld [vmem:[%s4438 + $0x58] sm:$0xff]
      %v4451 = vld [vmem:[%s4438 + $0x60] sm:$0xff]
      %v4452 = vld [vmem:[%s4438 + $0x68] sm:$0xff]
      %v4453 = vld [vmem:[%s4438 + $0x70] sm:$0xff]
      %v4454 = vld [vmem:[%s4438 + $0x78] sm:$0xff]
      %v4455 = vld [vmem:[%s4438 + $0x80] sm:$0xff]
      %v4456 = vadd.f32 %v4403, %v4404
      %v4457 = vadd.f32 %v4456, %v4405
      %v4458 = vadd.f32 %v4457, %v4406
      %v4459 = vadd.f32 %v4458, %v4407
      %v4460 = vadd.f32 %v4459, %v4408
      %v4461 = vadd.f32 %v4460, %v4409
      %v4462 = vadd.f32 %v4461, %v4410
      %v4463 = vadd.f32 %v4462, %v4411
      %v4464 = vadd.f32 %v4463, %v4412
      %v4465 = vadd.f32 %v4464, %v4413
      %v4466 = vadd.f32 %v4465, %v4414
      %v4467 = vadd.f32 %v4466, %v4415
      %v4468 = vadd.f32 %v4467, %v4416
      %v4469 = vadd.f32 %v4468, %v4417
      %v4470 = vadd.f32 %v4469, %v4418
      %v4471 = vadd.f32 %v4470, %v4419
      %v4472 = vrot.slane %v4471, 4
      %v4473 = vadd.f32 %v4471, %v4472
      %v4474 = vrot.slane %v4473, 2
      %v4475 = vadd.f32 %v4473, %v4474
      %v4476 = vrot.slane %v4475, 1
      %v4477 = vadd.f32 %v4475, %v4476
      %v4478 = vmul.f32 %v4477, %v909
      %v4479 = vsub.f32 %v4403, %v4478
      %v4480 = vsub.f32 %v4404, %v4478
      %v4481 = vsub.f32 %v4405, %v4478
      %v4482 = vsub.f32 %v4406, %v4478
      %v4483 = vsub.f32 %v4407, %v4478
      %v4484 = vsub.f32 %v4408, %v4478
      %v4485 = vsub.f32 %v4409, %v4478
      %v4486 = vsub.f32 %v4410, %v4478
      %v4487 = vsub.f32 %v4411, %v4478
      %v4488 = vsub.f32 %v4412, %v4478
      %v4489 = vsub.f32 %v4413, %v4478
      %v4490 = vsub.f32 %v4414, %v4478
      %v4491 = vsub.f32 %v4415, %v4478
      %v4492 = vsub.f32 %v4416, %v4478
      %v4493 = vsub.f32 %v4417, %v4478
      %v4494 = vsub.f32 %v4418, %v4478
      %v4495 = vsub.f32 %v4419, %v4478
      %v4496 = vmul.f32 %v4479, %v4479
      %v4497 = vmul.f32 %v4480, %v4480
      %v4498 = vmul.f32 %v4481, %v4481
      %v4499 = vmul.f32 %v4482, %v4482
      %v4500 = vmul.f32 %v4483, %v4483
      %v4501 = vmul.f32 %v4484, %v4484
      %v4502 = vmul.f32 %v4485, %v4485
      %v4503 = vmul.f32 %v4486, %v4486
      %v4504 = vmul.f32 %v4487, %v4487
      %v4505 = vmul.f32 %v4488, %v4488
      %v4506 = vmul.f32 %v4489, %v4489
      %v4507 = vmul.f32 %v4490, %v4490
      %v4508 = vmul.f32 %v4491, %v4491
      %v4509 = vmul.f32 %v4492, %v4492
      %v4510 = vmul.f32 %v4493, %v4493
      %v4511 = vmul.f32 %v4494, %v4494
      %v4512 = vmul.f32 %v4495, %v4495
      %v4513 = vadd.f32 %v4496, %v4497
      %v4514 = vadd.f32 %v4513, %v4498
      %v4515 = vadd.f32 %v4514, %v4499
      %v4516 = vadd.f32 %v4515, %v4500
      %v4517 = vadd.f32 %v4516, %v4501
      %v4518 = vadd.f32 %v4517, %v4502
      %v4519 = vadd.f32 %v4518, %v4503
      %v4520 = vadd.f32 %v4519, %v4504
      %v4521 = vadd.f32 %v4520, %v4505
      %v4522 = vadd.f32 %v4521, %v4506
      %v4523 = vadd.f32 %v4522, %v4507
      %v4524 = vadd.f32 %v4523, %v4508
      %v4525 = vadd.f32 %v4524, %v4509
      %v4526 = vadd.f32 %v4525, %v4510
      %v4527 = vadd.f32 %v4526, %v4511
      %v4528 = vadd.f32 %v4527, %v4512
      %v4529 = vrot.slane %v4528, 4
      %v4530 = vadd.f32 %v4528, %v4529
      %v4531 = vrot.slane %v4530, 2
      %v4532 = vadd.f32 %v4530, %v4531
      %v4533 = vrot.slane %v4532, 1
      %v4534 = vadd.f32 %v4532, %v4533
      %v4535 = vmul.f32 %v4534, %v909
      %v4536 = vadd.f32 %v4535, 1e-05
      %v4537 = vrsqrt.pop %v4536
      %v4538 = vmul.f32 %v4537, %v4536
      %v4539 = vmul.f32 %v4538, %v4537
      %v4540 = vmul.f32 0.5, %v4539
      %v4541 = vsub.f32 1.5, %v4540
      %v4542 = vmul.f32 %v4537, %v4541
      %vm4543 = vweird.f32 %v4536
      %vm4544 = vweird.f32 %v4537
      %vm4545 = vmor %vm4543, %vm4544
      %v4546 = vsel %vm4545, %v4537, %v4542
      %v4547 = vmul.f32 %v4479, %v4546
      %v4548 = vmul.f32 %v4480, %v4546
      %v4549 = vmul.f32 %v4481, %v4546
      %v4550 = vmul.f32 %v4482, %v4546
      %v4551 = vmul.f32 %v4483, %v4546
      %v4552 = vmul.f32 %v4484, %v4546
      %v4553 = vmul.f32 %v4485, %v4546
      %v4554 = vmul.f32 %v4486, %v4546
      %v4555 = vmul.f32 %v4487, %v4546
      %v4556 = vmul.f32 %v4488, %v4546
      %v4557 = vmul.f32 %v4489, %v4546
      %v4558 = vmul.f32 %v4490, %v4546
      %v4559 = vmul.f32 %v4491, %v4546
      %v4560 = vmul.f32 %v4492, %v4546
      %v4561 = vmul.f32 %v4493, %v4546
      %v4562 = vmul.f32 %v4494, %v4546
      %v4563 = vmul.f32 %v4495, %v4546
      %4565 = vset.pattern.permute.xlu0 0
      %4566 = vperm.xlu0 %4565, %v4421
      %v4567 = vpop.permute.xlu0 %4566
      %4570 = vset.pattern.permute.xlu0 0
      %4571 = vperm.xlu0 %4570, %v4422
      %v4572 = vpop.permute.xlu0 %4571
      %4575 = vset.pattern.permute.xlu0 0
      %4576 = vperm.xlu0 %4575, %v4423
      %v4577 = vpop.permute.xlu0 %4576
      %4580 = vset.pattern.permute.xlu0 0
      %4581 = vperm.xlu0 %4580, %v4424
      %v4582 = vpop.permute.xlu0 %4581
      %4585 = vset.pattern.permute.xlu0 0
      %4586 = vperm.xlu0 %4585, %v4425
      %v4587 = vpop.permute.xlu0 %4586
      %4590 = vset.pattern.permute.xlu0 0
      %4591 = vperm.xlu0 %4590, %v4426
      %v4592 = vpop.permute.xlu0 %4591
      %4595 = vset.pattern.permute.xlu0 0
      %4596 = vperm.xlu0 %4595, %v4427
      %v4597 = vpop.permute.xlu0 %4596
      %4600 = vset.pattern.permute.xlu0 0
      %4601 = vperm.xlu0 %4600, %v4428
      %v4602 = vpop.permute.xlu0 %4601
      %4605 = vset.pattern.permute.xlu0 0
      %4606 = vperm.xlu0 %4605, %v4429
      %v4607 = vpop.permute.xlu0 %4606
      %4610 = vset.pattern.permute.xlu0 0
      %4611 = vperm.xlu0 %4610, %v4430
      %v4612 = vpop.permute.xlu0 %4611
      %4615 = vset.pattern.permute.xlu0 0
      %4616 = vperm.xlu0 %4615, %v4431
      %v4617 = vpop.permute.xlu0 %4616
      %4620 = vset.pattern.permute.xlu0 0
      %4621 = vperm.xlu0 %4620, %v4432
      %v4622 = vpop.permute.xlu0 %4621
      %4625 = vset.pattern.permute.xlu0 0
      %4626 = vperm.xlu0 %4625, %v4433
      %v4627 = vpop.permute.xlu0 %4626
      %4630 = vset.pattern.permute.xlu0 0
      %4631 = vperm.xlu0 %4630, %v4434
      %v4632 = vpop.permute.xlu0 %4631
      %4635 = vset.pattern.permute.xlu0 0
      %4636 = vperm.xlu0 %4635, %v4435
      %v4637 = vpop.permute.xlu0 %4636
      %4640 = vset.pattern.permute.xlu0 0
      %4641 = vperm.xlu0 %4640, %v4436
      %v4642 = vpop.permute.xlu0 %4641
      %4645 = vset.pattern.permute.xlu0 0
      %4646 = vperm.xlu0 %4645, %v4437
      %v4647 = vpop.permute.xlu0 %4646
      %v4649 = vmul.f32 %v4547, %v4567
      %v4650 = vmul.f32 %v4548, %v4572
      %v4651 = vmul.f32 %v4549, %v4577
      %v4652 = vmul.f32 %v4550, %v4582
      %v4653 = vmul.f32 %v4551, %v4587
      %v4654 = vmul.f32 %v4552, %v4592
      %v4655 = vmul.f32 %v4553, %v4597
      %v4656 = vmul.f32 %v4554, %v4602
      %v4657 = vmul.f32 %v4555, %v4607
      %v4658 = vmul.f32 %v4556, %v4612
      %v4659 = vmul.f32 %v4557, %v4617
      %v4660 = vmul.f32 %v4558, %v4622
      %v4661 = vmul.f32 %v4559, %v4627
      %v4662 = vmul.f32 %v4560, %v4632
      %v4663 = vmul.f32 %v4561, %v4637
      %v4664 = vmul.f32 %v4562, %v4642
      %v4665 = vmul.f32 %v4563, %v4647
      %4667 = vset.pattern.permute.xlu0 0
      %4668 = vperm.xlu0 %4667, %v4439
      %v4669 = vpop.permute.xlu0 %4668
      %4672 = vset.pattern.permute.xlu0 0
      %4673 = vperm.xlu0 %4672, %v4440
      %v4674 = vpop.permute.xlu0 %4673
      %4677 = vset.pattern.permute.xlu0 0
      %4678 = vperm.xlu0 %4677, %v4441
      %v4679 = vpop.permute.xlu0 %4678
      %4682 = vset.pattern.permute.xlu0 0
      %4683 = vperm.xlu0 %4682, %v4442
      %v4684 = vpop.permute.xlu0 %4683
      %4687 = vset.pattern.permute.xlu0 0
      %4688 = vperm.xlu0 %4687, %v4443
      %v4689 = vpop.permute.xlu0 %4688
      %4692 = vset.pattern.permute.xlu0 0
      %4693 = vperm.xlu0 %4692, %v4444
      %v4694 = vpop.permute.xlu0 %4693
      %4697 = vset.pattern.permute.xlu0 0
      %4698 = vperm.xlu0 %4697, %v4445
      %v4699 = vpop.permute.xlu0 %4698
      %4702 = vset.pattern.permute.xlu0 0
      %4703 = vperm.xlu0 %4702, %v4446
      %v4704 = vpop.permute.xlu0 %4703
      %4707 = vset.pattern.permute.xlu0 0
      %4708 = vperm.xlu0 %4707, %v4447
      %v4709 = vpop.permute.xlu0 %4708
      %4712 = vset.pattern.permute.xlu0 0
      %4713 = vperm.xlu0 %4712, %v4448
      %v4714 = vpop.permute.xlu0 %4713
      %4717 = vset.pattern.permute.xlu0 0
      %4718 = vperm.xlu0 %4717, %v4449
      %v4719 = vpop.permute.xlu0 %4718
      %4722 = vset.pattern.permute.xlu0 0
      %4723 = vperm.xlu0 %4722, %v4450
      %v4724 = vpop.permute.xlu0 %4723
      %4727 = vset.pattern.permute.xlu0 0
      %4728 = vperm.xlu0 %4727, %v4451
      %v4729 = vpop.permute.xlu0 %4728
      %4732 = vset.pattern.permute.xlu0 0
      %4733 = vperm.xlu0 %4732, %v4452
      %v4734 = vpop.permute.xlu0 %4733
      %4737 = vset.pattern.permute.xlu0 0
      %4738 = vperm.xlu0 %4737, %v4453
      %v4739 = vpop.permute.xlu0 %4738
      %4742 = vset.pattern.permute.xlu0 0
      %4743 = vperm.xlu0 %4742, %v4454
      %v4744 = vpop.permute.xlu0 %4743
      %4747 = vset.pattern.permute.xlu0 0
      %4748 = vperm.xlu0 %4747, %v4455
      %v4749 = vpop.permute.xlu0 %4748
      %v4751 = vadd.f32 %v4649, %v4669
      %v4752 = vadd.f32 %v4650, %v4674
      %v4753 = vadd.f32 %v4651, %v4679
      %v4754 = vadd.f32 %v4652, %v4684
      %v4755 = vadd.f32 %v4653, %v4689
      %v4756 = vadd.f32 %v4654, %v4694
      %v4757 = vadd.f32 %v4655, %v4699
      %v4758 = vadd.f32 %v4656, %v4704
      %v4759 = vadd.f32 %v4657, %v4709
      %v4760 = vadd.f32 %v4658, %v4714
      %v4761 = vadd.f32 %v4659, %v4719
      %v4762 = vadd.f32 %v4660, %v4724
      %v4763 = vadd.f32 %v4661, %v4729
      %v4764 = vadd.f32 %v4662, %v4734
      %v4765 = vadd.f32 %v4663, %v4739
      %v4766 = vadd.f32 %v4664, %v4744
      %v4767 = vadd.f32 %v4665, %v4749
      %s4768 = scalar_lea.vmem %s5, 136
      %v4769 = vld [vmem:[%s4768] sm:$0xff]
      %v4770 = vld [vmem:[%s4768 + $0x8] sm:$0xff]
      %v4771 = vld [vmem:[%s4768 + $0x10] sm:$0xff]
      %v4772 = vld [vmem:[%s4768 + $0x18] sm:$0xff]
      %v4773 = vld [vmem:[%s4768 + $0x20] sm:$0xff]
      %v4774 = vld [vmem:[%s4768 + $0x28] sm:$0xff]
      %v4775 = vld [vmem:[%s4768 + $0x30] sm:$0xff]
      %v4776 = vld [vmem:[%s4768 + $0x38] sm:$0xff]
      %v4777 = vld [vmem:[%s4768 + $0x40] sm:$0xff]
      %v4778 = vld [vmem:[%s4768 + $0x48] sm:$0xff]
      %v4779 = vld [vmem:[%s4768 + $0x50] sm:$0xff]
      %v4780 = vld [vmem:[%s4768 + $0x58] sm:$0xff]
      %v4781 = vld [vmem:[%s4768 + $0x60] sm:$0xff]
      %v4782 = vld [vmem:[%s4768 + $0x68] sm:$0xff]
      %v4783 = vld [vmem:[%s4768 + $0x70] sm:$0xff]
      %v4784 = vld [vmem:[%s4768 + $0x78] sm:$0xff]
      %v4785 = vld [vmem:[%s4768 + $0x80] sm:$0xff]
      %s4786 = scalar_lea.vmem %s6, 1
      %v4787 = vld [vmem:[%s4786] sm:$0x1]
      %v4789 = vperm.slane %v4787, 0
      %4791 = vxpose.xlu0.b32.start [1/16] %v4751, 128
      %4792 = vxpose.xlu0.b32.cont [2/16] %v4752, 128
      %4793 = vxpose.xlu0.b32.cont [3/16] %v4753, 128
      %4794 = vxpose.xlu0.b32.cont [4/16] %v4754, 128
      %4795 = vxpose.xlu0.b32.cont [5/16] %v4755, 128
      %4796 = vxpose.xlu0.b32.cont [6/16] %v4756, 128
      %4797 = vxpose.xlu0.b32.cont [7/16] %v4757, 128
      %4798 = vxpose.xlu0.b32.cont [8/16] %v4758, 128
      %4799 = vxpose.xlu0.b32.cont [9/16] %v4759, 128
      %4800 = vxpose.xlu0.b32.cont [10/16] %v4760, 128
      %4801 = vxpose.xlu0.b32.cont [11/16] %v4761, 128
      %4802 = vxpose.xlu0.b32.cont [12/16] %v4762, 128
      %4803 = vxpose.xlu0.b32.cont [13/16] %v4763, 128
      %4804 = vxpose.xlu0.b32.cont [14/16] %v4764, 128
      %4805 = vxpose.xlu0.b32.cont [15/16] %v4765, 128
      %4806 = vxpose.xlu0.b32.end [16/16] %v4766, 128
      %v4807 = vpop.trf.xlu0
      %v4808 = vpop.trf.xlu0
      %v4809 = vpop.trf.xlu0
      %v4810 = vpop.trf.xlu0
      %v4811 = vpop.trf.xlu0
      %v4812 = vpop.trf.xlu0
      %v4813 = vpop.trf.xlu0
      %v4814 = vpop.trf.xlu0
      %v4815 = vpop.trf.xlu0
      %v4816 = vpop.trf.xlu0
      %v4817 = vpop.trf.xlu0
      %v4818 = vpop.trf.xlu0
      %v4819 = vpop.trf.xlu0
      %v4820 = vpop.trf.xlu0
      %v4821 = vpop.trf.xlu0
      %v4822 = vpop.trf.xlu0
      %4823 = vxpose.xlu0.b32.start [1/16] %v4767, 128
      %4824 = vxpose.xlu0.b32.cont [2/16] 0.0, 128
      %4825 = vxpose.xlu0.b32.cont [3/16] 0.0, 128
      %4826 = vxpose.xlu0.b32.cont [4/16] 0.0, 128
      %4827 = vxpose.xlu0.b32.cont [5/16] 0.0, 128
      %4828 = vxpose.xlu0.b32.cont [6/16] 0.0, 128
      %4829 = vxpose.xlu0.b32.cont [7/16] 0.0, 128
      %4830 = vxpose.xlu0.b32.cont [8/16] 0.0, 128
      %4831 = vxpose.xlu0.b32.cont [9/16] 0.0, 128
      %4832 = vxpose.xlu0.b32.cont [10/16] 0.0, 128
      %4833 = vxpose.xlu0.b32.cont [11/16] 0.0, 128
      %4834 = vxpose.xlu0.b32.cont [12/16] 0.0, 128
      %4835 = vxpose.xlu0.b32.cont [13/16] 0.0, 128
      %4836 = vxpose.xlu0.b32.cont [14/16] 0.0, 128
      %4837 = vxpose.xlu0.b32.cont [15/16] 0.0, 128
      %4838 = vxpose.xlu0.b32.end [16/16] 0.0, 128
      %v4839 = vpop.trf.xlu0
      %v4840 = vpop.trf.xlu0
      %v4841 = vpop.trf.xlu0
      %v4842 = vpop.trf.xlu0
      %v4843 = vpop.trf.xlu0
      %v4844 = vpop.trf.xlu0
      %v4845 = vpop.trf.xlu0
      %v4846 = vpop.trf.xlu0
      %v4847 = vpop.trf.xlu0
      %v4848 = vpop.trf.xlu0
      %v4849 = vpop.trf.xlu0
      %v4850 = vpop.trf.xlu0
      %v4851 = vpop.trf.xlu0
      %v4852 = vpop.trf.xlu0
      %v4853 = vpop.trf.xlu0
      %v4854 = vpop.trf.xlu0
      %v4856 = vsel %vm1285, %v4839, 0
      %v4859 = vsel %vm1285, %v4840, 0
      %v4862 = vsel %vm1285, %v4841, 0
      %v4865 = vsel %vm1285, %v4842, 0
      %v4868 = vsel %vm1285, %v4843, 0
      %v4871 = vsel %vm1285, %v4844, 0
      %v4874 = vsel %vm1285, %v4845, 0
      %v4877 = vsel %vm1285, %v4846, 0
      %v4880 = vsel %vm1285, %v4847, 0
      %v4883 = vsel %vm1285, %v4848, 0
      %v4886 = vsel %vm1285, %v4849, 0
      %v4889 = vsel %vm1285, %v4850, 0
      %v4892 = vsel %vm1285, %v4851, 0
      %v4895 = vsel %vm1285, %v4852, 0
      %v4898 = vsel %vm1285, %v4853, 0
      %v4901 = vsel %vm1285, %v4854, 0
      %4903 = vmatpush.msra.mxu0 %v4784
      %4904 = vmatpush.msra.mxu0 %v4783
      %4905 = vmatpush.msra.mxu0 %v4782
      %4906 = vmatpush.msra.mxu0 %v4781
      %4907 = vmatpush.msra.mxu0 %v4780
      %4908 = vmatpush.msra.mxu0 %v4779
      %4909 = vmatpush.msra.mxu0 %v4778
      %4910 = vmatpush.msra.mxu0 %v4777
      %4911 = vmatpush.msra.mxu0 %v4776
      %4912 = vmatpush.msra.mxu0 %v4775
      %4913 = vmatpush.msra.mxu0 %v4774
      %4914 = vmatpush.msra.mxu0 %v4773
      %4915 = vmatpush.msra.mxu0 %v4772
      %4916 = vmatpush.msra.mxu0 %v4771
      %4917 = vmatpush.msra.mxu0 %v4770
      %4918 = vmatpush.msra.mxu0 %v4769
      %4919 = vmatmul.f32.gmra.mxu0 %v4807
      %v4920 = vpop.f32.mrf.mxu0
      %v4921 = vadd.f32 %v4789, %v4920
      %4922 = vmatmul.f32.gmra.mxu0 %v4808
      %v4923 = vpop.f32.mrf.mxu0
      %v4924 = vadd.f32 %v4789, %v4923
      %4925 = vmatmul.f32.gmra.mxu0 %v4809
      %v4926 = vpop.f32.mrf.mxu0
      %v4927 = vadd.f32 %v4789, %v4926
      %4928 = vmatmul.f32.gmra.mxu0 %v4810
      %v4929 = vpop.f32.mrf.mxu0
      %v4930 = vadd.f32 %v4789, %v4929
      %4931 = vmatmul.f32.gmra.mxu0 %v4811
      %v4932 = vpop.f32.mrf.mxu0
      %v4933 = vadd.f32 %v4789, %v4932
      %4934 = vmatmul.f32.gmra.mxu0 %v4812
      %v4935 = vpop.f32.mrf.mxu0
      %v4936 = vadd.f32 %v4789, %v4935
      %4937 = vmatmul.f32.gmra.mxu0 %v4813
      %v4938 = vpop.f32.mrf.mxu0
      %v4939 = vadd.f32 %v4789, %v4938
      %4940 = vmatmul.f32.gmra.mxu0 %v4814
      %v4941 = vpop.f32.mrf.mxu0
      %v4942 = vadd.f32 %v4789, %v4941
      %4943 = vmatmul.f32.gmra.mxu0 %v4815
      %v4944 = vpop.f32.mrf.mxu0
      %v4945 = vadd.f32 %v4789, %v4944
      %4946 = vmatmul.f32.gmra.mxu0 %v4816
      %v4947 = vpop.f32.mrf.mxu0
      %v4948 = vadd.f32 %v4789, %v4947
      %4949 = vmatmul.f32.gmra.mxu0 %v4817
      %v4950 = vpop.f32.mrf.mxu0
      %v4951 = vadd.f32 %v4789, %v4950
      %4952 = vmatmul.f32.gmra.mxu0 %v4818
      %v4953 = vpop.f32.mrf.mxu0
      %v4954 = vadd.f32 %v4789, %v4953
      %4955 = vmatmul.f32.gmra.mxu0 %v4819
      %v4956 = vpop.f32.mrf.mxu0
      %v4957 = vadd.f32 %v4789, %v4956
      %4958 = vmatmul.f32.gmra.mxu0 %v4820
      %v4959 = vpop.f32.mrf.mxu0
      %v4960 = vadd.f32 %v4789, %v4959
      %4961 = vmatmul.f32.gmra.mxu0 %v4821
      %v4962 = vpop.f32.mrf.mxu0
      %v4963 = vadd.f32 %v4789, %v4962
      %4964 = vmatmul.f32.gmra.mxu0 %v4822
      %v4965 = vpop.f32.mrf.mxu0
      %v4966 = vadd.f32 %v4789, %v4965
      %4967 = vdwg.mxu0
      %4968 = vmatpush.msra.mxu0 0.0
      %4969 = vmatpush.msra.mxu0 0.0
      %4970 = vmatpush.msra.mxu0 0.0
      %4971 = vmatpush.msra.mxu0 0.0
      %4972 = vmatpush.msra.mxu0 0.0
      %4973 = vmatpush.msra.mxu0 0.0
      %4974 = vmatpush.msra.mxu0 0.0
      %4975 = vmatpush.msra.mxu0 0.0
      %4976 = vmatpush.msra.mxu0 0.0
      %4977 = vmatpush.msra.mxu0 0.0
      %4978 = vmatpush.msra.mxu0 0.0
      %4979 = vmatpush.msra.mxu0 0.0
      %4980 = vmatpush.msra.mxu0 0.0
      %4981 = vmatpush.msra.mxu0 0.0
      %4982 = vmatpush.msra.mxu0 0.0
      %4983 = vmatpush.msra.mxu0 %v4785
      %4984 = vmatmul.f32.gmra.mxu0 %v4856
      %v4985 = vpop.f32.mrf.mxu0
      %v4986 = vadd.f32 %v4921, %v4985
      %4987 = vmatmul.f32.gmra.mxu0 %v4859
      %v4988 = vpop.f32.mrf.mxu0
      %v4989 = vadd.f32 %v4924, %v4988
      %4990 = vmatmul.f32.gmra.mxu0 %v4862
      %v4991 = vpop.f32.mrf.mxu0
      %v4992 = vadd.f32 %v4927, %v4991
      %4993 = vmatmul.f32.gmra.mxu0 %v4865
      %v4994 = vpop.f32.mrf.mxu0
      %v4995 = vadd.f32 %v4930, %v4994
      %4996 = vmatmul.f32.gmra.mxu0 %v4868
      %v4997 = vpop.f32.mrf.mxu0
      %v4998 = vadd.f32 %v4933, %v4997
      %4999 = vmatmul.f32.gmra.mxu0 %v4871
      %v5000 = vpop.f32.mrf.mxu0
      %v5001 = vadd.f32 %v4936, %v5000
      %5002 = vmatmul.f32.gmra.mxu0 %v4874
      %v5003 = vpop.f32.mrf.mxu0
      %v5004 = vadd.f32 %v4939, %v5003
      %5005 = vmatmul.f32.gmra.mxu0 %v4877
      %v5006 = vpop.f32.mrf.mxu0
      %v5007 = vadd.f32 %v4942, %v5006
      %5008 = vmatmul.f32.gmra.mxu0 %v4880
      %v5009 = vpop.f32.mrf.mxu0
      %v5010 = vadd.f32 %v4945, %v5009
      %5011 = vmatmul.f32.gmra.mxu0 %v4883
      %v5012 = vpop.f32.mrf.mxu0
      %v5013 = vadd.f32 %v4948, %v5012
      %5014 = vmatmul.f32.gmra.mxu0 %v4886
      %v5015 = vpop.f32.mrf.mxu0
      %v5016 = vadd.f32 %v4951, %v5015
      %5017 = vmatmul.f32.gmra.mxu0 %v4889
      %v5018 = vpop.f32.mrf.mxu0
      %v5019 = vadd.f32 %v4954, %v5018
      %5020 = vmatmul.f32.gmra.mxu0 %v4892
      %v5021 = vpop.f32.mrf.mxu0
      %v5022 = vadd.f32 %v4957, %v5021
      %5023 = vmatmul.f32.gmra.mxu0 %v4895
      %v5024 = vpop.f32.mrf.mxu0
      %v5025 = vadd.f32 %v4960, %v5024
      %5026 = vmatmul.f32.gmra.mxu0 %v4898
      %v5027 = vpop.f32.mrf.mxu0
      %v5028 = vadd.f32 %v4963, %v5027
      %5029 = vmatmul.f32.gmra.mxu0 %v4901
      %v5030 = vpop.f32.mrf.mxu0
      %v5031 = vadd.f32 %v4966, %v5030
      %5032 = vdwg.mxu0
      %v5033 = vmul.f32 %v4986, 0.5
      %v5034 = vmul.f32 %v4989, 0.5
      %v5035 = vmul.f32 %v4992, 0.5
      %v5036 = vmul.f32 %v4995, 0.5
      %v5037 = vmul.f32 %v4998, 0.5
      %v5038 = vmul.f32 %v5001, 0.5
      %v5039 = vmul.f32 %v5004, 0.5
      %v5040 = vmul.f32 %v5007, 0.5
      %v5041 = vmul.f32 %v5010, 0.5
      %v5042 = vmul.f32 %v5013, 0.5
      %v5043 = vmul.f32 %v5016, 0.5
      %v5044 = vmul.f32 %v5019, 0.5
      %v5045 = vmul.f32 %v5022, 0.5
      %v5046 = vmul.f32 %v5025, 0.5
      %v5047 = vmul.f32 %v5028, 0.5
      %v5048 = vmul.f32 %v5031, 0.5
      %v5049 = vmul.f32 %v4986, 0.70710677
      %v5050 = vmul.f32 %v4989, 0.70710677
      %v5051 = vmul.f32 %v4992, 0.70710677
      %v5052 = vmul.f32 %v4995, 0.70710677
      %v5053 = vmul.f32 %v4998, 0.70710677
      %v5054 = vmul.f32 %v5001, 0.70710677
      %v5055 = vmul.f32 %v5004, 0.70710677
      %v5056 = vmul.f32 %v5007, 0.70710677
      %v5057 = vmul.f32 %v5010, 0.70710677
      %v5058 = vmul.f32 %v5013, 0.70710677
      %v5059 = vmul.f32 %v5016, 0.70710677
      %v5060 = vmul.f32 %v5019, 0.70710677
      %v5061 = vmul.f32 %v5022, 0.70710677
      %v5062 = vmul.f32 %v5025, 0.70710677
      %v5063 = vmul.f32 %v5028, 0.70710677
      %v5064 = vmul.f32 %v5031, 0.70710677
      %vm5065 = vcmp.ge.f32.partialorder %v5049, 0.0
      %vm5066 = vcmp.ge.f32.partialorder %v5050, 0.0
      %vm5067 = vcmp.ge.f32.partialorder %v5051, 0.0
      %vm5068 = vcmp.ge.f32.partialorder %v5052, 0.0
      %vm5069 = vcmp.ge.f32.partialorder %v5053, 0.0
      %vm5070 = vcmp.ge.f32.partialorder %v5054, 0.0
      %vm5071 = vcmp.ge.f32.partialorder %v5055, 0.0
      %vm5072 = vcmp.ge.f32.partialorder %v5056, 0.0
      %vm5073 = vcmp.ge.f32.partialorder %v5057, 0.0
      %vm5074 = vcmp.ge.f32.partialorder %v5058, 0.0
      %vm5075 = vcmp.ge.f32.partialorder %v5059, 0.0
      %vm5076 = vcmp.ge.f32.partialorder %v5060, 0.0
      %vm5077 = vcmp.ge.f32.partialorder %v5061, 0.0
      %vm5078 = vcmp.ge.f32.partialorder %v5062, 0.0
      %vm5079 = vcmp.ge.f32.partialorder %v5063, 0.0
      %vm5080 = vcmp.ge.f32.partialorder %v5064, 0.0
      %v5081 = vsel %vm5065, 1.0, -1.0
      %v5082 = vsel %vm5066, 1.0, -1.0
      %v5083 = vsel %vm5067, 1.0, -1.0
      %v5084 = vsel %vm5068, 1.0, -1.0
      %v5085 = vsel %vm5069, 1.0, -1.0
      %v5086 = vsel %vm5070, 1.0, -1.0
      %v5087 = vsel %vm5071, 1.0, -1.0
      %v5088 = vsel %vm5072, 1.0, -1.0
      %v5089 = vsel %vm5073, 1.0, -1.0
      %v5090 = vsel %vm5074, 1.0, -1.0
      %v5091 = vsel %vm5075, 1.0, -1.0
      %v5092 = vsel %vm5076, 1.0, -1.0
      %v5093 = vsel %vm5077, 1.0, -1.0
      %v5094 = vsel %vm5078, 1.0, -1.0
      %v5095 = vsel %vm5079, 1.0, -1.0
      %v5096 = vsel %vm5080, 1.0, -1.0
      %v5097 = vand.u32 2147483647, %v5049
      %v5098 = vand.u32 2147483647, %v5050
      %v5099 = vand.u32 2147483647, %v5051
      %v5100 = vand.u32 2147483647, %v5052
      %v5101 = vand.u32 2147483647, %v5053
      %v5102 = vand.u32 2147483647, %v5054
      %v5103 = vand.u32 2147483647, %v5055
      %v5104 = vand.u32 2147483647, %v5056
      %v5105 = vand.u32 2147483647, %v5057
      %v5106 = vand.u32 2147483647, %v5058
      %v5107 = vand.u32 2147483647, %v5059
      %v5108 = vand.u32 2147483647, %v5060
      %v5109 = vand.u32 2147483647, %v5061
      %v5110 = vand.u32 2147483647, %v5062
      %v5111 = vand.u32 2147483647, %v5063
      %v5112 = vand.u32 2147483647, %v5064
      %v5113 = vmul.f32 %v5097, 0.3275911
      %v5114 = vmul.f32 %v5098, 0.3275911
      %v5115 = vmul.f32 %v5099, 0.3275911
      %v5116 = vmul.f32 %v5100, 0.3275911
      %v5117 = vmul.f32 %v5101, 0.3275911
      %v5118 = vmul.f32 %v5102, 0.3275911
      %v5119 = vmul.f32 %v5103, 0.3275911
      %v5120 = vmul.f32 %v5104, 0.3275911
      %v5121 = vmul.f32 %v5105, 0.3275911
      %v5122 = vmul.f32 %v5106, 0.3275911
      %v5123 = vmul.f32 %v5107, 0.3275911
      %v5124 = vmul.f32 %v5108, 0.3275911
      %v5125 = vmul.f32 %v5109, 0.3275911
      %v5126 = vmul.f32 %v5110, 0.3275911
      %v5127 = vmul.f32 %v5111, 0.3275911
      %v5128 = vmul.f32 %v5112, 0.3275911
      %v5129 = vadd.f32 %v5113, 1.0
      %v5130 = vadd.f32 %v5114, 1.0
      %v5131 = vadd.f32 %v5115, 1.0
      %v5132 = vadd.f32 %v5116, 1.0
      %v5133 = vadd.f32 %v5117, 1.0
      %v5134 = vadd.f32 %v5118, 1.0
      %v5135 = vadd.f32 %v5119, 1.0
      %v5136 = vadd.f32 %v5120, 1.0
      %v5137 = vadd.f32 %v5121, 1.0
      %v5138 = vadd.f32 %v5122, 1.0
      %v5139 = vadd.f32 %v5123, 1.0
      %v5140 = vadd.f32 %v5124, 1.0
      %v5141 = vadd.f32 %v5125, 1.0
      %v5142 = vadd.f32 %v5126, 1.0
      %v5143 = vadd.f32 %v5127, 1.0
      %v5144 = vadd.f32 %v5128, 1.0
      %v5145 = vrcp.pop %v5129
      %v5146 = vmul.f32 %v5129, %v5145
      %v5147 = vsub.f32 1.0, %v5146
      %v5148 = vmul.f32 %v5145, %v5147
      %v5149 = vadd.f32 %v5145, %v5148
      %vm5150 = vweird.f32 %v5129
      %vm5151 = vweird.f32 %v5145
      %vm5152 = vmor %vm5150, %vm5151
      %v5153 = vsel %vm5152, %v5145, %v5149
      %v5154 = vand.u32 2147483647, %v5129
      %vm5155 = vcmp.eq.f32.partialorder %v5154, 8.507059e+37
      %v5156 = vand.u32 %v5129, 2147483648
      %v5157 = vor.u32 1.1754944e-38, %v5156
      %v5158 = vsel %vm5155, %v5157, %v5153
      %v5159 = vmul.f32 1.0, %v5158
      %v5160 = vrcp.pop %v5130
      %v5161 = vmul.f32 %v5130, %v5160
      %v5162 = vsub.f32 1.0, %v5161
      %v5163 = vmul.f32 %v5160, %v5162
      %v5164 = vadd.f32 %v5160, %v5163
      %vm5165 = vweird.f32 %v5130
      %vm5166 = vweird.f32 %v5160
      %vm5167 = vmor %vm5165, %vm5166
      %v5168 = vsel %vm5167, %v5160, %v5164
      %v5169 = vand.u32 2147483647, %v5130
      %vm5170 = vcmp.eq.f32.partialorder %v5169, 8.507059e+37
      %v5171 = vand.u32 %v5130, 2147483648
      %v5172 = vor.u32 1.1754944e-38, %v5171
      %v5173 = vsel %vm5170, %v5172, %v5168
      %v5174 = vmul.f32 1.0, %v5173
      %v5175 = vrcp.pop %v5131
      %v5176 = vmul.f32 %v5131, %v5175
      %v5177 = vsub.f32 1.0, %v5176
      %v5178 = vmul.f32 %v5175, %v5177
      %v5179 = vadd.f32 %v5175, %v5178
      %vm5180 = vweird.f32 %v5131
      %vm5181 = vweird.f32 %v5175
      %vm5182 = vmor %vm5180, %vm5181
      %v5183 = vsel %vm5182, %v5175, %v5179
      %v5184 = vand.u32 2147483647, %v5131
      %vm5185 = vcmp.eq.f32.partialorder %v5184, 8.507059e+37
      %v5186 = vand.u32 %v5131, 2147483648
      %v5187 = vor.u32 1.1754944e-38, %v5186
      %v5188 = vsel %vm5185, %v5187, %v5183
      %v5189 = vmul.f32 1.0, %v5188
      %v5190 = vrcp.pop %v5132
      %v5191 = vmul.f32 %v5132, %v5190
      %v5192 = vsub.f32 1.0, %v5191
      %v5193 = vmul.f32 %v5190, %v5192
      %v5194 = vadd.f32 %v5190, %v5193
      %vm5195 = vweird.f32 %v5132
      %vm5196 = vweird.f32 %v5190
      %vm5197 = vmor %vm5195, %vm5196
      %v5198 = vsel %vm5197, %v5190, %v5194
      %v5199 = vand.u32 2147483647, %v5132
      %vm5200 = vcmp.eq.f32.partialorder %v5199, 8.507059e+37
      %v5201 = vand.u32 %v5132, 2147483648
      %v5202 = vor.u32 1.1754944e-38, %v5201
      %v5203 = vsel %vm5200, %v5202, %v5198
      %v5204 = vmul.f32 1.0, %v5203
      %v5205 = vrcp.pop %v5133
      %v5206 = vmul.f32 %v5133, %v5205
      %v5207 = vsub.f32 1.0, %v5206
      %v5208 = vmul.f32 %v5205, %v5207
      %v5209 = vadd.f32 %v5205, %v5208
      %vm5210 = vweird.f32 %v5133
      %vm5211 = vweird.f32 %v5205
      %vm5212 = vmor %vm5210, %vm5211
      %v5213 = vsel %vm5212, %v5205, %v5209
      %v5214 = vand.u32 2147483647, %v5133
      %vm5215 = vcmp.eq.f32.partialorder %v5214, 8.507059e+37
      %v5216 = vand.u32 %v5133, 2147483648
      %v5217 = vor.u32 1.1754944e-38, %v5216
      %v5218 = vsel %vm5215, %v5217, %v5213
      %v5219 = vmul.f32 1.0, %v5218
      %v5220 = vrcp.pop %v5134
      %v5221 = vmul.f32 %v5134, %v5220
      %v5222 = vsub.f32 1.0, %v5221
      %v5223 = vmul.f32 %v5220, %v5222
      %v5224 = vadd.f32 %v5220, %v5223
      %vm5225 = vweird.f32 %v5134
      %vm5226 = vweird.f32 %v5220
      %vm5227 = vmor %vm5225, %vm5226
      %v5228 = vsel %vm5227, %v5220, %v5224
      %v5229 = vand.u32 2147483647, %v5134
      %vm5230 = vcmp.eq.f32.partialorder %v5229, 8.507059e+37
      %v5231 = vand.u32 %v5134, 2147483648
      %v5232 = vor.u32 1.1754944e-38, %v5231
      %v5233 = vsel %vm5230, %v5232, %v5228
      %v5234 = vmul.f32 1.0, %v5233
      %v5235 = vrcp.pop %v5135
      %v5236 = vmul.f32 %v5135, %v5235
      %v5237 = vsub.f32 1.0, %v5236
      %v5238 = vmul.f32 %v5235, %v5237
      %v5239 = vadd.f32 %v5235, %v5238
      %vm5240 = vweird.f32 %v5135
      %vm5241 = vweird.f32 %v5235
      %vm5242 = vmor %vm5240, %vm5241
      %v5243 = vsel %vm5242, %v5235, %v5239
      %v5244 = vand.u32 2147483647, %v5135
      %vm5245 = vcmp.eq.f32.partialorder %v5244, 8.507059e+37
      %v5246 = vand.u32 %v5135, 2147483648
      %v5247 = vor.u32 1.1754944e-38, %v5246
      %v5248 = vsel %vm5245, %v5247, %v5243
      %v5249 = vmul.f32 1.0, %v5248
      %v5250 = vrcp.pop %v5136
      %v5251 = vmul.f32 %v5136, %v5250
      %v5252 = vsub.f32 1.0, %v5251
      %v5253 = vmul.f32 %v5250, %v5252
      %v5254 = vadd.f32 %v5250, %v5253
      %vm5255 = vweird.f32 %v5136
      %vm5256 = vweird.f32 %v5250
      %vm5257 = vmor %vm5255, %vm5256
      %v5258 = vsel %vm5257, %v5250, %v5254
      %v5259 = vand.u32 2147483647, %v5136
      %vm5260 = vcmp.eq.f32.partialorder %v5259, 8.507059e+37
      %v5261 = vand.u32 %v5136, 2147483648
      %v5262 = vor.u32 1.1754944e-38, %v5261
      %v5263 = vsel %vm5260, %v5262, %v5258
      %v5264 = vmul.f32 1.0, %v5263
      %v5265 = vrcp.pop %v5137
      %v5266 = vmul.f32 %v5137, %v5265
      %v5267 = vsub.f32 1.0, %v5266
      %v5268 = vmul.f32 %v5265, %v5267
      %v5269 = vadd.f32 %v5265, %v5268
      %vm5270 = vweird.f32 %v5137
      %vm5271 = vweird.f32 %v5265
      %vm5272 = vmor %vm5270, %vm5271
      %v5273 = vsel %vm5272, %v5265, %v5269
      %v5274 = vand.u32 2147483647, %v5137
      %vm5275 = vcmp.eq.f32.partialorder %v5274, 8.507059e+37
      %v5276 = vand.u32 %v5137, 2147483648
      %v5277 = vor.u32 1.1754944e-38, %v5276
      %v5278 = vsel %vm5275, %v5277, %v5273
      %v5279 = vmul.f32 1.0, %v5278
      %v5280 = vrcp.pop %v5138
      %v5281 = vmul.f32 %v5138, %v5280
      %v5282 = vsub.f32 1.0, %v5281
      %v5283 = vmul.f32 %v5280, %v5282
      %v5284 = vadd.f32 %v5280, %v5283
      %vm5285 = vweird.f32 %v5138
      %vm5286 = vweird.f32 %v5280
      %vm5287 = vmor %vm5285, %vm5286
      %v5288 = vsel %vm5287, %v5280, %v5284
      %v5289 = vand.u32 2147483647, %v5138
      %vm5290 = vcmp.eq.f32.partialorder %v5289, 8.507059e+37
      %v5291 = vand.u32 %v5138, 2147483648
      %v5292 = vor.u32 1.1754944e-38, %v5291
      %v5293 = vsel %vm5290, %v5292, %v5288
      %v5294 = vmul.f32 1.0, %v5293
      %v5295 = vrcp.pop %v5139
      %v5296 = vmul.f32 %v5139, %v5295
      %v5297 = vsub.f32 1.0, %v5296
      %v5298 = vmul.f32 %v5295, %v5297
      %v5299 = vadd.f32 %v5295, %v5298
      %vm5300 = vweird.f32 %v5139
      %vm5301 = vweird.f32 %v5295
      %vm5302 = vmor %vm5300, %vm5301
      %v5303 = vsel %vm5302, %v5295, %v5299
      %v5304 = vand.u32 2147483647, %v5139
      %vm5305 = vcmp.eq.f32.partialorder %v5304, 8.507059e+37
      %v5306 = vand.u32 %v5139, 2147483648
      %v5307 = vor.u32 1.1754944e-38, %v5306
      %v5308 = vsel %vm5305, %v5307, %v5303
      %v5309 = vmul.f32 1.0, %v5308
      %v5310 = vrcp.pop %v5140
      %v5311 = vmul.f32 %v5140, %v5310
      %v5312 = vsub.f32 1.0, %v5311
      %v5313 = vmul.f32 %v5310, %v5312
      %v5314 = vadd.f32 %v5310, %v5313
      %vm5315 = vweird.f32 %v5140
      %vm5316 = vweird.f32 %v5310
      %vm5317 = vmor %vm5315, %vm5316
      %v5318 = vsel %vm5317, %v5310, %v5314
      %v5319 = vand.u32 2147483647, %v5140
      %vm5320 = vcmp.eq.f32.partialorder %v5319, 8.507059e+37
      %v5321 = vand.u32 %v5140, 2147483648
      %v5322 = vor.u32 1.1754944e-38, %v5321
      %v5323 = vsel %vm5320, %v5322, %v5318
      %v5324 = vmul.f32 1.0, %v5323
      %v5325 = vrcp.pop %v5141
      %v5326 = vmul.f32 %v5141, %v5325
      %v5327 = vsub.f32 1.0, %v5326
      %v5328 = vmul.f32 %v5325, %v5327
      %v5329 = vadd.f32 %v5325, %v5328
      %vm5330 = vweird.f32 %v5141
      %vm5331 = vweird.f32 %v5325
      %vm5332 = vmor %vm5330, %vm5331
      %v5333 = vsel %vm5332, %v5325, %v5329
      %v5334 = vand.u32 2147483647, %v5141
      %vm5335 = vcmp.eq.f32.partialorder %v5334, 8.507059e+37
      %v5336 = vand.u32 %v5141, 2147483648
      %v5337 = vor.u32 1.1754944e-38, %v5336
      %v5338 = vsel %vm5335, %v5337, %v5333
      %v5339 = vmul.f32 1.0, %v5338
      %v5340 = vrcp.pop %v5142
      %v5341 = vmul.f32 %v5142, %v5340
      %v5342 = vsub.f32 1.0, %v5341
      %v5343 = vmul.f32 %v5340, %v5342
      %v5344 = vadd.f32 %v5340, %v5343
      %vm5345 = vweird.f32 %v5142
      %vm5346 = vweird.f32 %v5340
      %vm5347 = vmor %vm5345, %vm5346
      %v5348 = vsel %vm5347, %v5340, %v5344
      %v5349 = vand.u32 2147483647, %v5142
      %vm5350 = vcmp.eq.f32.partialorder %v5349, 8.507059e+37
      %v5351 = vand.u32 %v5142, 2147483648
      %v5352 = vor.u32 1.1754944e-38, %v5351
      %v5353 = vsel %vm5350, %v5352, %v5348
      %v5354 = vmul.f32 1.0, %v5353
      %v5355 = vrcp.pop %v5143
      %v5356 = vmul.f32 %v5143, %v5355
      %v5357 = vsub.f32 1.0, %v5356
      %v5358 = vmul.f32 %v5355, %v5357
      %v5359 = vadd.f32 %v5355, %v5358
      %vm5360 = vweird.f32 %v5143
      %vm5361 = vweird.f32 %v5355
      %vm5362 = vmor %vm5360, %vm5361
      %v5363 = vsel %vm5362, %v5355, %v5359
      %v5364 = vand.u32 2147483647, %v5143
      %vm5365 = vcmp.eq.f32.partialorder %v5364, 8.507059e+37
      %v5366 = vand.u32 %v5143, 2147483648
      %v5367 = vor.u32 1.1754944e-38, %v5366
      %v5368 = vsel %vm5365, %v5367, %v5363
      %v5369 = vmul.f32 1.0, %v5368
      %v5370 = vrcp.pop %v5144
      %v5371 = vmul.f32 %v5144, %v5370
      %v5372 = vsub.f32 1.0, %v5371
      %v5373 = vmul.f32 %v5370, %v5372
      %v5374 = vadd.f32 %v5370, %v5373
      %vm5375 = vweird.f32 %v5144
      %vm5376 = vweird.f32 %v5370
      %vm5377 = vmor %vm5375, %vm5376
      %v5378 = vsel %vm5377, %v5370, %v5374
      %v5379 = vand.u32 2147483647, %v5144
      %vm5380 = vcmp.eq.f32.partialorder %v5379, 8.507059e+37
      %v5381 = vand.u32 %v5144, 2147483648
      %v5382 = vor.u32 1.1754944e-38, %v5381
      %v5383 = vsel %vm5380, %v5382, %v5378
      %v5384 = vmul.f32 1.0, %v5383
      %v5385 = vmul.f32 %v5159, 1.0614054
      %v5386 = vmul.f32 %v5174, 1.0614054
      %v5387 = vmul.f32 %v5189, 1.0614054
      %v5388 = vmul.f32 %v5204, 1.0614054
      %v5389 = vmul.f32 %v5219, 1.0614054
      %v5390 = vmul.f32 %v5234, 1.0614054
      %v5391 = vmul.f32 %v5249, 1.0614054
      %v5392 = vmul.f32 %v5264, 1.0614054
      %v5393 = vmul.f32 %v5279, 1.0614054
      %v5394 = vmul.f32 %v5294, 1.0614054
      %v5395 = vmul.f32 %v5309, 1.0614054
      %v5396 = vmul.f32 %v5324, 1.0614054
      %v5397 = vmul.f32 %v5339, 1.0614054
      %v5398 = vmul.f32 %v5354, 1.0614054
      %v5399 = vmul.f32 %v5369, 1.0614054
      %v5400 = vmul.f32 %v5384, 1.0614054
      %v5401 = vadd.f32 %v5385, -1.4531521
      %v5402 = vadd.f32 %v5386, -1.4531521
      %v5403 = vadd.f32 %v5387, -1.4531521
      %v5404 = vadd.f32 %v5388, -1.4531521
      %v5405 = vadd.f32 %v5389, -1.4531521
      %v5406 = vadd.f32 %v5390, -1.4531521
      %v5407 = vadd.f32 %v5391, -1.4531521
      %v5408 = vadd.f32 %v5392, -1.4531521
      %v5409 = vadd.f32 %v5393, -1.4531521
      %v5410 = vadd.f32 %v5394, -1.4531521
      %v5411 = vadd.f32 %v5395, -1.4531521
      %v5412 = vadd.f32 %v5396, -1.4531521
      %v5413 = vadd.f32 %v5397, -1.4531521
      %v5414 = vadd.f32 %v5398, -1.4531521
      %v5415 = vadd.f32 %v5399, -1.4531521
      %v5416 = vadd.f32 %v5400, -1.4531521
      %v5417 = vmul.f32 %v5401, %v5159
      %v5418 = vmul.f32 %v5402, %v5174
      %v5419 = vmul.f32 %v5403, %v5189
      %v5420 = vmul.f32 %v5404, %v5204
      %v5421 = vmul.f32 %v5405, %v5219
      %v5422 = vmul.f32 %v5406, %v5234
      %v5423 = vmul.f32 %v5407, %v5249
      %v5424 = vmul.f32 %v5408, %v5264
      %v5425 = vmul.f32 %v5409, %v5279
      %v5426 = vmul.f32 %v5410, %v5294
      %v5427 = vmul.f32 %v5411, %v5309
      %v5428 = vmul.f32 %v5412, %v5324
      %v5429 = vmul.f32 %v5413, %v5339
      %v5430 = vmul.f32 %v5414, %v5354
      %v5431 = vmul.f32 %v5415, %v5369
      %v5432 = vmul.f32 %v5416, %v5384
      %v5433 = vadd.f32 %v5417, 1.4214138
      %v5434 = vadd.f32 %v5418, 1.4214138
      %v5435 = vadd.f32 %v5419, 1.4214138
      %v5436 = vadd.f32 %v5420, 1.4214138
      %v5437 = vadd.f32 %v5421, 1.4214138
      %v5438 = vadd.f32 %v5422, 1.4214138
      %v5439 = vadd.f32 %v5423, 1.4214138
      %v5440 = vadd.f32 %v5424, 1.4214138
      %v5441 = vadd.f32 %v5425, 1.4214138
      %v5442 = vadd.f32 %v5426, 1.4214138
      %v5443 = vadd.f32 %v5427, 1.4214138
      %v5444 = vadd.f32 %v5428, 1.4214138
      %v5445 = vadd.f32 %v5429, 1.4214138
      %v5446 = vadd.f32 %v5430, 1.4214138
      %v5447 = vadd.f32 %v5431, 1.4214138
      %v5448 = vadd.f32 %v5432, 1.4214138
      %v5449 = vmul.f32 %v5433, %v5159
      %v5450 = vmul.f32 %v5434, %v5174
      %v5451 = vmul.f32 %v5435, %v5189
      %v5452 = vmul.f32 %v5436, %v5204
      %v5453 = vmul.f32 %v5437, %v5219
      %v5454 = vmul.f32 %v5438, %v5234
      %v5455 = vmul.f32 %v5439, %v5249
      %v5456 = vmul.f32 %v5440, %v5264
      %v5457 = vmul.f32 %v5441, %v5279
      %v5458 = vmul.f32 %v5442, %v5294
      %v5459 = vmul.f32 %v5443, %v5309
      %v5460 = vmul.f32 %v5444, %v5324
      %v5461 = vmul.f32 %v5445, %v5339
      %v5462 = vmul.f32 %v5446, %v5354
      %v5463 = vmul.f32 %v5447, %v5369
      %v5464 = vmul.f32 %v5448, %v5384
      %v5465 = vadd.f32 %v5449, -0.28449672
      %v5466 = vadd.f32 %v5450, -0.28449672
      %v5467 = vadd.f32 %v5451, -0.28449672
      %v5468 = vadd.f32 %v5452, -0.28449672
      %v5469 = vadd.f32 %v5453, -0.28449672
      %v5470 = vadd.f32 %v5454, -0.28449672
      %v5471 = vadd.f32 %v5455, -0.28449672
      %v5472 = vadd.f32 %v5456, -0.28449672
      %v5473 = vadd.f32 %v5457, -0.28449672
      %v5474 = vadd.f32 %v5458, -0.28449672
      %v5475 = vadd.f32 %v5459, -0.28449672
      %v5476 = vadd.f32 %v5460, -0.28449672
      %v5477 = vadd.f32 %v5461, -0.28449672
      %v5478 = vadd.f32 %v5462, -0.28449672
      %v5479 = vadd.f32 %v5463, -0.28449672
      %v5480 = vadd.f32 %v5464, -0.28449672
      %v5481 = vmul.f32 %v5465, %v5159
      %v5482 = vmul.f32 %v5466, %v5174
      %v5483 = vmul.f32 %v5467, %v5189
      %v5484 = vmul.f32 %v5468, %v5204
      %v5485 = vmul.f32 %v5469, %v5219
      %v5486 = vmul.f32 %v5470, %v5234
      %v5487 = vmul.f32 %v5471, %v5249
      %v5488 = vmul.f32 %v5472, %v5264
      %v5489 = vmul.f32 %v5473, %v5279
      %v5490 = vmul.f32 %v5474, %v5294
      %v5491 = vmul.f32 %v5475, %v5309
      %v5492 = vmul.f32 %v5476, %v5324
      %v5493 = vmul.f32 %v5477, %v5339
      %v5494 = vmul.f32 %v5478, %v5354
      %v5495 = vmul.f32 %v5479, %v5369
      %v5496 = vmul.f32 %v5480, %v5384
      %v5497 = vadd.f32 %v5481, 0.2548296
      %v5498 = vadd.f32 %v5482, 0.2548296
      %v5499 = vadd.f32 %v5483, 0.2548296
      %v5500 = vadd.f32 %v5484, 0.2548296
      %v5501 = vadd.f32 %v5485, 0.2548296
      %v5502 = vadd.f32 %v5486, 0.2548296
      %v5503 = vadd.f32 %v5487, 0.2548296
      %v5504 = vadd.f32 %v5488, 0.2548296
      %v5505 = vadd.f32 %v5489, 0.2548296
      %v5506 = vadd.f32 %v5490, 0.2548296
      %v5507 = vadd.f32 %v5491, 0.2548296
      %v5508 = vadd.f32 %v5492, 0.2548296
      %v5509 = vadd.f32 %v5493, 0.2548296
      %v5510 = vadd.f32 %v5494, 0.2548296
      %v5511 = vadd.f32 %v5495, 0.2548296
      %v5512 = vadd.f32 %v5496, 0.2548296
      %v5513 = vmul.f32 %v5497, %v5159
      %v5514 = vmul.f32 %v5498, %v5174
      %v5515 = vmul.f32 %v5499, %v5189
      %v5516 = vmul.f32 %v5500, %v5204
      %v5517 = vmul.f32 %v5501, %v5219
      %v5518 = vmul.f32 %v5502, %v5234
      %v5519 = vmul.f32 %v5503, %v5249
      %v5520 = vmul.f32 %v5504, %v5264
      %v5521 = vmul.f32 %v5505, %v5279
      %v5522 = vmul.f32 %v5506, %v5294
      %v5523 = vmul.f32 %v5507, %v5309
      %v5524 = vmul.f32 %v5508, %v5324
      %v5525 = vmul.f32 %v5509, %v5339
      %v5526 = vmul.f32 %v5510, %v5354
      %v5527 = vmul.f32 %v5511, %v5369
      %v5528 = vmul.f32 %v5512, %v5384
      %v5529 = vsub.f32 0.0, %v5097
      %v5530 = vsub.f32 0.0, %v5098
      %v5531 = vsub.f32 0.0, %v5099
      %v5532 = vsub.f32 0.0, %v5100
      %v5533 = vsub.f32 0.0, %v5101
      %v5534 = vsub.f32 0.0, %v5102
      %v5535 = vsub.f32 0.0, %v5103
      %v5536 = vsub.f32 0.0, %v5104
      %v5537 = vsub.f32 0.0, %v5105
      %v5538 = vsub.f32 0.0, %v5106
      %v5539 = vsub.f32 0.0, %v5107
      %v5540 = vsub.f32 0.0, %v5108
      %v5541 = vsub.f32 0.0, %v5109
      %v5542 = vsub.f32 0.0, %v5110
      %v5543 = vsub.f32 0.0, %v5111
      %v5544 = vsub.f32 0.0, %v5112
      %v5545 = vmul.f32 %v5529, %v5097
      %v5546 = vmul.f32 %v5530, %v5098
      %v5547 = vmul.f32 %v5531, %v5099
      %v5548 = vmul.f32 %v5532, %v5100
      %v5549 = vmul.f32 %v5533, %v5101
      %v5550 = vmul.f32 %v5534, %v5102
      %v5551 = vmul.f32 %v5535, %v5103
      %v5552 = vmul.f32 %v5536, %v5104
      %v5553 = vmul.f32 %v5537, %v5105
      %v5554 = vmul.f32 %v5538, %v5106
      %v5555 = vmul.f32 %v5539, %v5107
      %v5556 = vmul.f32 %v5540, %v5108
      %v5557 = vmul.f32 %v5541, %v5109
      %v5558 = vmul.f32 %v5542, %v5110
      %v5559 = vmul.f32 %v5543, %v5111
      %v5560 = vmul.f32 %v5544, %v5112
      %v5561 = vmul.f32 %v5545, 1.442695
      %v5562 = vpow.pop %v5561
      %v5563 = vmul.f32 %v5546, 1.442695
      %v5564 = vpow.pop %v5563
      %v5565 = vmul.f32 %v5547, 1.442695
      %v5566 = vpow.pop %v5565
      %v5567 = vmul.f32 %v5548, 1.442695
      %v5568 = vpow.pop %v5567
      %v5569 = vmul.f32 %v5549, 1.442695
      %v5570 = vpow.pop %v5569
      %v5571 = vmul.f32 %v5550, 1.442695
      %v5572 = vpow.pop %v5571
      %v5573 = vmul.f32 %v5551, 1.442695
      %v5574 = vpow.pop %v5573
      %v5575 = vmul.f32 %v5552, 1.442695
      %v5576 = vpow.pop %v5575
      %v5577 = vmul.f32 %v5553, 1.442695
      %v5578 = vpow.pop %v5577
      %v5579 = vmul.f32 %v5554, 1.442695
      %v5580 = vpow.pop %v5579
      %v5581 = vmul.f32 %v5555, 1.442695
      %v5582 = vpow.pop %v5581
      %v5583 = vmul.f32 %v5556, 1.442695
      %v5584 = vpow.pop %v5583
      %v5585 = vmul.f32 %v5557, 1.442695
      %v5586 = vpow.pop %v5585
      %v5587 = vmul.f32 %v5558, 1.442695
      %v5588 = vpow.pop %v5587
      %v5589 = vmul.f32 %v5559, 1.442695
      %v5590 = vpow.pop %v5589
      %v5591 = vmul.f32 %v5560, 1.442695
      %v5592 = vpow.pop %v5591
      %v5593 = vmul.f32 %v5513, %v5562
      %v5594 = vmul.f32 %v5514, %v5564
      %v5595 = vmul.f32 %v5515, %v5566
      %v5596 = vmul.f32 %v5516, %v5568
      %v5597 = vmul.f32 %v5517, %v5570
      %v5598 = vmul.f32 %v5518, %v5572
      %v5599 = vmul.f32 %v5519, %v5574
      %v5600 = vmul.f32 %v5520, %v5576
      %v5601 = vmul.f32 %v5521, %v5578
      %v5602 = vmul.f32 %v5522, %v5580
      %v5603 = vmul.f32 %v5523, %v5582
      %v5604 = vmul.f32 %v5524, %v5584
      %v5605 = vmul.f32 %v5525, %v5586
      %v5606 = vmul.f32 %v5526, %v5588
      %v5607 = vmul.f32 %v5527, %v5590
      %v5608 = vmul.f32 %v5528, %v5592
      %v5609 = vsub.f32 1.0, %v5593
      %v5610 = vsub.f32 1.0, %v5594
      %v5611 = vsub.f32 1.0, %v5595
      %v5612 = vsub.f32 1.0, %v5596
      %v5613 = vsub.f32 1.0, %v5597
      %v5614 = vsub.f32 1.0, %v5598
      %v5615 = vsub.f32 1.0, %v5599
      %v5616 = vsub.f32 1.0, %v5600
      %v5617 = vsub.f32 1.0, %v5601
      %v5618 = vsub.f32 1.0, %v5602
      %v5619 = vsub.f32 1.0, %v5603
      %v5620 = vsub.f32 1.0, %v5604
      %v5621 = vsub.f32 1.0, %v5605
      %v5622 = vsub.f32 1.0, %v5606
      %v5623 = vsub.f32 1.0, %v5607
      %v5624 = vsub.f32 1.0, %v5608
      %v5625 = vmul.f32 %v5081, %v5609
      %v5626 = vmul.f32 %v5082, %v5610
      %v5627 = vmul.f32 %v5083, %v5611
      %v5628 = vmul.f32 %v5084, %v5612
      %v5629 = vmul.f32 %v5085, %v5613
      %v5630 = vmul.f32 %v5086, %v5614
      %v5631 = vmul.f32 %v5087, %v5615
      %v5632 = vmul.f32 %v5088, %v5616
      %v5633 = vmul.f32 %v5089, %v5617
      %v5634 = vmul.f32 %v5090, %v5618
      %v5635 = vmul.f32 %v5091, %v5619
      %v5636 = vmul.f32 %v5092, %v5620
      %v5637 = vmul.f32 %v5093, %v5621
      %v5638 = vmul.f32 %v5094, %v5622
      %v5639 = vmul.f32 %v5095, %v5623
      %v5640 = vmul.f32 %v5096, %v5624
      %v5641 = vadd.f32 %v5625, 1.0
      %v5642 = vadd.f32 %v5626, 1.0
      %v5643 = vadd.f32 %v5627, 1.0
      %v5644 = vadd.f32 %v5628, 1.0
      %v5645 = vadd.f32 %v5629, 1.0
      %v5646 = vadd.f32 %v5630, 1.0
      %v5647 = vadd.f32 %v5631, 1.0
      %v5648 = vadd.f32 %v5632, 1.0
      %v5649 = vadd.f32 %v5633, 1.0
      %v5650 = vadd.f32 %v5634, 1.0
      %v5651 = vadd.f32 %v5635, 1.0
      %v5652 = vadd.f32 %v5636, 1.0
      %v5653 = vadd.f32 %v5637, 1.0
      %v5654 = vadd.f32 %v5638, 1.0
      %v5655 = vadd.f32 %v5639, 1.0
      %v5656 = vadd.f32 %v5640, 1.0
      %v5657 = vmul.f32 %v5033, %v5641
      %v5658 = vmul.f32 %v5034, %v5642
      %v5659 = vmul.f32 %v5035, %v5643
      %v5660 = vmul.f32 %v5036, %v5644
      %v5661 = vmul.f32 %v5037, %v5645
      %v5662 = vmul.f32 %v5038, %v5646
      %v5663 = vmul.f32 %v5039, %v5647
      %v5664 = vmul.f32 %v5040, %v5648
      %v5665 = vmul.f32 %v5041, %v5649
      %v5666 = vmul.f32 %v5042, %v5650
      %v5667 = vmul.f32 %v5043, %v5651
      %v5668 = vmul.f32 %v5044, %v5652
      %v5669 = vmul.f32 %v5045, %v5653
      %v5670 = vmul.f32 %v5046, %v5654
      %v5671 = vmul.f32 %v5047, %v5655
      %v5672 = vmul.f32 %v5048, %v5656
      %s5673 = scalar_lea.vmem %s7, 136
      %v5674 = vld [vmem:[%s5673] sm:$0xff]
      %v5675 = vld [vmem:[%s5673 + $0x8] sm:$0xff]
      %v5676 = vld [vmem:[%s5673 + $0x10] sm:$0xff]
      %v5677 = vld [vmem:[%s5673 + $0x18] sm:$0xff]
      %v5678 = vld [vmem:[%s5673 + $0x20] sm:$0xff]
      %v5679 = vld [vmem:[%s5673 + $0x28] sm:$0xff]
      %v5680 = vld [vmem:[%s5673 + $0x30] sm:$0xff]
      %v5681 = vld [vmem:[%s5673 + $0x38] sm:$0xff]
      %v5682 = vld [vmem:[%s5673 + $0x40] sm:$0xff]
      %v5683 = vld [vmem:[%s5673 + $0x48] sm:$0xff]
      %v5684 = vld [vmem:[%s5673 + $0x50] sm:$0xff]
      %v5685 = vld [vmem:[%s5673 + $0x58] sm:$0xff]
      %v5686 = vld [vmem:[%s5673 + $0x60] sm:$0xff]
      %v5687 = vld [vmem:[%s5673 + $0x68] sm:$0xff]
      %v5688 = vld [vmem:[%s5673 + $0x70] sm:$0xff]
      %v5689 = vld [vmem:[%s5673 + $0x78] sm:$0xff]
      %v5690 = vld [vmem:[%s5673 + $0x80] sm:$0xff]
      %s5691 = scalar_lea.vmem %s8, 136
      %v5692 = vld [vmem:[%s5691] sm:$0xff]
      %v5693 = vld [vmem:[%s5691 + $0x8] sm:$0xff]
      %v5694 = vld [vmem:[%s5691 + $0x10] sm:$0xff]
      %v5695 = vld [vmem:[%s5691 + $0x18] sm:$0xff]
      %v5696 = vld [vmem:[%s5691 + $0x20] sm:$0xff]
      %v5697 = vld [vmem:[%s5691 + $0x28] sm:$0xff]
      %v5698 = vld [vmem:[%s5691 + $0x30] sm:$0xff]
      %v5699 = vld [vmem:[%s5691 + $0x38] sm:$0xff]
      %v5700 = vld [vmem:[%s5691 + $0x40] sm:$0xff]
      %v5701 = vld [vmem:[%s5691 + $0x48] sm:$0xff]
      %v5702 = vld [vmem:[%s5691 + $0x50] sm:$0xff]
      %v5703 = vld [vmem:[%s5691 + $0x58] sm:$0xff]
      %v5704 = vld [vmem:[%s5691 + $0x60] sm:$0xff]
      %v5705 = vld [vmem:[%s5691 + $0x68] sm:$0xff]
      %v5706 = vld [vmem:[%s5691 + $0x70] sm:$0xff]
      %v5707 = vld [vmem:[%s5691 + $0x78] sm:$0xff]
      %v5708 = vld [vmem:[%s5691 + $0x80] sm:$0xff]
      %5710 = vset.pattern.permute.xlu0 0
      %5711 = vperm.xlu0 %5710, %v5692
      %v5712 = vpop.permute.xlu0 %5711
      %5715 = vset.pattern.permute.xlu0 0
      %5716 = vperm.xlu0 %5715, %v5693
      %v5717 = vpop.permute.xlu0 %5716
      %5720 = vset.pattern.permute.xlu0 0
      %5721 = vperm.xlu0 %5720, %v5694
      %v5722 = vpop.permute.xlu0 %5721
      %5725 = vset.pattern.permute.xlu0 0
      %5726 = vperm.xlu0 %5725, %v5695
      %v5727 = vpop.permute.xlu0 %5726
      %5730 = vset.pattern.permute.xlu0 0
      %5731 = vperm.xlu0 %5730, %v5696
      %v5732 = vpop.permute.xlu0 %5731
      %5735 = vset.pattern.permute.xlu0 0
      %5736 = vperm.xlu0 %5735, %v5697
      %v5737 = vpop.permute.xlu0 %5736
      %5740 = vset.pattern.permute.xlu0 0
      %5741 = vperm.xlu0 %5740, %v5698
      %v5742 = vpop.permute.xlu0 %5741
      %5745 = vset.pattern.permute.xlu0 0
      %5746 = vperm.xlu0 %5745, %v5699
      %v5747 = vpop.permute.xlu0 %5746
      %5750 = vset.pattern.permute.xlu0 0
      %5751 = vperm.xlu0 %5750, %v5700
      %v5752 = vpop.permute.xlu0 %5751
      %5755 = vset.pattern.permute.xlu0 0
      %5756 = vperm.xlu0 %5755, %v5701
      %v5757 = vpop.permute.xlu0 %5756
      %5760 = vset.pattern.permute.xlu0 0
      %5761 = vperm.xlu0 %5760, %v5702
      %v5762 = vpop.permute.xlu0 %5761
      %5765 = vset.pattern.permute.xlu0 0
      %5766 = vperm.xlu0 %5765, %v5703
      %v5767 = vpop.permute.xlu0 %5766
      %5770 = vset.pattern.permute.xlu0 0
      %5771 = vperm.xlu0 %5770, %v5704
      %v5772 = vpop.permute.xlu0 %5771
      %5775 = vset.pattern.permute.xlu0 0
      %5776 = vperm.xlu0 %5775, %v5705
      %v5777 = vpop.permute.xlu0 %5776
      %5780 = vset.pattern.permute.xlu0 0
      %5781 = vperm.xlu0 %5780, %v5706
      %v5782 = vpop.permute.xlu0 %5781
      %5785 = vset.pattern.permute.xlu0 0
      %5786 = vperm.xlu0 %5785, %v5707
      %v5787 = vpop.permute.xlu0 %5786
      %5790 = vset.pattern.permute.xlu0 0
      %5791 = vperm.xlu0 %5790, %v5708
      %v5792 = vpop.permute.xlu0 %5791
      %5794 = vmatpush.xpose.msra.mxu0 %v5672
      %5795 = vmatpush.xpose.msra.mxu0 %v5671
      %5796 = vmatpush.xpose.msra.mxu0 %v5670
      %5797 = vmatpush.xpose.msra.mxu0 %v5669
      %5798 = vmatpush.xpose.msra.mxu0 %v5668
      %5799 = vmatpush.xpose.msra.mxu0 %v5667
      %5800 = vmatpush.xpose.msra.mxu0 %v5666
      %5801 = vmatpush.xpose.msra.mxu0 %v5665
      %5802 = vmatpush.xpose.msra.mxu0 %v5664
      %5803 = vmatpush.xpose.msra.mxu0 %v5663
      %5804 = vmatpush.xpose.msra.mxu0 %v5662
      %5805 = vmatpush.xpose.msra.mxu0 %v5661
      %5806 = vmatpush.xpose.msra.mxu0 %v5660
      %5807 = vmatpush.xpose.msra.mxu0 %v5659
      %5808 = vmatpush.xpose.msra.mxu0 %v5658
      %5809 = vmatpush.xpose.msra.mxu0 %v5657
      %5810 = vmatmul.f32.gmra.mxu0 %v5674
      %v5811 = vpop.f32.mrf.mxu0
      %v5812 = vadd.f32 %v5712, %v5811
      %5813 = vmatmul.f32.gmra.mxu0 %v5675
      %v5814 = vpop.f32.mrf.mxu0
      %v5815 = vadd.f32 %v5717, %v5814
      %5816 = vmatmul.f32.gmra.mxu0 %v5676
      %v5817 = vpop.f32.mrf.mxu0
      %v5818 = vadd.f32 %v5722, %v5817
      %5819 = vmatmul.f32.gmra.mxu0 %v5677
      %v5820 = vpop.f32.mrf.mxu0
      %v5821 = vadd.f32 %v5727, %v5820
      %5822 = vmatmul.f32.gmra.mxu0 %v5678
      %v5823 = vpop.f32.mrf.mxu0
      %v5824 = vadd.f32 %v5732, %v5823
      %5825 = vmatmul.f32.gmra.mxu0 %v5679
      %v5826 = vpop.f32.mrf.mxu0
      %v5827 = vadd.f32 %v5737, %v5826
      %5828 = vmatmul.f32.gmra.mxu0 %v5680
      %v5829 = vpop.f32.mrf.mxu0
      %v5830 = vadd.f32 %v5742, %v5829
      %5831 = vmatmul.f32.gmra.mxu0 %v5681
      %v5832 = vpop.f32.mrf.mxu0
      %v5833 = vadd.f32 %v5747, %v5832
      %5834 = vmatmul.f32.gmra.mxu0 %v5682
      %v5835 = vpop.f32.mrf.mxu0
      %v5836 = vadd.f32 %v5752, %v5835
      %5837 = vmatmul.f32.gmra.mxu0 %v5683
      %v5838 = vpop.f32.mrf.mxu0
      %v5839 = vadd.f32 %v5757, %v5838
      %5840 = vmatmul.f32.gmra.mxu0 %v5684
      %v5841 = vpop.f32.mrf.mxu0
      %v5842 = vadd.f32 %v5762, %v5841
      %5843 = vmatmul.f32.gmra.mxu0 %v5685
      %v5844 = vpop.f32.mrf.mxu0
      %v5845 = vadd.f32 %v5767, %v5844
      %5846 = vmatmul.f32.gmra.mxu0 %v5686
      %v5847 = vpop.f32.mrf.mxu0
      %v5848 = vadd.f32 %v5772, %v5847
      %5849 = vmatmul.f32.gmra.mxu0 %v5687
      %v5850 = vpop.f32.mrf.mxu0
      %v5851 = vadd.f32 %v5777, %v5850
      %5852 = vmatmul.f32.gmra.mxu0 %v5688
      %v5853 = vpop.f32.mrf.mxu0
      %v5854 = vadd.f32 %v5782, %v5853
      %5855 = vmatmul.f32.gmra.mxu0 %v5689
      %v5856 = vpop.f32.mrf.mxu0
      %v5857 = vadd.f32 %v5787, %v5856
      %5858 = vmatmul.f32.gmra.mxu0 %v5690
      %v5859 = vpop.f32.mrf.mxu0
      %v5860 = vadd.f32 %v5792, %v5859
      %5861 = vdwg.mxu0
      %v5862 = vadd.f32 %v4403, %v5812
      %v5863 = vadd.f32 %v4404, %v5815
      %v5864 = vadd.f32 %v4405, %v5818
      %v5865 = vadd.f32 %v4406, %v5821
      %v5866 = vadd.f32 %v4407, %v5824
      %v5867 = vadd.f32 %v4408, %v5827
      %v5868 = vadd.f32 %v4409, %v5830
      %v5869 = vadd.f32 %v4410, %v5833
      %v5870 = vadd.f32 %v4411, %v5836
      %v5871 = vadd.f32 %v4412, %v5839
      %v5872 = vadd.f32 %v4413, %v5842
      %v5873 = vadd.f32 %v4414, %v5845
      %v5874 = vadd.f32 %v4415, %v5848
      %v5875 = vadd.f32 %v4416, %v5851
      %v5876 = vadd.f32 %v4417, %v5854
      %v5877 = vadd.f32 %v4418, %v5857
      %v5878 = vadd.f32 %v4419, %v5860
      %s5879 = scalar_lea.vmem %s9, 1
      %v5880 = vld [vmem:[%s5879] sm:$0x1]
      %s5881 = scalar_lea.vmem %s10, 1
      %v5882 = vld [vmem:[%s5881] sm:$0x1]
      %5883 = vadd.xlane.f32.xlu0 %v5862
      %v5884 = vpop.xlane.xlu0 %5883
      %5885 = vadd.xlane.f32.xlu0 %v5863
      %v5886 = vpop.xlane.xlu0 %5885
      %5887 = vadd.xlane.f32.xlu0 %v5864
      %v5888 = vpop.xlane.xlu0 %5887
      %5889 = vadd.xlane.f32.xlu0 %v5865
      %v5890 = vpop.xlane.xlu0 %5889
      %5891 = vadd.xlane.f32.xlu0 %v5866
      %v5892 = vpop.xlane.xlu0 %5891
      %5893 = vadd.xlane.f32.xlu0 %v5867
      %v5894 = vpop.xlane.xlu0 %5893
      %5895 = vadd.xlane.f32.xlu0 %v5868
      %v5896 = vpop.xlane.xlu0 %5895
      %5897 = vadd.xlane.f32.xlu0 %v5869
      %v5898 = vpop.xlane.xlu0 %5897
      %5899 = vadd.xlane.f32.xlu0 %v5870
      %v5900 = vpop.xlane.xlu0 %5899
      %5901 = vadd.xlane.f32.xlu0 %v5871
      %v5902 = vpop.xlane.xlu0 %5901
      %5903 = vadd.xlane.f32.xlu0 %v5872
      %v5904 = vpop.xlane.xlu0 %5903
      %5905 = vadd.xlane.f32.xlu0 %v5873
      %v5906 = vpop.xlane.xlu0 %5905
      %5907 = vadd.xlane.f32.xlu0 %v5874
      %v5908 = vpop.xlane.xlu0 %5907
      %5909 = vadd.xlane.f32.xlu0 %v5875
      %v5910 = vpop.xlane.xlu0 %5909
      %5911 = vadd.xlane.f32.xlu0 %v5876
      %v5912 = vpop.xlane.xlu0 %5911
      %5913 = vadd.xlane.f32.xlu0 %v5877
      %v5914 = vpop.xlane.xlu0 %5913
      %5915 = vadd.xlane.f32.xlu0 %v5878
      %v5916 = vpop.xlane.xlu0 %5915
      %v5917 = vmul.f32 %v5884, %v2350
      %v5918 = vmul.f32 %v5886, %v2350
      %v5919 = vmul.f32 %v5888, %v2350
      %v5920 = vmul.f32 %v5890, %v2350
      %v5921 = vmul.f32 %v5892, %v2350
      %v5922 = vmul.f32 %v5894, %v2350
      %v5923 = vmul.f32 %v5896, %v2350
      %v5924 = vmul.f32 %v5898, %v2350
      %v5925 = vmul.f32 %v5900, %v2350
      %v5926 = vmul.f32 %v5902, %v2350
      %v5927 = vmul.f32 %v5904, %v2350
      %v5928 = vmul.f32 %v5906, %v2350
      %v5929 = vmul.f32 %v5908, %v2350
      %v5930 = vmul.f32 %v5910, %v2350
      %v5931 = vmul.f32 %v5912, %v2350
      %v5932 = vmul.f32 %v5914, %v2350
      %v5933 = vmul.f32 %v5916, %v2350
      %v5934 = vsub.f32 %v5862, %v5917
      %v5935 = vsub.f32 %v5863, %v5918
      %v5936 = vsub.f32 %v5864, %v5919
      %v5937 = vsub.f32 %v5865, %v5920
      %v5938 = vsub.f32 %v5866, %v5921
      %v5939 = vsub.f32 %v5867, %v5922
      %v5940 = vsub.f32 %v5868, %v5923
      %v5941 = vsub.f32 %v5869, %v5924
      %v5942 = vsub.f32 %v5870, %v5925
      %v5943 = vsub.f32 %v5871, %v5926
      %v5944 = vsub.f32 %v5872, %v5927
      %v5945 = vsub.f32 %v5873, %v5928
      %v5946 = vsub.f32 %v5874, %v5929
      %v5947 = vsub.f32 %v5875, %v5930
      %v5948 = vsub.f32 %v5876, %v5931
      %v5949 = vsub.f32 %v5877, %v5932
      %v5950 = vsub.f32 %v5878, %v5933
      %v5951 = vmul.f32 %v5934, %v5934
      %v5952 = vmul.f32 %v5935, %v5935
      %v5953 = vmul.f32 %v5936, %v5936
      %v5954 = vmul.f32 %v5937, %v5937
      %v5955 = vmul.f32 %v5938, %v5938
      %v5956 = vmul.f32 %v5939, %v5939
      %v5957 = vmul.f32 %v5940, %v5940
      %v5958 = vmul.f32 %v5941, %v5941
      %v5959 = vmul.f32 %v5942, %v5942
      %v5960 = vmul.f32 %v5943, %v5943
      %v5961 = vmul.f32 %v5944, %v5944
      %v5962 = vmul.f32 %v5945, %v5945
      %v5963 = vmul.f32 %v5946, %v5946
      %v5964 = vmul.f32 %v5947, %v5947
      %v5965 = vmul.f32 %v5948, %v5948
      %v5966 = vmul.f32 %v5949, %v5949
      %v5967 = vmul.f32 %v5950, %v5950
      %5968 = vadd.xlane.f32.xlu0 %v5951
      %v5969 = vpop.xlane.xlu0 %5968
      %5970 = vadd.xlane.f32.xlu0 %v5952
      %v5971 = vpop.xlane.xlu0 %5970
      %5972 = vadd.xlane.f32.xlu0 %v5953
      %v5973 = vpop.xlane.xlu0 %5972
      %5974 = vadd.xlane.f32.xlu0 %v5954
      %v5975 = vpop.xlane.xlu0 %5974
      %5976 = vadd.xlane.f32.xlu0 %v5955
      %v5977 = vpop.xlane.xlu0 %5976
      %5978 = vadd.xlane.f32.xlu0 %v5956
      %v5979 = vpop.xlane.xlu0 %5978
      %5980 = vadd.xlane.f32.xlu0 %v5957
      %v5981 = vpop.xlane.xlu0 %5980
      %5982 = vadd.xlane.f32.xlu0 %v5958
      %v5983 = vpop.xlane.xlu0 %5982
      %5984 = vadd.xlane.f32.xlu0 %v5959
      %v5985 = vpop.xlane.xlu0 %5984
      %5986 = vadd.xlane.f32.xlu0 %v5960
      %v5987 = vpop.xlane.xlu0 %5986
      %5988 = vadd.xlane.f32.xlu0 %v5961
      %v5989 = vpop.xlane.xlu0 %5988
      %5990 = vadd.xlane.f32.xlu0 %v5962
      %v5991 = vpop.xlane.xlu0 %5990
      %5992 = vadd.xlane.f32.xlu0 %v5963
      %v5993 = vpop.xlane.xlu0 %5992
      %5994 = vadd.xlane.f32.xlu0 %v5964
      %v5995 = vpop.xlane.xlu0 %5994
      %5996 = vadd.xlane.f32.xlu0 %v5965
      %v5997 = vpop.xlane.xlu0 %5996
      %5998 = vadd.xlane.f32.xlu0 %v5966
      %v5999 = vpop.xlane.xlu0 %5998
      %6000 = vadd.xlane.f32.xlu0 %v5967
      %v6001 = vpop.xlane.xlu0 %6000
      %v6002 = vmul.f32 %v5969, %v2350
      %v6003 = vmul.f32 %v5971, %v2350
      %v6004 = vmul.f32 %v5973, %v2350
      %v6005 = vmul.f32 %v5975, %v2350
      %v6006 = vmul.f32 %v5977, %v2350
      %v6007 = vmul.f32 %v5979, %v2350
      %v6008 = vmul.f32 %v5981, %v2350
      %v6009 = vmul.f32 %v5983, %v2350
      %v6010 = vmul.f32 %v5985, %v2350
      %v6011 = vmul.f32 %v5987, %v2350
      %v6012 = vmul.f32 %v5989, %v2350
      %v6013 = vmul.f32 %v5991, %v2350
      %v6014 = vmul.f32 %v5993, %v2350
      %v6015 = vmul.f32 %v5995, %v2350
      %v6016 = vmul.f32 %v5997, %v2350
      %v6017 = vmul.f32 %v5999, %v2350
      %v6018 = vmul.f32 %v6001, %v2350
      %v6019 = vadd.f32 %v6002, 1e-05
      %v6020 = vadd.f32 %v6003, 1e-05
      %v6021 = vadd.f32 %v6004, 1e-05
      %v6022 = vadd.f32 %v6005, 1e-05
      %v6023 = vadd.f32 %v6006, 1e-05
      %v6024 = vadd.f32 %v6007, 1e-05
      %v6025 = vadd.f32 %v6008, 1e-05
      %v6026 = vadd.f32 %v6009, 1e-05
      %v6027 = vadd.f32 %v6010, 1e-05
      %v6028 = vadd.f32 %v6011, 1e-05
      %v6029 = vadd.f32 %v6012, 1e-05
      %v6030 = vadd.f32 %v6013, 1e-05
      %v6031 = vadd.f32 %v6014, 1e-05
      %v6032 = vadd.f32 %v6015, 1e-05
      %v6033 = vadd.f32 %v6016, 1e-05
      %v6034 = vadd.f32 %v6017, 1e-05
      %v6035 = vadd.f32 %v6018, 1e-05
      %v6036 = vrsqrt.pop %v6019
      %v6037 = vmul.f32 %v6036, %v6019
      %v6038 = vmul.f32 %v6037, %v6036
      %v6039 = vmul.f32 0.5, %v6038
      %v6040 = vsub.f32 1.5, %v6039
      %v6041 = vmul.f32 %v6036, %v6040
      %vm6042 = vweird.f32 %v6019
      %vm6043 = vweird.f32 %v6036
      %vm6044 = vmor %vm6042, %vm6043
      %v6045 = vsel %vm6044, %v6036, %v6041
      %v6046 = vrsqrt.pop %v6020
      %v6047 = vmul.f32 %v6046, %v6020
      %v6048 = vmul.f32 %v6047, %v6046
      %v6049 = vmul.f32 0.5, %v6048
      %v6050 = vsub.f32 1.5, %v6049
      %v6051 = vmul.f32 %v6046, %v6050
      %vm6052 = vweird.f32 %v6020
      %vm6053 = vweird.f32 %v6046
      %vm6054 = vmor %vm6052, %vm6053
      %v6055 = vsel %vm6054, %v6046, %v6051
      %v6056 = vrsqrt.pop %v6021
      %v6057 = vmul.f32 %v6056, %v6021
      %v6058 = vmul.f32 %v6057, %v6056
      %v6059 = vmul.f32 0.5, %v6058
      %v6060 = vsub.f32 1.5, %v6059
      %v6061 = vmul.f32 %v6056, %v6060
      %vm6062 = vweird.f32 %v6021
      %vm6063 = vweird.f32 %v6056
      %vm6064 = vmor %vm6062, %vm6063
      %v6065 = vsel %vm6064, %v6056, %v6061
      %v6066 = vrsqrt.pop %v6022
      %v6067 = vmul.f32 %v6066, %v6022
      %v6068 = vmul.f32 %v6067, %v6066
      %v6069 = vmul.f32 0.5, %v6068
      %v6070 = vsub.f32 1.5, %v6069
      %v6071 = vmul.f32 %v6066, %v6070
      %vm6072 = vweird.f32 %v6022
      %vm6073 = vweird.f32 %v6066
      %vm6074 = vmor %vm6072, %vm6073
      %v6075 = vsel %vm6074, %v6066, %v6071
      %v6076 = vrsqrt.pop %v6023
      %v6077 = vmul.f32 %v6076, %v6023
      %v6078 = vmul.f32 %v6077, %v6076
      %v6079 = vmul.f32 0.5, %v6078
      %v6080 = vsub.f32 1.5, %v6079
      %v6081 = vmul.f32 %v6076, %v6080
      %vm6082 = vweird.f32 %v6023
      %vm6083 = vweird.f32 %v6076
      %vm6084 = vmor %vm6082, %vm6083
      %v6085 = vsel %vm6084, %v6076, %v6081
      %v6086 = vrsqrt.pop %v6024
      %v6087 = vmul.f32 %v6086, %v6024
      %v6088 = vmul.f32 %v6087, %v6086
      %v6089 = vmul.f32 0.5, %v6088
      %v6090 = vsub.f32 1.5, %v6089
      %v6091 = vmul.f32 %v6086, %v6090
      %vm6092 = vweird.f32 %v6024
      %vm6093 = vweird.f32 %v6086
      %vm6094 = vmor %vm6092, %vm6093
      %v6095 = vsel %vm6094, %v6086, %v6091
      %v6096 = vrsqrt.pop %v6025
      %v6097 = vmul.f32 %v6096, %v6025
      %v6098 = vmul.f32 %v6097, %v6096
      %v6099 = vmul.f32 0.5, %v6098
      %v6100 = vsub.f32 1.5, %v6099
      %v6101 = vmul.f32 %v6096, %v6100
      %vm6102 = vweird.f32 %v6025
      %vm6103 = vweird.f32 %v6096
      %vm6104 = vmor %vm6102, %vm6103
      %v6105 = vsel %vm6104, %v6096, %v6101
      %v6106 = vrsqrt.pop %v6026
      %v6107 = vmul.f32 %v6106, %v6026
      %v6108 = vmul.f32 %v6107, %v6106
      %v6109 = vmul.f32 0.5, %v6108
      %v6110 = vsub.f32 1.5, %v6109
      %v6111 = vmul.f32 %v6106, %v6110
      %vm6112 = vweird.f32 %v6026
      %vm6113 = vweird.f32 %v6106
      %vm6114 = vmor %vm6112, %vm6113
      %v6115 = vsel %vm6114, %v6106, %v6111
      %v6116 = vrsqrt.pop %v6027
      %v6117 = vmul.f32 %v6116, %v6027
      %v6118 = vmul.f32 %v6117, %v6116
      %v6119 = vmul.f32 0.5, %v6118
      %v6120 = vsub.f32 1.5, %v6119
      %v6121 = vmul.f32 %v6116, %v6120
      %vm6122 = vweird.f32 %v6027
      %vm6123 = vweird.f32 %v6116
      %vm6124 = vmor %vm6122, %vm6123
      %v6125 = vsel %vm6124, %v6116, %v6121
      %v6126 = vrsqrt.pop %v6028
      %v6127 = vmul.f32 %v6126, %v6028
      %v6128 = vmul.f32 %v6127, %v6126
      %v6129 = vmul.f32 0.5, %v6128
      %v6130 = vsub.f32 1.5, %v6129
      %v6131 = vmul.f32 %v6126, %v6130
      %vm6132 = vweird.f32 %v6028
      %vm6133 = vweird.f32 %v6126
      %vm6134 = vmor %vm6132, %vm6133
      %v6135 = vsel %vm6134, %v6126, %v6131
      %v6136 = vrsqrt.pop %v6029
      %v6137 = vmul.f32 %v6136, %v6029
      %v6138 = vmul.f32 %v6137, %v6136
      %v6139 = vmul.f32 0.5, %v6138
      %v6140 = vsub.f32 1.5, %v6139
      %v6141 = vmul.f32 %v6136, %v6140
      %vm6142 = vweird.f32 %v6029
      %vm6143 = vweird.f32 %v6136
      %vm6144 = vmor %vm6142, %vm6143
      %v6145 = vsel %vm6144, %v6136, %v6141
      %v6146 = vrsqrt.pop %v6030
      %v6147 = vmul.f32 %v6146, %v6030
      %v6148 = vmul.f32 %v6147, %v6146
      %v6149 = vmul.f32 0.5, %v6148
      %v6150 = vsub.f32 1.5, %v6149
      %v6151 = vmul.f32 %v6146, %v6150
      %vm6152 = vweird.f32 %v6030
      %vm6153 = vweird.f32 %v6146
      %vm6154 = vmor %vm6152, %vm6153
      %v6155 = vsel %vm6154, %v6146, %v6151
      %v6156 = vrsqrt.pop %v6031
      %v6157 = vmul.f32 %v6156, %v6031
      %v6158 = vmul.f32 %v6157, %v6156
      %v6159 = vmul.f32 0.5, %v6158
      %v6160 = vsub.f32 1.5, %v6159
      %v6161 = vmul.f32 %v6156, %v6160
      %vm6162 = vweird.f32 %v6031
      %vm6163 = vweird.f32 %v6156
      %vm6164 = vmor %vm6162, %vm6163
      %v6165 = vsel %vm6164, %v6156, %v6161
      %v6166 = vrsqrt.pop %v6032
      %v6167 = vmul.f32 %v6166, %v6032
      %v6168 = vmul.f32 %v6167, %v6166
      %v6169 = vmul.f32 0.5, %v6168
      %v6170 = vsub.f32 1.5, %v6169
      %v6171 = vmul.f32 %v6166, %v6170
      %vm6172 = vweird.f32 %v6032
      %vm6173 = vweird.f32 %v6166
      %vm6174 = vmor %vm6172, %vm6173
      %v6175 = vsel %vm6174, %v6166, %v6171
      %v6176 = vrsqrt.pop %v6033
      %v6177 = vmul.f32 %v6176, %v6033
      %v6178 = vmul.f32 %v6177, %v6176
      %v6179 = vmul.f32 0.5, %v6178
      %v6180 = vsub.f32 1.5, %v6179
      %v6181 = vmul.f32 %v6176, %v6180
      %vm6182 = vweird.f32 %v6033
      %vm6183 = vweird.f32 %v6176
      %vm6184 = vmor %vm6182, %vm6183
      %v6185 = vsel %vm6184, %v6176, %v6181
      %v6186 = vrsqrt.pop %v6034
      %v6187 = vmul.f32 %v6186, %v6034
      %v6188 = vmul.f32 %v6187, %v6186
      %v6189 = vmul.f32 0.5, %v6188
      %v6190 = vsub.f32 1.5, %v6189
      %v6191 = vmul.f32 %v6186, %v6190
      %vm6192 = vweird.f32 %v6034
      %vm6193 = vweird.f32 %v6186
      %vm6194 = vmor %vm6192, %vm6193
      %v6195 = vsel %vm6194, %v6186, %v6191
      %v6196 = vrsqrt.pop %v6035
      %v6197 = vmul.f32 %v6196, %v6035
      %v6198 = vmul.f32 %v6197, %v6196
      %v6199 = vmul.f32 0.5, %v6198
      %v6200 = vsub.f32 1.5, %v6199
      %v6201 = vmul.f32 %v6196, %v6200
      %vm6202 = vweird.f32 %v6035
      %vm6203 = vweird.f32 %v6196
      %vm6204 = vmor %vm6202, %vm6203
      %v6205 = vsel %vm6204, %v6196, %v6201
      %v6206 = vmul.f32 %v5934, %v6045
      %v6207 = vmul.f32 %v5935, %v6055
      %v6208 = vmul.f32 %v5936, %v6065
      %v6209 = vmul.f32 %v5937, %v6075
      %v6210 = vmul.f32 %v5938, %v6085
      %v6211 = vmul.f32 %v5939, %v6095
      %v6212 = vmul.f32 %v5940, %v6105
      %v6213 = vmul.f32 %v5941, %v6115
      %v6214 = vmul.f32 %v5942, %v6125
      %v6215 = vmul.f32 %v5943, %v6135
      %v6216 = vmul.f32 %v5944, %v6145
      %v6217 = vmul.f32 %v5945, %v6155
      %v6218 = vmul.f32 %v5946, %v6165
      %v6219 = vmul.f32 %v5947, %v6175
      %v6220 = vmul.f32 %v5948, %v6185
      %v6221 = vmul.f32 %v5949, %v6195
      %v6222 = vmul.f32 %v5950, %v6205
      %v6224 = vperm.slane %v5880, 0
      %v6226 = vmul.f32 %v6206, %v6224
      %v6227 = vmul.f32 %v6207, %v6224
      %v6228 = vmul.f32 %v6208, %v6224
      %v6229 = vmul.f32 %v6209, %v6224
      %v6230 = vmul.f32 %v6210, %v6224
      %v6231 = vmul.f32 %v6211, %v6224
      %v6232 = vmul.f32 %v6212, %v6224
      %v6233 = vmul.f32 %v6213, %v6224
      %v6234 = vmul.f32 %v6214, %v6224
      %v6235 = vmul.f32 %v6215, %v6224
      %v6236 = vmul.f32 %v6216, %v6224
      %v6237 = vmul.f32 %v6217, %v6224
      %v6238 = vmul.f32 %v6218, %v6224
      %v6239 = vmul.f32 %v6219, %v6224
      %v6240 = vmul.f32 %v6220, %v6224
      %v6241 = vmul.f32 %v6221, %v6224
      %v6242 = vmul.f32 %v6222, %v6224
      %v6244 = vperm.slane %v5882, 0
      %v6246 = vadd.f32 %v6226, %v6244
      %v6247 = vadd.f32 %v6227, %v6244
      %v6248 = vadd.f32 %v6228, %v6244
      %v6249 = vadd.f32 %v6229, %v6244
      %v6250 = vadd.f32 %v6230, %v6244
      %v6251 = vadd.f32 %v6231, %v6244
      %v6252 = vadd.f32 %v6232, %v6244
      %v6253 = vadd.f32 %v6233, %v6244
      %v6254 = vadd.f32 %v6234, %v6244
      %v6255 = vadd.f32 %v6235, %v6244
      %v6256 = vadd.f32 %v6236, %v6244
      %v6257 = vadd.f32 %v6237, %v6244
      %v6258 = vadd.f32 %v6238, %v6244
      %v6259 = vadd.f32 %v6239, %v6244
      %v6260 = vadd.f32 %v6240, %v6244
      %v6261 = vadd.f32 %v6241, %v6244
      %v6262 = vadd.f32 %v6242, %v6244
      %s6263 = scalar_lea.vmem %s11, 256
      %v6264 = vld [vmem:[%s6263] sm:$0xff]
      %v6265 = vld [vmem:[%s6263 + $0x8] sm:$0xff]
      %v6266 = vld [vmem:[%s6263 + $0x10] sm:$0xff]
      %v6267 = vld [vmem:[%s6263 + $0x18] sm:$0xff]
      %v6268 = vld [vmem:[%s6263 + $0x20] sm:$0xff]
      %v6269 = vld [vmem:[%s6263 + $0x28] sm:$0xff]
      %v6270 = vld [vmem:[%s6263 + $0x30] sm:$0xff]
      %v6271 = vld [vmem:[%s6263 + $0x38] sm:$0xff]
      %v6272 = vld [vmem:[%s6263 + $0x40] sm:$0xff]
      %v6273 = vld [vmem:[%s6263 + $0x48] sm:$0xff]
      %v6274 = vld [vmem:[%s6263 + $0x50] sm:$0xff]
      %v6275 = vld [vmem:[%s6263 + $0x58] sm:$0xff]
      %v6276 = vld [vmem:[%s6263 + $0x60] sm:$0xff]
      %v6277 = vld [vmem:[%s6263 + $0x68] sm:$0xff]
      %v6278 = vld [vmem:[%s6263 + $0x70] sm:$0xff]
      %v6279 = vld [vmem:[%s6263 + $0x78] sm:$0xff]
      %v6280 = vld [vmem:[%s6263 + $0x80] sm:$0xff]
      %v6281 = vld [vmem:[%s6263 + $0x88] sm:$0xff]
      %v6282 = vld [vmem:[%s6263 + $0x90] sm:$0xff]
      %v6283 = vld [vmem:[%s6263 + $0x98] sm:$0xff]
      %v6284 = vld [vmem:[%s6263 + $0xa0] sm:$0xff]
      %v6285 = vld [vmem:[%s6263 + $0xa8] sm:$0xff]
      %v6286 = vld [vmem:[%s6263 + $0xb0] sm:$0xff]
      %v6287 = vld [vmem:[%s6263 + $0xb8] sm:$0xff]
      %v6288 = vld [vmem:[%s6263 + $0xc0] sm:$0xff]
      %v6289 = vld [vmem:[%s6263 + $0xc8] sm:$0xff]
      %v6290 = vld [vmem:[%s6263 + $0xd0] sm:$0xff]
      %v6291 = vld [vmem:[%s6263 + $0xd8] sm:$0xff]
      %v6292 = vld [vmem:[%s6263 + $0xe0] sm:$0xff]
      %v6293 = vld [vmem:[%s6263 + $0xe8] sm:$0xff]
      %v6294 = vld [vmem:[%s6263 + $0xf0] sm:$0xff]
      %v6295 = vld [vmem:[%s6263 + $0xf8] sm:$0xff]
      %s6296 = scalar_lea.vmem %s12, 2
      %v6297 = vld [vmem:[%s6296] sm:$0x3]
      %v6299 = vperm.slane %v6297, 0
      %v6300 = vperm.slane %v6297, 1
      %6303 = vmatpush.msra.mxu0 %v6294
      %6304 = vmatpush.msra.mxu0 %v6292
      %6305 = vmatpush.msra.mxu0 %v6290
      %6306 = vmatpush.msra.mxu0 %v6288
      %6307 = vmatpush.msra.mxu0 %v6286
      %6308 = vmatpush.msra.mxu0 %v6284
      %6309 = vmatpush.msra.mxu0 %v6282
      %6310 = vmatpush.msra.mxu0 %v6280
      %6311 = vmatpush.msra.mxu0 %v6278
      %6312 = vmatpush.msra.mxu0 %v6276
      %6313 = vmatpush.msra.mxu0 %v6274
      %6314 = vmatpush.msra.mxu0 %v6272
      %6315 = vmatpush.msra.mxu0 %v6270
      %6316 = vmatpush.msra.mxu0 %v6268
      %6317 = vmatpush.msra.mxu0 %v6266
      %6318 = vmatpush.msra.mxu0 %v6264
      %6319 = vmatmul.f32.gmra.mxu0 %v6246
      %v6320 = vpop.f32.mrf.mxu0
      %v6321 = vadd.f32 %v6299, %v6320
      %6322 = vmatmul.f32.gmra.mxu0 %v6247
      %v6323 = vpop.f32.mrf.mxu0
      %v6324 = vadd.f32 %v6299, %v6323
      %6325 = vmatmul.f32.gmra.mxu0 %v6248
      %v6326 = vpop.f32.mrf.mxu0
      %v6327 = vadd.f32 %v6299, %v6326
      %6328 = vmatmul.f32.gmra.mxu0 %v6249
      %v6329 = vpop.f32.mrf.mxu0
      %v6330 = vadd.f32 %v6299, %v6329
      %6331 = vmatmul.f32.gmra.mxu0 %v6250
      %v6332 = vpop.f32.mrf.mxu0
      %v6333 = vadd.f32 %v6299, %v6332
      %6334 = vmatmul.f32.gmra.mxu0 %v6251
      %v6335 = vpop.f32.mrf.mxu0
      %v6336 = vadd.f32 %v6299, %v6335
      %6337 = vmatmul.f32.gmra.mxu0 %v6252
      %v6338 = vpop.f32.mrf.mxu0
      %v6339 = vadd.f32 %v6299, %v6338
      %6340 = vmatmul.f32.gmra.mxu0 %v6253
      %v6341 = vpop.f32.mrf.mxu0
      %v6342 = vadd.f32 %v6299, %v6341
      %6343 = vmatmul.f32.gmra.mxu0 %v6254
      %v6344 = vpop.f32.mrf.mxu0
      %v6345 = vadd.f32 %v6299, %v6344
      %6346 = vmatmul.f32.gmra.mxu0 %v6255
      %v6347 = vpop.f32.mrf.mxu0
      %v6348 = vadd.f32 %v6299, %v6347
      %6349 = vmatmul.f32.gmra.mxu0 %v6256
      %v6350 = vpop.f32.mrf.mxu0
      %v6351 = vadd.f32 %v6299, %v6350
      %6352 = vmatmul.f32.gmra.mxu0 %v6257
      %v6353 = vpop.f32.mrf.mxu0
      %v6354 = vadd.f32 %v6299, %v6353
      %6355 = vmatmul.f32.gmra.mxu0 %v6258
      %v6356 = vpop.f32.mrf.mxu0
      %v6357 = vadd.f32 %v6299, %v6356
      %6358 = vmatmul.f32.gmra.mxu0 %v6259
      %v6359 = vpop.f32.mrf.mxu0
      %v6360 = vadd.f32 %v6299, %v6359
      %6361 = vmatmul.f32.gmra.mxu0 %v6260
      %v6362 = vpop.f32.mrf.mxu0
      %v6363 = vadd.f32 %v6299, %v6362
      %6364 = vmatmul.f32.gmra.mxu0 %v6261
      %v6365 = vpop.f32.mrf.mxu0
      %v6366 = vadd.f32 %v6299, %v6365
      %6367 = vmatmul.f32.gmra.mxu0 %v6262
      %v6368 = vpop.f32.mrf.mxu0
      %v6369 = vadd.f32 %v6299, %v6368
      %6370 = vdwg.mxu0
      %6371 = vmatpush.msra.mxu0 %v6295
      %6372 = vmatpush.msra.mxu0 %v6293
      %6373 = vmatpush.msra.mxu0 %v6291
      %6374 = vmatpush.msra.mxu0 %v6289
      %6375 = vmatpush.msra.mxu0 %v6287
      %6376 = vmatpush.msra.mxu0 %v6285
      %6377 = vmatpush.msra.mxu0 %v6283
      %6378 = vmatpush.msra.mxu0 %v6281
      %6379 = vmatpush.msra.mxu0 %v6279
      %6380 = vmatpush.msra.mxu0 %v6277
      %6381 = vmatpush.msra.mxu0 %v6275
      %6382 = vmatpush.msra.mxu0 %v6273
      %6383 = vmatpush.msra.mxu0 %v6271
      %6384 = vmatpush.msra.mxu0 %v6269
      %6385 = vmatpush.msra.mxu0 %v6267
      %6386 = vmatpush.msra.mxu0 %v6265
      %6387 = vmatmul.f32.gmra.mxu0 %v6246
      %v6388 = vpop.f32.mrf.mxu0
      %v6389 = vadd.f32 %v6300, %v6388
      %6390 = vmatmul.f32.gmra.mxu0 %v6247
      %v6391 = vpop.f32.mrf.mxu0
      %v6392 = vadd.f32 %v6300, %v6391
      %6393 = vmatmul.f32.gmra.mxu0 %v6248
      %v6394 = vpop.f32.mrf.mxu0
      %v6395 = vadd.f32 %v6300, %v6394
      %6396 = vmatmul.f32.gmra.mxu0 %v6249
      %v6397 = vpop.f32.mrf.mxu0
      %v6398 = vadd.f32 %v6300, %v6397
      %6399 = vmatmul.f32.gmra.mxu0 %v6250
      %v6400 = vpop.f32.mrf.mxu0
      %v6401 = vadd.f32 %v6300, %v6400
      %6402 = vmatmul.f32.gmra.mxu0 %v6251
      %v6403 = vpop.f32.mrf.mxu0
      %v6404 = vadd.f32 %v6300, %v6403
      %6405 = vmatmul.f32.gmra.mxu0 %v6252
      %v6406 = vpop.f32.mrf.mxu0
      %v6407 = vadd.f32 %v6300, %v6406
      %6408 = vmatmul.f32.gmra.mxu0 %v6253
      %v6409 = vpop.f32.mrf.mxu0
      %v6410 = vadd.f32 %v6300, %v6409
      %6411 = vmatmul.f32.gmra.mxu0 %v6254
      %v6412 = vpop.f32.mrf.mxu0
      %v6413 = vadd.f32 %v6300, %v6412
      %6414 = vmatmul.f32.gmra.mxu0 %v6255
      %v6415 = vpop.f32.mrf.mxu0
      %v6416 = vadd.f32 %v6300, %v6415
      %6417 = vmatmul.f32.gmra.mxu0 %v6256
      %v6418 = vpop.f32.mrf.mxu0
      %v6419 = vadd.f32 %v6300, %v6418
      %6420 = vmatmul.f32.gmra.mxu0 %v6257
      %v6421 = vpop.f32.mrf.mxu0
      %v6422 = vadd.f32 %v6300, %v6421
      %6423 = vmatmul.f32.gmra.mxu0 %v6258
      %v6424 = vpop.f32.mrf.mxu0
      %v6425 = vadd.f32 %v6300, %v6424
      %6426 = vmatmul.f32.gmra.mxu0 %v6259
      %v6427 = vpop.f32.mrf.mxu0
      %v6428 = vadd.f32 %v6300, %v6427
      %6429 = vmatmul.f32.gmra.mxu0 %v6260
      %v6430 = vpop.f32.mrf.mxu0
      %v6431 = vadd.f32 %v6300, %v6430
      %6432 = vmatmul.f32.gmra.mxu0 %v6261
      %v6433 = vpop.f32.mrf.mxu0
      %v6434 = vadd.f32 %v6300, %v6433
      %6435 = vmatmul.f32.gmra.mxu0 %v6262
      %v6436 = vpop.f32.mrf.mxu0
      %v6437 = vadd.f32 %v6300, %v6436
      %6438 = vdwg.mxu0
      %v6439 = vmul.f32 %v6321, 0.5
      %v6440 = vmul.f32 %v6389, 0.5
      %v6441 = vmul.f32 %v6324, 0.5
      %v6442 = vmul.f32 %v6392, 0.5
      %v6443 = vmul.f32 %v6327, 0.5
      %v6444 = vmul.f32 %v6395, 0.5
      %v6445 = vmul.f32 %v6330, 0.5
      %v6446 = vmul.f32 %v6398, 0.5
      %v6447 = vmul.f32 %v6333, 0.5
      %v6448 = vmul.f32 %v6401, 0.5
      %v6449 = vmul.f32 %v6336, 0.5
      %v6450 = vmul.f32 %v6404, 0.5
      %v6451 = vmul.f32 %v6339, 0.5
      %v6452 = vmul.f32 %v6407, 0.5
      %v6453 = vmul.f32 %v6342, 0.5
      %v6454 = vmul.f32 %v6410, 0.5
      %v6455 = vmul.f32 %v6345, 0.5
      %v6456 = vmul.f32 %v6413, 0.5
      %v6457 = vmul.f32 %v6348, 0.5
      %v6458 = vmul.f32 %v6416, 0.5
      %v6459 = vmul.f32 %v6351, 0.5
      %v6460 = vmul.f32 %v6419, 0.5
      %v6461 = vmul.f32 %v6354, 0.5
      %v6462 = vmul.f32 %v6422, 0.5
      %v6463 = vmul.f32 %v6357, 0.5
      %v6464 = vmul.f32 %v6425, 0.5
      %v6465 = vmul.f32 %v6360, 0.5
      %v6466 = vmul.f32 %v6428, 0.5
      %v6467 = vmul.f32 %v6363, 0.5
      %v6468 = vmul.f32 %v6431, 0.5
      %v6469 = vmul.f32 %v6366, 0.5
      %v6470 = vmul.f32 %v6434, 0.5
      %v6471 = vmul.f32 %v6369, 0.5
      %v6472 = vmul.f32 %v6437, 0.5
      %v6473 = vmul.f32 %v6321, 0.70710677
      %v6474 = vmul.f32 %v6389, 0.70710677
      %v6475 = vmul.f32 %v6324, 0.70710677
      %v6476 = vmul.f32 %v6392, 0.70710677
      %v6477 = vmul.f32 %v6327, 0.70710677
      %v6478 = vmul.f32 %v6395, 0.70710677
      %v6479 = vmul.f32 %v6330, 0.70710677
      %v6480 = vmul.f32 %v6398, 0.70710677
      %v6481 = vmul.f32 %v6333, 0.70710677
      %v6482 = vmul.f32 %v6401, 0.70710677
      %v6483 = vmul.f32 %v6336, 0.70710677
      %v6484 = vmul.f32 %v6404, 0.70710677
      %v6485 = vmul.f32 %v6339, 0.70710677
      %v6486 = vmul.f32 %v6407, 0.70710677
      %v6487 = vmul.f32 %v6342, 0.70710677
      %v6488 = vmul.f32 %v6410, 0.70710677
      %v6489 = vmul.f32 %v6345, 0.70710677
      %v6490 = vmul.f32 %v6413, 0.70710677
      %v6491 = vmul.f32 %v6348, 0.70710677
      %v6492 = vmul.f32 %v6416, 0.70710677
      %v6493 = vmul.f32 %v6351, 0.70710677
      %v6494 = vmul.f32 %v6419, 0.70710677
      %v6495 = vmul.f32 %v6354, 0.70710677
      %v6496 = vmul.f32 %v6422, 0.70710677
      %v6497 = vmul.f32 %v6357, 0.70710677
      %v6498 = vmul.f32 %v6425, 0.70710677
      %v6499 = vmul.f32 %v6360, 0.70710677
      %v6500 = vmul.f32 %v6428, 0.70710677
      %v6501 = vmul.f32 %v6363, 0.70710677
      %v6502 = vmul.f32 %v6431, 0.70710677
      %v6503 = vmul.f32 %v6366, 0.70710677
      %v6504 = vmul.f32 %v6434, 0.70710677
      %v6505 = vmul.f32 %v6369, 0.70710677
      %v6506 = vmul.f32 %v6437, 0.70710677
      %vm6507 = vcmp.ge.f32.partialorder %v6473, 0.0
      %vm6508 = vcmp.ge.f32.partialorder %v6474, 0.0
      %vm6509 = vcmp.ge.f32.partialorder %v6475, 0.0
      %vm6510 = vcmp.ge.f32.partialorder %v6476, 0.0
      %vm6511 = vcmp.ge.f32.partialorder %v6477, 0.0
      %vm6512 = vcmp.ge.f32.partialorder %v6478, 0.0
      %vm6513 = vcmp.ge.f32.partialorder %v6479, 0.0
      %vm6514 = vcmp.ge.f32.partialorder %v6480, 0.0
      %vm6515 = vcmp.ge.f32.partialorder %v6481, 0.0
      %vm6516 = vcmp.ge.f32.partialorder %v6482, 0.0
      %vm6517 = vcmp.ge.f32.partialorder %v6483, 0.0
      %vm6518 = vcmp.ge.f32.partialorder %v6484, 0.0
      %vm6519 = vcmp.ge.f32.partialorder %v6485, 0.0
      %vm6520 = vcmp.ge.f32.partialorder %v6486, 0.0
      %vm6521 = vcmp.ge.f32.partialorder %v6487, 0.0
      %vm6522 = vcmp.ge.f32.partialorder %v6488, 0.0
      %vm6523 = vcmp.ge.f32.partialorder %v6489, 0.0
      %vm6524 = vcmp.ge.f32.partialorder %v6490, 0.0
      %vm6525 = vcmp.ge.f32.partialorder %v6491, 0.0
      %vm6526 = vcmp.ge.f32.partialorder %v6492, 0.0
      %vm6527 = vcmp.ge.f32.partialorder %v6493, 0.0
      %vm6528 = vcmp.ge.f32.partialorder %v6494, 0.0
      %vm6529 = vcmp.ge.f32.partialorder %v6495, 0.0
      %vm6530 = vcmp.ge.f32.partialorder %v6496, 0.0
      %vm6531 = vcmp.ge.f32.partialorder %v6497, 0.0
      %vm6532 = vcmp.ge.f32.partialorder %v6498, 0.0
      %vm6533 = vcmp.ge.f32.partialorder %v6499, 0.0
      %vm6534 = vcmp.ge.f32.partialorder %v6500, 0.0
      %vm6535 = vcmp.ge.f32.partialorder %v6501, 0.0
      %vm6536 = vcmp.ge.f32.partialorder %v6502, 0.0
      %vm6537 = vcmp.ge.f32.partialorder %v6503, 0.0
      %vm6538 = vcmp.ge.f32.partialorder %v6504, 0.0
      %vm6539 = vcmp.ge.f32.partialorder %v6505, 0.0
      %vm6540 = vcmp.ge.f32.partialorder %v6506, 0.0
      %v6541 = vsel %vm6507, 1.0, -1.0
      %v6542 = vsel %vm6508, 1.0, -1.0
      %v6543 = vsel %vm6509, 1.0, -1.0
      %v6544 = vsel %vm6510, 1.0, -1.0
      %v6545 = vsel %vm6511, 1.0, -1.0
      %v6546 = vsel %vm6512, 1.0, -1.0
      %v6547 = vsel %vm6513, 1.0, -1.0
      %v6548 = vsel %vm6514, 1.0, -1.0
      %v6549 = vsel %vm6515, 1.0, -1.0
      %v6550 = vsel %vm6516, 1.0, -1.0
      %v6551 = vsel %vm6517, 1.0, -1.0
      %v6552 = vsel %vm6518, 1.0, -1.0
      %v6553 = vsel %vm6519, 1.0, -1.0
      %v6554 = vsel %vm6520, 1.0, -1.0
      %v6555 = vsel %vm6521, 1.0, -1.0
      %v6556 = vsel %vm6522, 1.0, -1.0
      %v6557 = vsel %vm6523, 1.0, -1.0
      %v6558 = vsel %vm6524, 1.0, -1.0
      %v6559 = vsel %vm6525, 1.0, -1.0
      %v6560 = vsel %vm6526, 1.0, -1.0
      %v6561 = vsel %vm6527, 1.0, -1.0
      %v6562 = vsel %vm6528, 1.0, -1.0
      %v6563 = vsel %vm6529, 1.0, -1.0
      %v6564 = vsel %vm6530, 1.0, -1.0
      %v6565 = vsel %vm6531, 1.0, -1.0
      %v6566 = vsel %vm6532, 1.0, -1.0
      %v6567 = vsel %vm6533, 1.0, -1.0
      %v6568 = vsel %vm6534, 1.0, -1.0
      %v6569 = vsel %vm6535, 1.0, -1.0
      %v6570 = vsel %vm6536, 1.0, -1.0
      %v6571 = vsel %vm6537, 1.0, -1.0
      %v6572 = vsel %vm6538, 1.0, -1.0
      %v6573 = vsel %vm6539, 1.0, -1.0
      %v6574 = vsel %vm6540, 1.0, -1.0
      %v6575 = vand.u32 2147483647, %v6473
      %v6576 = vand.u32 2147483647, %v6474
      %v6577 = vand.u32 2147483647, %v6475
      %v6578 = vand.u32 2147483647, %v6476
      %v6579 = vand.u32 2147483647, %v6477
      %v6580 = vand.u32 2147483647, %v6478
      %v6581 = vand.u32 2147483647, %v6479
      %v6582 = vand.u32 2147483647, %v6480
      %v6583 = vand.u32 2147483647, %v6481
      %v6584 = vand.u32 2147483647, %v6482
      %v6585 = vand.u32 2147483647, %v6483
      %v6586 = vand.u32 2147483647, %v6484
      %v6587 = vand.u32 2147483647, %v6485
      %v6588 = vand.u32 2147483647, %v6486
      %v6589 = vand.u32 2147483647, %v6487
      %v6590 = vand.u32 2147483647, %v6488
      %v6591 = vand.u32 2147483647, %v6489
      %v6592 = vand.u32 2147483647, %v6490
      %v6593 = vand.u32 2147483647, %v6491
      %v6594 = vand.u32 2147483647, %v6492
      %v6595 = vand.u32 2147483647, %v6493
      %v6596 = vand.u32 2147483647, %v6494
      %v6597 = vand.u32 2147483647, %v6495
      %v6598 = vand.u32 2147483647, %v6496
      %v6599 = vand.u32 2147483647, %v6497
      %v6600 = vand.u32 2147483647, %v6498
      %v6601 = vand.u32 2147483647, %v6499
      %v6602 = vand.u32 2147483647, %v6500
      %v6603 = vand.u32 2147483647, %v6501
      %v6604 = vand.u32 2147483647, %v6502
      %v6605 = vand.u32 2147483647, %v6503
      %v6606 = vand.u32 2147483647, %v6504
      %v6607 = vand.u32 2147483647, %v6505
      %v6608 = vand.u32 2147483647, %v6506
      %v6609 = vmul.f32 %v6575, 0.3275911
      %v6610 = vmul.f32 %v6576, 0.3275911
      %v6611 = vmul.f32 %v6577, 0.3275911
      %v6612 = vmul.f32 %v6578, 0.3275911
      %v6613 = vmul.f32 %v6579, 0.3275911
      %v6614 = vmul.f32 %v6580, 0.3275911
      %v6615 = vmul.f32 %v6581, 0.3275911
      %v6616 = vmul.f32 %v6582, 0.3275911
      %v6617 = vmul.f32 %v6583, 0.3275911
      %v6618 = vmul.f32 %v6584, 0.3275911
      %v6619 = vmul.f32 %v6585, 0.3275911
      %v6620 = vmul.f32 %v6586, 0.3275911
      %v6621 = vmul.f32 %v6587, 0.3275911
      %v6622 = vmul.f32 %v6588, 0.3275911
      %v6623 = vmul.f32 %v6589, 0.3275911
      %v6624 = vmul.f32 %v6590, 0.3275911
      %v6625 = vmul.f32 %v6591, 0.3275911
      %v6626 = vmul.f32 %v6592, 0.3275911
      %v6627 = vmul.f32 %v6593, 0.3275911
      %v6628 = vmul.f32 %v6594, 0.3275911
      %v6629 = vmul.f32 %v6595, 0.3275911
      %v6630 = vmul.f32 %v6596, 0.3275911
      %v6631 = vmul.f32 %v6597, 0.3275911
      %v6632 = vmul.f32 %v6598, 0.3275911
      %v6633 = vmul.f32 %v6599, 0.3275911
      %v6634 = vmul.f32 %v6600, 0.3275911
      %v6635 = vmul.f32 %v6601, 0.3275911
      %v6636 = vmul.f32 %v6602, 0.3275911
      %v6637 = vmul.f32 %v6603, 0.3275911
      %v6638 = vmul.f32 %v6604, 0.3275911
      %v6639 = vmul.f32 %v6605, 0.3275911
      %v6640 = vmul.f32 %v6606, 0.3275911
      %v6641 = vmul.f32 %v6607, 0.3275911
      %v6642 = vmul.f32 %v6608, 0.3275911
      %v6643 = vadd.f32 %v6609, 1.0
      %v6644 = vadd.f32 %v6610, 1.0
      %v6645 = vadd.f32 %v6611, 1.0
      %v6646 = vadd.f32 %v6612, 1.0
      %v6647 = vadd.f32 %v6613, 1.0
      %v6648 = vadd.f32 %v6614, 1.0
      %v6649 = vadd.f32 %v6615, 1.0
      %v6650 = vadd.f32 %v6616, 1.0
      %v6651 = vadd.f32 %v6617, 1.0
      %v6652 = vadd.f32 %v6618, 1.0
      %v6653 = vadd.f32 %v6619, 1.0
      %v6654 = vadd.f32 %v6620, 1.0
      %v6655 = vadd.f32 %v6621, 1.0
      %v6656 = vadd.f32 %v6622, 1.0
      %v6657 = vadd.f32 %v6623, 1.0
      %v6658 = vadd.f32 %v6624, 1.0
      %v6659 = vadd.f32 %v6625, 1.0
      %v6660 = vadd.f32 %v6626, 1.0
      %v6661 = vadd.f32 %v6627, 1.0
      %v6662 = vadd.f32 %v6628, 1.0
      %v6663 = vadd.f32 %v6629, 1.0
      %v6664 = vadd.f32 %v6630, 1.0
      %v6665 = vadd.f32 %v6631, 1.0
      %v6666 = vadd.f32 %v6632, 1.0
      %v6667 = vadd.f32 %v6633, 1.0
      %v6668 = vadd.f32 %v6634, 1.0
      %v6669 = vadd.f32 %v6635, 1.0
      %v6670 = vadd.f32 %v6636, 1.0
      %v6671 = vadd.f32 %v6637, 1.0
      %v6672 = vadd.f32 %v6638, 1.0
      %v6673 = vadd.f32 %v6639, 1.0
      %v6674 = vadd.f32 %v6640, 1.0
      %v6675 = vadd.f32 %v6641, 1.0
      %v6676 = vadd.f32 %v6642, 1.0
      %v6677 = vrcp.pop %v6643
      %v6678 = vmul.f32 %v6643, %v6677
      %v6679 = vsub.f32 1.0, %v6678
      %v6680 = vmul.f32 %v6677, %v6679
      %v6681 = vadd.f32 %v6677, %v6680
      %vm6682 = vweird.f32 %v6643
      %vm6683 = vweird.f32 %v6677
      %vm6684 = vmor %vm6682, %vm6683
      %v6685 = vsel %vm6684, %v6677, %v6681
      %v6686 = vand.u32 2147483647, %v6643
      %vm6687 = vcmp.eq.f32.partialorder %v6686, 8.507059e+37
      %v6688 = vand.u32 %v6643, 2147483648
      %v6689 = vor.u32 1.1754944e-38, %v6688
      %v6690 = vsel %vm6687, %v6689, %v6685
      %v6691 = vmul.f32 1.0, %v6690
      %v6692 = vrcp.pop %v6644
      %v6693 = vmul.f32 %v6644, %v6692
      %v6694 = vsub.f32 1.0, %v6693
      %v6695 = vmul.f32 %v6692, %v6694
      %v6696 = vadd.f32 %v6692, %v6695
      %vm6697 = vweird.f32 %v6644
      %vm6698 = vweird.f32 %v6692
      %vm6699 = vmor %vm6697, %vm6698
      %v6700 = vsel %vm6699, %v6692, %v6696
      %v6701 = vand.u32 2147483647, %v6644
      %vm6702 = vcmp.eq.f32.partialorder %v6701, 8.507059e+37
      %v6703 = vand.u32 %v6644, 2147483648
      %v6704 = vor.u32 1.1754944e-38, %v6703
      %v6705 = vsel %vm6702, %v6704, %v6700
      %v6706 = vmul.f32 1.0, %v6705
      %v6707 = vrcp.pop %v6645
      %v6708 = vmul.f32 %v6645, %v6707
      %v6709 = vsub.f32 1.0, %v6708
      %v6710 = vmul.f32 %v6707, %v6709
      %v6711 = vadd.f32 %v6707, %v6710
      %vm6712 = vweird.f32 %v6645
      %vm6713 = vweird.f32 %v6707
      %vm6714 = vmor %vm6712, %vm6713
      %v6715 = vsel %vm6714, %v6707, %v6711
      %v6716 = vand.u32 2147483647, %v6645
      %vm6717 = vcmp.eq.f32.partialorder %v6716, 8.507059e+37
      %v6718 = vand.u32 %v6645, 2147483648
      %v6719 = vor.u32 1.1754944e-38, %v6718
      %v6720 = vsel %vm6717, %v6719, %v6715
      %v6721 = vmul.f32 1.0, %v6720
      %v6722 = vrcp.pop %v6646
      %v6723 = vmul.f32 %v6646, %v6722
      %v6724 = vsub.f32 1.0, %v6723
      %v6725 = vmul.f32 %v6722, %v6724
      %v6726 = vadd.f32 %v6722, %v6725
      %vm6727 = vweird.f32 %v6646
      %vm6728 = vweird.f32 %v6722
      %vm6729 = vmor %vm6727, %vm6728
      %v6730 = vsel %vm6729, %v6722, %v6726
      %v6731 = vand.u32 2147483647, %v6646
      %vm6732 = vcmp.eq.f32.partialorder %v6731, 8.507059e+37
      %v6733 = vand.u32 %v6646, 2147483648
      %v6734 = vor.u32 1.1754944e-38, %v6733
      %v6735 = vsel %vm6732, %v6734, %v6730
      %v6736 = vmul.f32 1.0, %v6735
      %v6737 = vrcp.pop %v6647
      %v6738 = vmul.f32 %v6647, %v6737
      %v6739 = vsub.f32 1.0, %v6738
      %v6740 = vmul.f32 %v6737, %v6739
      %v6741 = vadd.f32 %v6737, %v6740
      %vm6742 = vweird.f32 %v6647
      %vm6743 = vweird.f32 %v6737
      %vm6744 = vmor %vm6742, %vm6743
      %v6745 = vsel %vm6744, %v6737, %v6741
      %v6746 = vand.u32 2147483647, %v6647
      %vm6747 = vcmp.eq.f32.partialorder %v6746, 8.507059e+37
      %v6748 = vand.u32 %v6647, 2147483648
      %v6749 = vor.u32 1.1754944e-38, %v6748
      %v6750 = vsel %vm6747, %v6749, %v6745
      %v6751 = vmul.f32 1.0, %v6750
      %v6752 = vrcp.pop %v6648
      %v6753 = vmul.f32 %v6648, %v6752
      %v6754 = vsub.f32 1.0, %v6753
      %v6755 = vmul.f32 %v6752, %v6754
      %v6756 = vadd.f32 %v6752, %v6755
      %vm6757 = vweird.f32 %v6648
      %vm6758 = vweird.f32 %v6752
      %vm6759 = vmor %vm6757, %vm6758
      %v6760 = vsel %vm6759, %v6752, %v6756
      %v6761 = vand.u32 2147483647, %v6648
      %vm6762 = vcmp.eq.f32.partialorder %v6761, 8.507059e+37
      %v6763 = vand.u32 %v6648, 2147483648
      %v6764 = vor.u32 1.1754944e-38, %v6763
      %v6765 = vsel %vm6762, %v6764, %v6760
      %v6766 = vmul.f32 1.0, %v6765
      %v6767 = vrcp.pop %v6649
      %v6768 = vmul.f32 %v6649, %v6767
      %v6769 = vsub.f32 1.0, %v6768
      %v6770 = vmul.f32 %v6767, %v6769
      %v6771 = vadd.f32 %v6767, %v6770
      %vm6772 = vweird.f32 %v6649
      %vm6773 = vweird.f32 %v6767
      %vm6774 = vmor %vm6772, %vm6773
      %v6775 = vsel %vm6774, %v6767, %v6771
      %v6776 = vand.u32 2147483647, %v6649
      %vm6777 = vcmp.eq.f32.partialorder %v6776, 8.507059e+37
      %v6778 = vand.u32 %v6649, 2147483648
      %v6779 = vor.u32 1.1754944e-38, %v6778
      %v6780 = vsel %vm6777, %v6779, %v6775
      %v6781 = vmul.f32 1.0, %v6780
      %v6782 = vrcp.pop %v6650
      %v6783 = vmul.f32 %v6650, %v6782
      %v6784 = vsub.f32 1.0, %v6783
      %v6785 = vmul.f32 %v6782, %v6784
      %v6786 = vadd.f32 %v6782, %v6785
      %vm6787 = vweird.f32 %v6650
      %vm6788 = vweird.f32 %v6782
      %vm6789 = vmor %vm6787, %vm6788
      %v6790 = vsel %vm6789, %v6782, %v6786
      %v6791 = vand.u32 2147483647, %v6650
      %vm6792 = vcmp.eq.f32.partialorder %v6791, 8.507059e+37
      %v6793 = vand.u32 %v6650, 2147483648
      %v6794 = vor.u32 1.1754944e-38, %v6793
      %v6795 = vsel %vm6792, %v6794, %v6790
      %v6796 = vmul.f32 1.0, %v6795
      %v6797 = vrcp.pop %v6651
      %v6798 = vmul.f32 %v6651, %v6797
      %v6799 = vsub.f32 1.0, %v6798
      %v6800 = vmul.f32 %v6797, %v6799
      %v6801 = vadd.f32 %v6797, %v6800
      %vm6802 = vweird.f32 %v6651
      %vm6803 = vweird.f32 %v6797
      %vm6804 = vmor %vm6802, %vm6803
      %v6805 = vsel %vm6804, %v6797, %v6801
      %v6806 = vand.u32 2147483647, %v6651
      %vm6807 = vcmp.eq.f32.partialorder %v6806, 8.507059e+37
      %v6808 = vand.u32 %v6651, 2147483648
      %v6809 = vor.u32 1.1754944e-38, %v6808
      %v6810 = vsel %vm6807, %v6809, %v6805
      %v6811 = vmul.f32 1.0, %v6810
      %v6812 = vrcp.pop %v6652
      %v6813 = vmul.f32 %v6652, %v6812
      %v6814 = vsub.f32 1.0, %v6813
      %v6815 = vmul.f32 %v6812, %v6814
      %v6816 = vadd.f32 %v6812, %v6815
      %vm6817 = vweird.f32 %v6652
      %vm6818 = vweird.f32 %v6812
      %vm6819 = vmor %vm6817, %vm6818
      %v6820 = vsel %vm6819, %v6812, %v6816
      %v6821 = vand.u32 2147483647, %v6652
      %vm6822 = vcmp.eq.f32.partialorder %v6821, 8.507059e+37
      %v6823 = vand.u32 %v6652, 2147483648
      %v6824 = vor.u32 1.1754944e-38, %v6823
      %v6825 = vsel %vm6822, %v6824, %v6820
      %v6826 = vmul.f32 1.0, %v6825
      %v6827 = vrcp.pop %v6653
      %v6828 = vmul.f32 %v6653, %v6827
      %v6829 = vsub.f32 1.0, %v6828
      %v6830 = vmul.f32 %v6827, %v6829
      %v6831 = vadd.f32 %v6827, %v6830
      %vm6832 = vweird.f32 %v6653
      %vm6833 = vweird.f32 %v6827
      %vm6834 = vmor %vm6832, %vm6833
      %v6835 = vsel %vm6834, %v6827, %v6831
      %v6836 = vand.u32 2147483647, %v6653
      %vm6837 = vcmp.eq.f32.partialorder %v6836, 8.507059e+37
      %v6838 = vand.u32 %v6653, 2147483648
      %v6839 = vor.u32 1.1754944e-38, %v6838
      %v6840 = vsel %vm6837, %v6839, %v6835
      %v6841 = vmul.f32 1.0, %v6840
      %v6842 = vrcp.pop %v6654
      %v6843 = vmul.f32 %v6654, %v6842
      %v6844 = vsub.f32 1.0, %v6843
      %v6845 = vmul.f32 %v6842, %v6844
      %v6846 = vadd.f32 %v6842, %v6845
      %vm6847 = vweird.f32 %v6654
      %vm6848 = vweird.f32 %v6842
      %vm6849 = vmor %vm6847, %vm6848
      %v6850 = vsel %vm6849, %v6842, %v6846
      %v6851 = vand.u32 2147483647, %v6654
      %vm6852 = vcmp.eq.f32.partialorder %v6851, 8.507059e+37
      %v6853 = vand.u32 %v6654, 2147483648
      %v6854 = vor.u32 1.1754944e-38, %v6853
      %v6855 = vsel %vm6852, %v6854, %v6850
      %v6856 = vmul.f32 1.0, %v6855
      %v6857 = vrcp.pop %v6655
      %v6858 = vmul.f32 %v6655, %v6857
      %v6859 = vsub.f32 1.0, %v6858
      %v6860 = vmul.f32 %v6857, %v6859
      %v6861 = vadd.f32 %v6857, %v6860
      %vm6862 = vweird.f32 %v6655
      %vm6863 = vweird.f32 %v6857
      %vm6864 = vmor %vm6862, %vm6863
      %v6865 = vsel %vm6864, %v6857, %v6861
      %v6866 = vand.u32 2147483647, %v6655
      %vm6867 = vcmp.eq.f32.partialorder %v6866, 8.507059e+37
      %v6868 = vand.u32 %v6655, 2147483648
      %v6869 = vor.u32 1.1754944e-38, %v6868
      %v6870 = vsel %vm6867, %v6869, %v6865
      %v6871 = vmul.f32 1.0, %v6870
      %v6872 = vrcp.pop %v6656
      %v6873 = vmul.f32 %v6656, %v6872
      %v6874 = vsub.f32 1.0, %v6873
      %v6875 = vmul.f32 %v6872, %v6874
      %v6876 = vadd.f32 %v6872, %v6875
      %vm6877 = vweird.f32 %v6656
      %vm6878 = vweird.f32 %v6872
      %vm6879 = vmor %vm6877, %vm6878
      %v6880 = vsel %vm6879, %v6872, %v6876
      %v6881 = vand.u32 2147483647, %v6656
      %vm6882 = vcmp.eq.f32.partialorder %v6881, 8.507059e+37
      %v6883 = vand.u32 %v6656, 2147483648
      %v6884 = vor.u32 1.1754944e-38, %v6883
      %v6885 = vsel %vm6882, %v6884, %v6880
      %v6886 = vmul.f32 1.0, %v6885
      %v6887 = vrcp.pop %v6657
      %v6888 = vmul.f32 %v6657, %v6887
      %v6889 = vsub.f32 1.0, %v6888
      %v6890 = vmul.f32 %v6887, %v6889
      %v6891 = vadd.f32 %v6887, %v6890
      %vm6892 = vweird.f32 %v6657
      %vm6893 = vweird.f32 %v6887
      %vm6894 = vmor %vm6892, %vm6893
      %v6895 = vsel %vm6894, %v6887, %v6891
      %v6896 = vand.u32 2147483647, %v6657
      %vm6897 = vcmp.eq.f32.partialorder %v6896, 8.507059e+37
      %v6898 = vand.u32 %v6657, 2147483648
      %v6899 = vor.u32 1.1754944e-38, %v6898
      %v6900 = vsel %vm6897, %v6899, %v6895
      %v6901 = vmul.f32 1.0, %v6900
      %v6902 = vrcp.pop %v6658
      %v6903 = vmul.f32 %v6658, %v6902
      %v6904 = vsub.f32 1.0, %v6903
      %v6905 = vmul.f32 %v6902, %v6904
      %v6906 = vadd.f32 %v6902, %v6905
      %vm6907 = vweird.f32 %v6658
      %vm6908 = vweird.f32 %v6902
      %vm6909 = vmor %vm6907, %vm6908
      %v6910 = vsel %vm6909, %v6902, %v6906
      %v6911 = vand.u32 2147483647, %v6658
      %vm6912 = vcmp.eq.f32.partialorder %v6911, 8.507059e+37
      %v6913 = vand.u32 %v6658, 2147483648
      %v6914 = vor.u32 1.1754944e-38, %v6913
      %v6915 = vsel %vm6912, %v6914, %v6910
      %v6916 = vmul.f32 1.0, %v6915
      %v6917 = vrcp.pop %v6659
      %v6918 = vmul.f32 %v6659, %v6917
      %v6919 = vsub.f32 1.0, %v6918
      %v6920 = vmul.f32 %v6917, %v6919
      %v6921 = vadd.f32 %v6917, %v6920
      %vm6922 = vweird.f32 %v6659
      %vm6923 = vweird.f32 %v6917
      %vm6924 = vmor %vm6922, %vm6923
      %v6925 = vsel %vm6924, %v6917, %v6921
      %v6926 = vand.u32 2147483647, %v6659
      %vm6927 = vcmp.eq.f32.partialorder %v6926, 8.507059e+37
      %v6928 = vand.u32 %v6659, 2147483648
      %v6929 = vor.u32 1.1754944e-38, %v6928
      %v6930 = vsel %vm6927, %v6929, %v6925
      %v6931 = vmul.f32 1.0, %v6930
      %v6932 = vrcp.pop %v6660
      %v6933 = vmul.f32 %v6660, %v6932
      %v6934 = vsub.f32 1.0, %v6933
      %v6935 = vmul.f32 %v6932, %v6934
      %v6936 = vadd.f32 %v6932, %v6935
      %vm6937 = vweird.f32 %v6660
      %vm6938 = vweird.f32 %v6932
      %vm6939 = vmor %vm6937, %vm6938
      %v6940 = vsel %vm6939, %v6932, %v6936
      %v6941 = vand.u32 2147483647, %v6660
      %vm6942 = vcmp.eq.f32.partialorder %v6941, 8.507059e+37
      %v6943 = vand.u32 %v6660, 2147483648
      %v6944 = vor.u32 1.1754944e-38, %v6943
      %v6945 = vsel %vm6942, %v6944, %v6940
      %v6946 = vmul.f32 1.0, %v6945
      %v6947 = vrcp.pop %v6661
      %v6948 = vmul.f32 %v6661, %v6947
      %v6949 = vsub.f32 1.0, %v6948
      %v6950 = vmul.f32 %v6947, %v6949
      %v6951 = vadd.f32 %v6947, %v6950
      %vm6952 = vweird.f32 %v6661
      %vm6953 = vweird.f32 %v6947
      %vm6954 = vmor %vm6952, %vm6953
      %v6955 = vsel %vm6954, %v6947, %v6951
      %v6956 = vand.u32 2147483647, %v6661
      %vm6957 = vcmp.eq.f32.partialorder %v6956, 8.507059e+37
      %v6958 = vand.u32 %v6661, 2147483648
      %v6959 = vor.u32 1.1754944e-38, %v6958
      %v6960 = vsel %vm6957, %v6959, %v6955
      %v6961 = vmul.f32 1.0, %v6960
      %v6962 = vrcp.pop %v6662
      %v6963 = vmul.f32 %v6662, %v6962
      %v6964 = vsub.f32 1.0, %v6963
      %v6965 = vmul.f32 %v6962, %v6964
      %v6966 = vadd.f32 %v6962, %v6965
      %vm6967 = vweird.f32 %v6662
      %vm6968 = vweird.f32 %v6962
      %vm6969 = vmor %vm6967, %vm6968
      %v6970 = vsel %vm6969, %v6962, %v6966
      %v6971 = vand.u32 2147483647, %v6662
      %vm6972 = vcmp.eq.f32.partialorder %v6971, 8.507059e+37
      %v6973 = vand.u32 %v6662, 2147483648
      %v6974 = vor.u32 1.1754944e-38, %v6973
      %v6975 = vsel %vm6972, %v6974, %v6970
      %v6976 = vmul.f32 1.0, %v6975
      %v6977 = vrcp.pop %v6663
      %v6978 = vmul.f32 %v6663, %v6977
      %v6979 = vsub.f32 1.0, %v6978
      %v6980 = vmul.f32 %v6977, %v6979
      %v6981 = vadd.f32 %v6977, %v6980
      %vm6982 = vweird.f32 %v6663
      %vm6983 = vweird.f32 %v6977
      %vm6984 = vmor %vm6982, %vm6983
      %v6985 = vsel %vm6984, %v6977, %v6981
      %v6986 = vand.u32 2147483647, %v6663
      %vm6987 = vcmp.eq.f32.partialorder %v6986, 8.507059e+37
      %v6988 = vand.u32 %v6663, 2147483648
      %v6989 = vor.u32 1.1754944e-38, %v6988
      %v6990 = vsel %vm6987, %v6989, %v6985
      %v6991 = vmul.f32 1.0, %v6990
      %v6992 = vrcp.pop %v6664
      %v6993 = vmul.f32 %v6664, %v6992
      %v6994 = vsub.f32 1.0, %v6993
      %v6995 = vmul.f32 %v6992, %v6994
      %v6996 = vadd.f32 %v6992, %v6995
      %vm6997 = vweird.f32 %v6664
      %vm6998 = vweird.f32 %v6992
      %vm6999 = vmor %vm6997, %vm6998
      %v7000 = vsel %vm6999, %v6992, %v6996
      %v7001 = vand.u32 2147483647, %v6664
      %vm7002 = vcmp.eq.f32.partialorder %v7001, 8.507059e+37
      %v7003 = vand.u32 %v6664, 2147483648
      %v7004 = vor.u32 1.1754944e-38, %v7003
      %v7005 = vsel %vm7002, %v7004, %v7000
      %v7006 = vmul.f32 1.0, %v7005
      %v7007 = vrcp.pop %v6665
      %v7008 = vmul.f32 %v6665, %v7007
      %v7009 = vsub.f32 1.0, %v7008
      %v7010 = vmul.f32 %v7007, %v7009
      %v7011 = vadd.f32 %v7007, %v7010
      %vm7012 = vweird.f32 %v6665
      %vm7013 = vweird.f32 %v7007
      %vm7014 = vmor %vm7012, %vm7013
      %v7015 = vsel %vm7014, %v7007, %v7011
      %v7016 = vand.u32 2147483647, %v6665
      %vm7017 = vcmp.eq.f32.partialorder %v7016, 8.507059e+37
      %v7018 = vand.u32 %v6665, 2147483648
      %v7019 = vor.u32 1.1754944e-38, %v7018
      %v7020 = vsel %vm7017, %v7019, %v7015
      %v7021 = vmul.f32 1.0, %v7020
      %v7022 = vrcp.pop %v6666
      %v7023 = vmul.f32 %v6666, %v7022
      %v7024 = vsub.f32 1.0, %v7023
      %v7025 = vmul.f32 %v7022, %v7024
      %v7026 = vadd.f32 %v7022, %v7025
      %vm7027 = vweird.f32 %v6666
      %vm7028 = vweird.f32 %v7022
      %vm7029 = vmor %vm7027, %vm7028
      %v7030 = vsel %vm7029, %v7022, %v7026
      %v7031 = vand.u32 2147483647, %v6666
      %vm7032 = vcmp.eq.f32.partialorder %v7031, 8.507059e+37
      %v7033 = vand.u32 %v6666, 2147483648
      %v7034 = vor.u32 1.1754944e-38, %v7033
      %v7035 = vsel %vm7032, %v7034, %v7030
      %v7036 = vmul.f32 1.0, %v7035
      %v7037 = vrcp.pop %v6667
      %v7038 = vmul.f32 %v6667, %v7037
      %v7039 = vsub.f32 1.0, %v7038
      %v7040 = vmul.f32 %v7037, %v7039
      %v7041 = vadd.f32 %v7037, %v7040
      %vm7042 = vweird.f32 %v6667
      %vm7043 = vweird.f32 %v7037
      %vm7044 = vmor %vm7042, %vm7043
      %v7045 = vsel %vm7044, %v7037, %v7041
      %v7046 = vand.u32 2147483647, %v6667
      %vm7047 = vcmp.eq.f32.partialorder %v7046, 8.507059e+37
      %v7048 = vand.u32 %v6667, 2147483648
      %v7049 = vor.u32 1.1754944e-38, %v7048
      %v7050 = vsel %vm7047, %v7049, %v7045
      %v7051 = vmul.f32 1.0, %v7050
      %v7052 = vrcp.pop %v6668
      %v7053 = vmul.f32 %v6668, %v7052
      %v7054 = vsub.f32 1.0, %v7053
      %v7055 = vmul.f32 %v7052, %v7054
      %v7056 = vadd.f32 %v7052, %v7055
      %vm7057 = vweird.f32 %v6668
      %vm7058 = vweird.f32 %v7052
      %vm7059 = vmor %vm7057, %vm7058
      %v7060 = vsel %vm7059, %v7052, %v7056
      %v7061 = vand.u32 2147483647, %v6668
      %vm7062 = vcmp.eq.f32.partialorder %v7061, 8.507059e+37
      %v7063 = vand.u32 %v6668, 2147483648
      %v7064 = vor.u32 1.1754944e-38, %v7063
      %v7065 = vsel %vm7062, %v7064, %v7060
      %v7066 = vmul.f32 1.0, %v7065
      %v7067 = vrcp.pop %v6669
      %v7068 = vmul.f32 %v6669, %v7067
      %v7069 = vsub.f32 1.0, %v7068
      %v7070 = vmul.f32 %v7067, %v7069
      %v7071 = vadd.f32 %v7067, %v7070
      %vm7072 = vweird.f32 %v6669
      %vm7073 = vweird.f32 %v7067
      %vm7074 = vmor %vm7072, %vm7073
      %v7075 = vsel %vm7074, %v7067, %v7071
      %v7076 = vand.u32 2147483647, %v6669
      %vm7077 = vcmp.eq.f32.partialorder %v7076, 8.507059e+37
      %v7078 = vand.u32 %v6669, 2147483648
      %v7079 = vor.u32 1.1754944e-38, %v7078
      %v7080 = vsel %vm7077, %v7079, %v7075
      %v7081 = vmul.f32 1.0, %v7080
      %v7082 = vrcp.pop %v6670
      %v7083 = vmul.f32 %v6670, %v7082
      %v7084 = vsub.f32 1.0, %v7083
      %v7085 = vmul.f32 %v7082, %v7084
      %v7086 = vadd.f32 %v7082, %v7085
      %vm7087 = vweird.f32 %v6670
      %vm7088 = vweird.f32 %v7082
      %vm7089 = vmor %vm7087, %vm7088
      %v7090 = vsel %vm7089, %v7082, %v7086
      %v7091 = vand.u32 2147483647, %v6670
      %vm7092 = vcmp.eq.f32.partialorder %v7091, 8.507059e+37
      %v7093 = vand.u32 %v6670, 2147483648
      %v7094 = vor.u32 1.1754944e-38, %v7093
      %v7095 = vsel %vm7092, %v7094, %v7090
      %v7096 = vmul.f32 1.0, %v7095
      %v7097 = vrcp.pop %v6671
      %v7098 = vmul.f32 %v6671, %v7097
      %v7099 = vsub.f32 1.0, %v7098
      %v7100 = vmul.f32 %v7097, %v7099
      %v7101 = vadd.f32 %v7097, %v7100
      %vm7102 = vweird.f32 %v6671
      %vm7103 = vweird.f32 %v7097
      %vm7104 = vmor %vm7102, %vm7103
      %v7105 = vsel %vm7104, %v7097, %v7101
      %v7106 = vand.u32 2147483647, %v6671
      %vm7107 = vcmp.eq.f32.partialorder %v7106, 8.507059e+37
      %v7108 = vand.u32 %v6671, 2147483648
      %v7109 = vor.u32 1.1754944e-38, %v7108
      %v7110 = vsel %vm7107, %v7109, %v7105
      %v7111 = vmul.f32 1.0, %v7110
      %v7112 = vrcp.pop %v6672
      %v7113 = vmul.f32 %v6672, %v7112
      %v7114 = vsub.f32 1.0, %v7113
      %v7115 = vmul.f32 %v7112, %v7114
      %v7116 = vadd.f32 %v7112, %v7115
      %vm7117 = vweird.f32 %v6672
      %vm7118 = vweird.f32 %v7112
      %vm7119 = vmor %vm7117, %vm7118
      %v7120 = vsel %vm7119, %v7112, %v7116
      %v7121 = vand.u32 2147483647, %v6672
      %vm7122 = vcmp.eq.f32.partialorder %v7121, 8.507059e+37
      %v7123 = vand.u32 %v6672, 2147483648
      %v7124 = vor.u32 1.1754944e-38, %v7123
      %v7125 = vsel %vm7122, %v7124, %v7120
      %v7126 = vmul.f32 1.0, %v7125
      %v7127 = vrcp.pop %v6673
      %v7128 = vmul.f32 %v6673, %v7127
      %v7129 = vsub.f32 1.0, %v7128
      %v7130 = vmul.f32 %v7127, %v7129
      %v7131 = vadd.f32 %v7127, %v7130
      %vm7132 = vweird.f32 %v6673
      %vm7133 = vweird.f32 %v7127
      %vm7134 = vmor %vm7132, %vm7133
      %v7135 = vsel %vm7134, %v7127, %v7131
      %v7136 = vand.u32 2147483647, %v6673
      %vm7137 = vcmp.eq.f32.partialorder %v7136, 8.507059e+37
      %v7138 = vand.u32 %v6673, 2147483648
      %v7139 = vor.u32 1.1754944e-38, %v7138
      %v7140 = vsel %vm7137, %v7139, %v7135
      %v7141 = vmul.f32 1.0, %v7140
      %v7142 = vrcp.pop %v6674
      %v7143 = vmul.f32 %v6674, %v7142
      %v7144 = vsub.f32 1.0, %v7143
      %v7145 = vmul.f32 %v7142, %v7144
      %v7146 = vadd.f32 %v7142, %v7145
      %vm7147 = vweird.f32 %v6674
      %vm7148 = vweird.f32 %v7142
      %vm7149 = vmor %vm7147, %vm7148
      %v7150 = vsel %vm7149, %v7142, %v7146
      %v7151 = vand.u32 2147483647, %v6674
      %vm7152 = vcmp.eq.f32.partialorder %v7151, 8.507059e+37
      %v7153 = vand.u32 %v6674, 2147483648
      %v7154 = vor.u32 1.1754944e-38, %v7153
      %v7155 = vsel %vm7152, %v7154, %v7150
      %v7156 = vmul.f32 1.0, %v7155
      %v7157 = vrcp.pop %v6675
      %v7158 = vmul.f32 %v6675, %v7157
      %v7159 = vsub.f32 1.0, %v7158
      %v7160 = vmul.f32 %v7157, %v7159
      %v7161 = vadd.f32 %v7157, %v7160
      %vm7162 = vweird.f32 %v6675
      %vm7163 = vweird.f32 %v7157
      %vm7164 = vmor %vm7162, %vm7163
      %v7165 = vsel %vm7164, %v7157, %v7161
      %v7166 = vand.u32 2147483647, %v6675
      %vm7167 = vcmp.eq.f32.partialorder %v7166, 8.507059e+37
      %v7168 = vand.u32 %v6675, 2147483648
      %v7169 = vor.u32 1.1754944e-38, %v7168
      %v7170 = vsel %vm7167, %v7169, %v7165
      %v7171 = vmul.f32 1.0, %v7170
      %v7172 = vrcp.pop %v6676
      %v7173 = vmul.f32 %v6676, %v7172
      %v7174 = vsub.f32 1.0, %v7173
      %v7175 = vmul.f32 %v7172, %v7174
      %v7176 = vadd.f32 %v7172, %v7175
      %vm7177 = vweird.f32 %v6676
      %vm7178 = vweird.f32 %v7172
      %vm7179 = vmor %vm7177, %vm7178
      %v7180 = vsel %vm7179, %v7172, %v7176
      %v7181 = vand.u32 2147483647, %v6676
      %vm7182 = vcmp.eq.f32.partialorder %v7181, 8.507059e+37
      %v7183 = vand.u32 %v6676, 2147483648
      %v7184 = vor.u32 1.1754944e-38, %v7183
      %v7185 = vsel %vm7182, %v7184, %v7180
      %v7186 = vmul.f32 1.0, %v7185
      %v7187 = vmul.f32 %v6691, 1.0614054
      %v7188 = vmul.f32 %v6706, 1.0614054
      %v7189 = vmul.f32 %v6721, 1.0614054
      %v7190 = vmul.f32 %v6736, 1.0614054
      %v7191 = vmul.f32 %v6751, 1.0614054
      %v7192 = vmul.f32 %v6766, 1.0614054
      %v7193 = vmul.f32 %v6781, 1.0614054
      %v7194 = vmul.f32 %v6796, 1.0614054
      %v7195 = vmul.f32 %v6811, 1.0614054
      %v7196 = vmul.f32 %v6826, 1.0614054
      %v7197 = vmul.f32 %v6841, 1.0614054
      %v7198 = vmul.f32 %v6856, 1.0614054
      %v7199 = vmul.f32 %v6871, 1.0614054
      %v7200 = vmul.f32 %v6886, 1.0614054
      %v7201 = vmul.f32 %v6901, 1.0614054
      %v7202 = vmul.f32 %v6916, 1.0614054
      %v7203 = vmul.f32 %v6931, 1.0614054
      %v7204 = vmul.f32 %v6946, 1.0614054
      %v7205 = vmul.f32 %v6961, 1.0614054
      %v7206 = vmul.f32 %v6976, 1.0614054
      %v7207 = vmul.f32 %v6991, 1.0614054
      %v7208 = vmul.f32 %v7006, 1.0614054
      %v7209 = vmul.f32 %v7021, 1.0614054
      %v7210 = vmul.f32 %v7036, 1.0614054
      %v7211 = vmul.f32 %v7051, 1.0614054
      %v7212 = vmul.f32 %v7066, 1.0614054
      %v7213 = vmul.f32 %v7081, 1.0614054
      %v7214 = vmul.f32 %v7096, 1.0614054
      %v7215 = vmul.f32 %v7111, 1.0614054
      %v7216 = vmul.f32 %v7126, 1.0614054
      %v7217 = vmul.f32 %v7141, 1.0614054
      %v7218 = vmul.f32 %v7156, 1.0614054
      %v7219 = vmul.f32 %v7171, 1.0614054
      %v7220 = vmul.f32 %v7186, 1.0614054
      %v7221 = vadd.f32 %v7187, -1.4531521
      %v7222 = vadd.f32 %v7188, -1.4531521
      %v7223 = vadd.f32 %v7189, -1.4531521
      %v7224 = vadd.f32 %v7190, -1.4531521
      %v7225 = vadd.f32 %v7191, -1.4531521
      %v7226 = vadd.f32 %v7192, -1.4531521
      %v7227 = vadd.f32 %v7193, -1.4531521
      %v7228 = vadd.f32 %v7194, -1.4531521
      %v7229 = vadd.f32 %v7195, -1.4531521
      %v7230 = vadd.f32 %v7196, -1.4531521
      %v7231 = vadd.f32 %v7197, -1.4531521
      %v7232 = vadd.f32 %v7198, -1.4531521
      %v7233 = vadd.f32 %v7199, -1.4531521
      %v7234 = vadd.f32 %v7200, -1.4531521
      %v7235 = vadd.f32 %v7201, -1.4531521
      %v7236 = vadd.f32 %v7202, -1.4531521
      %v7237 = vadd.f32 %v7203, -1.4531521
      %v7238 = vadd.f32 %v7204, -1.4531521
      %v7239 = vadd.f32 %v7205, -1.4531521
      %v7240 = vadd.f32 %v7206, -1.4531521
      %v7241 = vadd.f32 %v7207, -1.4531521
      %v7242 = vadd.f32 %v7208, -1.4531521
      %v7243 = vadd.f32 %v7209, -1.4531521
      %v7244 = vadd.f32 %v7210, -1.4531521
      %v7245 = vadd.f32 %v7211, -1.4531521
      %v7246 = vadd.f32 %v7212, -1.4531521
      %v7247 = vadd.f32 %v7213, -1.4531521
      %v7248 = vadd.f32 %v7214, -1.4531521
      %v7249 = vadd.f32 %v7215, -1.4531521
      %v7250 = vadd.f32 %v7216, -1.4531521
      %v7251 = vadd.f32 %v7217, -1.4531521
      %v7252 = vadd.f32 %v7218, -1.4531521
      %v7253 = vadd.f32 %v7219, -1.4531521
      %v7254 = vadd.f32 %v7220, -1.4531521
      %v7255 = vmul.f32 %v7221, %v6691
      %v7256 = vmul.f32 %v7222, %v6706
      %v7257 = vmul.f32 %v7223, %v6721
      %v7258 = vmul.f32 %v7224, %v6736
      %v7259 = vmul.f32 %v7225, %v6751
      %v7260 = vmul.f32 %v7226, %v6766
      %v7261 = vmul.f32 %v7227, %v6781
      %v7262 = vmul.f32 %v7228, %v6796
      %v7263 = vmul.f32 %v7229, %v6811
      %v7264 = vmul.f32 %v7230, %v6826
      %v7265 = vmul.f32 %v7231, %v6841
      %v7266 = vmul.f32 %v7232, %v6856
      %v7267 = vmul.f32 %v7233, %v6871
      %v7268 = vmul.f32 %v7234, %v6886
      %v7269 = vmul.f32 %v7235, %v6901
      %v7270 = vmul.f32 %v7236, %v6916
      %v7271 = vmul.f32 %v7237, %v6931
      %v7272 = vmul.f32 %v7238, %v6946
      %v7273 = vmul.f32 %v7239, %v6961
      %v7274 = vmul.f32 %v7240, %v6976
      %v7275 = vmul.f32 %v7241, %v6991
      %v7276 = vmul.f32 %v7242, %v7006
      %v7277 = vmul.f32 %v7243, %v7021
      %v7278 = vmul.f32 %v7244, %v7036
      %v7279 = vmul.f32 %v7245, %v7051
      %v7280 = vmul.f32 %v7246, %v7066
      %v7281 = vmul.f32 %v7247, %v7081
      %v7282 = vmul.f32 %v7248, %v7096
      %v7283 = vmul.f32 %v7249, %v7111
      %v7284 = vmul.f32 %v7250, %v7126
      %v7285 = vmul.f32 %v7251, %v7141
      %v7286 = vmul.f32 %v7252, %v7156
      %v7287 = vmul.f32 %v7253, %v7171
      %v7288 = vmul.f32 %v7254, %v7186
      %v7289 = vadd.f32 %v7255, 1.4214138
      %v7290 = vadd.f32 %v7256, 1.4214138
      %v7291 = vadd.f32 %v7257, 1.4214138
      %v7292 = vadd.f32 %v7258, 1.4214138
      %v7293 = vadd.f32 %v7259, 1.4214138
      %v7294 = vadd.f32 %v7260, 1.4214138
      %v7295 = vadd.f32 %v7261, 1.4214138
      %v7296 = vadd.f32 %v7262, 1.4214138
      %v7297 = vadd.f32 %v7263, 1.4214138
      %v7298 = vadd.f32 %v7264, 1.4214138
      %v7299 = vadd.f32 %v7265, 1.4214138
      %v7300 = vadd.f32 %v7266, 1.4214138
      %v7301 = vadd.f32 %v7267, 1.4214138
      %v7302 = vadd.f32 %v7268, 1.4214138
      %v7303 = vadd.f32 %v7269, 1.4214138
      %v7304 = vadd.f32 %v7270, 1.4214138
      %v7305 = vadd.f32 %v7271, 1.4214138
      %v7306 = vadd.f32 %v7272, 1.4214138
      %v7307 = vadd.f32 %v7273, 1.4214138
      %v7308 = vadd.f32 %v7274, 1.4214138
      %v7309 = vadd.f32 %v7275, 1.4214138
      %v7310 = vadd.f32 %v7276, 1.4214138
      %v7311 = vadd.f32 %v7277, 1.4214138
      %v7312 = vadd.f32 %v7278, 1.4214138
      %v7313 = vadd.f32 %v7279, 1.4214138
      %v7314 = vadd.f32 %v7280, 1.4214138
      %v7315 = vadd.f32 %v7281, 1.4214138
      %v7316 = vadd.f32 %v7282, 1.4214138
      %v7317 = vadd.f32 %v7283, 1.4214138
      %v7318 = vadd.f32 %v7284, 1.4214138
      %v7319 = vadd.f32 %v7285, 1.4214138
      %v7320 = vadd.f32 %v7286, 1.4214138
      %v7321 = vadd.f32 %v7287, 1.4214138
      %v7322 = vadd.f32 %v7288, 1.4214138
      %v7323 = vmul.f32 %v7289, %v6691
      %v7324 = vmul.f32 %v7290, %v6706
      %v7325 = vmul.f32 %v7291, %v6721
      %v7326 = vmul.f32 %v7292, %v6736
      %v7327 = vmul.f32 %v7293, %v6751
      %v7328 = vmul.f32 %v7294, %v6766
      %v7329 = vmul.f32 %v7295, %v6781
      %v7330 = vmul.f32 %v7296, %v6796
      %v7331 = vmul.f32 %v7297, %v6811
      %v7332 = vmul.f32 %v7298, %v6826
      %v7333 = vmul.f32 %v7299, %v6841
      %v7334 = vmul.f32 %v7300, %v6856
      %v7335 = vmul.f32 %v7301, %v6871
      %v7336 = vmul.f32 %v7302, %v6886
      %v7337 = vmul.f32 %v7303, %v6901
      %v7338 = vmul.f32 %v7304, %v6916
      %v7339 = vmul.f32 %v7305, %v6931
      %v7340 = vmul.f32 %v7306, %v6946
      %v7341 = vmul.f32 %v7307, %v6961
      %v7342 = vmul.f32 %v7308, %v6976
      %v7343 = vmul.f32 %v7309, %v6991
      %v7344 = vmul.f32 %v7310, %v7006
      %v7345 = vmul.f32 %v7311, %v7021
      %v7346 = vmul.f32 %v7312, %v7036
      %v7347 = vmul.f32 %v7313, %v7051
      %v7348 = vmul.f32 %v7314, %v7066
      %v7349 = vmul.f32 %v7315, %v7081
      %v7350 = vmul.f32 %v7316, %v7096
      %v7351 = vmul.f32 %v7317, %v7111
      %v7352 = vmul.f32 %v7318, %v7126
      %v7353 = vmul.f32 %v7319, %v7141
      %v7354 = vmul.f32 %v7320, %v7156
      %v7355 = vmul.f32 %v7321, %v7171
      %v7356 = vmul.f32 %v7322, %v7186
      %v7357 = vadd.f32 %v7323, -0.28449672
      %v7358 = vadd.f32 %v7324, -0.28449672
      %v7359 = vadd.f32 %v7325, -0.28449672
      %v7360 = vadd.f32 %v7326, -0.28449672
      %v7361 = vadd.f32 %v7327, -0.28449672
      %v7362 = vadd.f32 %v7328, -0.28449672
      %v7363 = vadd.f32 %v7329, -0.28449672
      %v7364 = vadd.f32 %v7330, -0.28449672
      %v7365 = vadd.f32 %v7331, -0.28449672
      %v7366 = vadd.f32 %v7332, -0.28449672
      %v7367 = vadd.f32 %v7333, -0.28449672
      %v7368 = vadd.f32 %v7334, -0.28449672
      %v7369 = vadd.f32 %v7335, -0.28449672
      %v7370 = vadd.f32 %v7336, -0.28449672
      %v7371 = vadd.f32 %v7337, -0.28449672
      %v7372 = vadd.f32 %v7338, -0.28449672
      %v7373 = vadd.f32 %v7339, -0.28449672
      %v7374 = vadd.f32 %v7340, -0.28449672
      %v7375 = vadd.f32 %v7341, -0.28449672
      %v7376 = vadd.f32 %v7342, -0.28449672
      %v7377 = vadd.f32 %v7343, -0.28449672
      %v7378 = vadd.f32 %v7344, -0.28449672
      %v7379 = vadd.f32 %v7345, -0.28449672
      %v7380 = vadd.f32 %v7346, -0.28449672
      %v7381 = vadd.f32 %v7347, -0.28449672
      %v7382 = vadd.f32 %v7348, -0.28449672
      %v7383 = vadd.f32 %v7349, -0.28449672
      %v7384 = vadd.f32 %v7350, -0.28449672
      %v7385 = vadd.f32 %v7351, -0.28449672
      %v7386 = vadd.f32 %v7352, -0.28449672
      %v7387 = vadd.f32 %v7353, -0.28449672
      %v7388 = vadd.f32 %v7354, -0.28449672
      %v7389 = vadd.f32 %v7355, -0.28449672
      %v7390 = vadd.f32 %v7356, -0.28449672
      %v7391 = vmul.f32 %v7357, %v6691
      %v7392 = vmul.f32 %v7358, %v6706
      %v7393 = vmul.f32 %v7359, %v6721
      %v7394 = vmul.f32 %v7360, %v6736
      %v7395 = vmul.f32 %v7361, %v6751
      %v7396 = vmul.f32 %v7362, %v6766
      %v7397 = vmul.f32 %v7363, %v6781
      %v7398 = vmul.f32 %v7364, %v6796
      %v7399 = vmul.f32 %v7365, %v6811
      %v7400 = vmul.f32 %v7366, %v6826
      %v7401 = vmul.f32 %v7367, %v6841
      %v7402 = vmul.f32 %v7368, %v6856
      %v7403 = vmul.f32 %v7369, %v6871
      %v7404 = vmul.f32 %v7370, %v6886
      %v7405 = vmul.f32 %v7371, %v6901
      %v7406 = vmul.f32 %v7372, %v6916
      %v7407 = vmul.f32 %v7373, %v6931
      %v7408 = vmul.f32 %v7374, %v6946
      %v7409 = vmul.f32 %v7375, %v6961
      %v7410 = vmul.f32 %v7376, %v6976
      %v7411 = vmul.f32 %v7377, %v6991
      %v7412 = vmul.f32 %v7378, %v7006
      %v7413 = vmul.f32 %v7379, %v7021
      %v7414 = vmul.f32 %v7380, %v7036
      %v7415 = vmul.f32 %v7381, %v7051
      %v7416 = vmul.f32 %v7382, %v7066
      %v7417 = vmul.f32 %v7383, %v7081
      %v7418 = vmul.f32 %v7384, %v7096
      %v7419 = vmul.f32 %v7385, %v7111
      %v7420 = vmul.f32 %v7386, %v7126
      %v7421 = vmul.f32 %v7387, %v7141
      %v7422 = vmul.f32 %v7388, %v7156
      %v7423 = vmul.f32 %v7389, %v7171
      %v7424 = vmul.f32 %v7390, %v7186
      %v7425 = vadd.f32 %v7391, 0.2548296
      %v7426 = vadd.f32 %v7392, 0.2548296
      %v7427 = vadd.f32 %v7393, 0.2548296
      %v7428 = vadd.f32 %v7394, 0.2548296
      %v7429 = vadd.f32 %v7395, 0.2548296
      %v7430 = vadd.f32 %v7396, 0.2548296
      %v7431 = vadd.f32 %v7397, 0.2548296
      %v7432 = vadd.f32 %v7398, 0.2548296
      %v7433 = vadd.f32 %v7399, 0.2548296
      %v7434 = vadd.f32 %v7400, 0.2548296
      %v7435 = vadd.f32 %v7401, 0.2548296
      %v7436 = vadd.f32 %v7402, 0.2548296
      %v7437 = vadd.f32 %v7403, 0.2548296
      %v7438 = vadd.f32 %v7404, 0.2548296
      %v7439 = vadd.f32 %v7405, 0.2548296
      %v7440 = vadd.f32 %v7406, 0.2548296
      %v7441 = vadd.f32 %v7407, 0.2548296
      %v7442 = vadd.f32 %v7408, 0.2548296
      %v7443 = vadd.f32 %v7409, 0.2548296
      %v7444 = vadd.f32 %v7410, 0.2548296
      %v7445 = vadd.f32 %v7411, 0.2548296
      %v7446 = vadd.f32 %v7412, 0.2548296
      %v7447 = vadd.f32 %v7413, 0.2548296
      %v7448 = vadd.f32 %v7414, 0.2548296
      %v7449 = vadd.f32 %v7415, 0.2548296
      %v7450 = vadd.f32 %v7416, 0.2548296
      %v7451 = vadd.f32 %v7417, 0.2548296
      %v7452 = vadd.f32 %v7418, 0.2548296
      %v7453 = vadd.f32 %v7419, 0.2548296
      %v7454 = vadd.f32 %v7420, 0.2548296
      %v7455 = vadd.f32 %v7421, 0.2548296
      %v7456 = vadd.f32 %v7422, 0.2548296
      %v7457 = vadd.f32 %v7423, 0.2548296
      %v7458 = vadd.f32 %v7424, 0.2548296
      %v7459 = vmul.f32 %v7425, %v6691
      %v7460 = vmul.f32 %v7426, %v6706
      %v7461 = vmul.f32 %v7427, %v6721
      %v7462 = vmul.f32 %v7428, %v6736
      %v7463 = vmul.f32 %v7429, %v6751
      %v7464 = vmul.f32 %v7430, %v6766
      %v7465 = vmul.f32 %v7431, %v6781
      %v7466 = vmul.f32 %v7432, %v6796
      %v7467 = vmul.f32 %v7433, %v6811
      %v7468 = vmul.f32 %v7434, %v6826
      %v7469 = vmul.f32 %v7435, %v6841
      %v7470 = vmul.f32 %v7436, %v6856
      %v7471 = vmul.f32 %v7437, %v6871
      %v7472 = vmul.f32 %v7438, %v6886
      %v7473 = vmul.f32 %v7439, %v6901
      %v7474 = vmul.f32 %v7440, %v6916
      %v7475 = vmul.f32 %v7441, %v6931
      %v7476 = vmul.f32 %v7442, %v6946
      %v7477 = vmul.f32 %v7443, %v6961
      %v7478 = vmul.f32 %v7444, %v6976
      %v7479 = vmul.f32 %v7445, %v6991
      %v7480 = vmul.f32 %v7446, %v7006
      %v7481 = vmul.f32 %v7447, %v7021
      %v7482 = vmul.f32 %v7448, %v7036
      %v7483 = vmul.f32 %v7449, %v7051
      %v7484 = vmul.f32 %v7450, %v7066
      %v7485 = vmul.f32 %v7451, %v7081
      %v7486 = vmul.f32 %v7452, %v7096
      %v7487 = vmul.f32 %v7453, %v7111
      %v7488 = vmul.f32 %v7454, %v7126
      %v7489 = vmul.f32 %v7455, %v7141
      %v7490 = vmul.f32 %v7456, %v7156
      %v7491 = vmul.f32 %v7457, %v7171
      %v7492 = vmul.f32 %v7458, %v7186
      %v7493 = vsub.f32 0.0, %v6575
      %v7494 = vsub.f32 0.0, %v6576
      %v7495 = vsub.f32 0.0, %v6577
      %v7496 = vsub.f32 0.0, %v6578
      %v7497 = vsub.f32 0.0, %v6579
      %v7498 = vsub.f32 0.0, %v6580
      %v7499 = vsub.f32 0.0, %v6581
      %v7500 = vsub.f32 0.0, %v6582
      %v7501 = vsub.f32 0.0, %v6583
      %v7502 = vsub.f32 0.0, %v6584
      %v7503 = vsub.f32 0.0, %v6585
      %v7504 = vsub.f32 0.0, %v6586
      %v7505 = vsub.f32 0.0, %v6587
      %v7506 = vsub.f32 0.0, %v6588
      %v7507 = vsub.f32 0.0, %v6589
      %v7508 = vsub.f32 0.0, %v6590
      %v7509 = vsub.f32 0.0, %v6591
      %v7510 = vsub.f32 0.0, %v6592
      %v7511 = vsub.f32 0.0, %v6593
      %v7512 = vsub.f32 0.0, %v6594
      %v7513 = vsub.f32 0.0, %v6595
      %v7514 = vsub.f32 0.0, %v6596
      %v7515 = vsub.f32 0.0, %v6597
      %v7516 = vsub.f32 0.0, %v6598
      %v7517 = vsub.f32 0.0, %v6599
      %v7518 = vsub.f32 0.0, %v6600
      %v7519 = vsub.f32 0.0, %v6601
      %v7520 = vsub.f32 0.0, %v6602
      %v7521 = vsub.f32 0.0, %v6603
      %v7522 = vsub.f32 0.0, %v6604
      %v7523 = vsub.f32 0.0, %v6605
      %v7524 = vsub.f32 0.0, %v6606
      %v7525 = vsub.f32 0.0, %v6607
      %v7526 = vsub.f32 0.0, %v6608
      %v7527 = vmul.f32 %v7493, %v6575
      %v7528 = vmul.f32 %v7494, %v6576
      %v7529 = vmul.f32 %v7495, %v6577
      %v7530 = vmul.f32 %v7496, %v6578
      %v7531 = vmul.f32 %v7497, %v6579
      %v7532 = vmul.f32 %v7498, %v6580
      %v7533 = vmul.f32 %v7499, %v6581
      %v7534 = vmul.f32 %v7500, %v6582
      %v7535 = vmul.f32 %v7501, %v6583
      %v7536 = vmul.f32 %v7502, %v6584
      %v7537 = vmul.f32 %v7503, %v6585
      %v7538 = vmul.f32 %v7504, %v6586
      %v7539 = vmul.f32 %v7505, %v6587
      %v7540 = vmul.f32 %v7506, %v6588
      %v7541 = vmul.f32 %v7507, %v6589
      %v7542 = vmul.f32 %v7508, %v6590
      %v7543 = vmul.f32 %v7509, %v6591
      %v7544 = vmul.f32 %v7510, %v6592
      %v7545 = vmul.f32 %v7511, %v6593
      %v7546 = vmul.f32 %v7512, %v6594
      %v7547 = vmul.f32 %v7513, %v6595
      %v7548 = vmul.f32 %v7514, %v6596
      %v7549 = vmul.f32 %v7515, %v6597
      %v7550 = vmul.f32 %v7516, %v6598
      %v7551 = vmul.f32 %v7517, %v6599
      %v7552 = vmul.f32 %v7518, %v6600
      %v7553 = vmul.f32 %v7519, %v6601
      %v7554 = vmul.f32 %v7520, %v6602
      %v7555 = vmul.f32 %v7521, %v6603
      %v7556 = vmul.f32 %v7522, %v6604
      %v7557 = vmul.f32 %v7523, %v6605
      %v7558 = vmul.f32 %v7524, %v6606
      %v7559 = vmul.f32 %v7525, %v6607
      %v7560 = vmul.f32 %v7526, %v6608
      %v7561 = vmul.f32 %v7527, 1.442695
      %v7562 = vpow.pop %v7561
      %v7563 = vmul.f32 %v7528, 1.442695
      %v7564 = vpow.pop %v7563
      %v7565 = vmul.f32 %v7529, 1.442695
      %v7566 = vpow.pop %v7565
      %v7567 = vmul.f32 %v7530, 1.442695
      %v7568 = vpow.pop %v7567
      %v7569 = vmul.f32 %v7531, 1.442695
      %v7570 = vpow.pop %v7569
      %v7571 = vmul.f32 %v7532, 1.442695
      %v7572 = vpow.pop %v7571
      %v7573 = vmul.f32 %v7533, 1.442695
      %v7574 = vpow.pop %v7573
      %v7575 = vmul.f32 %v7534, 1.442695
      %v7576 = vpow.pop %v7575
      %v7577 = vmul.f32 %v7535, 1.442695
      %v7578 = vpow.pop %v7577
      %v7579 = vmul.f32 %v7536, 1.442695
      %v7580 = vpow.pop %v7579
      %v7581 = vmul.f32 %v7537, 1.442695
      %v7582 = vpow.pop %v7581
      %v7583 = vmul.f32 %v7538, 1.442695
      %v7584 = vpow.pop %v7583
      %v7585 = vmul.f32 %v7539, 1.442695
      %v7586 = vpow.pop %v7585
      %v7587 = vmul.f32 %v7540, 1.442695
      %v7588 = vpow.pop %v7587
      %v7589 = vmul.f32 %v7541, 1.442695
      %v7590 = vpow.pop %v7589
      %v7591 = vmul.f32 %v7542, 1.442695
      %v7592 = vpow.pop %v7591
      %v7593 = vmul.f32 %v7543, 1.442695
      %v7594 = vpow.pop %v7593
      %v7595 = vmul.f32 %v7544, 1.442695
      %v7596 = vpow.pop %v7595
      %v7597 = vmul.f32 %v7545, 1.442695
      %v7598 = vpow.pop %v7597
      %v7599 = vmul.f32 %v7546, 1.442695
      %v7600 = vpow.pop %v7599
      %v7601 = vmul.f32 %v7547, 1.442695
      %v7602 = vpow.pop %v7601
      %v7603 = vmul.f32 %v7548, 1.442695
      %v7604 = vpow.pop %v7603
      %v7605 = vmul.f32 %v7549, 1.442695
      %v7606 = vpow.pop %v7605
      %v7607 = vmul.f32 %v7550, 1.442695
      %v7608 = vpow.pop %v7607
      %v7609 = vmul.f32 %v7551, 1.442695
      %v7610 = vpow.pop %v7609
      %v7611 = vmul.f32 %v7552, 1.442695
      %v7612 = vpow.pop %v7611
      %v7613 = vmul.f32 %v7553, 1.442695
      %v7614 = vpow.pop %v7613
      %v7615 = vmul.f32 %v7554, 1.442695
      %v7616 = vpow.pop %v7615
      %v7617 = vmul.f32 %v7555, 1.442695
      %v7618 = vpow.pop %v7617
      %v7619 = vmul.f32 %v7556, 1.442695
      %v7620 = vpow.pop %v7619
      %v7621 = vmul.f32 %v7557, 1.442695
      %v7622 = vpow.pop %v7621
      %v7623 = vmul.f32 %v7558, 1.442695
      %v7624 = vpow.pop %v7623
      %v7625 = vmul.f32 %v7559, 1.442695
      %v7626 = vpow.pop %v7625
      %v7627 = vmul.f32 %v7560, 1.442695
      %v7628 = vpow.pop %v7627
      %v7629 = vmul.f32 %v7459, %v7562
      %v7630 = vmul.f32 %v7460, %v7564
      %v7631 = vmul.f32 %v7461, %v7566
      %v7632 = vmul.f32 %v7462, %v7568
      %v7633 = vmul.f32 %v7463, %v7570
      %v7634 = vmul.f32 %v7464, %v7572
      %v7635 = vmul.f32 %v7465, %v7574
      %v7636 = vmul.f32 %v7466, %v7576
      %v7637 = vmul.f32 %v7467, %v7578
      %v7638 = vmul.f32 %v7468, %v7580
      %v7639 = vmul.f32 %v7469, %v7582
      %v7640 = vmul.f32 %v7470, %v7584
      %v7641 = vmul.f32 %v7471, %v7586
      %v7642 = vmul.f32 %v7472, %v7588
      %v7643 = vmul.f32 %v7473, %v7590
      %v7644 = vmul.f32 %v7474, %v7592
      %v7645 = vmul.f32 %v7475, %v7594
      %v7646 = vmul.f32 %v7476, %v7596
      %v7647 = vmul.f32 %v7477, %v7598
      %v7648 = vmul.f32 %v7478, %v7600
      %v7649 = vmul.f32 %v7479, %v7602
      %v7650 = vmul.f32 %v7480, %v7604
      %v7651 = vmul.f32 %v7481, %v7606
      %v7652 = vmul.f32 %v7482, %v7608
      %v7653 = vmul.f32 %v7483, %v7610
      %v7654 = vmul.f32 %v7484, %v7612
      %v7655 = vmul.f32 %v7485, %v7614
      %v7656 = vmul.f32 %v7486, %v7616
      %v7657 = vmul.f32 %v7487, %v7618
      %v7658 = vmul.f32 %v7488, %v7620
      %v7659 = vmul.f32 %v7489, %v7622
      %v7660 = vmul.f32 %v7490, %v7624
      %v7661 = vmul.f32 %v7491, %v7626
      %v7662 = vmul.f32 %v7492, %v7628
      %v7663 = vsub.f32 1.0, %v7629
      %v7664 = vsub.f32 1.0, %v7630
      %v7665 = vsub.f32 1.0, %v7631
      %v7666 = vsub.f32 1.0, %v7632
      %v7667 = vsub.f32 1.0, %v7633
      %v7668 = vsub.f32 1.0, %v7634
      %v7669 = vsub.f32 1.0, %v7635
      %v7670 = vsub.f32 1.0, %v7636
      %v7671 = vsub.f32 1.0, %v7637
      %v7672 = vsub.f32 1.0, %v7638
      %v7673 = vsub.f32 1.0, %v7639
      %v7674 = vsub.f32 1.0, %v7640
      %v7675 = vsub.f32 1.0, %v7641
      %v7676 = vsub.f32 1.0, %v7642
      %v7677 = vsub.f32 1.0, %v7643
      %v7678 = vsub.f32 1.0, %v7644
      %v7679 = vsub.f32 1.0, %v7645
      %v7680 = vsub.f32 1.0, %v7646
      %v7681 = vsub.f32 1.0, %v7647
      %v7682 = vsub.f32 1.0, %v7648
      %v7683 = vsub.f32 1.0, %v7649
      %v7684 = vsub.f32 1.0, %v7650
      %v7685 = vsub.f32 1.0, %v7651
      %v7686 = vsub.f32 1.0, %v7652
      %v7687 = vsub.f32 1.0, %v7653
      %v7688 = vsub.f32 1.0, %v7654
      %v7689 = vsub.f32 1.0, %v7655
      %v7690 = vsub.f32 1.0, %v7656
      %v7691 = vsub.f32 1.0, %v7657
      %v7692 = vsub.f32 1.0, %v7658
      %v7693 = vsub.f32 1.0, %v7659
      %v7694 = vsub.f32 1.0, %v7660
      %v7695 = vsub.f32 1.0, %v7661
      %v7696 = vsub.f32 1.0, %v7662
      %v7697 = vmul.f32 %v6541, %v7663
      %v7698 = vmul.f32 %v6542, %v7664
      %v7699 = vmul.f32 %v6543, %v7665
      %v7700 = vmul.f32 %v6544, %v7666
      %v7701 = vmul.f32 %v6545, %v7667
      %v7702 = vmul.f32 %v6546, %v7668
      %v7703 = vmul.f32 %v6547, %v7669
      %v7704 = vmul.f32 %v6548, %v7670
      %v7705 = vmul.f32 %v6549, %v7671
      %v7706 = vmul.f32 %v6550, %v7672
      %v7707 = vmul.f32 %v6551, %v7673
      %v7708 = vmul.f32 %v6552, %v7674
      %v7709 = vmul.f32 %v6553, %v7675
      %v7710 = vmul.f32 %v6554, %v7676
      %v7711 = vmul.f32 %v6555, %v7677
      %v7712 = vmul.f32 %v6556, %v7678
      %v7713 = vmul.f32 %v6557, %v7679
      %v7714 = vmul.f32 %v6558, %v7680
      %v7715 = vmul.f32 %v6559, %v7681
      %v7716 = vmul.f32 %v6560, %v7682
      %v7717 = vmul.f32 %v6561, %v7683
      %v7718 = vmul.f32 %v6562, %v7684
      %v7719 = vmul.f32 %v6563, %v7685
      %v7720 = vmul.f32 %v6564, %v7686
      %v7721 = vmul.f32 %v6565, %v7687
      %v7722 = vmul.f32 %v6566, %v7688
      %v7723 = vmul.f32 %v6567, %v7689
      %v7724 = vmul.f32 %v6568, %v7690
      %v7725 = vmul.f32 %v6569, %v7691
      %v7726 = vmul.f32 %v6570, %v7692
      %v7727 = vmul.f32 %v6571, %v7693
      %v7728 = vmul.f32 %v6572, %v7694
      %v7729 = vmul.f32 %v6573, %v7695
      %v7730 = vmul.f32 %v6574, %v7696
      %v7731 = vadd.f32 %v7697, 1.0
      %v7732 = vadd.f32 %v7698, 1.0
      %v7733 = vadd.f32 %v7699, 1.0
      %v7734 = vadd.f32 %v7700, 1.0
      %v7735 = vadd.f32 %v7701, 1.0
      %v7736 = vadd.f32 %v7702, 1.0
      %v7737 = vadd.f32 %v7703, 1.0
      %v7738 = vadd.f32 %v7704, 1.0
      %v7739 = vadd.f32 %v7705, 1.0
      %v7740 = vadd.f32 %v7706, 1.0
      %v7741 = vadd.f32 %v7707, 1.0
      %v7742 = vadd.f32 %v7708, 1.0
      %v7743 = vadd.f32 %v7709, 1.0
      %v7744 = vadd.f32 %v7710, 1.0
      %v7745 = vadd.f32 %v7711, 1.0
      %v7746 = vadd.f32 %v7712, 1.0
      %v7747 = vadd.f32 %v7713, 1.0
      %v7748 = vadd.f32 %v7714, 1.0
      %v7749 = vadd.f32 %v7715, 1.0
      %v7750 = vadd.f32 %v7716, 1.0
      %v7751 = vadd.f32 %v7717, 1.0
      %v7752 = vadd.f32 %v7718, 1.0
      %v7753 = vadd.f32 %v7719, 1.0
      %v7754 = vadd.f32 %v7720, 1.0
      %v7755 = vadd.f32 %v7721, 1.0
      %v7756 = vadd.f32 %v7722, 1.0
      %v7757 = vadd.f32 %v7723, 1.0
      %v7758 = vadd.f32 %v7724, 1.0
      %v7759 = vadd.f32 %v7725, 1.0
      %v7760 = vadd.f32 %v7726, 1.0
      %v7761 = vadd.f32 %v7727, 1.0
      %v7762 = vadd.f32 %v7728, 1.0
      %v7763 = vadd.f32 %v7729, 1.0
      %v7764 = vadd.f32 %v7730, 1.0
      %v7765 = vmul.f32 %v6439, %v7731
      %v7766 = vmul.f32 %v6440, %v7732
      %v7767 = vmul.f32 %v6441, %v7733
      %v7768 = vmul.f32 %v6442, %v7734
      %v7769 = vmul.f32 %v6443, %v7735
      %v7770 = vmul.f32 %v6444, %v7736
      %v7771 = vmul.f32 %v6445, %v7737
      %v7772 = vmul.f32 %v6446, %v7738
      %v7773 = vmul.f32 %v6447, %v7739
      %v7774 = vmul.f32 %v6448, %v7740
      %v7775 = vmul.f32 %v6449, %v7741
      %v7776 = vmul.f32 %v6450, %v7742
      %v7777 = vmul.f32 %v6451, %v7743
      %v7778 = vmul.f32 %v6452, %v7744
      %v7779 = vmul.f32 %v6453, %v7745
      %v7780 = vmul.f32 %v6454, %v7746
      %v7781 = vmul.f32 %v6455, %v7747
      %v7782 = vmul.f32 %v6456, %v7748
      %v7783 = vmul.f32 %v6457, %v7749
      %v7784 = vmul.f32 %v6458, %v7750
      %v7785 = vmul.f32 %v6459, %v7751
      %v7786 = vmul.f32 %v6460, %v7752
      %v7787 = vmul.f32 %v6461, %v7753
      %v7788 = vmul.f32 %v6462, %v7754
      %v7789 = vmul.f32 %v6463, %v7755
      %v7790 = vmul.f32 %v6464, %v7756
      %v7791 = vmul.f32 %v6465, %v7757
      %v7792 = vmul.f32 %v6466, %v7758
      %v7793 = vmul.f32 %v6467, %v7759
      %v7794 = vmul.f32 %v6468, %v7760
      %v7795 = vmul.f32 %v6469, %v7761
      %v7796 = vmul.f32 %v6470, %v7762
      %v7797 = vmul.f32 %v6471, %v7763
      %v7798 = vmul.f32 %v6472, %v7764
      %s7799 = scalar_lea.vmem %s13, 256
      %v7800 = vld [vmem:[%s7799] sm:$0xff]
      %v7801 = vld [vmem:[%s7799 + $0x8] sm:$0xff]
      %v7802 = vld [vmem:[%s7799 + $0x10] sm:$0xff]
      %v7803 = vld [vmem:[%s7799 + $0x18] sm:$0xff]
      %v7804 = vld [vmem:[%s7799 + $0x20] sm:$0xff]
      %v7805 = vld [vmem:[%s7799 + $0x28] sm:$0xff]
      %v7806 = vld [vmem:[%s7799 + $0x30] sm:$0xff]
      %v7807 = vld [vmem:[%s7799 + $0x38] sm:$0xff]
      %v7808 = vld [vmem:[%s7799 + $0x40] sm:$0xff]
      %v7809 = vld [vmem:[%s7799 + $0x48] sm:$0xff]
      %v7810 = vld [vmem:[%s7799 + $0x50] sm:$0xff]
      %v7811 = vld [vmem:[%s7799 + $0x58] sm:$0xff]
      %v7812 = vld [vmem:[%s7799 + $0x60] sm:$0xff]
      %v7813 = vld [vmem:[%s7799 + $0x68] sm:$0xff]
      %v7814 = vld [vmem:[%s7799 + $0x70] sm:$0xff]
      %v7815 = vld [vmem:[%s7799 + $0x78] sm:$0xff]
      %v7816 = vld [vmem:[%s7799 + $0x80] sm:$0xff]
      %v7817 = vld [vmem:[%s7799 + $0x88] sm:$0xff]
      %v7818 = vld [vmem:[%s7799 + $0x90] sm:$0xff]
      %v7819 = vld [vmem:[%s7799 + $0x98] sm:$0xff]
      %v7820 = vld [vmem:[%s7799 + $0xa0] sm:$0xff]
      %v7821 = vld [vmem:[%s7799 + $0xa8] sm:$0xff]
      %v7822 = vld [vmem:[%s7799 + $0xb0] sm:$0xff]
      %v7823 = vld [vmem:[%s7799 + $0xb8] sm:$0xff]
      %v7824 = vld [vmem:[%s7799 + $0xc0] sm:$0xff]
      %v7825 = vld [vmem:[%s7799 + $0xc8] sm:$0xff]
      %v7826 = vld [vmem:[%s7799 + $0xd0] sm:$0xff]
      %v7827 = vld [vmem:[%s7799 + $0xd8] sm:$0xff]
      %v7828 = vld [vmem:[%s7799 + $0xe0] sm:$0xff]
      %v7829 = vld [vmem:[%s7799 + $0xe8] sm:$0xff]
      %v7830 = vld [vmem:[%s7799 + $0xf0] sm:$0xff]
      %v7831 = vld [vmem:[%s7799 + $0xf8] sm:$0xff]
      %s7832 = scalar_lea.vmem %s14, 1
      %v7833 = vld [vmem:[%s7832] sm:$0x1]
      %v7835 = vperm.slane %v7833, 0
      %7837 = vmatpush.msra.mxu0 %v7815
      %7838 = vmatpush.msra.mxu0 %v7814
      %7839 = vmatpush.msra.mxu0 %v7813
      %7840 = vmatpush.msra.mxu0 %v7812
      %7841 = vmatpush.msra.mxu0 %v7811
      %7842 = vmatpush.msra.mxu0 %v7810
      %7843 = vmatpush.msra.mxu0 %v7809
      %7844 = vmatpush.msra.mxu0 %v7808
      %7845 = vmatpush.msra.mxu0 %v7807
      %7846 = vmatpush.msra.mxu0 %v7806
      %7847 = vmatpush.msra.mxu0 %v7805
      %7848 = vmatpush.msra.mxu0 %v7804
      %7849 = vmatpush.msra.mxu0 %v7803
      %7850 = vmatpush.msra.mxu0 %v7802
      %7851 = vmatpush.msra.mxu0 %v7801
      %7852 = vmatpush.msra.mxu0 %v7800
      %7853 = vmatmul.f32.gmra.mxu0 %v7765
      %v7854 = vpop.f32.mrf.mxu0
      %v7855 = vadd.f32 %v7835, %v7854
      %7856 = vmatmul.f32.gmra.mxu0 %v7767
      %v7857 = vpop.f32.mrf.mxu0
      %v7858 = vadd.f32 %v7835, %v7857
      %7859 = vmatmul.f32.gmra.mxu0 %v7769
      %v7860 = vpop.f32.mrf.mxu0
      %v7861 = vadd.f32 %v7835, %v7860
      %7862 = vmatmul.f32.gmra.mxu0 %v7771
      %v7863 = vpop.f32.mrf.mxu0
      %v7864 = vadd.f32 %v7835, %v7863
      %7865 = vmatmul.f32.gmra.mxu0 %v7773
      %v7866 = vpop.f32.mrf.mxu0
      %v7867 = vadd.f32 %v7835, %v7866
      %7868 = vmatmul.f32.gmra.mxu0 %v7775
      %v7869 = vpop.f32.mrf.mxu0
      %v7870 = vadd.f32 %v7835, %v7869
      %7871 = vmatmul.f32.gmra.mxu0 %v7777
      %v7872 = vpop.f32.mrf.mxu0
      %v7873 = vadd.f32 %v7835, %v7872
      %7874 = vmatmul.f32.gmra.mxu0 %v7779
      %v7875 = vpop.f32.mrf.mxu0
      %v7876 = vadd.f32 %v7835, %v7875
      %7877 = vmatmul.f32.gmra.mxu0 %v7781
      %v7878 = vpop.f32.mrf.mxu0
      %v7879 = vadd.f32 %v7835, %v7878
      %7880 = vmatmul.f32.gmra.mxu0 %v7783
      %v7881 = vpop.f32.mrf.mxu0
      %v7882 = vadd.f32 %v7835, %v7881
      %7883 = vmatmul.f32.gmra.mxu0 %v7785
      %v7884 = vpop.f32.mrf.mxu0
      %v7885 = vadd.f32 %v7835, %v7884
      %7886 = vmatmul.f32.gmra.mxu0 %v7787
      %v7887 = vpop.f32.mrf.mxu0
      %v7888 = vadd.f32 %v7835, %v7887
      %7889 = vmatmul.f32.gmra.mxu0 %v7789
      %v7890 = vpop.f32.mrf.mxu0
      %v7891 = vadd.f32 %v7835, %v7890
      %7892 = vmatmul.f32.gmra.mxu0 %v7791
      %v7893 = vpop.f32.mrf.mxu0
      %v7894 = vadd.f32 %v7835, %v7893
      %7895 = vmatmul.f32.gmra.mxu0 %v7793
      %v7896 = vpop.f32.mrf.mxu0
      %v7897 = vadd.f32 %v7835, %v7896
      %7898 = vmatmul.f32.gmra.mxu0 %v7795
      %v7899 = vpop.f32.mrf.mxu0
      %v7900 = vadd.f32 %v7835, %v7899
      %7901 = vmatmul.f32.gmra.mxu0 %v7797
      %v7902 = vpop.f32.mrf.mxu0
      %v7903 = vadd.f32 %v7835, %v7902
      %7904 = vdwg.mxu0
      %7905 = vmatpush.msra.mxu0 %v7831
      %7906 = vmatpush.msra.mxu0 %v7830
      %7907 = vmatpush.msra.mxu0 %v7829
      %7908 = vmatpush.msra.mxu0 %v7828
      %7909 = vmatpush.msra.mxu0 %v7827
      %7910 = vmatpush.msra.mxu0 %v7826
      %7911 = vmatpush.msra.mxu0 %v7825
      %7912 = vmatpush.msra.mxu0 %v7824
      %7913 = vmatpush.msra.mxu0 %v7823
      %7914 = vmatpush.msra.mxu0 %v7822
      %7915 = vmatpush.msra.mxu0 %v7821
      %7916 = vmatpush.msra.mxu0 %v7820
      %7917 = vmatpush.msra.mxu0 %v7819
      %7918 = vmatpush.msra.mxu0 %v7818
      %7919 = vmatpush.msra.mxu0 %v7817
      %7920 = vmatpush.msra.mxu0 %v7816
      %7921 = vmatmul.f32.gmra.mxu0 %v7766
      %v7922 = vpop.f32.mrf.mxu0
      %v7923 = vadd.f32 %v7855, %v7922
      %7924 = vmatmul.f32.gmra.mxu0 %v7768
      %v7925 = vpop.f32.mrf.mxu0
      %v7926 = vadd.f32 %v7858, %v7925
      %7927 = vmatmul.f32.gmra.mxu0 %v7770
      %v7928 = vpop.f32.mrf.mxu0
      %v7929 = vadd.f32 %v7861, %v7928
      %7930 = vmatmul.f32.gmra.mxu0 %v7772
      %v7931 = vpop.f32.mrf.mxu0
      %v7932 = vadd.f32 %v7864, %v7931
      %7933 = vmatmul.f32.gmra.mxu0 %v7774
      %v7934 = vpop.f32.mrf.mxu0
      %v7935 = vadd.f32 %v7867, %v7934
      %7936 = vmatmul.f32.gmra.mxu0 %v7776
      %v7937 = vpop.f32.mrf.mxu0
      %v7938 = vadd.f32 %v7870, %v7937
      %7939 = vmatmul.f32.gmra.mxu0 %v7778
      %v7940 = vpop.f32.mrf.mxu0
      %v7941 = vadd.f32 %v7873, %v7940
      %7942 = vmatmul.f32.gmra.mxu0 %v7780
      %v7943 = vpop.f32.mrf.mxu0
      %v7944 = vadd.f32 %v7876, %v7943
      %7945 = vmatmul.f32.gmra.mxu0 %v7782
      %v7946 = vpop.f32.mrf.mxu0
      %v7947 = vadd.f32 %v7879, %v7946
      %7948 = vmatmul.f32.gmra.mxu0 %v7784
      %v7949 = vpop.f32.mrf.mxu0
      %v7950 = vadd.f32 %v7882, %v7949
      %7951 = vmatmul.f32.gmra.mxu0 %v7786
      %v7952 = vpop.f32.mrf.mxu0
      %v7953 = vadd.f32 %v7885, %v7952
      %7954 = vmatmul.f32.gmra.mxu0 %v7788
      %v7955 = vpop.f32.mrf.mxu0
      %v7956 = vadd.f32 %v7888, %v7955
      %7957 = vmatmul.f32.gmra.mxu0 %v7790
      %v7958 = vpop.f32.mrf.mxu0
      %v7959 = vadd.f32 %v7891, %v7958
      %7960 = vmatmul.f32.gmra.mxu0 %v7792
      %v7961 = vpop.f32.mrf.mxu0
      %v7962 = vadd.f32 %v7894, %v7961
      %7963 = vmatmul.f32.gmra.mxu0 %v7794
      %v7964 = vpop.f32.mrf.mxu0
      %v7965 = vadd.f32 %v7897, %v7964
      %7966 = vmatmul.f32.gmra.mxu0 %v7796
      %v7967 = vpop.f32.mrf.mxu0
      %v7968 = vadd.f32 %v7900, %v7967
      %7969 = vmatmul.f32.gmra.mxu0 %v7798
      %v7970 = vpop.f32.mrf.mxu0
      %v7971 = vadd.f32 %v7903, %v7970
      %7972 = vdwg.mxu0
      %v7973 = vadd.f32 %v5862, %v7923
      %v7974 = vadd.f32 %v5863, %v7926
      %v7975 = vadd.f32 %v5864, %v7929
      %v7976 = vadd.f32 %v5865, %v7932
      %v7977 = vadd.f32 %v5866, %v7935
      %v7978 = vadd.f32 %v5867, %v7938
      %v7979 = vadd.f32 %v5868, %v7941
      %v7980 = vadd.f32 %v5869, %v7944
      %v7981 = vadd.f32 %v5870, %v7947
      %v7982 = vadd.f32 %v5871, %v7950
      %v7983 = vadd.f32 %v5872, %v7953
      %v7984 = vadd.f32 %v5873, %v7956
      %v7985 = vadd.f32 %v5874, %v7959
      %v7986 = vadd.f32 %v5875, %v7962
      %v7987 = vadd.f32 %v5876, %v7965
      %v7988 = vadd.f32 %v5877, %v7968
      %v7989 = vadd.f32 %v5878, %v7971
      %v7990 = vld [vmem:[%s15] sm:$0x1]
      %v7991 = vld [vmem:[%s16] sm:$0x1]
      %7992 = vadd.xlane.f32.xlu0 %v7973
      %v7993 = vpop.xlane.xlu0 %7992
      %7994 = vadd.xlane.f32.xlu0 %v7974
      %v7995 = vpop.xlane.xlu0 %7994
      %7996 = vadd.xlane.f32.xlu0 %v7975
      %v7997 = vpop.xlane.xlu0 %7996
      %7998 = vadd.xlane.f32.xlu0 %v7976
      %v7999 = vpop.xlane.xlu0 %7998
      %8000 = vadd.xlane.f32.xlu0 %v7977
      %v8001 = vpop.xlane.xlu0 %8000
      %8002 = vadd.xlane.f32.xlu0 %v7978
      %v8003 = vpop.xlane.xlu0 %8002
      %8004 = vadd.xlane.f32.xlu0 %v7979
      %v8005 = vpop.xlane.xlu0 %8004
      %8006 = vadd.xlane.f32.xlu0 %v7980
      %v8007 = vpop.xlane.xlu0 %8006
      %8008 = vadd.xlane.f32.xlu0 %v7981
      %v8009 = vpop.xlane.xlu0 %8008
      %8010 = vadd.xlane.f32.xlu0 %v7982
      %v8011 = vpop.xlane.xlu0 %8010
      %8012 = vadd.xlane.f32.xlu0 %v7983
      %v8013 = vpop.xlane.xlu0 %8012
      %8014 = vadd.xlane.f32.xlu0 %v7984
      %v8015 = vpop.xlane.xlu0 %8014
      %8016 = vadd.xlane.f32.xlu0 %v7985
      %v8017 = vpop.xlane.xlu0 %8016
      %8018 = vadd.xlane.f32.xlu0 %v7986
      %v8019 = vpop.xlane.xlu0 %8018
      %8020 = vadd.xlane.f32.xlu0 %v7987
      %v8021 = vpop.xlane.xlu0 %8020
      %8022 = vadd.xlane.f32.xlu0 %v7988
      %v8023 = vpop.xlane.xlu0 %8022
      %8024 = vadd.xlane.f32.xlu0 %v7989
      %v8025 = vpop.xlane.xlu0 %8024
      %v8026 = vmul.f32 %v7993, %v2350
      %v8027 = vmul.f32 %v7995, %v2350
      %v8028 = vmul.f32 %v7997, %v2350
      %v8029 = vmul.f32 %v7999, %v2350
      %v8030 = vmul.f32 %v8001, %v2350
      %v8031 = vmul.f32 %v8003, %v2350
      %v8032 = vmul.f32 %v8005, %v2350
      %v8033 = vmul.f32 %v8007, %v2350
      %v8034 = vmul.f32 %v8009, %v2350
      %v8035 = vmul.f32 %v8011, %v2350
      %v8036 = vmul.f32 %v8013, %v2350
      %v8037 = vmul.f32 %v8015, %v2350
      %v8038 = vmul.f32 %v8017, %v2350
      %v8039 = vmul.f32 %v8019, %v2350
      %v8040 = vmul.f32 %v8021, %v2350
      %v8041 = vmul.f32 %v8023, %v2350
      %v8042 = vmul.f32 %v8025, %v2350
      %v8043 = vsub.f32 %v7973, %v8026
      %v8044 = vsub.f32 %v7974, %v8027
      %v8045 = vsub.f32 %v7975, %v8028
      %v8046 = vsub.f32 %v7976, %v8029
      %v8047 = vsub.f32 %v7977, %v8030
      %v8048 = vsub.f32 %v7978, %v8031
      %v8049 = vsub.f32 %v7979, %v8032
      %v8050 = vsub.f32 %v7980, %v8033
      %v8051 = vsub.f32 %v7981, %v8034
      %v8052 = vsub.f32 %v7982, %v8035
      %v8053 = vsub.f32 %v7983, %v8036
      %v8054 = vsub.f32 %v7984, %v8037
      %v8055 = vsub.f32 %v7985, %v8038
      %v8056 = vsub.f32 %v7986, %v8039
      %v8057 = vsub.f32 %v7987, %v8040
      %v8058 = vsub.f32 %v7988, %v8041
      %v8059 = vsub.f32 %v7989, %v8042
      %v8060 = vmul.f32 %v8043, %v8043
      %v8061 = vmul.f32 %v8044, %v8044
      %v8062 = vmul.f32 %v8045, %v8045
      %v8063 = vmul.f32 %v8046, %v8046
      %v8064 = vmul.f32 %v8047, %v8047
      %v8065 = vmul.f32 %v8048, %v8048
      %v8066 = vmul.f32 %v8049, %v8049
      %v8067 = vmul.f32 %v8050, %v8050
      %v8068 = vmul.f32 %v8051, %v8051
      %v8069 = vmul.f32 %v8052, %v8052
      %v8070 = vmul.f32 %v8053, %v8053
      %v8071 = vmul.f32 %v8054, %v8054
      %v8072 = vmul.f32 %v8055, %v8055
      %v8073 = vmul.f32 %v8056, %v8056
      %v8074 = vmul.f32 %v8057, %v8057
      %v8075 = vmul.f32 %v8058, %v8058
      %v8076 = vmul.f32 %v8059, %v8059
      %8077 = vadd.xlane.f32.xlu0 %v8060
      %v8078 = vpop.xlane.xlu0 %8077
      %8079 = vadd.xlane.f32.xlu0 %v8061
      %v8080 = vpop.xlane.xlu0 %8079
      %8081 = vadd.xlane.f32.xlu0 %v8062
      %v8082 = vpop.xlane.xlu0 %8081
      %8083 = vadd.xlane.f32.xlu0 %v8063
      %v8084 = vpop.xlane.xlu0 %8083
      %8085 = vadd.xlane.f32.xlu0 %v8064
      %v8086 = vpop.xlane.xlu0 %8085
      %8087 = vadd.xlane.f32.xlu0 %v8065
      %v8088 = vpop.xlane.xlu0 %8087
      %8089 = vadd.xlane.f32.xlu0 %v8066
      %v8090 = vpop.xlane.xlu0 %8089
      %8091 = vadd.xlane.f32.xlu0 %v8067
      %v8092 = vpop.xlane.xlu0 %8091
      %8093 = vadd.xlane.f32.xlu0 %v8068
      %v8094 = vpop.xlane.xlu0 %8093
      %8095 = vadd.xlane.f32.xlu0 %v8069
      %v8096 = vpop.xlane.xlu0 %8095
      %8097 = vadd.xlane.f32.xlu0 %v8070
      %v8098 = vpop.xlane.xlu0 %8097
      %8099 = vadd.xlane.f32.xlu0 %v8071
      %v8100 = vpop.xlane.xlu0 %8099
      %8101 = vadd.xlane.f32.xlu0 %v8072
      %v8102 = vpop.xlane.xlu0 %8101
      %8103 = vadd.xlane.f32.xlu0 %v8073
      %v8104 = vpop.xlane.xlu0 %8103
      %8105 = vadd.xlane.f32.xlu0 %v8074
      %v8106 = vpop.xlane.xlu0 %8105
      %8107 = vadd.xlane.f32.xlu0 %v8075
      %v8108 = vpop.xlane.xlu0 %8107
      %8109 = vadd.xlane.f32.xlu0 %v8076
      %v8110 = vpop.xlane.xlu0 %8109
      %v8111 = vmul.f32 %v8078, %v2350
      %v8112 = vmul.f32 %v8080, %v2350
      %v8113 = vmul.f32 %v8082, %v2350
      %v8114 = vmul.f32 %v8084, %v2350
      %v8115 = vmul.f32 %v8086, %v2350
      %v8116 = vmul.f32 %v8088, %v2350
      %v8117 = vmul.f32 %v8090, %v2350
      %v8118 = vmul.f32 %v8092, %v2350
      %v8119 = vmul.f32 %v8094, %v2350
      %v8120 = vmul.f32 %v8096, %v2350
      %v8121 = vmul.f32 %v8098, %v2350
      %v8122 = vmul.f32 %v8100, %v2350
      %v8123 = vmul.f32 %v8102, %v2350
      %v8124 = vmul.f32 %v8104, %v2350
      %v8125 = vmul.f32 %v8106, %v2350
      %v8126 = vmul.f32 %v8108, %v2350
      %v8127 = vmul.f32 %v8110, %v2350
      %v8128 = vadd.f32 %v8111, 1e-05
      %v8129 = vadd.f32 %v8112, 1e-05
      %v8130 = vadd.f32 %v8113, 1e-05
      %v8131 = vadd.f32 %v8114, 1e-05
      %v8132 = vadd.f32 %v8115, 1e-05
      %v8133 = vadd.f32 %v8116, 1e-05
      %v8134 = vadd.f32 %v8117, 1e-05
      %v8135 = vadd.f32 %v8118, 1e-05
      %v8136 = vadd.f32 %v8119, 1e-05
      %v8137 = vadd.f32 %v8120, 1e-05
      %v8138 = vadd.f32 %v8121, 1e-05
      %v8139 = vadd.f32 %v8122, 1e-05
      %v8140 = vadd.f32 %v8123, 1e-05
      %v8141 = vadd.f32 %v8124, 1e-05
      %v8142 = vadd.f32 %v8125, 1e-05
      %v8143 = vadd.f32 %v8126, 1e-05
      %v8144 = vadd.f32 %v8127, 1e-05
      %v8145 = vrsqrt.pop %v8128
      %v8146 = vmul.f32 %v8145, %v8128
      %v8147 = vmul.f32 %v8146, %v8145
      %v8148 = vmul.f32 0.5, %v8147
      %v8149 = vsub.f32 1.5, %v8148
      %v8150 = vmul.f32 %v8145, %v8149
      %vm8151 = vweird.f32 %v8128
      %vm8152 = vweird.f32 %v8145
      %vm8153 = vmor %vm8151, %vm8152
      %v8154 = vsel %vm8153, %v8145, %v8150
      %v8155 = vrsqrt.pop %v8129
      %v8156 = vmul.f32 %v8155, %v8129
      %v8157 = vmul.f32 %v8156, %v8155
      %v8158 = vmul.f32 0.5, %v8157
      %v8159 = vsub.f32 1.5, %v8158
      %v8160 = vmul.f32 %v8155, %v8159
      %vm8161 = vweird.f32 %v8129
      %vm8162 = vweird.f32 %v8155
      %vm8163 = vmor %vm8161, %vm8162
      %v8164 = vsel %vm8163, %v8155, %v8160
      %v8165 = vrsqrt.pop %v8130
      %v8166 = vmul.f32 %v8165, %v8130
      %v8167 = vmul.f32 %v8166, %v8165
      %v8168 = vmul.f32 0.5, %v8167
      %v8169 = vsub.f32 1.5, %v8168
      %v8170 = vmul.f32 %v8165, %v8169
      %vm8171 = vweird.f32 %v8130
      %vm8172 = vweird.f32 %v8165
      %vm8173 = vmor %vm8171, %vm8172
      %v8174 = vsel %vm8173, %v8165, %v8170
      %v8175 = vrsqrt.pop %v8131
      %v8176 = vmul.f32 %v8175, %v8131
      %v8177 = vmul.f32 %v8176, %v8175
      %v8178 = vmul.f32 0.5, %v8177
      %v8179 = vsub.f32 1.5, %v8178
      %v8180 = vmul.f32 %v8175, %v8179
      %vm8181 = vweird.f32 %v8131
      %vm8182 = vweird.f32 %v8175
      %vm8183 = vmor %vm8181, %vm8182
      %v8184 = vsel %vm8183, %v8175, %v8180
      %v8185 = vrsqrt.pop %v8132
      %v8186 = vmul.f32 %v8185, %v8132
      %v8187 = vmul.f32 %v8186, %v8185
      %v8188 = vmul.f32 0.5, %v8187
      %v8189 = vsub.f32 1.5, %v8188
      %v8190 = vmul.f32 %v8185, %v8189
      %vm8191 = vweird.f32 %v8132
      %vm8192 = vweird.f32 %v8185
      %vm8193 = vmor %vm8191, %vm8192
      %v8194 = vsel %vm8193, %v8185, %v8190
      %v8195 = vrsqrt.pop %v8133
      %v8196 = vmul.f32 %v8195, %v8133
      %v8197 = vmul.f32 %v8196, %v8195
      %v8198 = vmul.f32 0.5, %v8197
      %v8199 = vsub.f32 1.5, %v8198
      %v8200 = vmul.f32 %v8195, %v8199
      %vm8201 = vweird.f32 %v8133
      %vm8202 = vweird.f32 %v8195
      %vm8203 = vmor %vm8201, %vm8202
      %v8204 = vsel %vm8203, %v8195, %v8200
      %v8205 = vrsqrt.pop %v8134
      %v8206 = vmul.f32 %v8205, %v8134
      %v8207 = vmul.f32 %v8206, %v8205
      %v8208 = vmul.f32 0.5, %v8207
      %v8209 = vsub.f32 1.5, %v8208
      %v8210 = vmul.f32 %v8205, %v8209
      %vm8211 = vweird.f32 %v8134
      %vm8212 = vweird.f32 %v8205
      %vm8213 = vmor %vm8211, %vm8212
      %v8214 = vsel %vm8213, %v8205, %v8210
      %v8215 = vrsqrt.pop %v8135
      %v8216 = vmul.f32 %v8215, %v8135
      %v8217 = vmul.f32 %v8216, %v8215
      %v8218 = vmul.f32 0.5, %v8217
      %v8219 = vsub.f32 1.5, %v8218
      %v8220 = vmul.f32 %v8215, %v8219
      %vm8221 = vweird.f32 %v8135
      %vm8222 = vweird.f32 %v8215
      %vm8223 = vmor %vm8221, %vm8222
      %v8224 = vsel %vm8223, %v8215, %v8220
      %v8225 = vrsqrt.pop %v8136
      %v8226 = vmul.f32 %v8225, %v8136
      %v8227 = vmul.f32 %v8226, %v8225
      %v8228 = vmul.f32 0.5, %v8227
      %v8229 = vsub.f32 1.5, %v8228
      %v8230 = vmul.f32 %v8225, %v8229
      %vm8231 = vweird.f32 %v8136
      %vm8232 = vweird.f32 %v8225
      %vm8233 = vmor %vm8231, %vm8232
      %v8234 = vsel %vm8233, %v8225, %v8230
      %v8235 = vrsqrt.pop %v8137
      %v8236 = vmul.f32 %v8235, %v8137
      %v8237 = vmul.f32 %v8236, %v8235
      %v8238 = vmul.f32 0.5, %v8237
      %v8239 = vsub.f32 1.5, %v8238
      %v8240 = vmul.f32 %v8235, %v8239
      %vm8241 = vweird.f32 %v8137
      %vm8242 = vweird.f32 %v8235
      %vm8243 = vmor %vm8241, %vm8242
      %v8244 = vsel %vm8243, %v8235, %v8240
      %v8245 = vrsqrt.pop %v8138
      %v8246 = vmul.f32 %v8245, %v8138
      %v8247 = vmul.f32 %v8246, %v8245
      %v8248 = vmul.f32 0.5, %v8247
      %v8249 = vsub.f32 1.5, %v8248
      %v8250 = vmul.f32 %v8245, %v8249
      %vm8251 = vweird.f32 %v8138
      %vm8252 = vweird.f32 %v8245
      %vm8253 = vmor %vm8251, %vm8252
      %v8254 = vsel %vm8253, %v8245, %v8250
      %v8255 = vrsqrt.pop %v8139
      %v8256 = vmul.f32 %v8255, %v8139
      %v8257 = vmul.f32 %v8256, %v8255
      %v8258 = vmul.f32 0.5, %v8257
      %v8259 = vsub.f32 1.5, %v8258
      %v8260 = vmul.f32 %v8255, %v8259
      %vm8261 = vweird.f32 %v8139
      %vm8262 = vweird.f32 %v8255
      %vm8263 = vmor %vm8261, %vm8262
      %v8264 = vsel %vm8263, %v8255, %v8260
      %v8265 = vrsqrt.pop %v8140
      %v8266 = vmul.f32 %v8265, %v8140
      %v8267 = vmul.f32 %v8266, %v8265
      %v8268 = vmul.f32 0.5, %v8267
      %v8269 = vsub.f32 1.5, %v8268
      %v8270 = vmul.f32 %v8265, %v8269
      %vm8271 = vweird.f32 %v8140
      %vm8272 = vweird.f32 %v8265
      %vm8273 = vmor %vm8271, %vm8272
      %v8274 = vsel %vm8273, %v8265, %v8270
      %v8275 = vrsqrt.pop %v8141
      %v8276 = vmul.f32 %v8275, %v8141
      %v8277 = vmul.f32 %v8276, %v8275
      %v8278 = vmul.f32 0.5, %v8277
      %v8279 = vsub.f32 1.5, %v8278
      %v8280 = vmul.f32 %v8275, %v8279
      %vm8281 = vweird.f32 %v8141
      %vm8282 = vweird.f32 %v8275
      %vm8283 = vmor %vm8281, %vm8282
      %v8284 = vsel %vm8283, %v8275, %v8280
      %v8285 = vrsqrt.pop %v8142
      %v8286 = vmul.f32 %v8285, %v8142
      %v8287 = vmul.f32 %v8286, %v8285
      %v8288 = vmul.f32 0.5, %v8287
      %v8289 = vsub.f32 1.5, %v8288
      %v8290 = vmul.f32 %v8285, %v8289
      %vm8291 = vweird.f32 %v8142
      %vm8292 = vweird.f32 %v8285
      %vm8293 = vmor %vm8291, %vm8292
      %v8294 = vsel %vm8293, %v8285, %v8290
      %v8295 = vrsqrt.pop %v8143
      %v8296 = vmul.f32 %v8295, %v8143
      %v8297 = vmul.f32 %v8296, %v8295
      %v8298 = vmul.f32 0.5, %v8297
      %v8299 = vsub.f32 1.5, %v8298
      %v8300 = vmul.f32 %v8295, %v8299
      %vm8301 = vweird.f32 %v8143
      %vm8302 = vweird.f32 %v8295
      %vm8303 = vmor %vm8301, %vm8302
      %v8304 = vsel %vm8303, %v8295, %v8300
      %v8305 = vrsqrt.pop %v8144
      %v8306 = vmul.f32 %v8305, %v8144
      %v8307 = vmul.f32 %v8306, %v8305
      %v8308 = vmul.f32 0.5, %v8307
      %v8309 = vsub.f32 1.5, %v8308
      %v8310 = vmul.f32 %v8305, %v8309
      %vm8311 = vweird.f32 %v8144
      %vm8312 = vweird.f32 %v8305
      %vm8313 = vmor %vm8311, %vm8312
      %v8314 = vsel %vm8313, %v8305, %v8310
      %v8315 = vmul.f32 %v8043, %v8154
      %v8316 = vmul.f32 %v8044, %v8164
      %v8317 = vmul.f32 %v8045, %v8174
      %v8318 = vmul.f32 %v8046, %v8184
      %v8319 = vmul.f32 %v8047, %v8194
      %v8320 = vmul.f32 %v8048, %v8204
      %v8321 = vmul.f32 %v8049, %v8214
      %v8322 = vmul.f32 %v8050, %v8224
      %v8323 = vmul.f32 %v8051, %v8234
      %v8324 = vmul.f32 %v8052, %v8244
      %v8325 = vmul.f32 %v8053, %v8254
      %v8326 = vmul.f32 %v8054, %v8264
      %v8327 = vmul.f32 %v8055, %v8274
      %v8328 = vmul.f32 %v8056, %v8284
      %v8329 = vmul.f32 %v8057, %v8294
      %v8330 = vmul.f32 %v8058, %v8304
      %v8331 = vmul.f32 %v8059, %v8314
      %v8333 = vperm.slane %v7990, 0
      %v8335 = vmul.f32 %v8315, %v8333
      %v8336 = vmul.f32 %v8316, %v8333
      %v8337 = vmul.f32 %v8317, %v8333
      %v8338 = vmul.f32 %v8318, %v8333
      %v8339 = vmul.f32 %v8319, %v8333
      %v8340 = vmul.f32 %v8320, %v8333
      %v8341 = vmul.f32 %v8321, %v8333
      %v8342 = vmul.f32 %v8322, %v8333
      %v8343 = vmul.f32 %v8323, %v8333
      %v8344 = vmul.f32 %v8324, %v8333
      %v8345 = vmul.f32 %v8325, %v8333
      %v8346 = vmul.f32 %v8326, %v8333
      %v8347 = vmul.f32 %v8327, %v8333
      %v8348 = vmul.f32 %v8328, %v8333
      %v8349 = vmul.f32 %v8329, %v8333
      %v8350 = vmul.f32 %v8330, %v8333
      %v8351 = vmul.f32 %v8331, %v8333
      %v8353 = vperm.slane %v7991, 0
      %v8355 = vadd.f32 %v8335, %v8353
      %v8356 = vadd.f32 %v8336, %v8353
      %v8357 = vadd.f32 %v8337, %v8353
      %v8358 = vadd.f32 %v8338, %v8353
      %v8359 = vadd.f32 %v8339, %v8353
      %v8360 = vadd.f32 %v8340, %v8353
      %v8361 = vadd.f32 %v8341, %v8353
      %v8362 = vadd.f32 %v8342, %v8353
      %v8363 = vadd.f32 %v8343, %v8353
      %v8364 = vadd.f32 %v8344, %v8353
      %v8365 = vadd.f32 %v8345, %v8353
      %v8366 = vadd.f32 %v8346, %v8353
      %v8367 = vadd.f32 %v8347, %v8353
      %v8368 = vadd.f32 %v8348, %v8353
      %v8369 = vadd.f32 %v8349, %v8353
      %v8370 = vadd.f32 %v8350, %v8353
      %v8371 = vadd.f32 %v8351, %v8353
      %v8372 = vld [vmem:[%s17] sm:$0x7]
      %v8373 = vld [vmem:[%s18] sm:$0x7]
      %8375 = vset.pattern.permute.xlu0 0
      %8376 = vperm.xlu0 %8375, %v8373
      %v8377 = vpop.permute.xlu0 %8376
      %8379 = vmatpush.xpose.msra.mxu0 %v8370
      %8380 = vmatpush.xpose.msra.mxu0 %v8369
      %8381 = vmatpush.xpose.msra.mxu0 %v8368
      %8382 = vmatpush.xpose.msra.mxu0 %v8367
      %8383 = vmatpush.xpose.msra.mxu0 %v8366
      %8384 = vmatpush.xpose.msra.mxu0 %v8365
      %8385 = vmatpush.xpose.msra.mxu0 %v8364
      %8386 = vmatpush.xpose.msra.mxu0 %v8363
      %8387 = vmatpush.xpose.msra.mxu0 %v8362
      %8388 = vmatpush.xpose.msra.mxu0 %v8361
      %8389 = vmatpush.xpose.msra.mxu0 %v8360
      %8390 = vmatpush.xpose.msra.mxu0 %v8359
      %8391 = vmatpush.xpose.msra.mxu0 %v8358
      %8392 = vmatpush.xpose.msra.mxu0 %v8357
      %8393 = vmatpush.xpose.msra.mxu0 %v8356
      %8394 = vmatpush.xpose.msra.mxu0 %v8355
      %8395 = vmatmul.f32.gmra.mxu0 %v8372
      %v8396 = vpop.f32.mrf.mxu0
      %v8397 = vadd.f32 %v8377, %v8396
      %8398 = vdwg.mxu0
      %8399 = vmatpush.xpose.msra.mxu0 0.0
      %8400 = vmatpush.xpose.msra.mxu0 0.0
      %8401 = vmatpush.xpose.msra.mxu0 0.0
      %8402 = vmatpush.xpose.msra.mxu0 0.0
      %8403 = vmatpush.xpose.msra.mxu0 0.0
      %8404 = vmatpush.xpose.msra.mxu0 0.0
      %8405 = vmatpush.xpose.msra.mxu0 0.0
      %8406 = vmatpush.xpose.msra.mxu0 0.0
      %8407 = vmatpush.xpose.msra.mxu0 0.0
      %8408 = vmatpush.xpose.msra.mxu0 0.0
      %8409 = vmatpush.xpose.msra.mxu0 0.0
      %8410 = vmatpush.xpose.msra.mxu0 0.0
      %8411 = vmatpush.xpose.msra.mxu0 0.0
      %8412 = vmatpush.xpose.msra.mxu0 0.0
      %8413 = vmatpush.xpose.msra.mxu0 0.0
      %8414 = vmatpush.xpose.msra.mxu0 %v8371
      %8415 = vmatmul.f32.gmra.mxu0 %v8372
      %v8416 = vpop.f32.mrf.mxu0
      %v8417 = vadd.f32 %v8377, %v8416
      %8418 = vdwg.mxu0
      %v8421 = vrot.slane %v8417, 4
      %vm8422 = vcmask 1043456
      %v8423 = vsel %vm8422, %v8397, %v8421
      %vm8425 = vcmask 1042432
      %vm8426 = vcmask 63492
      %vm8427 = vmor %vm8426, %vm8425
      %8428 = vst.msk [vmem:[%s602] sm:$0x77] %vm8427, %v8423
      %p8429 = scmp.lt.s32.totalorder %s30, 1
      %s8430 = scalar_select %p8429, %s30, 1
      %s8431 = smul.addr %s8430, 2
      %s8432 = smul.addr %s8431, 4
      %s8433 = scalar_lea.vmem %s19, %s8432
      // Predicated region
      $region97: #{mlp_mixer_forward.1} parent=95 // pred_check
        %p8434 = pneg %p452
      $region98: #{mlp_mixer_forward.1} parent=95 // pred_check_branch
        %8436 = sbr.rel (%p8434) target = $region100
      $region99: #{mlp_mixer_forward.1} parent=95 // pred_region
        _
      $region100: #{mlp_mixer_forward.1} parent=95 // pred_fallthru
        _
    $region96: #{mlp_mixer_forward.1} parent=5 // pred_fallthru
      _
    %p8437 = scmp.le.s32.totalorder 2, %s25
    // Predicated region
    $region101: #{mlp_mixer_forward.1} parent=5 // pred_check
      %p8438 = pneg %p8437
    $region102: #{mlp_mixer_forward.1} parent=5 // pred_check_branch
      %8440 = sbr.rel (%p8438) target = $region104
    $region103: #{mlp_mixer_forward.1} parent=5 // pred_region
      %s8441 = ssub.s32 %s25, 2
      // Predicated region
      $region105: #{mlp_mixer_forward.1} parent=103 // pred_check
        %p8442 = pneg %p458
      $region106: #{mlp_mixer_forward.1} parent=103 // pred_check_branch
        %8444 = sbr.rel (%p8442) target = $region108
      $region107: #{mlp_mixer_forward.1} parent=103 // pred_region
        %p8445 = scmp.lt.s32.totalorder %s31, 1
        %s8446 = scalar_select %p8445, %s31, 1
        %s8447 = smul.addr %s8446, 2
        %s8448 = smul.addr %s8447, 4
        %s8449 = scalar_lea.vmem %s19, %s8448
      $region108: #{mlp_mixer_forward.1} parent=103 // pred_fallthru
        _
    $region104: #{mlp_mixer_forward.1} parent=5 // pred_fallthru
      _
  $region6: #{mlp_mixer_forward.1} parent=0 // loop_footer
    %s29 = sadd.s32 1, %s25
  $region7: #{mlp_mixer_forward.1} parent=0 // loop_footer_branch
    %24 = sbr.rel target = $region3
  $region8: #{mlp_mixer_forward.1} parent=0 // loop_exit
    _

</llo_original>
